<compile_context>
chip_gen: v7x
topology: tpu7x:2x2x1
jax: 0.10.0
libtpu: 0.0.40
codegen_flags: <defaults>
</compile_context>

<pallas_src>
import functools

import jax
import jax.numpy as jnp
from jax.experimental import pallas as pl
from jax.experimental.pallas import tpu as pltpu

# ----------------------------- config -----------------------------------------
NUM_CLASSES = 4
IN_CH = 3
STEM_CH = 8
BLOCK_CH = 16
HEAD_DIM = 8
NUM_HEADS = BLOCK_CH // HEAD_DIM          # 2
PARTITION = 4                              # window / grid partition size
MLP_RATIO = 4
EXPANSION = 4
SQUEEZE = 0.25
MID_CH = BLOCK_CH * EXPANSION              # 64
SQZ_CH = int(BLOCK_CH * SQUEEZE)           # 4
BN_EPS = 1e-3                              # torchvision maxvit: BatchNorm2d(eps=1e-3)
LN_EPS = 1e-5

ACT_DT = jnp.bfloat16                      # inter-kernel activation dtype (halves HBM traffic)
VMEM_LIMIT = 32 * 1024 * 1024              # fits v5e/v6e/v7x scoped-VMEM comfortably


def _cparams(*sems):
    return pltpu.CompilerParams(dimension_semantics=sems, vmem_limit_bytes=VMEM_LIMIT)


def _gelu_tanh(x):
    c = 0.7978845608028654  # sqrt(2/pi)
    return 0.5 * x * (1.0 + jnp.tanh(c * (x + 0.044715 * x * x * x)))


_ACTS = {
    "none": lambda x: x,
    "gelu": _gelu_tanh,
    "sigmoid": jax.nn.sigmoid,
    "silu": lambda x: x * jax.nn.sigmoid(x),
}


def _layernorm(x, g, b):
    mu = jnp.mean(x, axis=-1, keepdims=True)
    var = jnp.mean(jnp.square(x - mu), axis=-1, keepdims=True)
    return (x - mu) * jax.lax.rsqrt(var + LN_EPS) * g + b


def _bn_scale_shift(bn):
    scale = bn["gamma"] / jnp.sqrt(bn["var"] + BN_EPS)
    shift = bn["beta"] - bn["mean"] * scale
    return scale, shift


def _fold_linear(w, b, pre=None, post=None):
    """Fold per-input-channel (pre) and per-output-channel (post) affines into (w, b)."""
    w = jnp.asarray(w, jnp.float32)
    b = jnp.zeros((w.shape[1],), jnp.float32) if b is None else jnp.asarray(b, jnp.float32)
    if pre is not None:
        s, t = pre
        b = b + t @ w
        w = w * s[:, None]
    if post is not None:
        s, t = post
        w = w * s[None, :]
        b = b * s + t
    return w, b


def _fold_stride2(x):
    """2x2 phase-fold (N,H,W,C) -> (N,H/2,W/2,4C); makes stride-2 taps unit-offset slices."""
    n, h, w, c = x.shape
    x = x.reshape(n, h // 2, 2, w // 2, 2, c).transpose(0, 1, 3, 2, 4, 5)
    return x.reshape(n, h // 2, w // 2, 4 * c)


def _taps(stride, cin):
    """Tap descriptors (row_off, col_off, chan_start) for the 9 kernel positions.

    stride 1: taps index a (+1,+1)-zero-padded input directly.
    stride 2: the input is 2x2 phase-folded into channels; each tap is a unit-offset window of
              the folded tensor plus a channel slice selecting the phase; only top/left padding
              is ever read (H, W even), so the kernel pads one block at the top/left only.
    """
    if stride == 1:
        pads = ((1, 1), (1, 1))
        return pads, tuple((ki, kj, 0) for ki in range(3) for kj in range(3))
    pads = ((1, 0), (1, 0))

    def dec(k):                      # kernel offset -> (block offset into padded tensor, phase)
        return (0, 1) if k == 0 else ((1, 0) if k == 1 else (1, 1))

    taps = []
    for ki in range(3):
        for kj in range(3):
            ro, pr = dec(ki)
            co, pc = dec(kj)
            taps.append((ro, co, (pr * 2 + pc) * cin))
    return pads, tuple(taps)


def _pad_hw_in_kernel(x, pad_h, pad_w):
    """Zero-pad axes 1 (H) / 2 (W) of an NHWC value in VMEM via concatenation (no HBM copies)."""
    n, h, w, c = x.shape
    top, bot = pad_h
    left, right = pad_w
    if left or right:
        parts = []
        if left:
            parts.append(jnp.zeros((n, h, left, c), x.dtype))
        parts.append(x)
        if right:
            parts.append(jnp.zeros((n, h, right, c), x.dtype))
        x = jnp.concatenate(parts, axis=2)
        w = w + left + right
    if top or bot:
        parts = []
        if top:
            parts.append(jnp.zeros((n, top, w, c), x.dtype))
        parts.append(x)
        if bot:
            parts.append(jnp.zeros((n, bot, w, c), x.dtype))
        x = jnp.concatenate(parts, axis=1)
    return x


# ----------------------------- Pallas kernels ----------------------------------


def _conv3x3_kernel(x_ref, w_ref, b_ref, o_ref, *, taps, pads, ho, wo, cin, cout, act):
    """3x3 conv as a single MXU dot: 9 taps concatenated along K; bias/BN/act fused."""
    x = x_ref[...].astype(jnp.float32)                         # (1, Hin, Win, Cf)
    xp = _pad_hw_in_kernel(x, pads[0], pads[1])
    m = ho * wo
    cols = [xp[:, ro:ro + ho, co:co + wo, cs:cs + cin].reshape(m, cin)
            for (ro, co, cs) in taps]
    patches = jnp.concatenate(cols, axis=-1).astype(jnp.bfloat16)   # (m, 9*cin)
    y = jnp.dot(patches, w_ref[...], preferred_element_type=jnp.float32) + b_ref[...]
    o_ref[...] = _ACTS[act](y).reshape(1, ho, wo, cout).astype(o_ref.dtype)


def conv3x3_fused(x, w, b, stride, post=None, act="none"):
    """3x3 conv (padding=1) with BN affine + bias folded into (w,b); grid over batch."""
    N, H, W, Cin = x.shape
    Cout = w.shape[-1]
    Ho, Wo = H // stride, W // stride
    wf, bf = _fold_linear(w.reshape(9 * Cin, Cout), b, post=post)
    pads, taps = _taps(stride, Cin)
    xin = _fold_stride2(x) if stride == 2 else x
    Hin, Win, Cf = xin.shape[1:]
    return pl.pallas_call(
        functools.partial(_conv3x3_kernel, taps=taps, pads=pads,
                          ho=Ho, wo=Wo, cin=Cin, cout=Cout, act=act),
        out_shape=jax.ShapeDtypeStruct((N, Ho, Wo, Cout), ACT_DT),
        grid=(N,),
        in_specs=[
            pl.BlockSpec((1, Hin, Win, Cf), lambda n: (n, 0, 0, 0)),
            pl.BlockSpec((9 * Cin, Cout), lambda n: (0, 0)),
            pl.BlockSpec((1, Cout), lambda n: (0, 0)),
        ],
        out_specs=pl.BlockSpec((1, Ho, Wo, Cout), lambda n: (n, 0, 0, 0)),
        compiler_params=_cparams("parallel"),
    )(xin.astype(ACT_DT), wf.astype(jnp.bfloat16), bf.reshape(1, Cout))


def _dw3x3_kernel(x_ref, w_ref, b_ref, o_ref, *, taps, ho, wo, c, act):
    """Depthwise 3x3 stride-2: per-channel tap MAC on the phase-folded input, BN+act fused."""
    x = x_ref[...].astype(jnp.float32)                         # (1, ho, wo, 4c)
    xp = _pad_hw_in_kernel(x, (1, 0), (1, 0))
    w = w_ref[...]                                             # (9, c) f32, BN scale folded
    acc = jnp.zeros((1, ho, wo, c), jnp.float32)
    for t, (ro, co, cs) in enumerate(taps):
        acc = acc + xp[:, ro:ro + ho, co:co + wo, cs:cs + c] * w[t]
    o_ref[...] = _ACTS[act](acc + b_ref[...]).astype(o_ref.dtype)


def depthwise3x3_s2_fused(x, w, post=None, act="none"):
    N, H, W, C = x.shape
    Ho, Wo = H // 2, W // 2
    if post is None:
        post = (jnp.ones((C,), jnp.float32), jnp.zeros((C,), jnp.float32))
    scale, shift = post
    wf = w.reshape(9, C).astype(jnp.float32) * scale[None, :]
    _, taps = _taps(2, C)
    xin = _fold_stride2(x)
    return pl.pallas_call(
        functools.partial(_dw3x3_kernel, taps=taps, ho=Ho, wo=Wo, c=C, act=act),
        out_shape=jax.ShapeDtypeStruct((N, Ho, Wo, C), ACT_DT),
        grid=(N,),
        in_specs=[
            pl.BlockSpec((1, Ho, Wo, 4 * C), lambda n: (n, 0, 0, 0)),
            pl.BlockSpec((9, C), lambda n: (0, 0)),
            pl.BlockSpec((1, C), lambda n: (0, 0)),
        ],
        out_specs=pl.BlockSpec((1, Ho, Wo, C), lambda n: (n, 0, 0, 0)),
        compiler_params=_cparams("parallel"),
    )(xin.astype(ACT_DT), wf, shift.reshape(1, C).astype(jnp.float32))


def _poolproj_kernel(x_ref, w_ref, b_ref, o_ref, *, taps, ho, wo, cin, cout):
    """AvgPool2d(3, s2, p1, count_include_pad=True) fused with the 1x1 projection."""
    x = x_ref[...].astype(jnp.float32)                         # (1, ho, wo, 4cin)
    xp = _pad_hw_in_kernel(x, (1, 0), (1, 0))
    m = ho * wo
    acc = jnp.zeros((m, cin), jnp.float32)
    for (ro, co, cs) in taps:
        acc = acc + xp[:, ro:ro + ho, co:co + wo, cs:cs + cin].reshape(m, cin)
    pooled = (acc * (1.0 / 9.0)).astype(jnp.bfloat16)
    y = jnp.dot(pooled, w_ref[...], preferred_element_type=jnp.float32) + b_ref[...]
    o_ref[...] = y.reshape(1, m, cout).astype(o_ref.dtype)


def avgpool_proj_fused(x, w, b):
    N, H, W, Cin = x.shape
    Cout = w.shape[1]
    Ho, Wo = H // 2, W // 2
    _, taps = _taps(2, Cin)
    xin = _fold_stride2(x)
    return pl.pallas_call(
        functools.partial(_poolproj_kernel, taps=taps, ho=Ho, wo=Wo, cin=Cin, cout=Cout),
        out_shape=jax.ShapeDtypeStruct((N, Ho * Wo, Cout), ACT_DT),
        grid=(N,),
        in_specs=[
            pl.BlockSpec((1, Ho, Wo, 4 * Cin), lambda n: (n, 0, 0, 0)),
            pl.BlockSpec((Cin, Cout), lambda n: (0, 0)),
            pl.BlockSpec((1, Cout), lambda n: (0, 0)),
        ],
        out_specs=pl.BlockSpec((1, Ho * Wo, Cout), lambda n: (n, 0, 0)),
        compiler_params=_cparams("parallel"),
    )(xin.astype(ACT_DT), w.astype(jnp.bfloat16), jnp.asarray(b, jnp.float32).reshape(1, Cout))


def _linear_kernel(x_ref, w_ref, b_ref, o_ref, *, act):
    y = jnp.dot(x_ref[...], w_ref[...], preferred_element_type=jnp.float32) + b_ref[...]
    o_ref[...] = _ACTS[act](y).astype(o_ref.dtype)


def pl_linear_fused(x, w, b=None, pre=None, post=None, act="none", block_m=256):
    """(M,K)@(K,N): pre/post affines + bias folded into (w,b); M-tiled parallel grid."""
    M, K = x.shape
    N = w.shape[1]
    wf, bf = _fold_linear(w, b, pre=pre, post=post)
    # pick block_m: target >=2 parallel grid steps (megacore) without exceeding block_m;
    # pad M up instead of collapsing to a single unpipelined block.
    half = ((max(1, (M + 1) // 2) + 7) // 8) * 8
    bm = min(block_m, max(8, half))
    Mp = ((M + bm - 1) // bm) * bm
    xp = jnp.pad(x, ((0, Mp - M), (0, 0))) if Mp != M else x
    y = pl.pallas_call(
        functools.partial(_linear_kernel, act=act),
        out_shape=jax.ShapeDtypeStruct((Mp, N), ACT_DT),
        grid=(Mp // bm,),
        in_specs=[
            pl.BlockSpec((bm, K), lambda i: (i, 0)),
            pl.BlockSpec((K, N), lambda i: (0, 0)),
            pl.BlockSpec((1, N), lambda i: (0, 0)),
        ],
        out_specs=pl.BlockSpec((bm, N), lambda i: (i, 0)),
        compiler_params=_cparams("parallel"),
    )(xp.astype(ACT_DT), wf.astype(jnp.bfloat16), bf.reshape(1, N))
    return y if Mp == M else y[:M]


def _se_proj_kernel(h_ref, w1_ref, b1_ref, w2_ref, b2_ref, wc_ref, bc_ref, res_ref, o_ref):
    """SE squeeze -> fc/SiLU -> fc/sigmoid -> channel scale -> 1x1 project -> +residual."""
    h = h_ref[...].astype(jnp.float32)                         # (1, L, Cmid)
    l, cmid = h.shape[1], h.shape[2]
    cout = wc_ref.shape[1]
    pooled = jnp.mean(h, axis=1)                               # (1, Cmid)
    z = jnp.dot(pooled.astype(jnp.bfloat16), w1_ref[...],
                preferred_element_type=jnp.float32) + b1_ref[...]
    z = z * jax.nn.sigmoid(z)                                  # SiLU
    z = jnp.dot(z.astype(jnp.bfloat16), w2_ref[...],
                preferred_element_type=jnp.float32) + b2_ref[...]
    se = jax.nn.sigmoid(z)                                     # (1, Cmid)
    hs = (h * se[:, None, :]).reshape(l, cmid).astype(jnp.bfloat16)
    y = jnp.dot(hs, wc_ref[...], preferred_element_type=jnp.float32) + bc_ref[...]
    y = y + res_ref[...].astype(jnp.float32).reshape(l, cout)
    o_ref[...] = y.reshape(1, l, cout).astype(o_ref.dtype)


def se_scale_proj_residual(h3d, p, res3d):
    # TODO(synk): at real resolutions split the global-mean squeeze into an L-tiled pass;
    # here one batch element fits VMEM with large headroom (also on v7x's 64 MiB).
    N, L, Cmid = h3d.shape
    Cout = p["conv_c_w"].shape[1]
    Sq = p["se_w1"].shape[1]
    return pl.pallas_call(
        _se_proj_kernel,
        out_shape=jax.ShapeDtypeStruct((N, L, Cout), ACT_DT),
        grid=(N,),
        in_specs=[
            pl.BlockSpec((1, L, Cmid), lambda n: (n, 0, 0)),
            pl.BlockSpec((Cmid, Sq), lambda n: (0, 0)),
            pl.BlockSpec((1, Sq), lambda n: (0, 0)),
            pl.BlockSpec((Sq, Cmid), lambda n: (0, 0)),
            pl.BlockSpec((1, Cmid), lambda n: (0, 0)),
            pl.BlockSpec((Cmid, Cout), lambda n: (0, 0)),
            pl.BlockSpec((1, Cout), lambda n: (0, 0)),
            pl.BlockSpec((1, L, Cout), lambda n: (n, 0, 0)),
        ],
        out_specs=pl.BlockSpec((1, L, Cout), lambda n: (n, 0, 0)),
        compiler_params=_cparams("parallel"),
    )(h3d.astype(ACT_DT),
      p["se_w1"].astype(jnp.bfloat16), p["se_b1"].reshape(1, Sq).astype(jnp.float32),
      p["se_w2"].astype(jnp.bfloat16), p["se_b2"].reshape(1, Cmid).astype(jnp.float32),
      p["conv_c_w"].astype(jnp.bfloat16), p["conv_c_b"].reshape(1, Cout).astype(jnp.float32),
      res3d.astype(ACT_DT))


def _attn_layer_kernel(x_ref, ln1g_ref, ln1b_ref, qkvw_ref, qkvb_ref, bias_ref,
                       mw_ref, mb_ref, ln2g_ref, ln2b_ref, w1_ref, b1_ref, w2_ref, b2_ref,
                       o_ref, *, wb, pp, c, heads, dh):
    """Whole PartitionAttentionLayer for a block of window-groups:
    LN1 -> one fused QKV dot -> per-head softmax(QK^T+bias)V -> one merge dot -> +res
    -> LN2 -> MLP(GELU) -> +res."""
    x = x_ref[...].astype(jnp.float32)                         # (wb, pp, c)
    xf = x.reshape(wb * pp, c)
    a = _layernorm(xf, ln1g_ref[...], ln1b_ref[...])
    qkv = jnp.dot(a.astype(jnp.bfloat16), qkvw_ref[...],
                  preferred_element_type=jnp.float32) + qkvb_ref[...]      # (M, 3c)
    bias = bias_ref[...]                                       # (heads, pp, pp)
    outs = []
    for h in range(heads):
        q = qkv[:, h * dh:(h + 1) * dh].reshape(wb, pp, dh)
        k = qkv[:, c + h * dh:c + (h + 1) * dh].reshape(wb, pp, dh)
        v = qkv[:, 2 * c + h * dh:2 * c + (h + 1) * dh].reshape(wb, pp, dh)
        s = jnp.einsum("wpd,wqd->wpq", q, k, preferred_element_type=jnp.float32) + bias[h][None]
        s = s - jnp.max(s, axis=-1, keepdims=True)
        e = jnp.exp(s)
        pr = e * pl.reciprocal(jnp.sum(e, axis=-1, keepdims=True), approx=True)
        o = jnp.einsum("wpq,wqd->wpd", pr, v, preferred_element_type=jnp.float32)
        outs.append(o.reshape(wb * pp, dh))
    attn = jnp.concatenate(outs, axis=-1).astype(jnp.bfloat16)             # (M, c)
    attn = jnp.dot(attn, mw_ref[...], preferred_element_type=jnp.float32)
    t = xf + attn + mb_ref[...]                                # residual 1 (+ merge bias)
    m = _layernorm(t, ln2g_ref[...], ln2b_ref[...])
    m = jnp.dot(m.astype(jnp.bfloat16), w1_ref[...],
                preferred_element_type=jnp.float32) + b1_ref[...]
    m = _gelu_tanh(m)
    m = jnp.dot(m.astype(jnp.bfloat16), w2_ref[...],
                preferred_element_type=jnp.float32) + b2_ref[...]
    o_ref[...] = (t + m).reshape(wb, pp, c).astype(o_ref.dtype)            # residual 2


def pl_partition_attention(t3d, p, bias):
    BG, P_, C = t3d.shape
    heads, dh = NUM_HEADS, HEAD_DIM
    hid = p["mlp_w1"].shape[1]
    # window-groups per step: target ~512 rows/step but keep >=2 parallel grid steps (megacore).
    wb = min(BG, max(1, 512 // P_))
    if BG >= 2:
        wb = min(wb, max(1, BG // 2))
    while BG % wb:
        wb -= 1
    # fold torchvision's K scale (feat_dim ** -0.5) into the K third of the QKV projection
    scale = float(C) ** -0.5
    colscale = jnp.concatenate(
        [jnp.ones((C,), jnp.float32), jnp.full((C,), scale, jnp.float32),
         jnp.ones((C,), jnp.float32)])
    qkv_w = p["qkv_w"].astype(jnp.float32) * colscale[None, :]
    qkv_b = p["qkv_b"].astype(jnp.float32) * colscale

    z2 = lambda i: (0, 0)
    z3 = lambda i: (0, 0, 0)
    return pl.pallas_call(
        functools.partial(_attn_layer_kernel, wb=wb, pp=P_, c=C, heads=heads, dh=dh),
        out_shape=jax.ShapeDtypeStruct((BG, P_, C), ACT_DT),
        grid=(BG // wb,),
        in_specs=[
            pl.BlockSpec((wb, P_, C), lambda i: (i, 0, 0)),
            pl.BlockSpec((1, C), z2), pl.BlockSpec((1, C), z2),
            pl.BlockSpec((C, 3 * C), z2), pl.BlockSpec((1, 3 * C), z2),
            pl.BlockSpec((heads, P_, P_), z3),
            pl.BlockSpec((C, C), z2), pl.BlockSpec((1, C), z2),
            pl.BlockSpec((1, C), z2), pl.BlockSpec((1, C), z2),
            pl.BlockSpec((C, hid), z2), pl.BlockSpec((1, hid), z2),
            pl.BlockSpec((hid, C), z2), pl.BlockSpec((1, C), z2),
        ],
        out_specs=pl.BlockSpec((wb, P_, C), lambda i: (i, 0, 0)),
        compiler_params=_cparams("parallel"),
    )(t3d.astype(ACT_DT),
      p["ln1_g"].reshape(1, C).astype(jnp.float32), p["ln1_b"].reshape(1, C).astype(jnp.float32),
      qkv_w.astype(jnp.bfloat16), qkv_b.reshape(1, 3 * C),
      bias.astype(jnp.float32),
      p["merge_w"].astype(jnp.bfloat16), p["merge_b"].reshape(1, C).astype(jnp.float32),
      p["ln2_g"].reshape(1, C).astype(jnp.float32), p["ln2_b"].reshape(1, C).astype(jnp.float32),
      p["mlp_w1"].astype(jnp.bfloat16), p["mlp_b1"].reshape(1, hid).astype(jnp.float32),
      p["mlp_w2"].astype(jnp.bfloat16), p["mlp_b2"].reshape(1, C).astype(jnp.float32))


def _head_kernel(x_ref, w_ref, b_ref, o_ref):
    ncls = w_ref.shape[1]
    pooled = jnp.mean(x_ref[...].astype(jnp.float32), axis=1)              # (1, C)
    y = jnp.dot(pooled.astype(jnp.bfloat16), w_ref[...],
                preferred_element_type=jnp.float32) + b_ref[...]
    o_ref[...] = jax.nn.sigmoid(y).reshape(1, 1, ncls)


def pl_pool_classifier(h, w, b):
    """AdaptiveAvgPool2d(1) + Linear + Sigmoid head, grid over batch."""
    N, Hh, Wh, C = h.shape
    L = Hh * Wh
    ncls = w.shape[1]
    out = pl.pallas_call(
        _head_kernel,
        out_shape=jax.ShapeDtypeStruct((N, 1, ncls), jnp.float32),
        grid=(N,),
        in_specs=[
            pl.BlockSpec((1, L, C), lambda n: (n, 0, 0)),
            pl.BlockSpec((C, ncls), lambda n: (0, 0)),
            pl.BlockSpec((1, ncls), lambda n: (0, 0)),
        ],
        out_specs=pl.BlockSpec((1, 1, ncls), lambda n: (n, 0, 0)),
        compiler_params=_cparams("parallel"),
    )(h.reshape(N, L, C).astype(ACT_DT), w.astype(jnp.bfloat16),
      jnp.asarray(b, jnp.float32).reshape(1, ncls))
    return out.reshape(N, ncls)


# ----------------------------- MaxViT building blocks ---------------------------


def mbconv(x, p):
    """MBConv with SE, stride-2 downsample (eval mode, stochastic depth = identity)."""
    N, H, W, Cin = x.shape
    Ho, Wo = H // 2, W // 2
    # residual/projection path: AvgPool(3,s2,p1) + 1x1 conv fused in one kernel
    res = avgpool_proj_fused(x, p["proj_w"], p["proj_b"])               # (N, Ho*Wo, BLOCK_CH)
    # main path: pre-BN + 1x1 expand + BN + GELU -> one M-tiled matmul kernel (affines folded)
    h = pl_linear_fused(x.reshape(-1, Cin), p["conv_a_w"], None,
                        pre=_bn_scale_shift(p["pre_bn"]),
                        post=_bn_scale_shift(p["bn_a"]), act="gelu")
    h = h.reshape(N, H, W, MID_CH)
    # depthwise 3x3 stride-2 + BN + GELU fused (phase-folded taps, no im2col)
    h = depthwise3x3_s2_fused(h, p["conv_b_w"], post=_bn_scale_shift(p["bn_b"]), act="gelu")
    # SE squeeze/excite + channel scale + 1x1 projection + residual add fused
    out = se_scale_proj_residual(h.reshape(N, Ho * Wo, MID_CH), p, res)
    return out.reshape(N, Ho, Wo, BLOCK_CH)


def window_partition(x, p):
    B, H, W, C = x.shape
    x = x.reshape(B, H // p, p, W // p, p, C).transpose(0, 1, 3, 2, 4, 5)
    return x.reshape(B, (H // p) * (W // p), p * p, C)


def window_departition(x, p, gh, gw):
    B = x.shape[0]
    C = x.shape[-1]
    x = x.reshape(B, gh, gw, p, p, C).transpose(0, 1, 3, 2, 4, 5)
    return x.reshape(B, gh * p, gw * p, C)


def relative_position_index(size):
    coords = jnp.stack(jnp.meshgrid(jnp.arange(size), jnp.arange(size), indexing="ij"))
    flat = coords.reshape(2, -1)
    rel = (flat[:, :, None] - flat[:, None, :]).transpose(1, 2, 0)   # (P, P, 2)
    rel = rel + (size - 1)
    return rel[..., 0] * (2 * size - 1) + rel[..., 1]                # (P, P)


def relative_bias(table, idx):
    P = idx.shape[0]
    bias = table[idx.reshape(-1)].reshape(P, P, NUM_HEADS)
    return bias.transpose(2, 0, 1)                                   # (H, P, P)


def partition_attention_layer(x, p, ptype, rel_idx):
    """PartitionAttentionLayer (window or grid), fully fused into one pallas_call."""
    N, H, W, C = x.shape
    pp = PARTITION if ptype == "window" else H // PARTITION
    gh, gw = H // pp, W // pp
    t = window_partition(x, pp)
    if ptype == "grid":
        t = jnp.swapaxes(t, -2, -3)
    B_, G_, P_, _ = t.shape
    bias = relative_bias(p["rel_table"], rel_idx)
    y = pl_partition_attention(t.reshape(B_ * G_, P_, C), p, bias)
    y = y.reshape(B_, G_, P_, C)
    if ptype == "grid":
        y = jnp.swapaxes(y, -2, -3)
    return window_departition(y, pp, gh, gw)


# ----------------------------- full forward -------------------------------------


def maxvit_forward(x_nchw, params):
    x = jnp.transpose(x_nchw, (0, 2, 3, 1))                           # NCHW -> NHWC

    # stem: conv3x3 s2 (bias-free) + BN + GELU fused, then conv3x3 s1 with bias
    h = conv3x3_fused(x, params["stem1_w"], None, stride=2,
                      post=_bn_scale_shift(params["stem1_bn"]), act="gelu")
    h = conv3x3_fused(h, params["stem2_w"], params["stem2_b"], stride=1)

    # MaxViT layer: MBConv -> window attention -> grid attention
    rel_idx = relative_position_index(PARTITION)
    h = mbconv(h, params["mbconv"])
    h = partition_attention_layer(h, params["attn_window"], "window", rel_idx)
    h = partition_attention_layer(h, params["attn_grid"], "grid", rel_idx)

    # classifier head (reference module: Linear(in_features, num_classes) + Sigmoid)
    return pl_pool_classifier(h, params["cls_w"], params["cls_b"])


# ----------------------------- deterministic params -----------------------------


def init_params(key):
    keys = iter(jax.random.split(key, 128))

    def w(shape, s=0.05):
        return s * jax.random.normal(next(keys), shape, jnp.float32)

    def bn_p(c):
        return dict(
            gamma=1.0 + 0.1 * jax.random.normal(next(keys), (c,), jnp.float32),
            beta=0.1 * jax.random.normal(next(keys), (c,), jnp.float32),
            mean=0.1 * jax.random.normal(next(keys), (c,), jnp.float32),
            var=1.0 + 0.1 * jnp.abs(jax.random.normal(next(keys), (c,), jnp.float32)),
        )

    def attn_p():
        C = BLOCK_CH
        d3 = 3 * NUM_HEADS * HEAD_DIM
        return dict(
            ln1_g=1.0 + 0.1 * jax.random.normal(next(keys), (C,), jnp.float32),
            ln1_b=0.1 * jax.random.normal(next(keys), (C,), jnp.float32),
            qkv_w=w((C, d3)), qkv_b=w((d3,)),
            merge_w=w((NUM_HEADS * HEAD_DIM, C)), merge_b=w((C,)),
            rel_table=w(((2 * PARTITION - 1) ** 2, NUM_HEADS)),
            ln2_g=1.0 + 0.1 * jax.random.normal(next(keys), (C,), jnp.float32),
            ln2_b=0.1 * jax.random.normal(next(keys), (C,), jnp.float32),
            mlp_w1=w((C, MLP_RATIO * C)), mlp_b1=w((MLP_RATIO * C,)),
            mlp_w2=w((MLP_RATIO * C, C)), mlp_b2=w((C,)),
        )

    return dict(
        stem1_w=w((3, 3, IN_CH, STEM_CH)),
        stem1_bn=bn_p(STEM_CH),
        stem2_w=w((3, 3, STEM_CH, STEM_CH)),
        stem2_b=w((STEM_CH,)),
        mbconv=dict(
            pre_bn=bn_p(STEM_CH),
            conv_a_w=w((STEM_CH, MID_CH)),
            bn_a=bn_p(MID_CH),
            conv_b_w=w((3, 3, MID_CH)),
            bn_b=bn_p(MID_CH),
            se_w1=w((MID_CH, SQZ_CH)), se_b1=w((SQZ_CH,)),
            se_w2=w((SQZ_CH, MID_CH)), se_b2=w((MID_CH,)),
            conv_c_w=w((MID_CH, BLOCK_CH)), conv_c_b=w((BLOCK_CH,)),
            proj_w=w((STEM_CH, BLOCK_CH)), proj_b=w((BLOCK_CH,)),
        ),
        attn_window=attn_p(),
        attn_grid=attn_p(),
        cls_w=w((BLOCK_CH, NUM_CLASSES)),
        cls_b=w((NUM_CLASSES,)),
    )


# ----------------------------- main ---------------------------------------------

if __name__ == "__main__":
    root = jax.random.PRNGKey(0)
    pkey, xkey = jax.random.split(root)
    params = init_params(pkey)

    # input: (batch=2, channels=3, H=32, W=32), NCHW like the PyTorch module
    x = jax.random.normal(xkey, (2, IN_CH, 32, 32), jnp.float32)

    out = jax.jit(maxvit_forward)(x, params)
    out = jax.block_until_ready(out)

    assert out.shape == (2, NUM_CLASSES), out.shape
    assert bool(jnp.all(jnp.isfinite(out)))
    assert bool(jnp.all((out >= 0.0) & (out <= 1.0)))   # sigmoid head
    print("KERNEL_OK")
</pallas_src>

<mosaic_0001>
module attributes {stable_mosaic.version = 11 : i64} {
  func.func @_conv3x3_kernel(%arg0: i32, %arg1: memref<1x16x16x12xbf16, #tpu.memory_space<vmem>>, %arg2: memref<27x8xbf16, #tpu.memory_space<vmem>>, %arg3: memref<1x8xf32, #tpu.memory_space<vmem>>, %arg4: memref<1x16x16x8xbf16, #tpu.memory_space<vmem>>) attributes {dimension_semantics = [#tpu.dimension_semantics<parallel>], iteration_bounds = array<i64: 2>, scalar_prefetch = 0 : i64, scratch_operands = 0 : i64, tpu.core_type = #tpu.core_type<tc>, window_params = [{transform_indices = @transform_0, window_bounds = array<i64: 1, 16, 16, 12>}, {pipeline_mode = #tpu.pipeline_mode<synchronous>, transform_indices = @transform_1, window_bounds = array<i64: 27, 8>}, {pipeline_mode = #tpu.pipeline_mode<synchronous>, transform_indices = @transform_2, window_bounds = array<i64: 1, 8>}, {transform_indices = @transform_3, window_bounds = array<i64: 1, 16, 16, 8>}]} {
    %c0 = arith.constant 0 : index
    %c0_0 = arith.constant 0 : index
    %c0_1 = arith.constant 0 : index
    %c0_2 = arith.constant 0 : index
    %0 = vector.load %arg1[%c0, %c0_0, %c0_1, %c0_2] : memref<1x16x16x12xbf16, #tpu.memory_space<vmem>>, vector<1x16x16x12xbf16>
    %1 = arith.extf %0 : vector<1x16x16x12xbf16> to vector<1x16x16x12xf32>
    %cst = arith.constant 0.000000e+00 : f32
    %2 = vector.broadcast %cst : f32 to vector<1x16x1x12xf32>
    %3 = tpu.concatenate %2, %1 in 2 : vector<1x16x1x12xf32>, vector<1x16x16x12xf32> -> vector<1x16x17x12xf32>
    %cst_3 = arith.constant 0.000000e+00 : f32
    %4 = vector.broadcast %cst_3 : f32 to vector<1x1x17x12xf32>
    %5 = tpu.concatenate %4, %3 in 1 : vector<1x1x17x12xf32>, vector<1x16x17x12xf32> -> vector<1x17x17x12xf32>
    %6 = vector.extract_strided_slice %5 {offsets = [0, 0, 0, 9], sizes = [1, 16, 16, 3], strides = [1, 1, 1, 1]} : vector<1x17x17x12xf32> to vector<1x16x16x3xf32>
    %7 = vector.shape_cast %6 : vector<1x16x16x3xf32> to vector<256x3xf32>
    %8 = vector.extract_strided_slice %5 {offsets = [0, 0, 1, 6], sizes = [1, 16, 16, 3], strides = [1, 1, 1, 1]} : vector<1x17x17x12xf32> to vector<1x16x16x3xf32>
    %9 = vector.shape_cast %8 : vector<1x16x16x3xf32> to vector<256x3xf32>
    %10 = vector.extract_strided_slice %5 {offsets = [0, 0, 1, 9], sizes = [1, 16, 16, 3], strides = [1, 1, 1, 1]} : vector<1x17x17x12xf32> to vector<1x16x16x3xf32>
    %11 = vector.shape_cast %10 : vector<1x16x16x3xf32> to vector<256x3xf32>
    %12 = vector.extract_strided_slice %5 {offsets = [0, 1, 0, 3], sizes = [1, 16, 16, 3], strides = [1, 1, 1, 1]} : vector<1x17x17x12xf32> to vector<1x16x16x3xf32>
    %13 = vector.shape_cast %12 : vector<1x16x16x3xf32> to vector<256x3xf32>
    %14 = vector.extract_strided_slice %5 {offsets = [0, 1, 1, 0], sizes = [1, 16, 16, 3], strides = [1, 1, 1, 1]} : vector<1x17x17x12xf32> to vector<1x16x16x3xf32>
    %15 = vector.shape_cast %14 : vector<1x16x16x3xf32> to vector<256x3xf32>
    %16 = vector.extract_strided_slice %5 {offsets = [0, 1, 1, 3], sizes = [1, 16, 16, 3], strides = [1, 1, 1, 1]} : vector<1x17x17x12xf32> to vector<1x16x16x3xf32>
    %17 = vector.shape_cast %16 : vector<1x16x16x3xf32> to vector<256x3xf32>
    %18 = vector.extract_strided_slice %5 {offsets = [0, 1, 0, 9], sizes = [1, 16, 16, 3], strides = [1, 1, 1, 1]} : vector<1x17x17x12xf32> to vector<1x16x16x3xf32>
    %19 = vector.shape_cast %18 : vector<1x16x16x3xf32> to vector<256x3xf32>
    %20 = vector.extract_strided_slice %5 {offsets = [0, 1, 1, 6], sizes = [1, 16, 16, 3], strides = [1, 1, 1, 1]} : vector<1x17x17x12xf32> to vector<1x16x16x3xf32>
    %21 = vector.shape_cast %20 : vector<1x16x16x3xf32> to vector<256x3xf32>
    %22 = vector.extract_strided_slice %5 {offsets = [0, 1, 1, 9], sizes = [1, 16, 16, 3], strides = [1, 1, 1, 1]} : vector<1x17x17x12xf32> to vector<1x16x16x3xf32>
    %23 = vector.shape_cast %22 : vector<1x16x16x3xf32> to vector<256x3xf32>
    %24 = tpu.concatenate %7, %9, %11, %13, %15, %17, %19, %21, %23 in 1 : vector<256x3xf32>, vector<256x3xf32>, vector<256x3xf32>, vector<256x3xf32>, vector<256x3xf32>, vector<256x3xf32>, vector<256x3xf32>, vector<256x3xf32>, vector<256x3xf32> -> vector<256x27xf32>
    %25 = arith.truncf %24 : vector<256x27xf32> to vector<256x27xbf16>
    %c0_4 = arith.constant 0 : index
    %c0_5 = arith.constant 0 : index
    %26 = vector.load %arg2[%c0_4, %c0_5] : memref<27x8xbf16, #tpu.memory_space<vmem>>, vector<27x8xbf16>
    %cst_6 = arith.constant dense<0.000000e+00> : vector<256x8xf32>
    %27 = tpu.matmul %25, %26, %cst_6 {dimension_numbers = #tpu.dot_dimension_numbers<[1], [0], [0], [1], [0, 0, 1, 1], [], []>} : vector<256x27xbf16>, vector<27x8xbf16>, vector<256x8xf32> -> vector<256x8xf32>
    %c0_7 = arith.constant 0 : index
    %c0_8 = arith.constant 0 : index
    %28 = vector.load %arg3[%c0_7, %c0_8] : memref<1x8xf32, #tpu.memory_space<vmem>>, vector<1x8xf32>
    %29 = vector.broadcast %28 : vector<1x8xf32> to vector<256x8xf32>
    %30 = arith.addf %27, %29 : vector<256x8xf32>
    %cst_9 = arith.constant 5.000000e-01 : f32
    %31 = vector.broadcast %cst_9 : f32 to vector<256x8xf32>
    %32 = arith.mulf %31, %30 : vector<256x8xf32>
    %cst_10 = arith.constant 4.471500e-02 : f32
    %33 = vector.broadcast %cst_10 : f32 to vector<256x8xf32>
    %34 = arith.mulf %33, %30 : vector<256x8xf32>
    %35 = arith.mulf %34, %30 : vector<256x8xf32>
    %36 = arith.mulf %35, %30 : vector<256x8xf32>
    %37 = arith.addf %30, %36 : vector<256x8xf32>
    %cst_11 = arith.constant 0.797884583 : f32
    %38 = vector.broadcast %cst_11 : f32 to vector<256x8xf32>
    %39 = arith.mulf %38, %37 : vector<256x8xf32>
    %40 = math.tanh %39 : vector<256x8xf32>
    %cst_12 = arith.constant 1.000000e+00 : f32
    %41 = vector.broadcast %cst_12 : f32 to vector<256x8xf32>
    %42 = arith.addf %41, %40 : vector<256x8xf32>
    %43 = arith.mulf %32, %42 : vector<256x8xf32>
    %44 = vector.shape_cast %43 : vector<256x8xf32> to vector<1x16x16x8xf32>
    %45 = arith.truncf %44 : vector<1x16x16x8xf32> to vector<1x16x16x8xbf16>
    %c0_13 = arith.constant 0 : index
    %c0_14 = arith.constant 0 : index
    %c0_15 = arith.constant 0 : index
    %c0_16 = arith.constant 0 : index
    %46 = vector.load %arg4[%c0_13, %c0_14, %c0_15, %c0_16] : memref<1x16x16x8xbf16, #tpu.memory_space<vmem>>, vector<1x16x16x8xbf16>
    tpu.vector_store %arg4[%c0_13, %c0_14, %c0_15, %c0_16], %45 {strides = array<i32>} : memref<1x16x16x8xbf16, #tpu.memory_space<vmem>>, vector<1x16x16x8xbf16>,
    return
  }
  func.func @transform_0(%arg0: i32) -> (i32, i32, i32, i32) {
    %c0_i32 = arith.constant 0 : i32
    %c0_i32_0 = arith.constant 0 : i32
    %c0_i32_1 = arith.constant 0 : i32
    %c0_i32_2 = arith.constant 0 : i32
    return %arg0, %c0_i32, %c0_i32_0, %c0_i32_1 : i32, i32, i32, i32
  }
  func.func @transform_1(%arg0: i32) -> (i32, i32) {
    %c0_i32 = arith.constant 0 : i32
    %c0_i32_0 = arith.constant 0 : i32
    %c0_i32_1 = arith.constant 0 : i32
    return %c0_i32, %c0_i32_0 : i32, i32
  }
  func.func @transform_2(%arg0: i32) -> (i32, i32) {
    %c0_i32 = arith.constant 0 : i32
    %c0_i32_0 = arith.constant 0 : i32
    %c0_i32_1 = arith.constant 0 : i32
    return %c0_i32, %c0_i32_0 : i32, i32
  }
  func.func @transform_3(%arg0: i32) -> (i32, i32, i32, i32) {
    %c0_i32 = arith.constant 0 : i32
    %c0_i32_0 = arith.constant 0 : i32
    %c0_i32_1 = arith.constant 0 : i32
    %c0_i32_2 = arith.constant 0 : i32
    return %arg0, %c0_i32, %c0_i32_0, %c0_i32_1 : i32, i32, i32, i32
  }
}

module attributes {stable_mosaic.version = 11 : i64} {
  func.func @_conv3x3_kernel(%arg0: i32, %arg1: memref<1x16x16x8xbf16, #tpu.memory_space<vmem>>, %arg2: memref<72x8xbf16, #tpu.memory_space<vmem>>, %arg3: memref<1x8xf32, #tpu.memory_space<vmem>>, %arg4: memref<1x16x16x8xbf16, #tpu.memory_space<vmem>>) attributes {dimension_semantics = [#tpu.dimension_semantics<parallel>], iteration_bounds = array<i64: 2>, scalar_prefetch = 0 : i64, scratch_operands = 0 : i64, tpu.core_type = #tpu.core_type<tc>, window_params = [{transform_indices = @transform_0, window_bounds = array<i64: 1, 16, 16, 8>}, {pipeline_mode = #tpu.pipeline_mode<synchronous>, transform_indices = @transform_1, window_bounds = array<i64: 72, 8>}, {pipeline_mode = #tpu.pipeline_mode<synchronous>, transform_indices = @transform_2, window_bounds = array<i64: 1, 8>}, {transform_indices = @transform_3, window_bounds = array<i64: 1, 16, 16, 8>}]} {
    %c0 = arith.constant 0 : index
    %c0_0 = arith.constant 0 : index
    %c0_1 = arith.constant 0 : index
    %c0_2 = arith.constant 0 : index
    %0 = vector.load %arg1[%c0, %c0_0, %c0_1, %c0_2] : memref<1x16x16x8xbf16, #tpu.memory_space<vmem>>, vector<1x16x16x8xbf16>
    %1 = arith.extf %0 : vector<1x16x16x8xbf16> to vector<1x16x16x8xf32>
    %cst = arith.constant 0.000000e+00 : f32
    %2 = vector.broadcast %cst : f32 to vector<1x16x1x8xf32>
    %cst_3 = arith.constant 0.000000e+00 : f32
    %3 = vector.broadcast %cst_3 : f32 to vector<1x16x1x8xf32>
    %4 = tpu.concatenate %2, %1, %3 in 2 : vector<1x16x1x8xf32>, vector<1x16x16x8xf32>, vector<1x16x1x8xf32> -> vector<1x16x18x8xf32>
    %cst_4 = arith.constant 0.000000e+00 : f32
    %5 = vector.broadcast %cst_4 : f32 to vector<1x1x18x8xf32>
    %cst_5 = arith.constant 0.000000e+00 : f32
    %6 = vector.broadcast %cst_5 : f32 to vector<1x1x18x8xf32>
    %7 = tpu.concatenate %5, %4, %6 in 1 : vector<1x1x18x8xf32>, vector<1x16x18x8xf32>, vector<1x1x18x8xf32> -> vector<1x18x18x8xf32>
    %8 = vector.extract_strided_slice %7 {offsets = [0, 0, 0, 0], sizes = [1, 16, 16, 8], strides = [1, 1, 1, 1]} : vector<1x18x18x8xf32> to vector<1x16x16x8xf32>
    %9 = vector.shape_cast %8 : vector<1x16x16x8xf32> to vector<256x8xf32>
    %10 = vector.extract_strided_slice %7 {offsets = [0, 0, 1, 0], sizes = [1, 16, 16, 8], strides = [1, 1, 1, 1]} : vector<1x18x18x8xf32> to vector<1x16x16x8xf32>
    %11 = vector.shape_cast %10 : vector<1x16x16x8xf32> to vector<256x8xf32>
    %12 = vector.extract_strided_slice %7 {offsets = [0, 0, 2, 0], sizes = [1, 16, 16, 8], strides = [1, 1, 1, 1]} : vector<1x18x18x8xf32> to vector<1x16x16x8xf32>
    %13 = vector.shape_cast %12 : vector<1x16x16x8xf32> to vector<256x8xf32>
    %14 = vector.extract_strided_slice %7 {offsets = [0, 1, 0, 0], sizes = [1, 16, 16, 8], strides = [1, 1, 1, 1]} : vector<1x18x18x8xf32> to vector<1x16x16x8xf32>
    %15 = vector.shape_cast %14 : vector<1x16x16x8xf32> to vector<256x8xf32>
    %16 = vector.extract_strided_slice %7 {offsets = [0, 1, 1, 0], sizes = [1, 16, 16, 8], strides = [1, 1, 1, 1]} : vector<1x18x18x8xf32> to vector<1x16x16x8xf32>
    %17 = vector.shape_cast %16 : vector<1x16x16x8xf32> to vector<256x8xf32>
    %18 = vector.extract_strided_slice %7 {offsets = [0, 1, 2, 0], sizes = [1, 16, 16, 8], strides = [1, 1, 1, 1]} : vector<1x18x18x8xf32> to vector<1x16x16x8xf32>
    %19 = vector.shape_cast %18 : vector<1x16x16x8xf32> to vector<256x8xf32>
    %20 = vector.extract_strided_slice %7 {offsets = [0, 2, 0, 0], sizes = [1, 16, 16, 8], strides = [1, 1, 1, 1]} : vector<1x18x18x8xf32> to vector<1x16x16x8xf32>
    %21 = vector.shape_cast %20 : vector<1x16x16x8xf32> to vector<256x8xf32>
    %22 = vector.extract_strided_slice %7 {offsets = [0, 2, 1, 0], sizes = [1, 16, 16, 8], strides = [1, 1, 1, 1]} : vector<1x18x18x8xf32> to vector<1x16x16x8xf32>
    %23 = vector.shape_cast %22 : vector<1x16x16x8xf32> to vector<256x8xf32>
    %24 = vector.extract_strided_slice %7 {offsets = [0, 2, 2, 0], sizes = [1, 16, 16, 8], strides = [1, 1, 1, 1]} : vector<1x18x18x8xf32> to vector<1x16x16x8xf32>
    %25 = vector.shape_cast %24 : vector<1x16x16x8xf32> to vector<256x8xf32>
    %26 = tpu.concatenate %9, %11, %13, %15, %17, %19, %21, %23, %25 in 1 : vector<256x8xf32>, vector<256x8xf32>, vector<256x8xf32>, vector<256x8xf32>, vector<256x8xf32>, vector<256x8xf32>, vector<256x8xf32>, vector<256x8xf32>, vector<256x8xf32> -> vector<256x72xf32>
    %27 = arith.truncf %26 : vector<256x72xf32> to vector<256x72xbf16>
    %c0_6 = arith.constant 0 : index
    %c0_7 = arith.constant 0 : index
    %28 = vector.load %arg2[%c0_6, %c0_7] : memref<72x8xbf16, #tpu.memory_space<vmem>>, vector<72x8xbf16>
    %cst_8 = arith.constant dense<0.000000e+00> : vector<256x8xf32>
    %29 = tpu.matmul %27, %28, %cst_8 {dimension_numbers = #tpu.dot_dimension_numbers<[1], [0], [0], [1], [0, 0, 1, 1], [], []>} : vector<256x72xbf16>, vector<72x8xbf16>, vector<256x8xf32> -> vector<256x8xf32>
    %c0_9 = arith.constant 0 : index
    %c0_10 = arith.constant 0 : index
    %30 = vector.load %arg3[%c0_9, %c0_10] : memref<1x8xf32, #tpu.memory_space<vmem>>, vector<1x8xf32>
    %31 = vector.broadcast %30 : vector<1x8xf32> to vector<256x8xf32>
    %32 = arith.addf %29, %31 : vector<256x8xf32>
    %33 = vector.shape_cast %32 : vector<256x8xf32> to vector<1x16x16x8xf32>
    %34 = arith.truncf %33 : vector<1x16x16x8xf32> to vector<1x16x16x8xbf16>
    %c0_11 = arith.constant 0 : index
    %c0_12 = arith.constant 0 : index
    %c0_13 = arith.constant 0 : index
    %c0_14 = arith.constant 0 : index
    %35 = vector.load %arg4[%c0_11, %c0_12, %c0_13, %c0_14] : memref<1x16x16x8xbf16, #tpu.memory_space<vmem>>, vector<1x16x16x8xbf16>
    tpu.vector_store %arg4[%c0_11, %c0_12, %c0_13, %c0_14], %34 {strides = array<i32>} : memref<1x16x16x8xbf16, #tpu.memory_space<vmem>>, vector<1x16x16x8xbf16>,
    return
  }
  func.func @transform_0(%arg0: i32) -> (i32, i32, i32, i32) {
    %c0_i32 = arith.constant 0 : i32
    %c0_i32_0 = arith.constant 0 : i32
    %c0_i32_1 = arith.constant 0 : i32
    %c0_i32_2 = arith.constant 0 : i32
    return %arg0, %c0_i32, %c0_i32_0, %c0_i32_1 : i32, i32, i32, i32
  }
  func.func @transform_1(%arg0: i32) -> (i32, i32) {
    %c0_i32 = arith.constant 0 : i32
    %c0_i32_0 = arith.constant 0 : i32
    %c0_i32_1 = arith.constant 0 : i32
    return %c0_i32, %c0_i32_0 : i32, i32
  }
  func.func @transform_2(%arg0: i32) -> (i32, i32) {
    %c0_i32 = arith.constant 0 : i32
    %c0_i32_0 = arith.constant 0 : i32
    %c0_i32_1 = arith.constant 0 : i32
    return %c0_i32, %c0_i32_0 : i32, i32
  }
  func.func @transform_3(%arg0: i32) -> (i32, i32, i32, i32) {
    %c0_i32 = arith.constant 0 : i32
    %c0_i32_0 = arith.constant 0 : i32
    %c0_i32_1 = arith.constant 0 : i32
    %c0_i32_2 = arith.constant 0 : i32
    return %arg0, %c0_i32, %c0_i32_0, %c0_i32_1 : i32, i32, i32, i32
  }
}

module attributes {stable_mosaic.version = 11 : i64} {
  func.func @_linear_kernel(%arg0: i32, %arg1: memref<256x8xbf16, #tpu.memory_space<vmem>>, %arg2: memref<8x64xbf16, #tpu.memory_space<vmem>>, %arg3: memref<1x64xf32, #tpu.memory_space<vmem>>, %arg4: memref<256x64xbf16, #tpu.memory_space<vmem>>) attributes {dimension_semantics = [#tpu.dimension_semantics<parallel>], iteration_bounds = array<i64: 2>, scalar_prefetch = 0 : i64, scratch_operands = 0 : i64, tpu.core_type = #tpu.core_type<tc>, window_params = [{transform_indices = @transform_0, window_bounds = array<i64: 256, 8>}, {pipeline_mode = #tpu.pipeline_mode<synchronous>, transform_indices = @transform_1, window_bounds = array<i64: 8, 64>}, {pipeline_mode = #tpu.pipeline_mode<synchronous>, transform_indices = @transform_2, window_bounds = array<i64: 1, 64>}, {transform_indices = @transform_3, window_bounds = array<i64: 256, 64>}]} {
    %c0 = arith.constant 0 : index
    %c0_0 = arith.constant 0 : index
    %0 = vector.load %arg1[%c0, %c0_0] : memref<256x8xbf16, #tpu.memory_space<vmem>>, vector<256x8xbf16>
    %c0_1 = arith.constant 0 : index
    %c0_2 = arith.constant 0 : index
    %1 = vector.load %arg2[%c0_1, %c0_2] : memref<8x64xbf16, #tpu.memory_space<vmem>>, vector<8x64xbf16>
    %cst = arith.constant dense<0.000000e+00> : vector<256x64xf32>
    %2 = tpu.matmul %0, %1, %cst {dimension_numbers = #tpu.dot_dimension_numbers<[1], [0], [0], [1], [0, 0, 1, 1], [], []>} : vector<256x8xbf16>, vector<8x64xbf16>, vector<256x64xf32> -> vector<256x64xf32>
    %c0_3 = arith.constant 0 : index
    %c0_4 = arith.constant 0 : index
    %3 = vector.load %arg3[%c0_3, %c0_4] : memref<1x64xf32, #tpu.memory_space<vmem>>, vector<1x64xf32>
    %4 = vector.broadcast %3 : vector<1x64xf32> to vector<256x64xf32>
    %5 = arith.addf %2, %4 : vector<256x64xf32>
    %cst_5 = arith.constant 5.000000e-01 : f32
    %6 = vector.broadcast %cst_5 : f32 to vector<256x64xf32>
    %7 = arith.mulf %6, %5 : vector<256x64xf32>
    %cst_6 = arith.constant 4.471500e-02 : f32
    %8 = vector.broadcast %cst_6 : f32 to vector<256x64xf32>
    %9 = arith.mulf %8, %5 : vector<256x64xf32>
    %10 = arith.mulf %9, %5 : vector<256x64xf32>
    %11 = arith.mulf %10, %5 : vector<256x64xf32>
    %12 = arith.addf %5, %11 : vector<256x64xf32>
    %cst_7 = arith.constant 0.797884583 : f32
    %13 = vector.broadcast %cst_7 : f32 to vector<256x64xf32>
    %14 = arith.mulf %13, %12 : vector<256x64xf32>
    %15 = math.tanh %14 : vector<256x64xf32>
    %cst_8 = arith.constant 1.000000e+00 : f32
    %16 = vector.broadcast %cst_8 : f32 to vector<256x64xf32>
    %17 = arith.addf %16, %15 : vector<256x64xf32>
    %18 = arith.mulf %7, %17 : vector<256x64xf32>
    %19 = arith.truncf %18 : vector<256x64xf32> to vector<256x64xbf16>
    %c0_9 = arith.constant 0 : index
    %c0_10 = arith.constant 0 : index
    %20 = vector.load %arg4[%c0_9, %c0_10] : memref<256x64xbf16, #tpu.memory_space<vmem>>, vector<256x64xbf16>
    tpu.vector_store %arg4[%c0_9, %c0_10], %19 {strides = array<i32>} : memref<256x64xbf16, #tpu.memory_space<vmem>>, vector<256x64xbf16>,
    return
  }
  func.func @transform_0(%arg0: i32) -> (i32, i32) {
    %c0_i32 = arith.constant 0 : i32
    %c0_i32_0 = arith.constant 0 : i32
    return %arg0, %c0_i32 : i32, i32
  }
  func.func @transform_1(%arg0: i32) -> (i32, i32) {
    %c0_i32 = arith.constant 0 : i32
    %c0_i32_0 = arith.constant 0 : i32
    %c0_i32_1 = arith.constant 0 : i32
    return %c0_i32, %c0_i32_0 : i32, i32
  }
  func.func @transform_2(%arg0: i32) -> (i32, i32) {
    %c0_i32 = arith.constant 0 : i32
    %c0_i32_0 = arith.constant 0 : i32
    %c0_i32_1 = arith.constant 0 : i32
    return %c0_i32, %c0_i32_0 : i32, i32
  }
  func.func @transform_3(%arg0: i32) -> (i32, i32) {
    %c0_i32 = arith.constant 0 : i32
    %c0_i32_0 = arith.constant 0 : i32
    return %arg0, %c0_i32 : i32, i32
  }
}

module attributes {stable_mosaic.version = 11 : i64} {
  func.func @_dw3x3_kernel(%arg0: i32, %arg1: memref<1x8x8x256xbf16, #tpu.memory_space<vmem>>, %arg2: memref<9x64xf32, #tpu.memory_space<vmem>>, %arg3: memref<1x64xf32, #tpu.memory_space<vmem>>, %arg4: memref<1x8x8x64xbf16, #tpu.memory_space<vmem>>) attributes {dimension_semantics = [#tpu.dimension_semantics<parallel>], iteration_bounds = array<i64: 2>, scalar_prefetch = 0 : i64, scratch_operands = 0 : i64, tpu.core_type = #tpu.core_type<tc>, window_params = [{transform_indices = @transform_0, window_bounds = array<i64: 1, 8, 8, 256>}, {pipeline_mode = #tpu.pipeline_mode<synchronous>, transform_indices = @transform_1, window_bounds = array<i64: 9, 64>}, {pipeline_mode = #tpu.pipeline_mode<synchronous>, transform_indices = @transform_2, window_bounds = array<i64: 1, 64>}, {transform_indices = @transform_3, window_bounds = array<i64: 1, 8, 8, 64>}]} {
    %c0 = arith.constant 0 : index
    %c0_0 = arith.constant 0 : index
    %c0_1 = arith.constant 0 : index
    %c0_2 = arith.constant 0 : index
    %0 = vector.load %arg1[%c0, %c0_0, %c0_1, %c0_2] : memref<1x8x8x256xbf16, #tpu.memory_space<vmem>>, vector<1x8x8x256xbf16>
    %1 = arith.extf %0 : vector<1x8x8x256xbf16> to vector<1x8x8x256xf32>
    %cst = arith.constant 0.000000e+00 : f32
    %2 = vector.broadcast %cst : f32 to vector<1x8x1x256xf32>
    %3 = tpu.concatenate %2, %1 in 2 : vector<1x8x1x256xf32>, vector<1x8x8x256xf32> -> vector<1x8x9x256xf32>
    %cst_3 = arith.constant 0.000000e+00 : f32
    %4 = vector.broadcast %cst_3 : f32 to vector<1x1x9x256xf32>
    %5 = tpu.concatenate %4, %3 in 1 : vector<1x1x9x256xf32>, vector<1x8x9x256xf32> -> vector<1x9x9x256xf32>
    %c0_4 = arith.constant 0 : index
    %c0_5 = arith.constant 0 : index
    %6 = vector.load %arg2[%c0_4, %c0_5] : memref<9x64xf32, #tpu.memory_space<vmem>>, vector<9x64xf32>
    %cst_6 = arith.constant 0.000000e+00 : f32
    %7 = vector.broadcast %cst_6 : f32 to vector<1x8x8x64xf32>
    %8 = vector.extract_strided_slice %5 {offsets = [0, 0, 0, 192], sizes = [1, 8, 8, 64], strides = [1, 1, 1, 1]} : vector<1x9x9x256xf32> to vector<1x8x8x64xf32>
    %9 = vector.extract_strided_slice %6 {offsets = [0, 0], sizes = [1, 64], strides = [1, 1]} : vector<9x64xf32> to vector<1x64xf32>
    %10 = vector.shape_cast %9 : vector<1x64xf32> to vector<64xf32>
    %11 = vector.shape_cast %10 : vector<64xf32> to vector<1x1x1x64xf32>
    %12 = vector.broadcast %11 : vector<1x1x1x64xf32> to vector<1x8x8x64xf32>
    %13 = arith.mulf %8, %12 : vector<1x8x8x64xf32>
    %14 = arith.addf %7, %13 : vector<1x8x8x64xf32>
    %15 = vector.extract_strided_slice %5 {offsets = [0, 0, 1, 128], sizes = [1, 8, 8, 64], strides = [1, 1, 1, 1]} : vector<1x9x9x256xf32> to vector<1x8x8x64xf32>
    %16 = vector.extract_strided_slice %6 {offsets = [1, 0], sizes = [1, 64], strides = [1, 1]} : vector<9x64xf32> to vector<1x64xf32>
    %17 = vector.shape_cast %16 : vector<1x64xf32> to vector<64xf32>
    %18 = vector.shape_cast %17 : vector<64xf32> to vector<1x1x1x64xf32>
    %19 = vector.broadcast %18 : vector<1x1x1x64xf32> to vector<1x8x8x64xf32>
    %20 = arith.mulf %15, %19 : vector<1x8x8x64xf32>
    %21 = arith.addf %14, %20 : vector<1x8x8x64xf32>
    %22 = vector.extract_strided_slice %5 {offsets = [0, 0, 1, 192], sizes = [1, 8, 8, 64], strides = [1, 1, 1, 1]} : vector<1x9x9x256xf32> to vector<1x8x8x64xf32>
    %23 = vector.extract_strided_slice %6 {offsets = [2, 0], sizes = [1, 64], strides = [1, 1]} : vector<9x64xf32> to vector<1x64xf32>
    %24 = vector.shape_cast %23 : vector<1x64xf32> to vector<64xf32>
    %25 = vector.shape_cast %24 : vector<64xf32> to vector<1x1x1x64xf32>
    %26 = vector.broadcast %25 : vector<1x1x1x64xf32> to vector<1x8x8x64xf32>
    %27 = arith.mulf %22, %26 : vector<1x8x8x64xf32>
    %28 = arith.addf %21, %27 : vector<1x8x8x64xf32>
    %29 = vector.extract_strided_slice %5 {offsets = [0, 1, 0, 64], sizes = [1, 8, 8, 64], strides = [1, 1, 1, 1]} : vector<1x9x9x256xf32> to vector<1x8x8x64xf32>
    %30 = vector.extract_strided_slice %6 {offsets = [3, 0], sizes = [1, 64], strides = [1, 1]} : vector<9x64xf32> to vector<1x64xf32>
    %31 = vector.shape_cast %30 : vector<1x64xf32> to vector<64xf32>
    %32 = vector.shape_cast %31 : vector<64xf32> to vector<1x1x1x64xf32>
    %33 = vector.broadcast %32 : vector<1x1x1x64xf32> to vector<1x8x8x64xf32>
    %34 = arith.mulf %29, %33 : vector<1x8x8x64xf32>
    %35 = arith.addf %28, %34 : vector<1x8x8x64xf32>
    %36 = vector.extract_strided_slice %5 {offsets = [0, 1, 1, 0], sizes = [1, 8, 8, 64], strides = [1, 1, 1, 1]} : vector<1x9x9x256xf32> to vector<1x8x8x64xf32>
    %37 = vector.extract_strided_slice %6 {offsets = [4, 0], sizes = [1, 64], strides = [1, 1]} : vector<9x64xf32> to vector<1x64xf32>
    %38 = vector.shape_cast %37 : vector<1x64xf32> to vector<64xf32>
    %39 = vector.shape_cast %38 : vector<64xf32> to vector<1x1x1x64xf32>
    %40 = vector.broadcast %39 : vector<1x1x1x64xf32> to vector<1x8x8x64xf32>
    %41 = arith.mulf %36, %40 : vector<1x8x8x64xf32>
    %42 = arith.addf %35, %41 : vector<1x8x8x64xf32>
    %43 = vector.extract_strided_slice %5 {offsets = [0, 1, 1, 64], sizes = [1, 8, 8, 64], strides = [1, 1, 1, 1]} : vector<1x9x9x256xf32> to vector<1x8x8x64xf32>
    %44 = vector.extract_strided_slice %6 {offsets = [5, 0], sizes = [1, 64], strides = [1, 1]} : vector<9x64xf32> to vector<1x64xf32>
    %45 = vector.shape_cast %44 : vector<1x64xf32> to vector<64xf32>
    %46 = vector.shape_cast %45 : vector<64xf32> to vector<1x1x1x64xf32>
    %47 = vector.broadcast %46 : vector<1x1x1x64xf32> to vector<1x8x8x64xf32>
    %48 = arith.mulf %43, %47 : vector<1x8x8x64xf32>
    %49 = arith.addf %42, %48 : vector<1x8x8x64xf32>
    %50 = vector.extract_strided_slice %5 {offsets = [0, 1, 0, 192], sizes = [1, 8, 8, 64], strides = [1, 1, 1, 1]} : vector<1x9x9x256xf32> to vector<1x8x8x64xf32>
    %51 = vector.extract_strided_slice %6 {offsets = [6, 0], sizes = [1, 64], strides = [1, 1]} : vector<9x64xf32> to vector<1x64xf32>
    %52 = vector.shape_cast %51 : vector<1x64xf32> to vector<64xf32>
    %53 = vector.shape_cast %52 : vector<64xf32> to vector<1x1x1x64xf32>
    %54 = vector.broadcast %53 : vector<1x1x1x64xf32> to vector<1x8x8x64xf32>
    %55 = arith.mulf %50, %54 : vector<1x8x8x64xf32>
    %56 = arith.addf %49, %55 : vector<1x8x8x64xf32>
    %57 = vector.extract_strided_slice %5 {offsets = [0, 1, 1, 128], sizes = [1, 8, 8, 64], strides = [1, 1, 1, 1]} : vector<1x9x9x256xf32> to vector<1x8x8x64xf32>
    %58 = vector.extract_strided_slice %6 {offsets = [7, 0], sizes = [1, 64], strides = [1, 1]} : vector<9x64xf32> to vector<1x64xf32>
    %59 = vector.shape_cast %58 : vector<1x64xf32> to vector<64xf32>
    %60 = vector.shape_cast %59 : vector<64xf32> to vector<1x1x1x64xf32>
    %61 = vector.broadcast %60 : vector<1x1x1x64xf32> to vector<1x8x8x64xf32>
    %62 = arith.mulf %57, %61 : vector<1x8x8x64xf32>
    %63 = arith.addf %56, %62 : vector<1x8x8x64xf32>
    %64 = vector.extract_strided_slice %5 {offsets = [0, 1, 1, 192], sizes = [1, 8, 8, 64], strides = [1, 1, 1, 1]} : vector<1x9x9x256xf32> to vector<1x8x8x64xf32>
    %65 = vector.extract_strided_slice %6 {offsets = [8, 0], sizes = [1, 64], strides = [1, 1]} : vector<9x64xf32> to vector<1x64xf32>
    %66 = vector.shape_cast %65 : vector<1x64xf32> to vector<64xf32>
    %67 = vector.shape_cast %66 : vector<64xf32> to vector<1x1x1x64xf32>
    %68 = vector.broadcast %67 : vector<1x1x1x64xf32> to vector<1x8x8x64xf32>
    %69 = arith.mulf %64, %68 : vector<1x8x8x64xf32>
    %70 = arith.addf %63, %69 : vector<1x8x8x64xf32>
    %c0_7 = arith.constant 0 : index
    %c0_8 = arith.constant 0 : index
    %71 = vector.load %arg3[%c0_7, %c0_8] : memref<1x64xf32, #tpu.memory_space<vmem>>, vector<1x64xf32>
    %72 = vector.shape_cast %71 : vector<1x64xf32> to vector<1x1x1x64xf32>
    %73 = vector.broadcast %72 : vector<1x1x1x64xf32> to vector<1x8x8x64xf32>
    %74 = arith.addf %70, %73 : vector<1x8x8x64xf32>
    %cst_9 = arith.constant 5.000000e-01 : f32
    %75 = vector.broadcast %cst_9 : f32 to vector<1x8x8x64xf32>
    %76 = arith.mulf %75, %74 : vector<1x8x8x64xf32>
    %cst_10 = arith.constant 4.471500e-02 : f32
    %77 = vector.broadcast %cst_10 : f32 to vector<1x8x8x64xf32>
    %78 = arith.mulf %77, %74 : vector<1x8x8x64xf32>
    %79 = arith.mulf %78, %74 : vector<1x8x8x64xf32>
    %80 = arith.mulf %79, %74 : vector<1x8x8x64xf32>
    %81 = arith.addf %74, %80 : vector<1x8x8x64xf32>
    %cst_11 = arith.constant 0.797884583 : f32
    %82 = vector.broadcast %cst_11 : f32 to vector<1x8x8x64xf32>
    %83 = arith.mulf %82, %81 : vector<1x8x8x64xf32>
    %84 = math.tanh %83 : vector<1x8x8x64xf32>
    %cst_12 = arith.constant 1.000000e+00 : f32
    %85 = vector.broadcast %cst_12 : f32 to vector<1x8x8x64xf32>
    %86 = arith.addf %85, %84 : vector<1x8x8x64xf32>
    %87 = arith.mulf %76, %86 : vector<1x8x8x64xf32>
    %88 = arith.truncf %87 : vector<1x8x8x64xf32> to vector<1x8x8x64xbf16>
    %c0_13 = arith.constant 0 : index
    %c0_14 = arith.constant 0 : index
    %c0_15 = arith.constant 0 : index
    %c0_16 = arith.constant 0 : index
    %89 = vector.load %arg4[%c0_13, %c0_14, %c0_15, %c0_16] : memref<1x8x8x64xbf16, #tpu.memory_space<vmem>>, vector<1x8x8x64xbf16>
    tpu.vector_store %arg4[%c0_13, %c0_14, %c0_15, %c0_16], %88 {strides = array<i32>} : memref<1x8x8x64xbf16, #tpu.memory_space<vmem>>, vector<1x8x8x64xbf16>,
    return
  }
  func.func @transform_0(%arg0: i32) -> (i32, i32, i32, i32) {
    %c0_i32 = arith.constant 0 : i32
    %c0_i32_0 = arith.constant 0 : i32
    %c0_i32_1 = arith.constant 0 : i32
    %c0_i32_2 = arith.constant 0 : i32
    return %arg0, %c0_i32, %c0_i32_0, %c0_i32_1 : i32, i32, i32, i32
  }
  func.func @transform_1(%arg0: i32) -> (i32, i32) {
    %c0_i32 = arith.constant 0 : i32
    %c0_i32_0 = arith.constant 0 : i32
    %c0_i32_1 = arith.constant 0 : i32
    return %c0_i32, %c0_i32_0 : i32, i32
  }
  func.func @transform_2(%arg0: i32) -> (i32, i32) {
    %c0_i32 = arith.constant 0 : i32
    %c0_i32_0 = arith.constant 0 : i32
    %c0_i32_1 = arith.constant 0 : i32
    return %c0_i32, %c0_i32_0 : i32, i32
  }
  func.func @transform_3(%arg0: i32) -> (i32, i32, i32, i32) {
    %c0_i32 = arith.constant 0 : i32
    %c0_i32_0 = arith.constant 0 : i32
    %c0_i32_1 = arith.constant 0 : i32
    %c0_i32_2 = arith.constant 0 : i32
    return %arg0, %c0_i32, %c0_i32_0, %c0_i32_1 : i32, i32, i32, i32
  }
}

module attributes {stable_mosaic.version = 11 : i64} {
  func.func @_poolproj_kernel(%arg0: i32, %arg1: memref<1x8x8x32xbf16, #tpu.memory_space<vmem>>, %arg2: memref<8x16xbf16, #tpu.memory_space<vmem>>, %arg3: memref<1x16xf32, #tpu.memory_space<vmem>>, %arg4: memref<1x64x16xbf16, #tpu.memory_space<vmem>>) attributes {dimension_semantics = [#tpu.dimension_semantics<parallel>], iteration_bounds = array<i64: 2>, scalar_prefetch = 0 : i64, scratch_operands = 0 : i64, tpu.core_type = #tpu.core_type<tc>, window_params = [{transform_indices = @transform_0, window_bounds = array<i64: 1, 8, 8, 32>}, {pipeline_mode = #tpu.pipeline_mode<synchronous>, transform_indices = @transform_1, window_bounds = array<i64: 8, 16>}, {pipeline_mode = #tpu.pipeline_mode<synchronous>, transform_indices = @transform_2, window_bounds = array<i64: 1, 16>}, {transform_indices = @transform_3, window_bounds = array<i64: 1, 64, 16>}]} {
    %c0 = arith.constant 0 : index
    %c0_0 = arith.constant 0 : index
    %c0_1 = arith.constant 0 : index
    %c0_2 = arith.constant 0 : index
    %0 = vector.load %arg1[%c0, %c0_0, %c0_1, %c0_2] : memref<1x8x8x32xbf16, #tpu.memory_space<vmem>>, vector<1x8x8x32xbf16>
    %1 = arith.extf %0 : vector<1x8x8x32xbf16> to vector<1x8x8x32xf32>
    %cst = arith.constant 0.000000e+00 : f32
    %2 = vector.broadcast %cst : f32 to vector<1x8x1x32xf32>
    %3 = tpu.concatenate %2, %1 in 2 : vector<1x8x1x32xf32>, vector<1x8x8x32xf32> -> vector<1x8x9x32xf32>
    %cst_3 = arith.constant 0.000000e+00 : f32
    %4 = vector.broadcast %cst_3 : f32 to vector<1x1x9x32xf32>
    %5 = tpu.concatenate %4, %3 in 1 : vector<1x1x9x32xf32>, vector<1x8x9x32xf32> -> vector<1x9x9x32xf32>
    %cst_4 = arith.constant 0.000000e+00 : f32
    %6 = vector.broadcast %cst_4 : f32 to vector<64x8xf32>
    %7 = vector.extract_strided_slice %5 {offsets = [0, 0, 0, 24], sizes = [1, 8, 8, 8], strides = [1, 1, 1, 1]} : vector<1x9x9x32xf32> to vector<1x8x8x8xf32>
    %8 = vector.shape_cast %7 : vector<1x8x8x8xf32> to vector<64x8xf32>
    %9 = arith.addf %6, %8 : vector<64x8xf32>
    %10 = vector.extract_strided_slice %5 {offsets = [0, 0, 1, 16], sizes = [1, 8, 8, 8], strides = [1, 1, 1, 1]} : vector<1x9x9x32xf32> to vector<1x8x8x8xf32>
    %11 = vector.shape_cast %10 : vector<1x8x8x8xf32> to vector<64x8xf32>
    %12 = arith.addf %9, %11 : vector<64x8xf32>
    %13 = vector.extract_strided_slice %5 {offsets = [0, 0, 1, 24], sizes = [1, 8, 8, 8], strides = [1, 1, 1, 1]} : vector<1x9x9x32xf32> to vector<1x8x8x8xf32>
    %14 = vector.shape_cast %13 : vector<1x8x8x8xf32> to vector<64x8xf32>
    %15 = arith.addf %12, %14 : vector<64x8xf32>
    %16 = vector.extract_strided_slice %5 {offsets = [0, 1, 0, 8], sizes = [1, 8, 8, 8], strides = [1, 1, 1, 1]} : vector<1x9x9x32xf32> to vector<1x8x8x8xf32>
    %17 = vector.shape_cast %16 : vector<1x8x8x8xf32> to vector<64x8xf32>
    %18 = arith.addf %15, %17 : vector<64x8xf32>
    %19 = vector.extract_strided_slice %5 {offsets = [0, 1, 1, 0], sizes = [1, 8, 8, 8], strides = [1, 1, 1, 1]} : vector<1x9x9x32xf32> to vector<1x8x8x8xf32>
    %20 = vector.shape_cast %19 : vector<1x8x8x8xf32> to vector<64x8xf32>
    %21 = arith.addf %18, %20 : vector<64x8xf32>
    %22 = vector.extract_strided_slice %5 {offsets = [0, 1, 1, 8], sizes = [1, 8, 8, 8], strides = [1, 1, 1, 1]} : vector<1x9x9x32xf32> to vector<1x8x8x8xf32>
    %23 = vector.shape_cast %22 : vector<1x8x8x8xf32> to vector<64x8xf32>
    %24 = arith.addf %21, %23 : vector<64x8xf32>
    %25 = vector.extract_strided_slice %5 {offsets = [0, 1, 0, 24], sizes = [1, 8, 8, 8], strides = [1, 1, 1, 1]} : vector<1x9x9x32xf32> to vector<1x8x8x8xf32>
    %26 = vector.shape_cast %25 : vector<1x8x8x8xf32> to vector<64x8xf32>
    %27 = arith.addf %24, %26 : vector<64x8xf32>
    %28 = vector.extract_strided_slice %5 {offsets = [0, 1, 1, 16], sizes = [1, 8, 8, 8], strides = [1, 1, 1, 1]} : vector<1x9x9x32xf32> to vector<1x8x8x8xf32>
    %29 = vector.shape_cast %28 : vector<1x8x8x8xf32> to vector<64x8xf32>
    %30 = arith.addf %27, %29 : vector<64x8xf32>
    %31 = vector.extract_strided_slice %5 {offsets = [0, 1, 1, 24], sizes = [1, 8, 8, 8], strides = [1, 1, 1, 1]} : vector<1x9x9x32xf32> to vector<1x8x8x8xf32>
    %32 = vector.shape_cast %31 : vector<1x8x8x8xf32> to vector<64x8xf32>
    %33 = arith.addf %30, %32 : vector<64x8xf32>
    %cst_5 = arith.constant 0.111111112 : f32
    %34 = vector.broadcast %cst_5 : f32 to vector<64x8xf32>
    %35 = arith.mulf %33, %34 : vector<64x8xf32>
    %36 = arith.truncf %35 : vector<64x8xf32> to vector<64x8xbf16>
    %c0_6 = arith.constant 0 : index
    %c0_7 = arith.constant 0 : index
    %37 = vector.load %arg2[%c0_6, %c0_7] : memref<8x16xbf16, #tpu.memory_space<vmem>>, vector<8x16xbf16>
    %cst_8 = arith.constant dense<0.000000e+00> : vector<64x16xf32>
    %38 = tpu.matmul %36, %37, %cst_8 {dimension_numbers = #tpu.dot_dimension_numbers<[1], [0], [0], [1], [0, 0, 1, 1], [], []>} : vector<64x8xbf16>, vector<8x16xbf16>, vector<64x16xf32> -> vector<64x16xf32>
    %c0_9 = arith.constant 0 : index
    %c0_10 = arith.constant 0 : index
    %39 = vector.load %arg3[%c0_9, %c0_10] : memref<1x16xf32, #tpu.memory_space<vmem>>, vector<1x16xf32>
    %40 = vector.broadcast %39 : vector<1x16xf32> to vector<64x16xf32>
    %41 = arith.addf %38, %40 : vector<64x16xf32>
    %42 = vector.shape_cast %41 : vector<64x16xf32> to vector<1x64x16xf32>
    %43 = arith.truncf %42 : vector<1x64x16xf32> to vector<1x64x16xbf16>
    %c0_11 = arith.constant 0 : index
    %c0_12 = arith.constant 0 : index
    %c0_13 = arith.constant 0 : index
    %44 = vector.load %arg4[%c0_11, %c0_12, %c0_13] : memref<1x64x16xbf16, #tpu.memory_space<vmem>>, vector<1x64x16xbf16>
    tpu.vector_store %arg4[%c0_11, %c0_12, %c0_13], %43 {strides = array<i32>} : memref<1x64x16xbf16, #tpu.memory_space<vmem>>, vector<1x64x16xbf16>,
    return
  }
  func.func @transform_0(%arg0: i32) -> (i32, i32, i32, i32) {
    %c0_i32 = arith.constant 0 : i32
    %c0_i32_0 = arith.constant 0 : i32
    %c0_i32_1 = arith.constant 0 : i32
    %c0_i32_2 = arith.constant 0 : i32
    return %arg0, %c0_i32, %c0_i32_0, %c0_i32_1 : i32, i32, i32, i32
  }
  func.func @transform_1(%arg0: i32) -> (i32, i32) {
    %c0_i32 = arith.constant 0 : i32
    %c0_i32_0 = arith.constant 0 : i32
    %c0_i32_1 = arith.constant 0 : i32
    return %c0_i32, %c0_i32_0 : i32, i32
  }
  func.func @transform_2(%arg0: i32) -> (i32, i32) {
    %c0_i32 = arith.constant 0 : i32
    %c0_i32_0 = arith.constant 0 : i32
    %c0_i32_1 = arith.constant 0 : i32
    return %c0_i32, %c0_i32_0 : i32, i32
  }
  func.func @transform_3(%arg0: i32) -> (i32, i32, i32) {
    %c0_i32 = arith.constant 0 : i32
    %c0_i32_0 = arith.constant 0 : i32
    %c0_i32_1 = arith.constant 0 : i32
    return %arg0, %c0_i32, %c0_i32_0 : i32, i32, i32
  }
}

module attributes {stable_mosaic.version = 11 : i64} {
  func.func @_se_proj_kernel(%arg0: i32, %arg1: memref<1x64x64xbf16, #tpu.memory_space<vmem>>, %arg2: memref<64x4xbf16, #tpu.memory_space<vmem>>, %arg3: memref<1x4xf32, #tpu.memory_space<vmem>>, %arg4: memref<4x64xbf16, #tpu.memory_space<vmem>>, %arg5: memref<1x64xf32, #tpu.memory_space<vmem>>, %arg6: memref<64x16xbf16, #tpu.memory_space<vmem>>, %arg7: memref<1x16xf32, #tpu.memory_space<vmem>>, %arg8: memref<1x64x16xbf16, #tpu.memory_space<vmem>>, %arg9: memref<1x64x16xbf16, #tpu.memory_space<vmem>>) attributes {dimension_semantics = [#tpu.dimension_semantics<parallel>], iteration_bounds = array<i64: 2>, scalar_prefetch = 0 : i64, scratch_operands = 0 : i64, tpu.core_type = #tpu.core_type<tc>, window_params = [{transform_indices = @transform_0, window_bounds = array<i64: 1, 64, 64>}, {pipeline_mode = #tpu.pipeline_mode<synchronous>, transform_indices = @transform_1, window_bounds = array<i64: 64, 4>}, {pipeline_mode = #tpu.pipeline_mode<synchronous>, transform_indices = @transform_2, window_bounds = array<i64: 1, 4>}, {pipeline_mode = #tpu.pipeline_mode<synchronous>, transform_indices = @transform_3, window_bounds = array<i64: 4, 64>}, {pipeline_mode = #tpu.pipeline_mode<synchronous>, transform_indices = @transform_4, window_bounds = array<i64: 1, 64>}, {pipeline_mode = #tpu.pipeline_mode<synchronous>, transform_indices = @transform_5, window_bounds = array<i64: 64, 16>}, {pipeline_mode = #tpu.pipeline_mode<synchronous>, transform_indices = @transform_6, window_bounds = array<i64: 1, 16>}, {transform_indices = @transform_7, window_bounds = array<i64: 1, 64, 16>}, {transform_indices = @transform_8, window_bounds = array<i64: 1, 64, 16>}]} {
    %c0 = arith.constant 0 : index
    %c0_0 = arith.constant 0 : index
    %c0_1 = arith.constant 0 : index
    %0 = vector.load %arg1[%c0, %c0_0, %c0_1] : memref<1x64x64xbf16, #tpu.memory_space<vmem>>, vector<1x64x64xbf16>
    %1 = arith.extf %0 : vector<1x64x64xbf16> to vector<1x64x64xf32>
    %cst = arith.constant dense<0.000000e+00> : vector<1x64xf32>
    %2 = vector.multi_reduction <add>, %1, %cst [1] : vector<1x64x64xf32> to vector<1x64xf32>
    %cst_2 = arith.constant 6.400000e+01 : f32
    %3 = vector.broadcast %cst_2 : f32 to vector<1x64xf32>
    %4 = arith.divf %2, %3 : vector<1x64xf32>
    %5 = arith.truncf %4 : vector<1x64xf32> to vector<1x64xbf16>
    %c0_3 = arith.constant 0 : index
    %c0_4 = arith.constant 0 : index
    %6 = vector.load %arg2[%c0_3, %c0_4] : memref<64x4xbf16, #tpu.memory_space<vmem>>, vector<64x4xbf16>
    %cst_5 = arith.constant dense<0.000000e+00> : vector<1x4xf32>
    %7 = tpu.matmul %5, %6, %cst_5 {dimension_numbers = #tpu.dot_dimension_numbers<[1], [0], [0], [1], [0, 0, 1, 1], [], []>} : vector<1x64xbf16>, vector<64x4xbf16>, vector<1x4xf32> -> vector<1x4xf32>
    %c0_6 = arith.constant 0 : index
    %c0_7 = arith.constant 0 : index
    %8 = vector.load %arg3[%c0_6, %c0_7] : memref<1x4xf32, #tpu.memory_space<vmem>>, vector<1x4xf32>
    %9 = arith.addf %7, %8 : vector<1x4xf32>
    %10 = arith.negf %9 : vector<1x4xf32>
    %11 = math.exp %10 : vector<1x4xf32>
    %cst_8 = arith.constant 1.000000e+00 : f32
    %12 = vector.broadcast %cst_8 : f32 to vector<1x4xf32>
    %13 = arith.addf %12, %11 : vector<1x4xf32>
    %14 = arith.divf %12, %13 : vector<1x4xf32>
    %15 = arith.mulf %9, %14 : vector<1x4xf32>
    %16 = arith.truncf %15 : vector<1x4xf32> to vector<1x4xbf16>
    %c0_9 = arith.constant 0 : index
    %c0_10 = arith.constant 0 : index
    %17 = vector.load %arg4[%c0_9, %c0_10] : memref<4x64xbf16, #tpu.memory_space<vmem>>, vector<4x64xbf16>
    %cst_11 = arith.constant dense<0.000000e+00> : vector<1x64xf32>
    %18 = tpu.matmul %16, %17, %cst_11 {dimension_numbers = #tpu.dot_dimension_numbers<[1], [0], [0], [1], [0, 0, 1, 1], [], []>} : vector<1x4xbf16>, vector<4x64xbf16>, vector<1x64xf32> -> vector<1x64xf32>
    %c0_12 = arith.constant 0 : index
    %c0_13 = arith.constant 0 : index
    %19 = vector.load %arg5[%c0_12, %c0_13] : memref<1x64xf32, #tpu.memory_space<vmem>>, vector<1x64xf32>
    %20 = arith.addf %18, %19 : vector<1x64xf32>
    %21 = arith.negf %20 : vector<1x64xf32>
    %22 = math.exp %21 : vector<1x64xf32>
    %cst_14 = arith.constant 1.000000e+00 : f32
    %23 = vector.broadcast %cst_14 : f32 to vector<1x64xf32>
    %24 = arith.addf %23, %22 : vector<1x64xf32>
    %25 = arith.divf %23, %24 : vector<1x64xf32>
    %26 = vector.shape_cast %25 : vector<1x64xf32> to vector<1x1x64xf32>
    %27 = vector.broadcast %26 : vector<1x1x64xf32> to vector<1x64x64xf32>
    %28 = arith.mulf %1, %27 : vector<1x64x64xf32>
    %29 = vector.shape_cast %28 : vector<1x64x64xf32> to vector<64x64xf32>
    %30 = arith.truncf %29 : vector<64x64xf32> to vector<64x64xbf16>
    %c0_15 = arith.constant 0 : index
    %c0_16 = arith.constant 0 : index
    %31 = vector.load %arg6[%c0_15, %c0_16] : memref<64x16xbf16, #tpu.memory_space<vmem>>, vector<64x16xbf16>
    %cst_17 = arith.constant dense<0.000000e+00> : vector<64x16xf32>
    %32 = tpu.matmul %30, %31, %cst_17 {dimension_numbers = #tpu.dot_dimension_numbers<[1], [0], [0], [1], [0, 0, 1, 1], [], []>} : vector<64x64xbf16>, vector<64x16xbf16>, vector<64x16xf32> -> vector<64x16xf32>
    %c0_18 = arith.constant 0 : index
    %c0_19 = arith.constant 0 : index
    %33 = vector.load %arg7[%c0_18, %c0_19] : memref<1x16xf32, #tpu.memory_space<vmem>>, vector<1x16xf32>
    %34 = vector.broadcast %33 : vector<1x16xf32> to vector<64x16xf32>
    %35 = arith.addf %32, %34 : vector<64x16xf32>
    %c0_20 = arith.constant 0 : index
    %c0_21 = arith.constant 0 : index
    %c0_22 = arith.constant 0 : index
    %36 = vector.load %arg8[%c0_20, %c0_21, %c0_22] : memref<1x64x16xbf16, #tpu.memory_space<vmem>>, vector<1x64x16xbf16>
    %37 = arith.extf %36 : vector<1x64x16xbf16> to vector<1x64x16xf32>
    %38 = vector.shape_cast %37 : vector<1x64x16xf32> to vector<64x16xf32>
    %39 = arith.addf %35, %38 : vector<64x16xf32>
    %40 = vector.shape_cast %39 : vector<64x16xf32> to vector<1x64x16xf32>
    %41 = arith.truncf %40 : vector<1x64x16xf32> to vector<1x64x16xbf16>
    %c0_23 = arith.constant 0 : index
    %c0_24 = arith.constant 0 : index
    %c0_25 = arith.constant 0 : index
    %42 = vector.load %arg9[%c0_23, %c0_24, %c0_25] : memref<1x64x16xbf16, #tpu.memory_space<vmem>>, vector<1x64x16xbf16>
    tpu.vector_store %arg9[%c0_23, %c0_24, %c0_25], %41 {strides = array<i32>} : memref<1x64x16xbf16, #tpu.memory_space<vmem>>, vector<1x64x16xbf16>,
    return
  }
  func.func @transform_0(%arg0: i32) -> (i32, i32, i32) {
    %c0_i32 = arith.constant 0 : i32
    %c0_i32_0 = arith.constant 0 : i32
    %c0_i32_1 = arith.constant 0 : i32
    return %arg0, %c0_i32, %c0_i32_0 : i32, i32, i32
  }
  func.func @transform_1(%arg0: i32) -> (i32, i32) {
    %c0_i32 = arith.constant 0 : i32
    %c0_i32_0 = arith.constant 0 : i32
    %c0_i32_1 = arith.constant 0 : i32
    return %c0_i32, %c0_i32_0 : i32, i32
  }
  func.func @transform_2(%arg0: i32) -> (i32, i32) {
    %c0_i32 = arith.constant 0 : i32
    %c0_i32_0 = arith.constant 0 : i32
    %c0_i32_1 = arith.constant 0 : i32
    return %c0_i32, %c0_i32_0 : i32, i32
  }
  func.func @transform_3(%arg0: i32) -> (i32, i32) {
    %c0_i32 = arith.constant 0 : i32
    %c0_i32_0 = arith.constant 0 : i32
    %c0_i32_1 = arith.constant 0 : i32
    return %c0_i32, %c0_i32_0 : i32, i32
  }
  func.func @transform_4(%arg0: i32) -> (i32, i32) {
    %c0_i32 = arith.constant 0 : i32
    %c0_i32_0 = arith.constant 0 : i32
    %c0_i32_1 = arith.constant 0 : i32
    return %c0_i32, %c0_i32_0 : i32, i32
  }
  func.func @transform_5(%arg0: i32) -> (i32, i32) {
    %c0_i32 = arith.constant 0 : i32
    %c0_i32_0 = arith.constant 0 : i32
    %c0_i32_1 = arith.constant 0 : i32
    return %c0_i32, %c0_i32_0 : i32, i32
  }
  func.func @transform_6(%arg0: i32) -> (i32, i32) {
    %c0_i32 = arith.constant 0 : i32
    %c0_i32_0 = arith.constant 0 : i32
    %c0_i32_1 = arith.constant 0 : i32
    return %c0_i32, %c0_i32_0 : i32, i32
  }
  func.func @transform_7(%arg0: i32) -> (i32, i32, i32) {
    %c0_i32 = arith.constant 0 : i32
    %c0_i32_0 = arith.constant 0 : i32
    %c0_i32_1 = arith.constant 0 : i32
    return %arg0, %c0_i32, %c0_i32_0 : i32, i32, i32
  }
  func.func @transform_8(%arg0: i32) -> (i32, i32, i32) {
    %c0_i32 = arith.constant 0 : i32
    %c0_i32_0 = arith.constant 0 : i32
    %c0_i32_1 = arith.constant 0 : i32
    return %arg0, %c0_i32, %c0_i32_0 : i32, i32, i32
  }
}

module attributes {stable_mosaic.version = 11 : i64} {
  func.func @_attn_layer_kernel(%arg0: i32, %arg1: memref<4x16x16xbf16, #tpu.memory_space<vmem>>, %arg2: memref<1x16xf32, #tpu.memory_space<vmem>>, %arg3: memref<1x16xf32, #tpu.memory_space<vmem>>, %arg4: memref<16x48xbf16, #tpu.memory_space<vmem>>, %arg5: memref<1x48xf32, #tpu.memory_space<vmem>>, %arg6: memref<2x16x16xf32, #tpu.memory_space<vmem>>, %arg7: memref<16x16xbf16, #tpu.memory_space<vmem>>, %arg8: memref<1x16xf32, #tpu.memory_space<vmem>>, %arg9: memref<1x16xf32, #tpu.memory_space<vmem>>, %arg10: memref<1x16xf32, #tpu.memory_space<vmem>>, %arg11: memref<16x64xbf16, #tpu.memory_space<vmem>>, %arg12: memref<1x64xf32, #tpu.memory_space<vmem>>, %arg13: memref<64x16xbf16, #tpu.memory_space<vmem>>, %arg14: memref<1x16xf32, #tpu.memory_space<vmem>>, %arg15: memref<4x16x16xbf16, #tpu.memory_space<vmem>>) attributes {dimension_semantics = [#tpu.dimension_semantics<parallel>], iteration_bounds = array<i64: 2>, scalar_prefetch = 0 : i64, scratch_operands = 0 : i64, tpu.core_type = #tpu.core_type<tc>, window_params = [{transform_indices = @transform_0, window_bounds = array<i64: 4, 16, 16>}, {pipeline_mode = #tpu.pipeline_mode<synchronous>, transform_indices = @transform_1, window_bounds = array<i64: 1, 16>}, {pipeline_mode = #tpu.pipeline_mode<synchronous>, transform_indices = @transform_2, window_bounds = array<i64: 1, 16>}, {pipeline_mode = #tpu.pipeline_mode<synchronous>, transform_indices = @transform_3, window_bounds = array<i64: 16, 48>}, {pipeline_mode = #tpu.pipeline_mode<synchronous>, transform_indices = @transform_4, window_bounds = array<i64: 1, 48>}, {pipeline_mode = #tpu.pipeline_mode<synchronous>, transform_indices = @transform_5, window_bounds = array<i64: 2, 16, 16>}, {pipeline_mode = #tpu.pipeline_mode<synchronous>, transform_indices = @transform_6, window_bounds = array<i64: 16, 16>}, {pipeline_mode = #tpu.pipeline_mode<synchronous>, transform_indices = @transform_7, window_bounds = array<i64: 1, 16>}, {pipeline_mode = #tpu.pipeline_mode<synchronous>, transform_indices = @transform_8, window_bounds = array<i64: 1, 16>}, {pipeline_mode = #tpu.pipeline_mode<synchronous>, transform_indices = @transform_9, window_bounds = array<i64: 1, 16>}, {pipeline_mode = #tpu.pipeline_mode<synchronous>, transform_indices = @transform_10, window_bounds = array<i64: 16, 64>}, {pipeline_mode = #tpu.pipeline_mode<synchronous>, transform_indices = @transform_11, window_bounds = array<i64: 1, 64>}, {pipeline_mode = #tpu.pipeline_mode<synchronous>, transform_indices = @transform_12, window_bounds = array<i64: 64, 16>}, {pipeline_mode = #tpu.pipeline_mode<synchronous>, transform_indices = @transform_13, window_bounds = array<i64: 1, 16>}, {transform_indices = @transform_14, window_bounds = array<i64: 4, 16, 16>}]} {
    %c0 = arith.constant 0 : index
    %c0_0 = arith.constant 0 : index
    %c0_1 = arith.constant 0 : index
    %0 = vector.load %arg1[%c0, %c0_0, %c0_1] : memref<4x16x16xbf16, #tpu.memory_space<vmem>>, vector<4x16x16xbf16>
    %1 = arith.extf %0 : vector<4x16x16xbf16> to vector<4x16x16xf32>
    %2 = vector.shape_cast %1 : vector<4x16x16xf32> to vector<64x16xf32>
    %c0_2 = arith.constant 0 : index
    %c0_3 = arith.constant 0 : index
    %3 = vector.load %arg2[%c0_2, %c0_3] : memref<1x16xf32, #tpu.memory_space<vmem>>, vector<1x16xf32>
    %c0_4 = arith.constant 0 : index
    %c0_5 = arith.constant 0 : index
    %4 = vector.load %arg3[%c0_4, %c0_5] : memref<1x16xf32, #tpu.memory_space<vmem>>, vector<1x16xf32>
    %cst = arith.constant dense<0.000000e+00> : vector<64xf32>
    %5 = vector.multi_reduction <add>, %2, %cst [1] : vector<64x16xf32> to vector<64xf32>
    %6 = vector.shape_cast %5 : vector<64xf32> to vector<64x1xf32>
    %cst_6 = arith.constant 1.600000e+01 : f32
    %7 = vector.broadcast %cst_6 : f32 to vector<64x1xf32>
    %8 = arith.divf %6, %7 : vector<64x1xf32>
    %9 = vector.broadcast %8 : vector<64x1xf32> to vector<64x16xf32>
    %10 = arith.subf %2, %9 : vector<64x16xf32>
    %11 = arith.mulf %10, %10 : vector<64x16xf32>
    %cst_7 = arith.constant dense<0.000000e+00> : vector<64xf32>
    %12 = vector.multi_reduction <add>, %11, %cst_7 [1] : vector<64x16xf32> to vector<64xf32>
    %13 = vector.shape_cast %12 : vector<64xf32> to vector<64x1xf32>
    %cst_8 = arith.constant 1.600000e+01 : f32
    %14 = vector.broadcast %cst_8 : f32 to vector<64x1xf32>
    %15 = arith.divf %13, %14 : vector<64x1xf32>
    %16 = vector.broadcast %8 : vector<64x1xf32> to vector<64x16xf32>
    %17 = arith.subf %2, %16 : vector<64x16xf32>
    %cst_9 = arith.constant 9.99999974E-6 : f32
    %18 = vector.broadcast %cst_9 : f32 to vector<64x1xf32>
    %19 = arith.addf %15, %18 : vector<64x1xf32>
    %20 = math.rsqrt %19 : vector<64x1xf32>
    %21 = vector.broadcast %20 : vector<64x1xf32> to vector<64x16xf32>
    %22 = arith.mulf %17, %21 : vector<64x16xf32>
    %23 = vector.broadcast %3 : vector<1x16xf32> to vector<64x16xf32>
    %24 = arith.mulf %22, %23 : vector<64x16xf32>
    %25 = vector.broadcast %4 : vector<1x16xf32> to vector<64x16xf32>
    %26 = arith.addf %24, %25 : vector<64x16xf32>
    %27 = arith.truncf %26 : vector<64x16xf32> to vector<64x16xbf16>
    %c0_10 = arith.constant 0 : index
    %c0_11 = arith.constant 0 : index
    %28 = vector.load %arg4[%c0_10, %c0_11] : memref<16x48xbf16, #tpu.memory_space<vmem>>, vector<16x48xbf16>
    %cst_12 = arith.constant dense<0.000000e+00> : vector<64x48xf32>
    %29 = tpu.matmul %27, %28, %cst_12 {dimension_numbers = #tpu.dot_dimension_numbers<[1], [0], [0], [1], [0, 0, 1, 1], [], []>} : vector<64x16xbf16>, vector<16x48xbf16>, vector<64x48xf32> -> vector<64x48xf32>
    %c0_13 = arith.constant 0 : index
    %c0_14 = arith.constant 0 : index
    %30 = vector.load %arg5[%c0_13, %c0_14] : memref<1x48xf32, #tpu.memory_space<vmem>>, vector<1x48xf32>
    %31 = vector.broadcast %30 : vector<1x48xf32> to vector<64x48xf32>
    %32 = arith.addf %29, %31 : vector<64x48xf32>
    %c0_15 = arith.constant 0 : index
    %c0_16 = arith.constant 0 : index
    %c0_17 = arith.constant 0 : index
    %33 = vector.load %arg6[%c0_15, %c0_16, %c0_17] : memref<2x16x16xf32, #tpu.memory_space<vmem>>, vector<2x16x16xf32>
    %34 = vector.extract_strided_slice %32 {offsets = [0, 0], sizes = [64, 8], strides = [1, 1]} : vector<64x48xf32> to vector<64x8xf32>
    %35 = vector.shape_cast %34 : vector<64x8xf32> to vector<4x16x8xf32>
    %36 = vector.extract_strided_slice %32 {offsets = [0, 16], sizes = [64, 8], strides = [1, 1]} : vector<64x48xf32> to vector<64x8xf32>
    %37 = vector.shape_cast %36 : vector<64x8xf32> to vector<4x16x8xf32>
    %38 = vector.extract_strided_slice %32 {offsets = [0, 32], sizes = [64, 8], strides = [1, 1]} : vector<64x48xf32> to vector<64x8xf32>
    %39 = vector.shape_cast %38 : vector<64x8xf32> to vector<4x16x8xf32>
    "tpu.trace_start"() <{level = 10 : i32, message = "wpd,wqd->wpq"}> : () -> ()
    %cst_18 = arith.constant dense<0.000000e+00> : vector<4x16x16xf32>
    %40 = tpu.matmul %35, %37, %cst_18 {dimension_numbers = #tpu.dot_dimension_numbers<[2], [2], [1], [1], [0, 0, 0, 1, 1, 1], [0], [0]>} : vector<4x16x8xf32>, vector<4x16x8xf32>, vector<4x16x16xf32> -> vector<4x16x16xf32>
    "tpu.trace_stop"() : () -> ()
    %41 = vector.extract_strided_slice %33 {offsets = [0, 0, 0], sizes = [1, 16, 16], strides = [1, 1, 1]} : vector<2x16x16xf32> to vector<1x16x16xf32>
    %42 = vector.shape_cast %41 : vector<1x16x16xf32> to vector<16x16xf32>
    %43 = vector.shape_cast %42 : vector<16x16xf32> to vector<1x16x16xf32>
    %44 = vector.broadcast %43 : vector<1x16x16xf32> to vector<4x16x16xf32>
    %45 = arith.addf %40, %44 : vector<4x16x16xf32>
    %cst_19 = arith.constant dense<0xFF800000> : vector<4x16xf32>
    %46 = vector.multi_reduction <maximumf>, %45, %cst_19 [2] : vector<4x16x16xf32> to vector<4x16xf32>
    %47 = vector.shape_cast %46 : vector<4x16xf32> to vector<4x16x1xf32>
    %48 = vector.broadcast %47 : vector<4x16x1xf32> to vector<4x16x16xf32>
    %49 = arith.subf %45, %48 : vector<4x16x16xf32>
    %50 = math.exp %49 : vector<4x16x16xf32>
    %cst_20 = arith.constant dense<0.000000e+00> : vector<4x16xf32>
    %51 = vector.multi_reduction <add>, %50, %cst_20 [2] : vector<4x16x16xf32> to vector<4x16xf32>
    %52 = vector.shape_cast %51 : vector<4x16xf32> to vector<4x16x1xf32>
    %53 = tpu.reciprocal %52 {approx = true} : vector<4x16x1xf32> -> vector<4x16x1xf32>
    %54 = vector.broadcast %53 : vector<4x16x1xf32> to vector<4x16x16xf32>
    %55 = arith.mulf %50, %54 : vector<4x16x16xf32>
    "tpu.trace_start"() <{level = 10 : i32, message = "wpq,wqd->wpd"}> : () -> ()
    %cst_21 = arith.constant dense<0.000000e+00> : vector<4x16x8xf32>
    %56 = tpu.matmul %55, %39, %cst_21 {dimension_numbers = #tpu.dot_dimension_numbers<[2], [1], [1], [2], [0, 0, 0, 1, 1, 2], [0], [0]>} : vector<4x16x16xf32>, vector<4x16x8xf32>, vector<4x16x8xf32> -> vector<4x16x8xf32>
    "tpu.trace_stop"() : () -> ()
    %57 = vector.shape_cast %56 : vector<4x16x8xf32> to vector<64x8xf32>
    %58 = vector.extract_strided_slice %32 {offsets = [0, 8], sizes = [64, 8], strides = [1, 1]} : vector<64x48xf32> to vector<64x8xf32>
    %59 = vector.shape_cast %58 : vector<64x8xf32> to vector<4x16x8xf32>
    %60 = vector.extract_strided_slice %32 {offsets = [0, 24], sizes = [64, 8], strides = [1, 1]} : vector<64x48xf32> to vector<64x8xf32>
    %61 = vector.shape_cast %60 : vector<64x8xf32> to vector<4x16x8xf32>
    %62 = vector.extract_strided_slice %32 {offsets = [0, 40], sizes = [64, 8], strides = [1, 1]} : vector<64x48xf32> to vector<64x8xf32>
    %63 = vector.shape_cast %62 : vector<64x8xf32> to vector<4x16x8xf32>
    "tpu.trace_start"() <{level = 10 : i32, message = "wpd,wqd->wpq"}> : () -> ()
    %cst_22 = arith.constant dense<0.000000e+00> : vector<4x16x16xf32>
    %64 = tpu.matmul %59, %61, %cst_22 {dimension_numbers = #tpu.dot_dimension_numbers<[2], [2], [1], [1], [0, 0, 0, 1, 1, 1], [0], [0]>} : vector<4x16x8xf32>, vector<4x16x8xf32>, vector<4x16x16xf32> -> vector<4x16x16xf32>
    "tpu.trace_stop"() : () -> ()
    %65 = vector.extract_strided_slice %33 {offsets = [1, 0, 0], sizes = [1, 16, 16], strides = [1, 1, 1]} : vector<2x16x16xf32> to vector<1x16x16xf32>
    %66 = vector.shape_cast %65 : vector<1x16x16xf32> to vector<16x16xf32>
    %67 = vector.shape_cast %66 : vector<16x16xf32> to vector<1x16x16xf32>
    %68 = vector.broadcast %67 : vector<1x16x16xf32> to vector<4x16x16xf32>
    %69 = arith.addf %64, %68 : vector<4x16x16xf32>
    %cst_23 = arith.constant dense<0xFF800000> : vector<4x16xf32>
    %70 = vector.multi_reduction <maximumf>, %69, %cst_23 [2] : vector<4x16x16xf32> to vector<4x16xf32>
    %71 = vector.shape_cast %70 : vector<4x16xf32> to vector<4x16x1xf32>
    %72 = vector.broadcast %71 : vector<4x16x1xf32> to vector<4x16x16xf32>
    %73 = arith.subf %69, %72 : vector<4x16x16xf32>
    %74 = math.exp %73 : vector<4x16x16xf32>
    %cst_24 = arith.constant dense<0.000000e+00> : vector<4x16xf32>
    %75 = vector.multi_reduction <add>, %74, %cst_24 [2] : vector<4x16x16xf32> to vector<4x16xf32>
    %76 = vector.shape_cast %75 : vector<4x16xf32> to vector<4x16x1xf32>
    %77 = tpu.reciprocal %76 {approx = true} : vector<4x16x1xf32> -> vector<4x16x1xf32>
    %78 = vector.broadcast %77 : vector<4x16x1xf32> to vector<4x16x16xf32>
    %79 = arith.mulf %74, %78 : vector<4x16x16xf32>
    "tpu.trace_start"() <{level = 10 : i32, message = "wpq,wqd->wpd"}> : () -> ()
    %cst_25 = arith.constant dense<0.000000e+00> : vector<4x16x8xf32>
    %80 = tpu.matmul %79, %63, %cst_25 {dimension_numbers = #tpu.dot_dimension_numbers<[2], [1], [1], [2], [0, 0, 0, 1, 1, 2], [0], [0]>} : vector<4x16x16xf32>, vector<4x16x8xf32>, vector<4x16x8xf32> -> vector<4x16x8xf32>
    "tpu.trace_stop"() : () -> ()
    %81 = vector.shape_cast %80 : vector<4x16x8xf32> to vector<64x8xf32>
    %82 = tpu.concatenate %57, %81 in 1 : vector<64x8xf32>, vector<64x8xf32> -> vector<64x16xf32>
    %83 = arith.truncf %82 : vector<64x16xf32> to vector<64x16xbf16>
    %c0_26 = arith.constant 0 : index
    %c0_27 = arith.constant 0 : index
    %84 = vector.load %arg7[%c0_26, %c0_27] : memref<16x16xbf16, #tpu.memory_space<vmem>>, vector<16x16xbf16>
    %cst_28 = arith.constant dense<0.000000e+00> : vector<64x16xf32>
    %85 = tpu.matmul %83, %84, %cst_28 {dimension_numbers = #tpu.dot_dimension_numbers<[1], [0], [0], [1], [0, 0, 1, 1], [], []>} : vector<64x16xbf16>, vector<16x16xbf16>, vector<64x16xf32> -> vector<64x16xf32>
    %86 = arith.addf %2, %85 : vector<64x16xf32>
    %c0_29 = arith.constant 0 : index
    %c0_30 = arith.constant 0 : index
    %87 = vector.load %arg8[%c0_29, %c0_30] : memref<1x16xf32, #tpu.memory_space<vmem>>, vector<1x16xf32>
    %88 = vector.broadcast %87 : vector<1x16xf32> to vector<64x16xf32>
    %89 = arith.addf %86, %88 : vector<64x16xf32>
    %c0_31 = arith.constant 0 : index
    %c0_32 = arith.constant 0 : index
    %90 = vector.load %arg9[%c0_31, %c0_32] : memref<1x16xf32, #tpu.memory_space<vmem>>, vector<1x16xf32>
    %c0_33 = arith.constant 0 : index
    %c0_34 = arith.constant 0 : index
    %91 = vector.load %arg10[%c0_33, %c0_34] : memref<1x16xf32, #tpu.memory_space<vmem>>, vector<1x16xf32>
    %cst_35 = arith.constant dense<0.000000e+00> : vector<64xf32>
    %92 = vector.multi_reduction <add>, %89, %cst_35 [1] : vector<64x16xf32> to vector<64xf32>
    %93 = vector.shape_cast %92 : vector<64xf32> to vector<64x1xf32>
    %cst_36 = arith.constant 1.600000e+01 : f32
    %94 = vector.broadcast %cst_36 : f32 to vector<64x1xf32>
    %95 = arith.divf %93, %94 : vector<64x1xf32>
    %96 = vector.broadcast %95 : vector<64x1xf32> to vector<64x16xf32>
    %97 = arith.subf %89, %96 : vector<64x16xf32>
    %98 = arith.mulf %97, %97 : vector<64x16xf32>
    %cst_37 = arith.constant dense<0.000000e+00> : vector<64xf32>
    %99 = vector.multi_reduction <add>, %98, %cst_37 [1] : vector<64x16xf32> to vector<64xf32>
    %100 = vector.shape_cast %99 : vector<64xf32> to vector<64x1xf32>
    %cst_38 = arith.constant 1.600000e+01 : f32
    %101 = vector.broadcast %cst_38 : f32 to vector<64x1xf32>
    %102 = arith.divf %100, %101 : vector<64x1xf32>
    %103 = vector.broadcast %95 : vector<64x1xf32> to vector<64x16xf32>
    %104 = arith.subf %89, %103 : vector<64x16xf32>
    %cst_39 = arith.constant 9.99999974E-6 : f32
    %105 = vector.broadcast %cst_39 : f32 to vector<64x1xf32>
    %106 = arith.addf %102, %105 : vector<64x1xf32>
    %107 = math.rsqrt %106 : vector<64x1xf32>
    %108 = vector.broadcast %107 : vector<64x1xf32> to vector<64x16xf32>
    %109 = arith.mulf %104, %108 : vector<64x16xf32>
    %110 = vector.broadcast %90 : vector<1x16xf32> to vector<64x16xf32>
    %111 = arith.mulf %109, %110 : vector<64x16xf32>
    %112 = vector.broadcast %91 : vector<1x16xf32> to vector<64x16xf32>
    %113 = arith.addf %111, %112 : vector<64x16xf32>
    %114 = arith.truncf %113 : vector<64x16xf32> to vector<64x16xbf16>
    %c0_40 = arith.constant 0 : index
    %c0_41 = arith.constant 0 : index
    %115 = vector.load %arg11[%c0_40, %c0_41] : memref<16x64xbf16, #tpu.memory_space<vmem>>, vector<16x64xbf16>
    %cst_42 = arith.constant dense<0.000000e+00> : vector<64x64xf32>
    %116 = tpu.matmul %114, %115, %cst_42 {dimension_numbers = #tpu.dot_dimension_numbers<[1], [0], [0], [1], [0, 0, 1, 1], [], []>} : vector<64x16xbf16>, vector<16x64xbf16>, vector<64x64xf32> -> vector<64x64xf32>
    %c0_43 = arith.constant 0 : index
    %c0_44 = arith.constant 0 : index
    %117 = vector.load %arg12[%c0_43, %c0_44] : memref<1x64xf32, #tpu.memory_space<vmem>>, vector<1x64xf32>
    %118 = vector.broadcast %117 : vector<1x64xf32> to vector<64x64xf32>
    %119 = arith.addf %116, %118 : vector<64x64xf32>
    %cst_45 = arith.constant 5.000000e-01 : f32
    %120 = vector.broadcast %cst_45 : f32 to vector<64x64xf32>
    %121 = arith.mulf %120, %119 : vector<64x64xf32>
    %cst_46 = arith.constant 4.471500e-02 : f32
    %122 = vector.broadcast %cst_46 : f32 to vector<64x64xf32>
    %123 = arith.mulf %122, %119 : vector<64x64xf32>
    %124 = arith.mulf %123, %119 : vector<64x64xf32>
    %125 = arith.mulf %124, %119 : vector<64x64xf32>
    %126 = arith.addf %119, %125 : vector<64x64xf32>
    %cst_47 = arith.constant 0.797884583 : f32
    %127 = vector.broadcast %cst_47 : f32 to vector<64x64xf32>
    %128 = arith.mulf %127, %126 : vector<64x64xf32>
    %129 = math.tanh %128 : vector<64x64xf32>
    %cst_48 = arith.constant 1.000000e+00 : f32
    %130 = vector.broadcast %cst_48 : f32 to vector<64x64xf32>
    %131 = arith.addf %130, %129 : vector<64x64xf32>
    %132 = arith.mulf %121, %131 : vector<64x64xf32>
    %133 = arith.truncf %132 : vector<64x64xf32> to vector<64x64xbf16>
    %c0_49 = arith.constant 0 : index
    %c0_50 = arith.constant 0 : index
    %134 = vector.load %arg13[%c0_49, %c0_50] : memref<64x16xbf16, #tpu.memory_space<vmem>>, vector<64x16xbf16>
    %cst_51 = arith.constant dense<0.000000e+00> : vector<64x16xf32>
    %135 = tpu.matmul %133, %134, %cst_51 {dimension_numbers = #tpu.dot_dimension_numbers<[1], [0], [0], [1], [0, 0, 1, 1], [], []>} : vector<64x64xbf16>, vector<64x16xbf16>, vector<64x16xf32> -> vector<64x16xf32>
    %c0_52 = arith.constant 0 : index
    %c0_53 = arith.constant 0 : index
    %136 = vector.load %arg14[%c0_52, %c0_53] : memref<1x16xf32, #tpu.memory_space<vmem>>, vector<1x16xf32>
    %137 = vector.broadcast %136 : vector<1x16xf32> to vector<64x16xf32>
    %138 = arith.addf %135, %137 : vector<64x16xf32>
    %139 = arith.addf %89, %138 : vector<64x16xf32>
    %140 = vector.shape_cast %139 : vector<64x16xf32> to vector<4x16x16xf32>
    %141 = arith.truncf %140 : vector<4x16x16xf32> to vector<4x16x16xbf16>
    %c0_54 = arith.constant 0 : index
    %c0_55 = arith.constant 0 : index
    %c0_56 = arith.constant 0 : index
    %142 = vector.load %arg15[%c0_54, %c0_55, %c0_56] : memref<4x16x16xbf16, #tpu.memory_space<vmem>>, vector<4x16x16xbf16>
    tpu.vector_store %arg15[%c0_54, %c0_55, %c0_56], %141 {strides = array<i32>} : memref<4x16x16xbf16, #tpu.memory_space<vmem>>, vector<4x16x16xbf16>,
    return
  }
  func.func @transform_0(%arg0: i32) -> (i32, i32, i32) {
    %c0_i32 = arith.constant 0 : i32
    %c0_i32_0 = arith.constant 0 : i32
    %c0_i32_1 = arith.constant 0 : i32
    return %arg0, %c0_i32, %c0_i32_0 : i32, i32, i32
  }
  func.func @transform_1(%arg0: i32) -> (i32, i32) {
    %c0_i32 = arith.constant 0 : i32
    %c0_i32_0 = arith.constant 0 : i32
    %c0_i32_1 = arith.constant 0 : i32
    return %c0_i32, %c0_i32_0 : i32, i32
  }
  func.func @transform_2(%arg0: i32) -> (i32, i32) {
    %c0_i32 = arith.constant 0 : i32
    %c0_i32_0 = arith.constant 0 : i32
    %c0_i32_1 = arith.constant 0 : i32
    return %c0_i32, %c0_i32_0 : i32, i32
  }
  func.func @transform_3(%arg0: i32) -> (i32, i32) {
    %c0_i32 = arith.constant 0 : i32
    %c0_i32_0 = arith.constant 0 : i32
    %c0_i32_1 = arith.constant 0 : i32
    return %c0_i32, %c0_i32_0 : i32, i32
  }
  func.func @transform_4(%arg0: i32) -> (i32, i32) {
    %c0_i32 = arith.constant 0 : i32
    %c0_i32_0 = arith.constant 0 : i32
    %c0_i32_1 = arith.constant 0 : i32
    return %c0_i32, %c0_i32_0 : i32, i32
  }
  func.func @transform_5(%arg0: i32) -> (i32, i32, i32) {
    %c0_i32 = arith.constant 0 : i32
    %c0_i32_0 = arith.constant 0 : i32
    %c0_i32_1 = arith.constant 0 : i32
    %c0_i32_2 = arith.constant 0 : i32
    return %c0_i32, %c0_i32_0, %c0_i32_1 : i32, i32, i32
  }
  func.func @transform_6(%arg0: i32) -> (i32, i32) {
    %c0_i32 = arith.constant 0 : i32
    %c0_i32_0 = arith.constant 0 : i32
    %c0_i32_1 = arith.constant 0 : i32
    return %c0_i32, %c0_i32_0 : i32, i32
  }
  func.func @transform_7(%arg0: i32) -> (i32, i32) {
    %c0_i32 = arith.constant 0 : i32
    %c0_i32_0 = arith.constant 0 : i32
    %c0_i32_1 = arith.constant 0 : i32
    return %c0_i32, %c0_i32_0 : i32, i32
  }
  func.func @transform_8(%arg0: i32) -> (i32, i32) {
    %c0_i32 = arith.constant 0 : i32
    %c0_i32_0 = arith.constant 0 : i32
    %c0_i32_1 = arith.constant 0 : i32
    return %c0_i32, %c0_i32_0 : i32, i32
  }
  func.func @transform_9(%arg0: i32) -> (i32, i32) {
    %c0_i32 = arith.constant 0 : i32
    %c0_i32_0 = arith.constant 0 : i32
    %c0_i32_1 = arith.constant 0 : i32
    return %c0_i32, %c0_i32_0 : i32, i32
  }
  func.func @transform_10(%arg0: i32) -> (i32, i32) {
    %c0_i32 = arith.constant 0 : i32
    %c0_i32_0 = arith.constant 0 : i32
    %c0_i32_1 = arith.constant 0 : i32
    return %c0_i32, %c0_i32_0 : i32, i32
  }
  func.func @transform_11(%arg0: i32) -> (i32, i32) {
    %c0_i32 = arith.constant 0 : i32
    %c0_i32_0 = arith.constant 0 : i32
    %c0_i32_1 = arith.constant 0 : i32
    return %c0_i32, %c0_i32_0 : i32, i32
  }
  func.func @transform_12(%arg0: i32) -> (i32, i32) {
    %c0_i32 = arith.constant 0 : i32
    %c0_i32_0 = arith.constant 0 : i32
    %c0_i32_1 = arith.constant 0 : i32
    return %c0_i32, %c0_i32_0 : i32, i32
  }
  func.func @transform_13(%arg0: i32) -> (i32, i32) {
    %c0_i32 = arith.constant 0 : i32
    %c0_i32_0 = arith.constant 0 : i32
    %c0_i32_1 = arith.constant 0 : i32
    return %c0_i32, %c0_i32_0 : i32, i32
  }
  func.func @transform_14(%arg0: i32) -> (i32, i32, i32) {
    %c0_i32 = arith.constant 0 : i32
    %c0_i32_0 = arith.constant 0 : i32
    %c0_i32_1 = arith.constant 0 : i32
    return %arg0, %c0_i32, %c0_i32_0 : i32, i32, i32
  }
}

module attributes {stable_mosaic.version = 11 : i64} {
  func.func @_head_kernel(%arg0: i32, %arg1: memref<1x64x16xbf16, #tpu.memory_space<vmem>>, %arg2: memref<16x4xbf16, #tpu.memory_space<vmem>>, %arg3: memref<1x4xf32, #tpu.memory_space<vmem>>, %arg4: memref<1x1x4xf32, #tpu.memory_space<vmem>>) attributes {dimension_semantics = [#tpu.dimension_semantics<parallel>], iteration_bounds = array<i64: 2>, scalar_prefetch = 0 : i64, scratch_operands = 0 : i64, tpu.core_type = #tpu.core_type<tc>, window_params = [{transform_indices = @transform_0, window_bounds = array<i64: 1, 64, 16>}, {pipeline_mode = #tpu.pipeline_mode<synchronous>, transform_indices = @transform_1, window_bounds = array<i64: 16, 4>}, {pipeline_mode = #tpu.pipeline_mode<synchronous>, transform_indices = @transform_2, window_bounds = array<i64: 1, 4>}, {transform_indices = @transform_3, window_bounds = array<i64: 1, 1, 4>}]} {
    %c0 = arith.constant 0 : index
    %c0_0 = arith.constant 0 : index
    %c0_1 = arith.constant 0 : index
    %0 = vector.load %arg1[%c0, %c0_0, %c0_1] : memref<1x64x16xbf16, #tpu.memory_space<vmem>>, vector<1x64x16xbf16>
    %1 = arith.extf %0 : vector<1x64x16xbf16> to vector<1x64x16xf32>
    %cst = arith.constant dense<0.000000e+00> : vector<1x16xf32>
    %2 = vector.multi_reduction <add>, %1, %cst [1] : vector<1x64x16xf32> to vector<1x16xf32>
    %cst_2 = arith.constant 6.400000e+01 : f32
    %3 = vector.broadcast %cst_2 : f32 to vector<1x16xf32>
    %4 = arith.divf %2, %3 : vector<1x16xf32>
    %5 = arith.truncf %4 : vector<1x16xf32> to vector<1x16xbf16>
    %c0_3 = arith.constant 0 : index
    %c0_4 = arith.constant 0 : index
    %6 = vector.load %arg2[%c0_3, %c0_4] : memref<16x4xbf16, #tpu.memory_space<vmem>>, vector<16x4xbf16>
    %cst_5 = arith.constant dense<0.000000e+00> : vector<1x4xf32>
    %7 = tpu.matmul %5, %6, %cst_5 {dimension_numbers = #tpu.dot_dimension_numbers<[1], [0], [0], [1], [0, 0, 1, 1], [], []>} : vector<1x16xbf16>, vector<16x4xbf16>, vector<1x4xf32> -> vector<1x4xf32>
    %c0_6 = arith.constant 0 : index
    %c0_7 = arith.constant 0 : index
    %8 = vector.load %arg3[%c0_6, %c0_7] : memref<1x4xf32, #tpu.memory_space<vmem>>, vector<1x4xf32>
    %9 = arith.addf %7, %8 : vector<1x4xf32>
    %10 = arith.negf %9 : vector<1x4xf32>
    %11 = math.exp %10 : vector<1x4xf32>
    %cst_8 = arith.constant 1.000000e+00 : f32
    %12 = vector.broadcast %cst_8 : f32 to vector<1x4xf32>
    %13 = arith.addf %12, %11 : vector<1x4xf32>
    %14 = arith.divf %12, %13 : vector<1x4xf32>
    %15 = vector.shape_cast %14 : vector<1x4xf32> to vector<1x1x4xf32>
    %c0_9 = arith.constant 0 : index
    %c0_10 = arith.constant 0 : index
    %c0_11 = arith.constant 0 : index
    %16 = vector.load %arg4[%c0_9, %c0_10, %c0_11] : memref<1x1x4xf32, #tpu.memory_space<vmem>>, vector<1x1x4xf32>
    tpu.vector_store %arg4[%c0_9, %c0_10, %c0_11], %15 {strides = array<i32>} : memref<1x1x4xf32, #tpu.memory_space<vmem>>, vector<1x1x4xf32>,
    return
  }
  func.func @transform_0(%arg0: i32) -> (i32, i32, i32) {
    %c0_i32 = arith.constant 0 : i32
    %c0_i32_0 = arith.constant 0 : i32
    %c0_i32_1 = arith.constant 0 : i32
    return %arg0, %c0_i32, %c0_i32_0 : i32, i32, i32
  }
  func.func @transform_1(%arg0: i32) -> (i32, i32) {
    %c0_i32 = arith.constant 0 : i32
    %c0_i32_0 = arith.constant 0 : i32
    %c0_i32_1 = arith.constant 0 : i32
    return %c0_i32, %c0_i32_0 : i32, i32
  }
  func.func @transform_2(%arg0: i32) -> (i32, i32) {
    %c0_i32 = arith.constant 0 : i32
    %c0_i32_0 = arith.constant 0 : i32
    %c0_i32_1 = arith.constant 0 : i32
    return %c0_i32, %c0_i32_0 : i32, i32
  }
  func.func @transform_3(%arg0: i32) -> (i32, i32, i32) {
    %c0_i32 = arith.constant 0 : i32
    %c0_i32_0 = arith.constant 0 : i32
    %c0_i32_1 = arith.constant 0 : i32
    return %arg0, %c0_i32, %c0_i32_0 : i32, i32, i32
  }
}

</mosaic_0001>

<llo_original>
// kernel: maxvit_forward.9
$region0: #{maxvit_forward.9}
  #allocation0 [shape = 'u32[]', space=smem, size = 0x4, offset = 0x4, fixed_abs, tag = 'smem constant byte address 0x4 - core index']
  #allocation1 [shape = 'u32[144,128]{1,0:T(1,128)}', space=vmem, size = 0x12000, scoped, tag = 'internal scratch']
  %s0 = inlined_call_operand.vmem [shape: bf16[2,16,16,12], index: 0, kind: input, shape index: {}]
  %s1 = inlined_call_operand.vmem [shape: bf16[27,8], index: 1, kind: input, shape index: {}]
  %s2 = inlined_call_operand.vmem [shape: f32[1,8], index: 2, kind: input, shape index: {}]
  %s3 = inlined_call_operand.vmem [shape: bf16[2,16,16,8], index: 3, kind: output, shape index: {}]
  %s4 = sld [smem:[#allocation0]]
  $region45: #{maxvit_forward.9} parent=0
    _
  %s6 = ssub.s32 1, %s4
  %s7 = scalar_select 0, %s6, %s4
  loop: start=0, step=1, limit=4
  $region2: #{maxvit_forward.9} parent=0 // loop_pre_header
    _
  $region3: #{maxvit_forward.9} parent=0 // loop_header
    %s9 = sphi 0, %s13
    %p10 = scmp.ge.s32.totalorder %s9, 4
    %s19 = sphi 0, %s21
    %s22 = sphi 0, %s19
    %s23 = sphi 0, %s22
    %s39 = sphi 0, %s23
    %s43 = sphi 0, %s43
    %s45 = sphi 0, %s43
    %s46 = sphi 0, %s45
    %s60 = sphi 0, %s46
    %s64 = sphi 0, %s64
    %s66 = sphi 0, %s64
    %s67 = sphi 0, %s66
    %s81 = sphi 0, %s67
    %s87 = sphi 0, %s89
    %s90 = sphi 0, %s87
    %s91 = sphi 0, %s90
    %s107 = sphi 0, %s91
  $region4: #{maxvit_forward.9} parent=0 // loop_header_branch
    %12 = sbr.rel (%p10) target = $region8
  $region5: #{maxvit_forward.9} parent=0 // loop_body
    %s14 = ssub.s32 %s9, 1
    %s15 = ssub.s32 %s9, 2
    %s16 = sadd.s32 %s9, 1
    %s17 = ssub.s32 %s9, %s16
    %p18 = scmp.eq.s32.totalorder %s17, 0
    %s20 = sadd.s32 %s19, 1
    %s21 = scalar_select %p18, %s19, %s20
    %p24 = pneg %p18
    %p25 = scmp.eq.s32.totalorder %s9, 1
    %p26 = por %p24, %p25
    %p27 = scmp.ne.s32.totalorder %s19, %s22
    %p28 = scmp.eq.s32.totalorder %s9, 0
    %p29 = por %p27, %p28
    %p30 = scmp.ne.s32.totalorder %s19, %s22
    %p31 = scmp.eq.s32.totalorder %s14, 1
    %p32 = por %p30, %p31
    %p33 = scmp.ne.s32.totalorder %s22, %s23
    %p34 = scmp.eq.s32.totalorder %s14, 0
    %p35 = por %p33, %p34
    %p36 = scmp.ne.s32.totalorder %s22, %s23
    %p37 = scmp.eq.s32.totalorder %s15, 1
    %p38 = por %p36, %p37
    %p40 = scmp.ne.s32.totalorder %s23, %s39
    %p41 = scmp.eq.s32.totalorder %s15, 0
    %p42 = por %p40, %p41
    %s44 = sadd.s32 %s43, 1
    %p47 = scmp.eq.s32.totalorder %s9, 1
    %p48 = scmp.ne.s32.totalorder %s43, %s45
    %p49 = scmp.eq.s32.totalorder %s9, 0
    %p50 = por %p48, %p49
    %p51 = scmp.ne.s32.totalorder %s43, %s45
    %p52 = scmp.eq.s32.totalorder %s14, 1
    %p53 = por %p51, %p52
    %p54 = scmp.ne.s32.totalorder %s45, %s46
    %p55 = scmp.eq.s32.totalorder %s14, 0
    %p56 = por %p54, %p55
    %p57 = scmp.ne.s32.totalorder %s45, %s46
    %p58 = scmp.eq.s32.totalorder %s15, 1
    %p59 = por %p57, %p58
    %p61 = scmp.ne.s32.totalorder %s46, %s60
    %p62 = scmp.eq.s32.totalorder %s15, 0
    %p63 = por %p61, %p62
    %s65 = sadd.s32 %s64, 1
    %p68 = scmp.eq.s32.totalorder %s9, 1
    %p69 = scmp.ne.s32.totalorder %s64, %s66
    %p70 = scmp.eq.s32.totalorder %s9, 0
    %p71 = por %p69, %p70
    %p72 = scmp.ne.s32.totalorder %s64, %s66
    %p73 = scmp.eq.s32.totalorder %s14, 1
    %p74 = por %p72, %p73
    %p75 = scmp.ne.s32.totalorder %s66, %s67
    %p76 = scmp.eq.s32.totalorder %s14, 0
    %p77 = por %p75, %p76
    %p78 = scmp.ne.s32.totalorder %s66, %s67
    %p79 = scmp.eq.s32.totalorder %s15, 1
    %p80 = por %p78, %p79
    %p82 = scmp.ne.s32.totalorder %s67, %s81
    %p83 = scmp.eq.s32.totalorder %s15, 0
    %p84 = por %p82, %p83
    %s85 = ssub.s32 %s9, %s16
    %p86 = scmp.eq.s32.totalorder %s85, 0
    %s88 = sadd.s32 %s87, 1
    %s89 = scalar_select %p86, %s87, %s88
    %p92 = pneg %p86
    %p93 = scmp.eq.s32.totalorder %s9, 1
    %p94 = por %p92, %p93
    %p95 = scmp.ne.s32.totalorder %s87, %s90
    %p96 = scmp.eq.s32.totalorder %s9, 0
    %p97 = por %p95, %p96
    %p98 = scmp.ne.s32.totalorder %s87, %s90
    %p99 = scmp.eq.s32.totalorder %s14, 1
    %p100 = por %p98, %p99
    %p101 = scmp.ne.s32.totalorder %s90, %s91
    %p102 = scmp.eq.s32.totalorder %s14, 0
    %p103 = por %p101, %p102
    %p104 = scmp.ne.s32.totalorder %s90, %s91
    %p105 = scmp.eq.s32.totalorder %s15, 1
    %p106 = por %p104, %p105
    %p108 = scmp.ne.s32.totalorder %s91, %s107
    %p109 = scmp.eq.s32.totalorder %s15, 0
    %p110 = por %p108, %p109
    %p111 = scmp.le.s32.totalorder 1, %s9
    %p112 = scmp.lt.s32.totalorder %s9, 3
    %p113 = pnand %p111, %p112
    %p114 = pneg %p113
    // Predicated region
    $region9: #{maxvit_forward.9} parent=5 // pred_check
      _
    $region10: #{maxvit_forward.9} parent=5 // pred_check_branch
      %116 = sbr.rel (%p113) target = $region12
    $region11: #{maxvit_forward.9} parent=5 // pred_region
      %s117 = ssub.s32 %s9, 1
      // Predicated region
      $region13: #{maxvit_forward.9} parent=11 // pred_check
        %p118 = pneg %p56
      $region14: #{maxvit_forward.9} parent=11 // pred_check_branch
        %120 = sbr.rel (%p118) target = $region16
      $region15: #{maxvit_forward.9} parent=11 // pred_region
        _
      $region16: #{maxvit_forward.9} parent=11 // pred_fallthru
        _
      // Predicated region
      $region17: #{maxvit_forward.9} parent=11 // pred_check
        %p121 = pneg %p77
      $region18: #{maxvit_forward.9} parent=11 // pred_check_branch
        %123 = sbr.rel (%p121) target = $region20
      $region19: #{maxvit_forward.9} parent=11 // pred_region
        _
      $region20: #{maxvit_forward.9} parent=11 // pred_fallthru
        _
    $region12: #{maxvit_forward.9} parent=5 // pred_fallthru
      _
    %p124 = scmp.lt.s32.totalorder %s9, 2
    // Predicated region
    $region21: #{maxvit_forward.9} parent=5 // pred_check
      %p125 = pneg %p124
    $region22: #{maxvit_forward.9} parent=5 // pred_check_branch
      %127 = sbr.rel (%p125) target = $region24
    $region23: #{maxvit_forward.9} parent=5 // pred_region
      // Predicated region
      $region25: #{maxvit_forward.9} parent=23 // pred_check
        %p128 = pneg %p29
      $region26: #{maxvit_forward.9} parent=23 // pred_check_branch
        %130 = sbr.rel (%p128) target = $region28
      $region27: #{maxvit_forward.9} parent=23 // pred_region
        %p131 = scmp.lt.s32.totalorder %s9, 1
        %s132 = scalar_select %p131, %s9, 1
        %s133 = smul.addr %s132, 32
        %s134 = smul.addr %s133, 4
        %s135 = scalar_lea.vmem %s0, %s134
      $region28: #{maxvit_forward.9} parent=23 // pred_fallthru
        _
    $region24: #{maxvit_forward.9} parent=5 // pred_fallthru
      _
    %p136 = scmp.le.s32.totalorder 1, %s9
    %p137 = scmp.lt.s32.totalorder %s9, 3
    %p138 = pnand %p136, %p137
    %p139 = pneg %p138
    // Predicated region
    $region29: #{maxvit_forward.9} parent=5 // pred_check
      _
    $region30: #{maxvit_forward.9} parent=5 // pred_check_branch
      %141 = sbr.rel (%p138) target = $region32
    $region31: #{maxvit_forward.9} parent=5 // pred_region
      %s142 = ssub.s32 %s9, 1
      %p143 = scmp.lt.s32.totalorder %s14, 1
      %s144 = scalar_select %p143, %s14, 1
      %s145 = smul.addr %s144, 32
      %s146 = smul.addr %s145, 4
      %s147 = scalar_lea.vmem %s0, %s146
      %p148 = pneg %p35
      %p149 = pneg %p32
      %p150 = pneg %p56
      %p151 = pneg %p53
      %p152 = pneg %p77
      %p153 = pneg %p74
      %p154 = pneg %p103
      %p155 = pneg %p100
      %p156 = scmp.lt.s32.totalorder %s14, 1
      %s157 = scalar_select %p156, %s14, 1
      %s158 = smul.addr %s157, 32
      %s159 = smul.addr %s158, 4
      %s160 = scalar_lea.vmem %s3, %s159
      %p161 = scmp.lt.s32.totalorder %s14, 1
      %s162 = scalar_select %p161, %s14, 1
      %s163 = smul.addr %s162, 32
      %s164 = smul.addr %s163, 4
      %s165 = scalar_lea.vmem %s0, %s164
      %p166 = scmp.lt.s32.totalorder %s14, 1
      %s167 = scalar_select %p166, %s14, 1
      %s168 = smul.addr %s167, 32
      %s169 = smul.addr %s168, 4
      %s170 = scalar_lea.vmem %s3, %s169
      %v172 = vld [vmem:[%s165] sm:$0xf]
      %v173 = vld [vmem:[%s165 + $0x4] sm:$0xf]
      %v174 = vld [vmem:[%s165 + $0x8] sm:$0xf]
      %v175 = vld [vmem:[%s165 + $0xc] sm:$0xf]
      %v176 = vld [vmem:[%s165 + $0x10] sm:$0xf]
      %v177 = vld [vmem:[%s165 + $0x14] sm:$0xf]
      %v178 = vld [vmem:[%s165 + $0x18] sm:$0xf]
      %v179 = vld [vmem:[%s165 + $0x1c] sm:$0xf]
      %v180 = vld [vmem:[%s165 + $0x20] sm:$0xf]
      %v181 = vld [vmem:[%s165 + $0x24] sm:$0xf]
      %v182 = vld [vmem:[%s165 + $0x28] sm:$0xf]
      %v183 = vld [vmem:[%s165 + $0x2c] sm:$0xf]
      %v184 = vld [vmem:[%s165 + $0x30] sm:$0xf]
      %v185 = vld [vmem:[%s165 + $0x34] sm:$0xf]
      %v186 = vld [vmem:[%s165 + $0x38] sm:$0xf]
      %v187 = vld [vmem:[%s165 + $0x3c] sm:$0xf]
      %v188 = vld [vmem:[%s165 + $0x40] sm:$0xf]
      %v189 = vld [vmem:[%s165 + $0x44] sm:$0xf]
      %v190 = vld [vmem:[%s165 + $0x48] sm:$0xf]
      %v191 = vld [vmem:[%s165 + $0x4c] sm:$0xf]
      %v192 = vld [vmem:[%s165 + $0x50] sm:$0xf]
      %v193 = vld [vmem:[%s165 + $0x54] sm:$0xf]
      %v194 = vld [vmem:[%s165 + $0x58] sm:$0xf]
      %v195 = vld [vmem:[%s165 + $0x5c] sm:$0xf]
      %v196 = vld [vmem:[%s165 + $0x60] sm:$0xf]
      %v197 = vld [vmem:[%s165 + $0x64] sm:$0xf]
      %v198 = vld [vmem:[%s165 + $0x68] sm:$0xf]
      %v199 = vld [vmem:[%s165 + $0x6c] sm:$0xf]
      %v200 = vld [vmem:[%s165 + $0x70] sm:$0xf]
      %v201 = vld [vmem:[%s165 + $0x74] sm:$0xf]
      %v202 = vld [vmem:[%s165 + $0x78] sm:$0xf]
      %v203 = vld [vmem:[%s165 + $0x7c] sm:$0xf]
      %v204 = vunpack.c.l.bf16 %v172
      %v205 = vunpack.c.l.bf16 %v173
      %v206 = vunpack.c.l.bf16 %v174
      %v207 = vunpack.c.l.bf16 %v175
      %v208 = vunpack.c.l.bf16 %v176
      %v209 = vunpack.c.l.bf16 %v177
      %v210 = vunpack.c.l.bf16 %v178
      %v211 = vunpack.c.l.bf16 %v179
      %v212 = vunpack.c.l.bf16 %v180
      %v213 = vunpack.c.l.bf16 %v181
      %v214 = vunpack.c.l.bf16 %v182
      %v215 = vunpack.c.l.bf16 %v183
      %v216 = vunpack.c.l.bf16 %v184
      %v217 = vunpack.c.l.bf16 %v185
      %v218 = vunpack.c.l.bf16 %v186
      %v219 = vunpack.c.l.bf16 %v187
      %v220 = vunpack.c.l.bf16 %v188
      %v221 = vunpack.c.l.bf16 %v189
      %v222 = vunpack.c.l.bf16 %v190
      %v223 = vunpack.c.l.bf16 %v191
      %v224 = vunpack.c.l.bf16 %v192
      %v225 = vunpack.c.l.bf16 %v193
      %v226 = vunpack.c.l.bf16 %v194
      %v227 = vunpack.c.l.bf16 %v195
      %v228 = vunpack.c.l.bf16 %v196
      %v229 = vunpack.c.l.bf16 %v197
      %v230 = vunpack.c.l.bf16 %v198
      %v231 = vunpack.c.l.bf16 %v199
      %v232 = vunpack.c.l.bf16 %v200
      %v233 = vunpack.c.l.bf16 %v201
      %v234 = vunpack.c.l.bf16 %v202
      %v235 = vunpack.c.l.bf16 %v203
      %vm268 = vcmask 1040384
      %v269 = vrot.slane %v204, 7
      %v270 = vrot.slane %v205, 7
      %v271 = vsel %vm268, %v269, %v270
      %v272 = vrot.slane %v206, 7
      %v273 = vrot.slane %v207, 7
      %v274 = vsel %vm268, %v272, %v273
      %v275 = vrot.slane %v208, 7
      %v276 = vrot.slane %v209, 7
      %v277 = vsel %vm268, %v275, %v276
      %v278 = vrot.slane %v210, 7
      %v279 = vrot.slane %v211, 7
      %v280 = vsel %vm268, %v278, %v279
      %v281 = vrot.slane %v212, 7
      %v282 = vrot.slane %v213, 7
      %v283 = vsel %vm268, %v281, %v282
      %v284 = vrot.slane %v214, 7
      %v285 = vrot.slane %v215, 7
      %v286 = vsel %vm268, %v284, %v285
      %v287 = vrot.slane %v216, 7
      %v288 = vrot.slane %v217, 7
      %v289 = vsel %vm268, %v287, %v288
      %v290 = vrot.slane %v218, 7
      %v291 = vrot.slane %v219, 7
      %v292 = vsel %vm268, %v290, %v291
      %v293 = vrot.slane %v220, 7
      %v294 = vrot.slane %v221, 7
      %v295 = vsel %vm268, %v293, %v294
      %v296 = vrot.slane %v222, 7
      %v297 = vrot.slane %v223, 7
      %v298 = vsel %vm268, %v296, %v297
      %v299 = vrot.slane %v224, 7
      %v300 = vrot.slane %v225, 7
      %v301 = vsel %vm268, %v299, %v300
      %v302 = vrot.slane %v226, 7
      %v303 = vrot.slane %v227, 7
      %v304 = vsel %vm268, %v302, %v303
      %v305 = vrot.slane %v228, 7
      %v306 = vrot.slane %v229, 7
      %v307 = vsel %vm268, %v305, %v306
      %v308 = vrot.slane %v230, 7
      %v309 = vrot.slane %v231, 7
      %v310 = vsel %vm268, %v308, %v309
      %v311 = vrot.slane %v232, 7
      %v312 = vrot.slane %v233, 7
      %v313 = vsel %vm268, %v311, %v312
      %v314 = vrot.slane %v234, 7
      %v315 = vrot.slane %v235, 7
      %v316 = vsel %vm268, %v314, %v315
      %v333 = vsel %vm268, 0.0, %v269
      %v334 = vsel %vm268, 0.0, %v272
      %v335 = vsel %vm268, 0.0, %v275
      %v336 = vsel %vm268, 0.0, %v278
      %v337 = vsel %vm268, 0.0, %v281
      %v338 = vsel %vm268, 0.0, %v284
      %v339 = vsel %vm268, 0.0, %v287
      %v340 = vsel %vm268, 0.0, %v290
      %v341 = vsel %vm268, 0.0, %v293
      %v342 = vsel %vm268, 0.0, %v296
      %v343 = vsel %vm268, 0.0, %v299
      %v344 = vsel %vm268, 0.0, %v302
      %v345 = vsel %vm268, 0.0, %v305
      %v346 = vsel %vm268, 0.0, %v308
      %v347 = vsel %vm268, 0.0, %v311
      %v348 = vsel %vm268, 0.0, %v314
      %vm365 = vcmask 1046528
      %v366 = vrot.slane 0.0, 1
      %v367 = vsel %vm365, %v366, %v366
      %v368 = vrot.slane %v333, 1
      %v369 = vrot.slane %v271, 1
      %v370 = vsel %vm365, %v368, %v369
      %v371 = vrot.slane %v270, 1
      %v372 = vsel %vm365, %v369, %v371
      %v373 = vrot.slane %v334, 1
      %v374 = vrot.slane %v274, 1
      %v375 = vsel %vm365, %v373, %v374
      %v376 = vrot.slane %v273, 1
      %v377 = vsel %vm365, %v374, %v376
      %v378 = vrot.slane %v335, 1
      %v379 = vrot.slane %v277, 1
      %v380 = vsel %vm365, %v378, %v379
      %v381 = vrot.slane %v276, 1
      %v382 = vsel %vm365, %v379, %v381
      %v383 = vrot.slane %v336, 1
      %v384 = vrot.slane %v280, 1
      %v385 = vsel %vm365, %v383, %v384
      %v386 = vrot.slane %v279, 1
      %v387 = vsel %vm365, %v384, %v386
      %v388 = vrot.slane %v337, 1
      %v389 = vrot.slane %v283, 1
      %v390 = vsel %vm365, %v388, %v389
      %v391 = vrot.slane %v282, 1
      %v392 = vsel %vm365, %v389, %v391
      %v393 = vrot.slane %v338, 1
      %v394 = vrot.slane %v286, 1
      %v395 = vsel %vm365, %v393, %v394
      %v396 = vrot.slane %v285, 1
      %v397 = vsel %vm365, %v394, %v396
      %v398 = vrot.slane %v339, 1
      %v399 = vrot.slane %v289, 1
      %v400 = vsel %vm365, %v398, %v399
      %v401 = vrot.slane %v288, 1
      %v402 = vsel %vm365, %v399, %v401
      %v403 = vrot.slane %v340, 1
      %v404 = vrot.slane %v292, 1
      %v405 = vsel %vm365, %v403, %v404
      %v406 = vrot.slane %v291, 1
      %v407 = vsel %vm365, %v404, %v406
      %v408 = vrot.slane %v341, 1
      %v409 = vrot.slane %v295, 1
      %v410 = vsel %vm365, %v408, %v409
      %v411 = vrot.slane %v294, 1
      %v412 = vsel %vm365, %v409, %v411
      %v413 = vrot.slane %v342, 1
      %v414 = vrot.slane %v298, 1
      %v415 = vsel %vm365, %v413, %v414
      %v416 = vrot.slane %v297, 1
      %v417 = vsel %vm365, %v414, %v416
      %v418 = vrot.slane %v343, 1
      %v419 = vrot.slane %v301, 1
      %v420 = vsel %vm365, %v418, %v419
      %v421 = vrot.slane %v300, 1
      %v422 = vsel %vm365, %v419, %v421
      %v423 = vrot.slane %v344, 1
      %v424 = vrot.slane %v304, 1
      %v425 = vsel %vm365, %v423, %v424
      %v426 = vrot.slane %v303, 1
      %v427 = vsel %vm365, %v424, %v426
      %v428 = vrot.slane %v345, 1
      %v429 = vrot.slane %v307, 1
      %v430 = vsel %vm365, %v428, %v429
      %v431 = vrot.slane %v306, 1
      %v432 = vsel %vm365, %v429, %v431
      %v433 = vrot.slane %v346, 1
      %v434 = vrot.slane %v310, 1
      %v435 = vsel %vm365, %v433, %v434
      %v436 = vrot.slane %v309, 1
      %v437 = vsel %vm365, %v434, %v436
      %v438 = vrot.slane %v347, 1
      %v439 = vrot.slane %v313, 1
      %v440 = vsel %vm365, %v438, %v439
      %v441 = vrot.slane %v312, 1
      %v442 = vsel %vm365, %v439, %v441
      %v444 = vrot.slane %v348, 1
      %v445 = vrot.slane %v316, 1
      %v446 = vsel %vm365, %v444, %v445
      %v447 = vrot.slane %v315, 1
      %v448 = vsel %vm365, %v445, %v447
      %449 = vrot.lane.b32.xlu0 0.0, 119
      %v450 = vpop.permute.xlu0 %449
      %451 = vrot.lane.b32.xlu0 %v333, 119
      %v452 = vpop.permute.xlu0 %451
      %453 = vrot.lane.b32.xlu0 %v271, 119
      %v454 = vpop.permute.xlu0 %453
      %455 = vrot.lane.b32.xlu0 %v334, 119
      %v456 = vpop.permute.xlu0 %455
      %457 = vrot.lane.b32.xlu0 %v274, 119
      %v458 = vpop.permute.xlu0 %457
      %459 = vrot.lane.b32.xlu0 %v335, 119
      %v460 = vpop.permute.xlu0 %459
      %461 = vrot.lane.b32.xlu0 %v277, 119
      %v462 = vpop.permute.xlu0 %461
      %463 = vrot.lane.b32.xlu0 %v336, 119
      %v464 = vpop.permute.xlu0 %463
      %465 = vrot.lane.b32.xlu0 %v280, 119
      %v466 = vpop.permute.xlu0 %465
      %467 = vrot.lane.b32.xlu0 %v337, 119
      %v468 = vpop.permute.xlu0 %467
      %469 = vrot.lane.b32.xlu0 %v283, 119
      %v470 = vpop.permute.xlu0 %469
      %471 = vrot.lane.b32.xlu0 %v338, 119
      %v472 = vpop.permute.xlu0 %471
      %473 = vrot.lane.b32.xlu0 %v286, 119
      %v474 = vpop.permute.xlu0 %473
      %475 = vrot.lane.b32.xlu0 %v339, 119
      %v476 = vpop.permute.xlu0 %475
      %477 = vrot.lane.b32.xlu0 %v289, 119
      %v478 = vpop.permute.xlu0 %477
      %479 = vrot.lane.b32.xlu0 %v340, 119
      %v480 = vpop.permute.xlu0 %479
      %481 = vrot.lane.b32.xlu0 %v292, 119
      %v482 = vpop.permute.xlu0 %481
      %483 = vrot.lane.b32.xlu0 %v341, 119
      %v484 = vpop.permute.xlu0 %483
      %485 = vrot.lane.b32.xlu0 %v295, 119
      %v486 = vpop.permute.xlu0 %485
      %487 = vrot.lane.b32.xlu0 %v342, 119
      %v488 = vpop.permute.xlu0 %487
      %489 = vrot.lane.b32.xlu0 %v298, 119
      %v490 = vpop.permute.xlu0 %489
      %491 = vrot.lane.b32.xlu0 %v343, 119
      %v492 = vpop.permute.xlu0 %491
      %493 = vrot.lane.b32.xlu0 %v301, 119
      %v494 = vpop.permute.xlu0 %493
      %495 = vrot.lane.b32.xlu0 %v344, 119
      %v496 = vpop.permute.xlu0 %495
      %497 = vrot.lane.b32.xlu0 %v304, 119
      %v498 = vpop.permute.xlu0 %497
      %499 = vrot.lane.b32.xlu0 %v345, 119
      %v500 = vpop.permute.xlu0 %499
      %501 = vrot.lane.b32.xlu0 %v307, 119
      %v502 = vpop.permute.xlu0 %501
      %503 = vrot.lane.b32.xlu0 %v346, 119
      %v504 = vpop.permute.xlu0 %503
      %505 = vrot.lane.b32.xlu0 %v310, 119
      %v506 = vpop.permute.xlu0 %505
      %507 = vrot.lane.b32.xlu0 %v347, 119
      %v508 = vpop.permute.xlu0 %507
      %509 = vrot.lane.b32.xlu0 %v313, 119
      %v510 = vpop.permute.xlu0 %509
      %542 = vrot.lane.b32.xlu0 %v367, 125
      %v543 = vpop.permute.xlu0 %542
      %544 = vrot.lane.b32.xlu0 %v370, 125
      %v545 = vpop.permute.xlu0 %544
      %546 = vrot.lane.b32.xlu0 %v372, 125
      %v547 = vpop.permute.xlu0 %546
      %548 = vrot.lane.b32.xlu0 %v375, 125
      %v549 = vpop.permute.xlu0 %548
      %550 = vrot.lane.b32.xlu0 %v377, 125
      %v551 = vpop.permute.xlu0 %550
      %552 = vrot.lane.b32.xlu0 %v380, 125
      %v553 = vpop.permute.xlu0 %552
      %554 = vrot.lane.b32.xlu0 %v382, 125
      %v555 = vpop.permute.xlu0 %554
      %556 = vrot.lane.b32.xlu0 %v385, 125
      %v557 = vpop.permute.xlu0 %556
      %558 = vrot.lane.b32.xlu0 %v387, 125
      %v559 = vpop.permute.xlu0 %558
      %560 = vrot.lane.b32.xlu0 %v390, 125
      %v561 = vpop.permute.xlu0 %560
      %562 = vrot.lane.b32.xlu0 %v392, 125
      %v563 = vpop.permute.xlu0 %562
      %564 = vrot.lane.b32.xlu0 %v395, 125
      %v565 = vpop.permute.xlu0 %564
      %566 = vrot.lane.b32.xlu0 %v397, 125
      %v567 = vpop.permute.xlu0 %566
      %568 = vrot.lane.b32.xlu0 %v400, 125
      %v569 = vpop.permute.xlu0 %568
      %570 = vrot.lane.b32.xlu0 %v402, 125
      %v571 = vpop.permute.xlu0 %570
      %572 = vrot.lane.b32.xlu0 %v405, 125
      %v573 = vpop.permute.xlu0 %572
      %574 = vrot.lane.b32.xlu0 %v407, 125
      %v575 = vpop.permute.xlu0 %574
      %576 = vrot.lane.b32.xlu0 %v410, 125
      %v577 = vpop.permute.xlu0 %576
      %578 = vrot.lane.b32.xlu0 %v412, 125
      %v579 = vpop.permute.xlu0 %578
      %580 = vrot.lane.b32.xlu0 %v415, 125
      %v581 = vpop.permute.xlu0 %580
      %582 = vrot.lane.b32.xlu0 %v417, 125
      %v583 = vpop.permute.xlu0 %582
      %584 = vrot.lane.b32.xlu0 %v420, 125
      %v585 = vpop.permute.xlu0 %584
      %586 = vrot.lane.b32.xlu0 %v422, 125
      %v587 = vpop.permute.xlu0 %586
      %588 = vrot.lane.b32.xlu0 %v425, 125
      %v589 = vpop.permute.xlu0 %588
      %590 = vrot.lane.b32.xlu0 %v427, 125
      %v591 = vpop.permute.xlu0 %590
      %592 = vrot.lane.b32.xlu0 %v430, 125
      %v593 = vpop.permute.xlu0 %592
      %594 = vrot.lane.b32.xlu0 %v432, 125
      %v595 = vpop.permute.xlu0 %594
      %596 = vrot.lane.b32.xlu0 %v435, 125
      %v597 = vpop.permute.xlu0 %596
      %598 = vrot.lane.b32.xlu0 %v437, 125
      %v599 = vpop.permute.xlu0 %598
      %600 = vrot.lane.b32.xlu0 %v440, 125
      %v601 = vpop.permute.xlu0 %600
      %602 = vrot.lane.b32.xlu0 %v442, 125
      %v603 = vpop.permute.xlu0 %602
      %635 = vrot.lane.b32.xlu0 %v333, 6
      %v636 = vpop.permute.xlu0 %635
      %637 = vrot.lane.b32.xlu0 %v271, 6
      %v638 = vpop.permute.xlu0 %637
      %639 = vrot.lane.b32.xlu0 %v334, 6
      %v640 = vpop.permute.xlu0 %639
      %641 = vrot.lane.b32.xlu0 %v274, 6
      %v642 = vpop.permute.xlu0 %641
      %643 = vrot.lane.b32.xlu0 %v335, 6
      %v644 = vpop.permute.xlu0 %643
      %645 = vrot.lane.b32.xlu0 %v277, 6
      %v646 = vpop.permute.xlu0 %645
      %647 = vrot.lane.b32.xlu0 %v336, 6
      %v648 = vpop.permute.xlu0 %647
      %649 = vrot.lane.b32.xlu0 %v280, 6
      %v650 = vpop.permute.xlu0 %649
      %651 = vrot.lane.b32.xlu0 %v337, 6
      %v652 = vpop.permute.xlu0 %651
      %653 = vrot.lane.b32.xlu0 %v283, 6
      %v654 = vpop.permute.xlu0 %653
      %655 = vrot.lane.b32.xlu0 %v338, 6
      %v656 = vpop.permute.xlu0 %655
      %657 = vrot.lane.b32.xlu0 %v286, 6
      %v658 = vpop.permute.xlu0 %657
      %659 = vrot.lane.b32.xlu0 %v339, 6
      %v660 = vpop.permute.xlu0 %659
      %661 = vrot.lane.b32.xlu0 %v289, 6
      %v662 = vpop.permute.xlu0 %661
      %663 = vrot.lane.b32.xlu0 %v340, 6
      %v664 = vpop.permute.xlu0 %663
      %665 = vrot.lane.b32.xlu0 %v292, 6
      %v666 = vpop.permute.xlu0 %665
      %667 = vrot.lane.b32.xlu0 %v341, 6
      %v668 = vpop.permute.xlu0 %667
      %669 = vrot.lane.b32.xlu0 %v295, 6
      %v670 = vpop.permute.xlu0 %669
      %671 = vrot.lane.b32.xlu0 %v342, 6
      %v672 = vpop.permute.xlu0 %671
      %673 = vrot.lane.b32.xlu0 %v298, 6
      %v674 = vpop.permute.xlu0 %673
      %675 = vrot.lane.b32.xlu0 %v343, 6
      %v676 = vpop.permute.xlu0 %675
      %677 = vrot.lane.b32.xlu0 %v301, 6
      %v678 = vpop.permute.xlu0 %677
      %679 = vrot.lane.b32.xlu0 %v344, 6
      %v680 = vpop.permute.xlu0 %679
      %681 = vrot.lane.b32.xlu0 %v304, 6
      %v682 = vpop.permute.xlu0 %681
      %683 = vrot.lane.b32.xlu0 %v345, 6
      %v684 = vpop.permute.xlu0 %683
      %685 = vrot.lane.b32.xlu0 %v307, 6
      %v686 = vpop.permute.xlu0 %685
      %687 = vrot.lane.b32.xlu0 %v346, 6
      %v688 = vpop.permute.xlu0 %687
      %689 = vrot.lane.b32.xlu0 %v310, 6
      %v690 = vpop.permute.xlu0 %689
      %691 = vrot.lane.b32.xlu0 %v347, 6
      %v692 = vpop.permute.xlu0 %691
      %693 = vrot.lane.b32.xlu0 %v313, 6
      %v694 = vpop.permute.xlu0 %693
      %695 = vrot.lane.b32.xlu0 %v348, 6
      %v696 = vpop.permute.xlu0 %695
      %697 = vrot.lane.b32.xlu0 %v316, 6
      %v698 = vpop.permute.xlu0 %697
      %731 = vrot.lane.b32.xlu0 %v370, 12
      %v732 = vpop.permute.xlu0 %731
      %733 = vrot.lane.b32.xlu0 %v372, 12
      %v734 = vpop.permute.xlu0 %733
      %735 = vrot.lane.b32.xlu0 %v375, 12
      %v736 = vpop.permute.xlu0 %735
      %737 = vrot.lane.b32.xlu0 %v377, 12
      %v738 = vpop.permute.xlu0 %737
      %739 = vrot.lane.b32.xlu0 %v380, 12
      %v740 = vpop.permute.xlu0 %739
      %741 = vrot.lane.b32.xlu0 %v382, 12
      %v742 = vpop.permute.xlu0 %741
      %743 = vrot.lane.b32.xlu0 %v385, 12
      %v744 = vpop.permute.xlu0 %743
      %745 = vrot.lane.b32.xlu0 %v387, 12
      %v746 = vpop.permute.xlu0 %745
      %747 = vrot.lane.b32.xlu0 %v390, 12
      %v748 = vpop.permute.xlu0 %747
      %749 = vrot.lane.b32.xlu0 %v392, 12
      %v750 = vpop.permute.xlu0 %749
      %751 = vrot.lane.b32.xlu0 %v395, 12
      %v752 = vpop.permute.xlu0 %751
      %753 = vrot.lane.b32.xlu0 %v397, 12
      %v754 = vpop.permute.xlu0 %753
      %755 = vrot.lane.b32.xlu0 %v400, 12
      %v756 = vpop.permute.xlu0 %755
      %757 = vrot.lane.b32.xlu0 %v402, 12
      %v758 = vpop.permute.xlu0 %757
      %759 = vrot.lane.b32.xlu0 %v405, 12
      %v760 = vpop.permute.xlu0 %759
      %761 = vrot.lane.b32.xlu0 %v407, 12
      %v762 = vpop.permute.xlu0 %761
      %763 = vrot.lane.b32.xlu0 %v410, 12
      %v764 = vpop.permute.xlu0 %763
      %765 = vrot.lane.b32.xlu0 %v412, 12
      %v766 = vpop.permute.xlu0 %765
      %767 = vrot.lane.b32.xlu0 %v415, 12
      %v768 = vpop.permute.xlu0 %767
      %769 = vrot.lane.b32.xlu0 %v417, 12
      %v770 = vpop.permute.xlu0 %769
      %771 = vrot.lane.b32.xlu0 %v420, 12
      %v772 = vpop.permute.xlu0 %771
      %773 = vrot.lane.b32.xlu0 %v422, 12
      %v774 = vpop.permute.xlu0 %773
      %775 = vrot.lane.b32.xlu0 %v425, 12
      %v776 = vpop.permute.xlu0 %775
      %777 = vrot.lane.b32.xlu0 %v427, 12
      %v778 = vpop.permute.xlu0 %777
      %779 = vrot.lane.b32.xlu0 %v430, 12
      %v780 = vpop.permute.xlu0 %779
      %781 = vrot.lane.b32.xlu0 %v432, 12
      %v782 = vpop.permute.xlu0 %781
      %783 = vrot.lane.b32.xlu0 %v435, 12
      %v784 = vpop.permute.xlu0 %783
      %785 = vrot.lane.b32.xlu0 %v437, 12
      %v786 = vpop.permute.xlu0 %785
      %787 = vrot.lane.b32.xlu0 %v440, 12
      %v788 = vpop.permute.xlu0 %787
      %789 = vrot.lane.b32.xlu0 %v442, 12
      %v790 = vpop.permute.xlu0 %789
      %791 = vrot.lane.b32.xlu0 %v446, 12
      %v792 = vpop.permute.xlu0 %791
      %793 = vrot.lane.b32.xlu0 %v448, 12
      %v794 = vpop.permute.xlu0 %793
      %827 = vrot.lane.b32.xlu0 %v333, 9
      %v828 = vpop.permute.xlu0 %827
      %829 = vrot.lane.b32.xlu0 %v271, 9
      %v830 = vpop.permute.xlu0 %829
      %831 = vrot.lane.b32.xlu0 %v334, 9
      %v832 = vpop.permute.xlu0 %831
      %833 = vrot.lane.b32.xlu0 %v274, 9
      %v834 = vpop.permute.xlu0 %833
      %835 = vrot.lane.b32.xlu0 %v335, 9
      %v836 = vpop.permute.xlu0 %835
      %837 = vrot.lane.b32.xlu0 %v277, 9
      %v838 = vpop.permute.xlu0 %837
      %839 = vrot.lane.b32.xlu0 %v336, 9
      %v840 = vpop.permute.xlu0 %839
      %841 = vrot.lane.b32.xlu0 %v280, 9
      %v842 = vpop.permute.xlu0 %841
      %843 = vrot.lane.b32.xlu0 %v337, 9
      %v844 = vpop.permute.xlu0 %843
      %845 = vrot.lane.b32.xlu0 %v283, 9
      %v846 = vpop.permute.xlu0 %845
      %847 = vrot.lane.b32.xlu0 %v338, 9
      %v848 = vpop.permute.xlu0 %847
      %849 = vrot.lane.b32.xlu0 %v286, 9
      %v850 = vpop.permute.xlu0 %849
      %851 = vrot.lane.b32.xlu0 %v339, 9
      %v852 = vpop.permute.xlu0 %851
      %853 = vrot.lane.b32.xlu0 %v289, 9
      %v854 = vpop.permute.xlu0 %853
      %855 = vrot.lane.b32.xlu0 %v340, 9
      %v856 = vpop.permute.xlu0 %855
      %857 = vrot.lane.b32.xlu0 %v292, 9
      %v858 = vpop.permute.xlu0 %857
      %859 = vrot.lane.b32.xlu0 %v341, 9
      %v860 = vpop.permute.xlu0 %859
      %861 = vrot.lane.b32.xlu0 %v295, 9
      %v862 = vpop.permute.xlu0 %861
      %863 = vrot.lane.b32.xlu0 %v342, 9
      %v864 = vpop.permute.xlu0 %863
      %865 = vrot.lane.b32.xlu0 %v298, 9
      %v866 = vpop.permute.xlu0 %865
      %867 = vrot.lane.b32.xlu0 %v343, 9
      %v868 = vpop.permute.xlu0 %867
      %869 = vrot.lane.b32.xlu0 %v301, 9
      %v870 = vpop.permute.xlu0 %869
      %871 = vrot.lane.b32.xlu0 %v344, 9
      %v872 = vpop.permute.xlu0 %871
      %873 = vrot.lane.b32.xlu0 %v304, 9
      %v874 = vpop.permute.xlu0 %873
      %875 = vrot.lane.b32.xlu0 %v345, 9
      %v876 = vpop.permute.xlu0 %875
      %877 = vrot.lane.b32.xlu0 %v307, 9
      %v878 = vpop.permute.xlu0 %877
      %879 = vrot.lane.b32.xlu0 %v346, 9
      %v880 = vpop.permute.xlu0 %879
      %881 = vrot.lane.b32.xlu0 %v310, 9
      %v882 = vpop.permute.xlu0 %881
      %883 = vrot.lane.b32.xlu0 %v347, 9
      %v884 = vpop.permute.xlu0 %883
      %885 = vrot.lane.b32.xlu0 %v313, 9
      %v886 = vpop.permute.xlu0 %885
      %887 = vrot.lane.b32.xlu0 %v348, 9
      %v888 = vpop.permute.xlu0 %887
      %889 = vrot.lane.b32.xlu0 %v316, 9
      %v890 = vpop.permute.xlu0 %889
      %923 = vrot.lane.b32.xlu0 %v370, 15
      %v924 = vpop.permute.xlu0 %923
      %925 = vrot.lane.b32.xlu0 %v372, 15
      %v926 = vpop.permute.xlu0 %925
      %927 = vrot.lane.b32.xlu0 %v375, 15
      %v928 = vpop.permute.xlu0 %927
      %929 = vrot.lane.b32.xlu0 %v377, 15
      %v930 = vpop.permute.xlu0 %929
      %931 = vrot.lane.b32.xlu0 %v380, 15
      %v932 = vpop.permute.xlu0 %931
      %933 = vrot.lane.b32.xlu0 %v382, 15
      %v934 = vpop.permute.xlu0 %933
      %935 = vrot.lane.b32.xlu0 %v385, 15
      %v936 = vpop.permute.xlu0 %935
      %937 = vrot.lane.b32.xlu0 %v387, 15
      %v938 = vpop.permute.xlu0 %937
      %939 = vrot.lane.b32.xlu0 %v390, 15
      %v940 = vpop.permute.xlu0 %939
      %941 = vrot.lane.b32.xlu0 %v392, 15
      %v942 = vpop.permute.xlu0 %941
      %943 = vrot.lane.b32.xlu0 %v395, 15
      %v944 = vpop.permute.xlu0 %943
      %945 = vrot.lane.b32.xlu0 %v397, 15
      %v946 = vpop.permute.xlu0 %945
      %947 = vrot.lane.b32.xlu0 %v400, 15
      %v948 = vpop.permute.xlu0 %947
      %949 = vrot.lane.b32.xlu0 %v402, 15
      %v950 = vpop.permute.xlu0 %949
      %951 = vrot.lane.b32.xlu0 %v405, 15
      %v952 = vpop.permute.xlu0 %951
      %953 = vrot.lane.b32.xlu0 %v407, 15
      %v954 = vpop.permute.xlu0 %953
      %955 = vrot.lane.b32.xlu0 %v410, 15
      %v956 = vpop.permute.xlu0 %955
      %957 = vrot.lane.b32.xlu0 %v412, 15
      %v958 = vpop.permute.xlu0 %957
      %959 = vrot.lane.b32.xlu0 %v415, 15
      %v960 = vpop.permute.xlu0 %959
      %961 = vrot.lane.b32.xlu0 %v417, 15
      %v962 = vpop.permute.xlu0 %961
      %963 = vrot.lane.b32.xlu0 %v420, 15
      %v964 = vpop.permute.xlu0 %963
      %965 = vrot.lane.b32.xlu0 %v422, 15
      %v966 = vpop.permute.xlu0 %965
      %967 = vrot.lane.b32.xlu0 %v425, 15
      %v968 = vpop.permute.xlu0 %967
      %969 = vrot.lane.b32.xlu0 %v427, 15
      %v970 = vpop.permute.xlu0 %969
      %971 = vrot.lane.b32.xlu0 %v430, 15
      %v972 = vpop.permute.xlu0 %971
      %973 = vrot.lane.b32.xlu0 %v432, 15
      %v974 = vpop.permute.xlu0 %973
      %975 = vrot.lane.b32.xlu0 %v435, 15
      %v976 = vpop.permute.xlu0 %975
      %977 = vrot.lane.b32.xlu0 %v437, 15
      %v978 = vpop.permute.xlu0 %977
      %979 = vrot.lane.b32.xlu0 %v440, 15
      %v980 = vpop.permute.xlu0 %979
      %981 = vrot.lane.b32.xlu0 %v442, 15
      %v982 = vpop.permute.xlu0 %981
      %983 = vrot.lane.b32.xlu0 %v446, 15
      %v984 = vpop.permute.xlu0 %983
      %985 = vrot.lane.b32.xlu0 %v448, 15
      %v986 = vpop.permute.xlu0 %985
      %vm1019 = vcmask 23552
      %v1020 = vsel %vm1019, %v450, %v543
      %v1021 = vsel %vm1019, %v452, %v545
      %v1022 = vsel %vm1019, %v454, %v547
      %v1023 = vsel %vm1019, %v456, %v549
      %v1024 = vsel %vm1019, %v458, %v551
      %v1025 = vsel %vm1019, %v460, %v553
      %v1026 = vsel %vm1019, %v462, %v555
      %v1027 = vsel %vm1019, %v464, %v557
      %v1028 = vsel %vm1019, %v466, %v559
      %v1029 = vsel %vm1019, %v468, %v561
      %v1030 = vsel %vm1019, %v470, %v563
      %v1031 = vsel %vm1019, %v472, %v565
      %v1032 = vsel %vm1019, %v474, %v567
      %v1033 = vsel %vm1019, %v476, %v569
      %v1034 = vsel %vm1019, %v478, %v571
      %v1035 = vsel %vm1019, %v480, %v573
      %v1036 = vsel %vm1019, %v482, %v575
      %v1037 = vsel %vm1019, %v484, %v577
      %v1038 = vsel %vm1019, %v486, %v579
      %v1039 = vsel %vm1019, %v488, %v581
      %v1040 = vsel %vm1019, %v490, %v583
      %v1041 = vsel %vm1019, %v492, %v585
      %v1042 = vsel %vm1019, %v494, %v587
      %v1043 = vsel %vm1019, %v496, %v589
      %v1044 = vsel %vm1019, %v498, %v591
      %v1045 = vsel %vm1019, %v500, %v593
      %v1046 = vsel %vm1019, %v502, %v595
      %v1047 = vsel %vm1019, %v504, %v597
      %v1048 = vsel %vm1019, %v506, %v599
      %v1049 = vsel %vm1019, %v508, %v601
      %v1050 = vsel %vm1019, %v510, %v603
      %vm1051 = vcmask 48128
      %v1052 = vsel %vm1051, %v1020, %v543
      %v1053 = vsel %vm1051, %v1021, %v545
      %v1054 = vsel %vm1051, %v1022, %v547
      %v1055 = vsel %vm1051, %v1023, %v549
      %v1056 = vsel %vm1051, %v1024, %v551
      %v1057 = vsel %vm1051, %v1025, %v553
      %v1058 = vsel %vm1051, %v1026, %v555
      %v1059 = vsel %vm1051, %v1027, %v557
      %v1060 = vsel %vm1051, %v1028, %v559
      %v1061 = vsel %vm1051, %v1029, %v561
      %v1062 = vsel %vm1051, %v1030, %v563
      %v1063 = vsel %vm1051, %v1031, %v565
      %v1064 = vsel %vm1051, %v1032, %v567
      %v1065 = vsel %vm1051, %v1033, %v569
      %v1066 = vsel %vm1051, %v1034, %v571
      %v1067 = vsel %vm1051, %v1035, %v573
      %v1068 = vsel %vm1051, %v1036, %v575
      %v1069 = vsel %vm1051, %v1037, %v577
      %v1070 = vsel %vm1051, %v1038, %v579
      %v1071 = vsel %vm1051, %v1039, %v581
      %v1072 = vsel %vm1051, %v1040, %v583
      %v1073 = vsel %vm1051, %v1041, %v585
      %v1074 = vsel %vm1051, %v1042, %v587
      %v1075 = vsel %vm1051, %v1043, %v589
      %v1076 = vsel %vm1051, %v1044, %v591
      %v1077 = vsel %vm1051, %v1045, %v593
      %v1078 = vsel %vm1051, %v1046, %v595
      %v1079 = vsel %vm1051, %v1047, %v597
      %v1080 = vsel %vm1051, %v1048, %v599
      %v1081 = vsel %vm1051, %v1049, %v601
      %v1082 = vsel %vm1051, %v1050, %v603
      %vm1083 = vcmask 72704
      %v1084 = vsel %vm1083, %v1052, %v636
      %v1085 = vsel %vm1083, %v1052, %v638
      %v1086 = vsel %vm1083, %v1053, %v640
      %v1087 = vsel %vm1083, %v1054, %v642
      %v1088 = vsel %vm1083, %v1055, %v644
      %v1089 = vsel %vm1083, %v1056, %v646
      %v1090 = vsel %vm1083, %v1057, %v648
      %v1091 = vsel %vm1083, %v1058, %v650
      %v1092 = vsel %vm1083, %v1059, %v652
      %v1093 = vsel %vm1083, %v1060, %v654
      %v1094 = vsel %vm1083, %v1061, %v656
      %v1095 = vsel %vm1083, %v1062, %v658
      %v1096 = vsel %vm1083, %v1063, %v660
      %v1097 = vsel %vm1083, %v1064, %v662
      %v1098 = vsel %vm1083, %v1065, %v664
      %v1099 = vsel %vm1083, %v1066, %v666
      %v1100 = vsel %vm1083, %v1067, %v668
      %v1101 = vsel %vm1083, %v1068, %v670
      %v1102 = vsel %vm1083, %v1069, %v672
      %v1103 = vsel %vm1083, %v1070, %v674
      %v1104 = vsel %vm1083, %v1071, %v676
      %v1105 = vsel %vm1083, %v1072, %v678
      %v1106 = vsel %vm1083, %v1073, %v680
      %v1107 = vsel %vm1083, %v1074, %v682
      %v1108 = vsel %vm1083, %v1075, %v684
      %v1109 = vsel %vm1083, %v1076, %v686
      %v1110 = vsel %vm1083, %v1077, %v688
      %v1111 = vsel %vm1083, %v1078, %v690
      %v1112 = vsel %vm1083, %v1079, %v692
      %v1113 = vsel %vm1083, %v1080, %v694
      %v1114 = vsel %vm1083, %v1081, %v696
      %v1115 = vsel %vm1083, %v1082, %v698
      %vm1116 = vcmask 97280
      %v1117 = vsel %vm1116, %v1084, %v732
      %v1118 = vsel %vm1116, %v1085, %v734
      %v1119 = vsel %vm1116, %v1086, %v736
      %v1120 = vsel %vm1116, %v1087, %v738
      %v1121 = vsel %vm1116, %v1088, %v740
      %v1122 = vsel %vm1116, %v1089, %v742
      %v1123 = vsel %vm1116, %v1090, %v744
      %v1124 = vsel %vm1116, %v1091, %v746
      %v1125 = vsel %vm1116, %v1092, %v748
      %v1126 = vsel %vm1116, %v1093, %v750
      %v1127 = vsel %vm1116, %v1094, %v752
      %v1128 = vsel %vm1116, %v1095, %v754
      %v1129 = vsel %vm1116, %v1096, %v756
      %v1130 = vsel %vm1116, %v1097, %v758
      %v1131 = vsel %vm1116, %v1098, %v760
      %v1132 = vsel %vm1116, %v1099, %v762
      %v1133 = vsel %vm1116, %v1100, %v764
      %v1134 = vsel %vm1116, %v1101, %v766
      %v1135 = vsel %vm1116, %v1102, %v768
      %v1136 = vsel %vm1116, %v1103, %v770
      %v1137 = vsel %vm1116, %v1104, %v772
      %v1138 = vsel %vm1116, %v1105, %v774
      %v1139 = vsel %vm1116, %v1106, %v776
      %v1140 = vsel %vm1116, %v1107, %v778
      %v1141 = vsel %vm1116, %v1108, %v780
      %v1142 = vsel %vm1116, %v1109, %v782
      %v1143 = vsel %vm1116, %v1110, %v784
      %v1144 = vsel %vm1116, %v1111, %v786
      %v1145 = vsel %vm1116, %v1112, %v788
      %v1146 = vsel %vm1116, %v1113, %v790
      %v1147 = vsel %vm1116, %v1114, %v792
      %v1148 = vsel %vm1116, %v1115, %v794
      %vm1149 = vcmask 121856
      %v1150 = vsel %vm1149, %v1117, %v732
      %v1151 = vsel %vm1149, %v1118, %v734
      %v1152 = vsel %vm1149, %v1119, %v736
      %v1153 = vsel %vm1149, %v1120, %v738
      %v1154 = vsel %vm1149, %v1121, %v740
      %v1155 = vsel %vm1149, %v1122, %v742
      %v1156 = vsel %vm1149, %v1123, %v744
      %v1157 = vsel %vm1149, %v1124, %v746
      %v1158 = vsel %vm1149, %v1125, %v748
      %v1159 = vsel %vm1149, %v1126, %v750
      %v1160 = vsel %vm1149, %v1127, %v752
      %v1161 = vsel %vm1149, %v1128, %v754
      %v1162 = vsel %vm1149, %v1129, %v756
      %v1163 = vsel %vm1149, %v1130, %v758
      %v1164 = vsel %vm1149, %v1131, %v760
      %v1165 = vsel %vm1149, %v1132, %v762
      %v1166 = vsel %vm1149, %v1133, %v764
      %v1167 = vsel %vm1149, %v1134, %v766
      %v1168 = vsel %vm1149, %v1135, %v768
      %v1169 = vsel %vm1149, %v1136, %v770
      %v1170 = vsel %vm1149, %v1137, %v772
      %v1171 = vsel %vm1149, %v1138, %v774
      %v1172 = vsel %vm1149, %v1139, %v776
      %v1173 = vsel %vm1149, %v1140, %v778
      %v1174 = vsel %vm1149, %v1141, %v780
      %v1175 = vsel %vm1149, %v1142, %v782
      %v1176 = vsel %vm1149, %v1143, %v784
      %v1177 = vsel %vm1149, %v1144, %v786
      %v1178 = vsel %vm1149, %v1145, %v788
      %v1179 = vsel %vm1149, %v1146, %v790
      %v1180 = vsel %vm1149, %v1147, %v792
      %v1181 = vsel %vm1149, %v1148, %v794
      %vm1182 = vcmask 146432
      %v1183 = vsel %vm1182, %v1150, %v828
      %v1184 = vsel %vm1182, %v1151, %v830
      %v1185 = vsel %vm1182, %v1152, %v832
      %v1186 = vsel %vm1182, %v1153, %v834
      %v1187 = vsel %vm1182, %v1154, %v836
      %v1188 = vsel %vm1182, %v1155, %v838
      %v1189 = vsel %vm1182, %v1156, %v840
      %v1190 = vsel %vm1182, %v1157, %v842
      %v1191 = vsel %vm1182, %v1158, %v844
      %v1192 = vsel %vm1182, %v1159, %v846
      %v1193 = vsel %vm1182, %v1160, %v848
      %v1194 = vsel %vm1182, %v1161, %v850
      %v1195 = vsel %vm1182, %v1162, %v852
      %v1196 = vsel %vm1182, %v1163, %v854
      %v1197 = vsel %vm1182, %v1164, %v856
      %v1198 = vsel %vm1182, %v1165, %v858
      %v1199 = vsel %vm1182, %v1166, %v860
      %v1200 = vsel %vm1182, %v1167, %v862
      %v1201 = vsel %vm1182, %v1168, %v864
      %v1202 = vsel %vm1182, %v1169, %v866
      %v1203 = vsel %vm1182, %v1170, %v868
      %v1204 = vsel %vm1182, %v1171, %v870
      %v1205 = vsel %vm1182, %v1172, %v872
      %v1206 = vsel %vm1182, %v1173, %v874
      %v1207 = vsel %vm1182, %v1174, %v876
      %v1208 = vsel %vm1182, %v1175, %v878
      %v1209 = vsel %vm1182, %v1176, %v880
      %v1210 = vsel %vm1182, %v1177, %v882
      %v1211 = vsel %vm1182, %v1178, %v884
      %v1212 = vsel %vm1182, %v1179, %v886
      %v1213 = vsel %vm1182, %v1180, %v888
      %v1214 = vsel %vm1182, %v1181, %v890
      %vm1215 = vcmask 171008
      %v1216 = vsel %vm1215, %v1183, %v924
      %v1217 = vsel %vm1215, %v1184, %v926
      %v1218 = vsel %vm1215, %v1185, %v928
      %v1219 = vsel %vm1215, %v1186, %v930
      %v1220 = vsel %vm1215, %v1187, %v932
      %v1221 = vsel %vm1215, %v1188, %v934
      %v1222 = vsel %vm1215, %v1189, %v936
      %v1223 = vsel %vm1215, %v1190, %v938
      %v1224 = vsel %vm1215, %v1191, %v940
      %v1225 = vsel %vm1215, %v1192, %v942
      %v1226 = vsel %vm1215, %v1193, %v944
      %v1227 = vsel %vm1215, %v1194, %v946
      %v1228 = vsel %vm1215, %v1195, %v948
      %v1229 = vsel %vm1215, %v1196, %v950
      %v1230 = vsel %vm1215, %v1197, %v952
      %v1231 = vsel %vm1215, %v1198, %v954
      %v1232 = vsel %vm1215, %v1199, %v956
      %v1233 = vsel %vm1215, %v1200, %v958
      %v1234 = vsel %vm1215, %v1201, %v960
      %v1235 = vsel %vm1215, %v1202, %v962
      %v1236 = vsel %vm1215, %v1203, %v964
      %v1237 = vsel %vm1215, %v1204, %v966
      %v1238 = vsel %vm1215, %v1205, %v968
      %v1239 = vsel %vm1215, %v1206, %v970
      %v1240 = vsel %vm1215, %v1207, %v972
      %v1241 = vsel %vm1215, %v1208, %v974
      %v1242 = vsel %vm1215, %v1209, %v976
      %v1243 = vsel %vm1215, %v1210, %v978
      %v1244 = vsel %vm1215, %v1211, %v980
      %v1245 = vsel %vm1215, %v1212, %v982
      %v1246 = vsel %vm1215, %v1213, %v984
      %v1247 = vsel %vm1215, %v1214, %v986
      %vm1248 = vcmask 195584
      %v1249 = vsel %vm1248, %v1216, %v924
      %v1250 = vsel %vm1248, %v1217, %v926
      %v1251 = vsel %vm1248, %v1218, %v928
      %v1252 = vsel %vm1248, %v1219, %v930
      %v1253 = vsel %vm1248, %v1220, %v932
      %v1254 = vsel %vm1248, %v1221, %v934
      %v1255 = vsel %vm1248, %v1222, %v936
      %v1256 = vsel %vm1248, %v1223, %v938
      %v1257 = vsel %vm1248, %v1224, %v940
      %v1258 = vsel %vm1248, %v1225, %v942
      %v1259 = vsel %vm1248, %v1226, %v944
      %v1260 = vsel %vm1248, %v1227, %v946
      %v1261 = vsel %vm1248, %v1228, %v948
      %v1262 = vsel %vm1248, %v1229, %v950
      %v1263 = vsel %vm1248, %v1230, %v952
      %v1264 = vsel %vm1248, %v1231, %v954
      %v1265 = vsel %vm1248, %v1232, %v956
      %v1266 = vsel %vm1248, %v1233, %v958
      %v1267 = vsel %vm1248, %v1234, %v960
      %v1268 = vsel %vm1248, %v1235, %v962
      %v1269 = vsel %vm1248, %v1236, %v964
      %v1270 = vsel %vm1248, %v1237, %v966
      %v1271 = vsel %vm1248, %v1238, %v968
      %v1272 = vsel %vm1248, %v1239, %v970
      %v1273 = vsel %vm1248, %v1240, %v972
      %v1274 = vsel %vm1248, %v1241, %v974
      %v1275 = vsel %vm1248, %v1242, %v976
      %v1276 = vsel %vm1248, %v1243, %v978
      %v1277 = vsel %vm1248, %v1244, %v980
      %v1278 = vsel %vm1248, %v1245, %v982
      %v1279 = vsel %vm1248, %v1246, %v984
      %v1280 = vsel %vm1248, %v1247, %v986
      %v1281 = vpack.c.bf16 %v1250, %v1249
      %v1282 = vpack.c.bf16 %v1252, %v1251
      %v1283 = vpack.c.bf16 %v1254, %v1253
      %v1284 = vpack.c.bf16 %v1256, %v1255
      %v1285 = vpack.c.bf16 %v1258, %v1257
      %v1286 = vpack.c.bf16 %v1260, %v1259
      %v1287 = vpack.c.bf16 %v1262, %v1261
      %v1288 = vpack.c.bf16 %v1264, %v1263
      %v1289 = vpack.c.bf16 %v1266, %v1265
      %v1290 = vpack.c.bf16 %v1268, %v1267
      %v1291 = vpack.c.bf16 %v1270, %v1269
      %v1292 = vpack.c.bf16 %v1272, %v1271
      %v1293 = vpack.c.bf16 %v1274, %v1273
      %v1294 = vpack.c.bf16 %v1276, %v1275
      %v1295 = vpack.c.bf16 %v1278, %v1277
      %v1296 = vpack.c.bf16 %v1280, %v1279
      %v1297 = vld [vmem:[%s1] sm:$0xf]
      %v1298 = vld [vmem:[%s1 + $0x4] sm:$0xf]
      %v1299 = vld [vmem:[%s1 + $0x8] sm:$0xf]
      %v1300 = vld [vmem:[%s1 + $0xc] sm:$0x3]
      %v1301 = vld [vmem:[%s2] sm:$0x1]
      %v1303 = vlaneseq
      %v1304 = vshrl.u32 %v1303, 7
      %v1305 = vsub.s32 0, %v1304
      %v1306 = vrot.slane %v1301, %v1305
      %v1312 = vunpack.c.l.b16 %v1297
      %v1313 = vunpack.c.l.b16 %v1298
      %v1314 = vunpack.c.l.b16 %v1299
      %v1315 = vunpack.c.l.b16 %v1300
      %v1316 = vpack.c.b16 %v1313, %v1312
      %v1317 = vpack.c.b16 %v1315, %v1314
      %vm1319 = vcmask 220160
      %v1321 = vsel %vm1319, %v1281, 0
      %v1324 = vsel %vm1319, %v1282, 0
      %v1327 = vsel %vm1319, %v1283, 0
      %v1330 = vsel %vm1319, %v1284, 0
      %v1333 = vsel %vm1319, %v1285, 0
      %v1336 = vsel %vm1319, %v1286, 0
      %v1339 = vsel %vm1319, %v1287, 0
      %v1342 = vsel %vm1319, %v1288, 0
      %v1345 = vsel %vm1319, %v1289, 0
      %v1348 = vsel %vm1319, %v1290, 0
      %v1351 = vsel %vm1319, %v1291, 0
      %v1354 = vsel %vm1319, %v1292, 0
      %v1357 = vsel %vm1319, %v1293, 0
      %v1360 = vsel %vm1319, %v1294, 0
      %v1363 = vsel %vm1319, %v1295, 0
      %v1366 = vsel %vm1319, %v1296, 0
      %vm1368 = vcmask 1044480
      %vm1369 = vcmask 1045504
      %v1370 = vsel %vm1368, 4294967295, 65535
      %v1371 = vsel %vm1369, %v1370, 0
      %v1373 = vand.u32 %v1317, %v1371
      %1375 = vmatprep.subr.bf16.mxu0 0
      %1376 = vmatpush1.bf16.msra.mxu0 %v1316
      %1377 = vmatprep.subr.bf16.mxu0 0
      %1378 = vmatpush1.bf16.msra.mxu0 %v1373
      %1379 = vmatprep.subr.bf16.mxu0 0
      %1380 = vmatpush1.bf16.msra.mxu0 0
      %1381 = vmatprep.subr.bf16.mxu0 0
      %1382 = vmatpush1.bf16.msra.mxu0 0
      %1383 = vmatprep.subr.bf16.mxu0 0
      %1384 = vmatpush1.bf16.msra.mxu0 0
      %1385 = vmatprep.subr.bf16.mxu0 0
      %1386 = vmatpush1.bf16.msra.mxu0 0
      %1387 = vmatprep.subr.bf16.mxu0 0
      %1388 = vmatpush1.bf16.msra.mxu0 0
      %1389 = vmatprep.subr.bf16.mxu0 0
      %1390 = vmatpush1.bf16.msra.mxu0 0
      %1391 = vmatprep.subr.bf16.mxu0 0
      %1392 = vmatpush1.bf16.msra.mxu0 0
      %1393 = vmatprep.subr.bf16.mxu0 0
      %1394 = vmatpush1.bf16.msra.mxu0 0
      %1395 = vmatprep.subr.bf16.mxu0 0
      %1396 = vmatpush1.bf16.msra.mxu0 0
      %1397 = vmatprep.subr.bf16.mxu0 0
      %1398 = vmatpush1.bf16.msra.mxu0 0
      %1399 = vmatprep.subr.bf16.mxu0 0
      %1400 = vmatpush1.bf16.msra.mxu0 0
      %1401 = vmatprep.subr.bf16.mxu0 0
      %1402 = vmatpush1.bf16.msra.mxu0 0
      %1403 = vmatprep.subr.bf16.mxu0 0
      %1404 = vmatpush1.bf16.msra.mxu0 0
      %1405 = vmatprep.subr.bf16.mxu0 0
      %1406 = vmatpush1.bf16.msra.mxu0 0
      %1407 = vmatprep.mubr.bf16.mxu0 0
      %1408 = vmatmul.mubr.bf16.gmra.mrb[0].mxu0 %v1321
      %v1409 = vpop.f32.mrb[0].mxu0
      %v1410 = vadd.f32 %v1306, %v1409
      %v1411 = vpop.f32.mrb[0].mxu0
      %v1412 = vpop.f32.mrb[0].mxu0
      %v1413 = vadd.f32 %v1306, %v1412
      %v1414 = vpop.f32.mrb[0].mxu0
      %1415 = vmatprep.mubr.bf16.mxu0 0
      %1416 = vmatmul.mubr.bf16.gmra.mrb[0].mxu0 %v1324
      %v1417 = vpop.f32.mrb[0].mxu0
      %v1418 = vadd.f32 %v1306, %v1417
      %v1419 = vpop.f32.mrb[0].mxu0
      %v1420 = vpop.f32.mrb[0].mxu0
      %v1421 = vadd.f32 %v1306, %v1420
      %v1422 = vpop.f32.mrb[0].mxu0
      %1423 = vmatprep.mubr.bf16.mxu0 0
      %1424 = vmatmul.mubr.bf16.gmra.mrb[0].mxu0 %v1327
      %v1425 = vpop.f32.mrb[0].mxu0
      %v1426 = vadd.f32 %v1306, %v1425
      %v1427 = vpop.f32.mrb[0].mxu0
      %v1428 = vpop.f32.mrb[0].mxu0
      %v1429 = vadd.f32 %v1306, %v1428
      %v1430 = vpop.f32.mrb[0].mxu0
      %1431 = vmatprep.mubr.bf16.mxu0 0
      %1432 = vmatmul.mubr.bf16.gmra.mrb[0].mxu0 %v1330
      %v1433 = vpop.f32.mrb[0].mxu0
      %v1434 = vadd.f32 %v1306, %v1433
      %v1435 = vpop.f32.mrb[0].mxu0
      %v1436 = vpop.f32.mrb[0].mxu0
      %v1437 = vadd.f32 %v1306, %v1436
      %v1438 = vpop.f32.mrb[0].mxu0
      %1439 = vmatprep.mubr.bf16.mxu0 0
      %1440 = vmatmul.mubr.bf16.gmra.mrb[0].mxu0 %v1333
      %v1441 = vpop.f32.mrb[0].mxu0
      %v1442 = vadd.f32 %v1306, %v1441
      %v1443 = vpop.f32.mrb[0].mxu0
      %v1444 = vpop.f32.mrb[0].mxu0
      %v1445 = vadd.f32 %v1306, %v1444
      %v1446 = vpop.f32.mrb[0].mxu0
      %1447 = vmatprep.mubr.bf16.mxu0 0
      %1448 = vmatmul.mubr.bf16.gmra.mrb[0].mxu0 %v1336
      %v1449 = vpop.f32.mrb[0].mxu0
      %v1450 = vadd.f32 %v1306, %v1449
      %v1451 = vpop.f32.mrb[0].mxu0
      %v1452 = vpop.f32.mrb[0].mxu0
      %v1453 = vadd.f32 %v1306, %v1452
      %v1454 = vpop.f32.mrb[0].mxu0
      %1455 = vmatprep.mubr.bf16.mxu0 0
      %1456 = vmatmul.mubr.bf16.gmra.mrb[0].mxu0 %v1339
      %v1457 = vpop.f32.mrb[0].mxu0
      %v1458 = vadd.f32 %v1306, %v1457
      %v1459 = vpop.f32.mrb[0].mxu0
      %v1460 = vpop.f32.mrb[0].mxu0
      %v1461 = vadd.f32 %v1306, %v1460
      %v1462 = vpop.f32.mrb[0].mxu0
      %1463 = vmatprep.mubr.bf16.mxu0 0
      %1464 = vmatmul.mubr.bf16.gmra.mrb[0].mxu0 %v1342
      %v1465 = vpop.f32.mrb[0].mxu0
      %v1466 = vadd.f32 %v1306, %v1465
      %v1467 = vpop.f32.mrb[0].mxu0
      %v1468 = vpop.f32.mrb[0].mxu0
      %v1469 = vadd.f32 %v1306, %v1468
      %v1470 = vpop.f32.mrb[0].mxu0
      %1471 = vmatprep.mubr.bf16.mxu0 0
      %1472 = vmatmul.mubr.bf16.gmra.mrb[0].mxu0 %v1345
      %v1473 = vpop.f32.mrb[0].mxu0
      %v1474 = vadd.f32 %v1306, %v1473
      %v1475 = vpop.f32.mrb[0].mxu0
      %v1476 = vpop.f32.mrb[0].mxu0
      %v1477 = vadd.f32 %v1306, %v1476
      %v1478 = vpop.f32.mrb[0].mxu0
      %1479 = vmatprep.mubr.bf16.mxu0 0
      %1480 = vmatmul.mubr.bf16.gmra.mrb[0].mxu0 %v1348
      %v1481 = vpop.f32.mrb[0].mxu0
      %v1482 = vadd.f32 %v1306, %v1481
      %v1483 = vpop.f32.mrb[0].mxu0
      %v1484 = vpop.f32.mrb[0].mxu0
      %v1485 = vadd.f32 %v1306, %v1484
      %v1486 = vpop.f32.mrb[0].mxu0
      %1487 = vmatprep.mubr.bf16.mxu0 0
      %1488 = vmatmul.mubr.bf16.gmra.mrb[0].mxu0 %v1351
      %v1489 = vpop.f32.mrb[0].mxu0
      %v1490 = vadd.f32 %v1306, %v1489
      %v1491 = vpop.f32.mrb[0].mxu0
      %v1492 = vpop.f32.mrb[0].mxu0
      %v1493 = vadd.f32 %v1306, %v1492
      %v1494 = vpop.f32.mrb[0].mxu0
      %1495 = vmatprep.mubr.bf16.mxu0 0
      %1496 = vmatmul.mubr.bf16.gmra.mrb[0].mxu0 %v1354
      %v1497 = vpop.f32.mrb[0].mxu0
      %v1498 = vadd.f32 %v1306, %v1497
      %v1499 = vpop.f32.mrb[0].mxu0
      %v1500 = vpop.f32.mrb[0].mxu0
      %v1501 = vadd.f32 %v1306, %v1500
      %v1502 = vpop.f32.mrb[0].mxu0
      %1503 = vmatprep.mubr.bf16.mxu0 0
      %1504 = vmatmul.mubr.bf16.gmra.mrb[0].mxu0 %v1357
      %v1505 = vpop.f32.mrb[0].mxu0
      %v1506 = vadd.f32 %v1306, %v1505
      %v1507 = vpop.f32.mrb[0].mxu0
      %v1508 = vpop.f32.mrb[0].mxu0
      %v1509 = vadd.f32 %v1306, %v1508
      %v1510 = vpop.f32.mrb[0].mxu0
      %1511 = vmatprep.mubr.bf16.mxu0 0
      %1512 = vmatmul.mubr.bf16.gmra.mrb[0].mxu0 %v1360
      %v1513 = vpop.f32.mrb[0].mxu0
      %v1514 = vadd.f32 %v1306, %v1513
      %v1515 = vpop.f32.mrb[0].mxu0
      %v1516 = vpop.f32.mrb[0].mxu0
      %v1517 = vadd.f32 %v1306, %v1516
      %v1518 = vpop.f32.mrb[0].mxu0
      %1519 = vmatprep.mubr.bf16.mxu0 0
      %1520 = vmatmul.mubr.bf16.gmra.mrb[0].mxu0 %v1363
      %v1521 = vpop.f32.mrb[0].mxu0
      %v1522 = vadd.f32 %v1306, %v1521
      %v1523 = vpop.f32.mrb[0].mxu0
      %v1524 = vpop.f32.mrb[0].mxu0
      %v1525 = vadd.f32 %v1306, %v1524
      %v1526 = vpop.f32.mrb[0].mxu0
      %1527 = vmatprep.mubr.bf16.mxu0 0
      %1528 = vmatmul.mubr.bf16.gmra.mrb[0].mxu0 %v1366
      %v1529 = vpop.f32.mrb[0].mxu0
      %v1530 = vadd.f32 %v1306, %v1529
      %v1531 = vpop.f32.mrb[0].mxu0
      %v1532 = vpop.f32.mrb[0].mxu0
      %v1533 = vadd.f32 %v1306, %v1532
      %v1534 = vpop.f32.mrb[0].mxu0
      %1535 = vdwg.mxu0
      %v1536 = vmul.f32 %v1410, 0.5
      %v1537 = vmul.f32 %v1413, 0.5
      %v1538 = vmul.f32 %v1418, 0.5
      %v1539 = vmul.f32 %v1421, 0.5
      %v1540 = vmul.f32 %v1426, 0.5
      %v1541 = vmul.f32 %v1429, 0.5
      %v1542 = vmul.f32 %v1434, 0.5
      %v1543 = vmul.f32 %v1437, 0.5
      %v1544 = vmul.f32 %v1442, 0.5
      %v1545 = vmul.f32 %v1445, 0.5
      %v1546 = vmul.f32 %v1450, 0.5
      %v1547 = vmul.f32 %v1453, 0.5
      %v1548 = vmul.f32 %v1458, 0.5
      %v1549 = vmul.f32 %v1461, 0.5
      %v1550 = vmul.f32 %v1466, 0.5
      %v1551 = vmul.f32 %v1469, 0.5
      %v1552 = vmul.f32 %v1474, 0.5
      %v1553 = vmul.f32 %v1477, 0.5
      %v1554 = vmul.f32 %v1482, 0.5
      %v1555 = vmul.f32 %v1485, 0.5
      %v1556 = vmul.f32 %v1490, 0.5
      %v1557 = vmul.f32 %v1493, 0.5
      %v1558 = vmul.f32 %v1498, 0.5
      %v1559 = vmul.f32 %v1501, 0.5
      %v1560 = vmul.f32 %v1506, 0.5
      %v1561 = vmul.f32 %v1509, 0.5
      %v1562 = vmul.f32 %v1514, 0.5
      %v1563 = vmul.f32 %v1517, 0.5
      %v1564 = vmul.f32 %v1522, 0.5
      %v1565 = vmul.f32 %v1525, 0.5
      %v1566 = vmul.f32 %v1530, 0.5
      %v1567 = vmul.f32 %v1533, 0.5
      %v1568 = vmul.f32 %v1410, 0.044715
      %v1569 = vmul.f32 %v1413, 0.044715
      %v1570 = vmul.f32 %v1418, 0.044715
      %v1571 = vmul.f32 %v1421, 0.044715
      %v1572 = vmul.f32 %v1426, 0.044715
      %v1573 = vmul.f32 %v1429, 0.044715
      %v1574 = vmul.f32 %v1434, 0.044715
      %v1575 = vmul.f32 %v1437, 0.044715
      %v1576 = vmul.f32 %v1442, 0.044715
      %v1577 = vmul.f32 %v1445, 0.044715
      %v1578 = vmul.f32 %v1450, 0.044715
      %v1579 = vmul.f32 %v1453, 0.044715
      %v1580 = vmul.f32 %v1458, 0.044715
      %v1581 = vmul.f32 %v1461, 0.044715
      %v1582 = vmul.f32 %v1466, 0.044715
      %v1583 = vmul.f32 %v1469, 0.044715
      %v1584 = vmul.f32 %v1474, 0.044715
      %v1585 = vmul.f32 %v1477, 0.044715
      %v1586 = vmul.f32 %v1482, 0.044715
      %v1587 = vmul.f32 %v1485, 0.044715
      %v1588 = vmul.f32 %v1490, 0.044715
      %v1589 = vmul.f32 %v1493, 0.044715
      %v1590 = vmul.f32 %v1498, 0.044715
      %v1591 = vmul.f32 %v1501, 0.044715
      %v1592 = vmul.f32 %v1506, 0.044715
      %v1593 = vmul.f32 %v1509, 0.044715
      %v1594 = vmul.f32 %v1514, 0.044715
      %v1595 = vmul.f32 %v1517, 0.044715
      %v1596 = vmul.f32 %v1522, 0.044715
      %v1597 = vmul.f32 %v1525, 0.044715
      %v1598 = vmul.f32 %v1530, 0.044715
      %v1599 = vmul.f32 %v1533, 0.044715
      %v1600 = vmul.f32 %v1568, %v1410
      %v1601 = vmul.f32 %v1569, %v1413
      %v1602 = vmul.f32 %v1570, %v1418
      %v1603 = vmul.f32 %v1571, %v1421
      %v1604 = vmul.f32 %v1572, %v1426
      %v1605 = vmul.f32 %v1573, %v1429
      %v1606 = vmul.f32 %v1574, %v1434
      %v1607 = vmul.f32 %v1575, %v1437
      %v1608 = vmul.f32 %v1576, %v1442
      %v1609 = vmul.f32 %v1577, %v1445
      %v1610 = vmul.f32 %v1578, %v1450
      %v1611 = vmul.f32 %v1579, %v1453
      %v1612 = vmul.f32 %v1580, %v1458
      %v1613 = vmul.f32 %v1581, %v1461
      %v1614 = vmul.f32 %v1582, %v1466
      %v1615 = vmul.f32 %v1583, %v1469
      %v1616 = vmul.f32 %v1584, %v1474
      %v1617 = vmul.f32 %v1585, %v1477
      %v1618 = vmul.f32 %v1586, %v1482
      %v1619 = vmul.f32 %v1587, %v1485
      %v1620 = vmul.f32 %v1588, %v1490
      %v1621 = vmul.f32 %v1589, %v1493
      %v1622 = vmul.f32 %v1590, %v1498
      %v1623 = vmul.f32 %v1591, %v1501
      %v1624 = vmul.f32 %v1592, %v1506
      %v1625 = vmul.f32 %v1593, %v1509
      %v1626 = vmul.f32 %v1594, %v1514
      %v1627 = vmul.f32 %v1595, %v1517
      %v1628 = vmul.f32 %v1596, %v1522
      %v1629 = vmul.f32 %v1597, %v1525
      %v1630 = vmul.f32 %v1598, %v1530
      %v1631 = vmul.f32 %v1599, %v1533
      %v1632 = vmul.f32 %v1600, %v1410
      %v1633 = vmul.f32 %v1601, %v1413
      %v1634 = vmul.f32 %v1602, %v1418
      %v1635 = vmul.f32 %v1603, %v1421
      %v1636 = vmul.f32 %v1604, %v1426
      %v1637 = vmul.f32 %v1605, %v1429
      %v1638 = vmul.f32 %v1606, %v1434
      %v1639 = vmul.f32 %v1607, %v1437
      %v1640 = vmul.f32 %v1608, %v1442
      %v1641 = vmul.f32 %v1609, %v1445
      %v1642 = vmul.f32 %v1610, %v1450
      %v1643 = vmul.f32 %v1611, %v1453
      %v1644 = vmul.f32 %v1612, %v1458
      %v1645 = vmul.f32 %v1613, %v1461
      %v1646 = vmul.f32 %v1614, %v1466
      %v1647 = vmul.f32 %v1615, %v1469
      %v1648 = vmul.f32 %v1616, %v1474
      %v1649 = vmul.f32 %v1617, %v1477
      %v1650 = vmul.f32 %v1618, %v1482
      %v1651 = vmul.f32 %v1619, %v1485
      %v1652 = vmul.f32 %v1620, %v1490
      %v1653 = vmul.f32 %v1621, %v1493
      %v1654 = vmul.f32 %v1622, %v1498
      %v1655 = vmul.f32 %v1623, %v1501
      %v1656 = vmul.f32 %v1624, %v1506
      %v1657 = vmul.f32 %v1625, %v1509
      %v1658 = vmul.f32 %v1626, %v1514
      %v1659 = vmul.f32 %v1627, %v1517
      %v1660 = vmul.f32 %v1628, %v1522
      %v1661 = vmul.f32 %v1629, %v1525
      %v1662 = vmul.f32 %v1630, %v1530
      %v1663 = vmul.f32 %v1631, %v1533
      %v1664 = vadd.f32 %v1410, %v1632
      %v1665 = vadd.f32 %v1413, %v1633
      %v1666 = vadd.f32 %v1418, %v1634
      %v1667 = vadd.f32 %v1421, %v1635
      %v1668 = vadd.f32 %v1426, %v1636
      %v1669 = vadd.f32 %v1429, %v1637
      %v1670 = vadd.f32 %v1434, %v1638
      %v1671 = vadd.f32 %v1437, %v1639
      %v1672 = vadd.f32 %v1442, %v1640
      %v1673 = vadd.f32 %v1445, %v1641
      %v1674 = vadd.f32 %v1450, %v1642
      %v1675 = vadd.f32 %v1453, %v1643
      %v1676 = vadd.f32 %v1458, %v1644
      %v1677 = vadd.f32 %v1461, %v1645
      %v1678 = vadd.f32 %v1466, %v1646
      %v1679 = vadd.f32 %v1469, %v1647
      %v1680 = vadd.f32 %v1474, %v1648
      %v1681 = vadd.f32 %v1477, %v1649
      %v1682 = vadd.f32 %v1482, %v1650
      %v1683 = vadd.f32 %v1485, %v1651
      %v1684 = vadd.f32 %v1490, %v1652
      %v1685 = vadd.f32 %v1493, %v1653
      %v1686 = vadd.f32 %v1498, %v1654
      %v1687 = vadd.f32 %v1501, %v1655
      %v1688 = vadd.f32 %v1506, %v1656
      %v1689 = vadd.f32 %v1509, %v1657
      %v1690 = vadd.f32 %v1514, %v1658
      %v1691 = vadd.f32 %v1517, %v1659
      %v1692 = vadd.f32 %v1522, %v1660
      %v1693 = vadd.f32 %v1525, %v1661
      %v1694 = vadd.f32 %v1530, %v1662
      %v1695 = vadd.f32 %v1533, %v1663
      %v1696 = vmul.f32 %v1664, 0.7978846
      %v1697 = vmul.f32 %v1665, 0.7978846
      %v1698 = vmul.f32 %v1666, 0.7978846
      %v1699 = vmul.f32 %v1667, 0.7978846
      %v1700 = vmul.f32 %v1668, 0.7978846
      %v1701 = vmul.f32 %v1669, 0.7978846
      %v1702 = vmul.f32 %v1670, 0.7978846
      %v1703 = vmul.f32 %v1671, 0.7978846
      %v1704 = vmul.f32 %v1672, 0.7978846
      %v1705 = vmul.f32 %v1673, 0.7978846
      %v1706 = vmul.f32 %v1674, 0.7978846
      %v1707 = vmul.f32 %v1675, 0.7978846
      %v1708 = vmul.f32 %v1676, 0.7978846
      %v1709 = vmul.f32 %v1677, 0.7978846
      %v1710 = vmul.f32 %v1678, 0.7978846
      %v1711 = vmul.f32 %v1679, 0.7978846
      %v1712 = vmul.f32 %v1680, 0.7978846
      %v1713 = vmul.f32 %v1681, 0.7978846
      %v1714 = vmul.f32 %v1682, 0.7978846
      %v1715 = vmul.f32 %v1683, 0.7978846
      %v1716 = vmul.f32 %v1684, 0.7978846
      %v1717 = vmul.f32 %v1685, 0.7978846
      %v1718 = vmul.f32 %v1686, 0.7978846
      %v1719 = vmul.f32 %v1687, 0.7978846
      %v1720 = vmul.f32 %v1688, 0.7978846
      %v1721 = vmul.f32 %v1689, 0.7978846
      %v1722 = vmul.f32 %v1690, 0.7978846
      %v1723 = vmul.f32 %v1691, 0.7978846
      %v1724 = vmul.f32 %v1692, 0.7978846
      %v1725 = vmul.f32 %v1693, 0.7978846
      %v1726 = vmul.f32 %v1694, 0.7978846
      %v1727 = vmul.f32 %v1695, 0.7978846
      %v1728 = vtanh.pop %v1696
      %v1729 = vtanh.pop %v1697
      %v1730 = vtanh.pop %v1698
      %v1731 = vtanh.pop %v1699
      %v1732 = vtanh.pop %v1700
      %v1733 = vtanh.pop %v1701
      %v1734 = vtanh.pop %v1702
      %v1735 = vtanh.pop %v1703
      %v1736 = vtanh.pop %v1704
      %v1737 = vtanh.pop %v1705
      %v1738 = vtanh.pop %v1706
      %v1739 = vtanh.pop %v1707
      %v1740 = vtanh.pop %v1708
      %v1741 = vtanh.pop %v1709
      %v1742 = vtanh.pop %v1710
      %v1743 = vtanh.pop %v1711
      %v1744 = vtanh.pop %v1712
      %v1745 = vtanh.pop %v1713
      %v1746 = vtanh.pop %v1714
      %v1747 = vtanh.pop %v1715
      %v1748 = vtanh.pop %v1716
      %v1749 = vtanh.pop %v1717
      %v1750 = vtanh.pop %v1718
      %v1751 = vtanh.pop %v1719
      %v1752 = vtanh.pop %v1720
      %v1753 = vtanh.pop %v1721
      %v1754 = vtanh.pop %v1722
      %v1755 = vtanh.pop %v1723
      %v1756 = vtanh.pop %v1724
      %v1757 = vtanh.pop %v1725
      %v1758 = vtanh.pop %v1726
      %v1759 = vtanh.pop %v1727
      %v1760 = vadd.f32 %v1728, 1.0
      %v1761 = vadd.f32 %v1729, 1.0
      %v1762 = vadd.f32 %v1730, 1.0
      %v1763 = vadd.f32 %v1731, 1.0
      %v1764 = vadd.f32 %v1732, 1.0
      %v1765 = vadd.f32 %v1733, 1.0
      %v1766 = vadd.f32 %v1734, 1.0
      %v1767 = vadd.f32 %v1735, 1.0
      %v1768 = vadd.f32 %v1736, 1.0
      %v1769 = vadd.f32 %v1737, 1.0
      %v1770 = vadd.f32 %v1738, 1.0
      %v1771 = vadd.f32 %v1739, 1.0
      %v1772 = vadd.f32 %v1740, 1.0
      %v1773 = vadd.f32 %v1741, 1.0
      %v1774 = vadd.f32 %v1742, 1.0
      %v1775 = vadd.f32 %v1743, 1.0
      %v1776 = vadd.f32 %v1744, 1.0
      %v1777 = vadd.f32 %v1745, 1.0
      %v1778 = vadd.f32 %v1746, 1.0
      %v1779 = vadd.f32 %v1747, 1.0
      %v1780 = vadd.f32 %v1748, 1.0
      %v1781 = vadd.f32 %v1749, 1.0
      %v1782 = vadd.f32 %v1750, 1.0
      %v1783 = vadd.f32 %v1751, 1.0
      %v1784 = vadd.f32 %v1752, 1.0
      %v1785 = vadd.f32 %v1753, 1.0
      %v1786 = vadd.f32 %v1754, 1.0
      %v1787 = vadd.f32 %v1755, 1.0
      %v1788 = vadd.f32 %v1756, 1.0
      %v1789 = vadd.f32 %v1757, 1.0
      %v1790 = vadd.f32 %v1758, 1.0
      %v1791 = vadd.f32 %v1759, 1.0
      %v1792 = vmul.f32 %v1536, %v1760
      %v1793 = vmul.f32 %v1537, %v1761
      %v1794 = vmul.f32 %v1538, %v1762
      %v1795 = vmul.f32 %v1539, %v1763
      %v1796 = vmul.f32 %v1540, %v1764
      %v1797 = vmul.f32 %v1541, %v1765
      %v1798 = vmul.f32 %v1542, %v1766
      %v1799 = vmul.f32 %v1543, %v1767
      %v1800 = vmul.f32 %v1544, %v1768
      %v1801 = vmul.f32 %v1545, %v1769
      %v1802 = vmul.f32 %v1546, %v1770
      %v1803 = vmul.f32 %v1547, %v1771
      %v1804 = vmul.f32 %v1548, %v1772
      %v1805 = vmul.f32 %v1549, %v1773
      %v1806 = vmul.f32 %v1550, %v1774
      %v1807 = vmul.f32 %v1551, %v1775
      %v1808 = vmul.f32 %v1552, %v1776
      %v1809 = vmul.f32 %v1553, %v1777
      %v1810 = vmul.f32 %v1554, %v1778
      %v1811 = vmul.f32 %v1555, %v1779
      %v1812 = vmul.f32 %v1556, %v1780
      %v1813 = vmul.f32 %v1557, %v1781
      %v1814 = vmul.f32 %v1558, %v1782
      %v1815 = vmul.f32 %v1559, %v1783
      %v1816 = vmul.f32 %v1560, %v1784
      %v1817 = vmul.f32 %v1561, %v1785
      %v1818 = vmul.f32 %v1562, %v1786
      %v1819 = vmul.f32 %v1563, %v1787
      %v1820 = vmul.f32 %v1564, %v1788
      %v1821 = vmul.f32 %v1565, %v1789
      %v1822 = vmul.f32 %v1566, %v1790
      %v1823 = vmul.f32 %v1567, %v1791
      %v1824 = vpack.c.bf16 %v1793, %v1792
      %v1825 = vpack.c.bf16 %v1795, %v1794
      %v1826 = vpack.c.bf16 %v1797, %v1796
      %v1827 = vpack.c.bf16 %v1799, %v1798
      %v1828 = vpack.c.bf16 %v1801, %v1800
      %v1829 = vpack.c.bf16 %v1803, %v1802
      %v1830 = vpack.c.bf16 %v1805, %v1804
      %v1831 = vpack.c.bf16 %v1807, %v1806
      %v1832 = vpack.c.bf16 %v1809, %v1808
      %v1833 = vpack.c.bf16 %v1811, %v1810
      %v1834 = vpack.c.bf16 %v1813, %v1812
      %v1835 = vpack.c.bf16 %v1815, %v1814
      %v1836 = vpack.c.bf16 %v1817, %v1816
      %v1837 = vpack.c.bf16 %v1819, %v1818
      %v1838 = vpack.c.bf16 %v1821, %v1820
      %v1839 = vpack.c.bf16 %v1823, %v1822
      %v1856 = vunpack.c.l.b16 %v1824
      %v1857 = vunpack.c.h.b16 %v1824
      %v1858 = vunpack.c.l.b16 %v1825
      %v1859 = vunpack.c.h.b16 %v1825
      %v1860 = vunpack.c.l.b16 %v1826
      %v1861 = vunpack.c.h.b16 %v1826
      %v1862 = vunpack.c.l.b16 %v1827
      %v1863 = vunpack.c.h.b16 %v1827
      %v1864 = vunpack.c.l.b16 %v1828
      %v1865 = vunpack.c.h.b16 %v1828
      %v1866 = vunpack.c.l.b16 %v1829
      %v1867 = vunpack.c.h.b16 %v1829
      %v1868 = vunpack.c.l.b16 %v1830
      %v1869 = vunpack.c.h.b16 %v1830
      %v1870 = vunpack.c.l.b16 %v1831
      %v1871 = vunpack.c.h.b16 %v1831
      %v1872 = vunpack.c.l.b16 %v1832
      %v1873 = vunpack.c.h.b16 %v1832
      %v1874 = vunpack.c.l.b16 %v1833
      %v1875 = vunpack.c.h.b16 %v1833
      %v1876 = vunpack.c.l.b16 %v1834
      %v1877 = vunpack.c.h.b16 %v1834
      %v1878 = vunpack.c.l.b16 %v1835
      %v1879 = vunpack.c.h.b16 %v1835
      %v1880 = vunpack.c.l.b16 %v1836
      %v1881 = vunpack.c.h.b16 %v1836
      %v1882 = vunpack.c.l.b16 %v1837
      %v1883 = vunpack.c.h.b16 %v1837
      %v1884 = vunpack.c.l.b16 %v1838
      %v1885 = vunpack.c.h.b16 %v1838
      %v1886 = vunpack.c.l.b16 %v1839
      %v1887 = vunpack.c.h.b16 %v1839
      %v1888 = vpack.c.b16 %v1856, %v1856
      %v1889 = vpack.c.b16 %v1857, %v1857
      %v1890 = vpack.c.b16 %v1858, %v1858
      %v1891 = vpack.c.b16 %v1859, %v1859
      %v1892 = vpack.c.b16 %v1860, %v1860
      %v1893 = vpack.c.b16 %v1861, %v1861
      %v1894 = vpack.c.b16 %v1862, %v1862
      %v1895 = vpack.c.b16 %v1863, %v1863
      %v1896 = vpack.c.b16 %v1864, %v1864
      %v1897 = vpack.c.b16 %v1865, %v1865
      %v1898 = vpack.c.b16 %v1866, %v1866
      %v1899 = vpack.c.b16 %v1867, %v1867
      %v1900 = vpack.c.b16 %v1868, %v1868
      %v1901 = vpack.c.b16 %v1869, %v1869
      %v1902 = vpack.c.b16 %v1870, %v1870
      %v1903 = vpack.c.b16 %v1871, %v1871
      %v1904 = vpack.c.b16 %v1872, %v1872
      %v1905 = vpack.c.b16 %v1873, %v1873
      %v1906 = vpack.c.b16 %v1874, %v1874
      %v1907 = vpack.c.b16 %v1875, %v1875
      %v1908 = vpack.c.b16 %v1876, %v1876
      %v1909 = vpack.c.b16 %v1877, %v1877
      %v1910 = vpack.c.b16 %v1878, %v1878
      %v1911 = vpack.c.b16 %v1879, %v1879
      %v1912 = vpack.c.b16 %v1880, %v1880
      %v1913 = vpack.c.b16 %v1881, %v1881
      %v1914 = vpack.c.b16 %v1882, %v1882
      %v1915 = vpack.c.b16 %v1883, %v1883
      %v1916 = vpack.c.b16 %v1884, %v1884
      %v1917 = vpack.c.b16 %v1885, %v1885
      %v1918 = vpack.c.b16 %v1886, %v1886
      %v1919 = vpack.c.b16 %v1887, %v1887
      %vm1952 = vcmask 60416
      %1953 = vst.msk [vmem:[%s170] sm:$0xf] %vm1952, %v1888
      %1954 = vst.msk [vmem:[%s170 + $0x4] sm:$0xf] %vm1952, %v1889
      %1955 = vst.msk [vmem:[%s170 + $0x8] sm:$0xf] %vm1952, %v1890
      %1956 = vst.msk [vmem:[%s170 + $0xc] sm:$0xf] %vm1952, %v1891
      %1957 = vst.msk [vmem:[%s170 + $0x10] sm:$0xf] %vm1952, %v1892
      %1958 = vst.msk [vmem:[%s170 + $0x14] sm:$0xf] %vm1952, %v1893
      %1959 = vst.msk [vmem:[%s170 + $0x18] sm:$0xf] %vm1952, %v1894
      %1960 = vst.msk [vmem:[%s170 + $0x1c] sm:$0xf] %vm1952, %v1895
      %1961 = vst.msk [vmem:[%s170 + $0x20] sm:$0xf] %vm1952, %v1896
      %1962 = vst.msk [vmem:[%s170 + $0x24] sm:$0xf] %vm1952, %v1897
      %1963 = vst.msk [vmem:[%s170 + $0x28] sm:$0xf] %vm1952, %v1898
      %1964 = vst.msk [vmem:[%s170 + $0x2c] sm:$0xf] %vm1952, %v1899
      %1965 = vst.msk [vmem:[%s170 + $0x30] sm:$0xf] %vm1952, %v1900
      %1966 = vst.msk [vmem:[%s170 + $0x34] sm:$0xf] %vm1952, %v1901
      %1967 = vst.msk [vmem:[%s170 + $0x38] sm:$0xf] %vm1952, %v1902
      %1968 = vst.msk [vmem:[%s170 + $0x3c] sm:$0xf] %vm1952, %v1903
      %1969 = vst.msk [vmem:[%s170 + $0x40] sm:$0xf] %vm1952, %v1904
      %1970 = vst.msk [vmem:[%s170 + $0x44] sm:$0xf] %vm1952, %v1905
      %1971 = vst.msk [vmem:[%s170 + $0x48] sm:$0xf] %vm1952, %v1906
      %1972 = vst.msk [vmem:[%s170 + $0x4c] sm:$0xf] %vm1952, %v1907
      %1973 = vst.msk [vmem:[%s170 + $0x50] sm:$0xf] %vm1952, %v1908
      %1974 = vst.msk [vmem:[%s170 + $0x54] sm:$0xf] %vm1952, %v1909
      %1975 = vst.msk [vmem:[%s170 + $0x58] sm:$0xf] %vm1952, %v1910
      %1976 = vst.msk [vmem:[%s170 + $0x5c] sm:$0xf] %vm1952, %v1911
      %1977 = vst.msk [vmem:[%s170 + $0x60] sm:$0xf] %vm1952, %v1912
      %1978 = vst.msk [vmem:[%s170 + $0x64] sm:$0xf] %vm1952, %v1913
      %1979 = vst.msk [vmem:[%s170 + $0x68] sm:$0xf] %vm1952, %v1914
      %1980 = vst.msk [vmem:[%s170 + $0x6c] sm:$0xf] %vm1952, %v1915
      %1981 = vst.msk [vmem:[%s170 + $0x70] sm:$0xf] %vm1952, %v1916
      %1982 = vst.msk [vmem:[%s170 + $0x74] sm:$0xf] %vm1952, %v1917
      %1983 = vst.msk [vmem:[%s170 + $0x78] sm:$0xf] %vm1952, %v1918
      %1984 = vst.msk [vmem:[%s170 + $0x7c] sm:$0xf] %vm1952, %v1919
      %p1985 = scmp.lt.s32.totalorder %s14, 1
      %s1986 = scalar_select %p1985, %s14, 1
      %s1987 = smul.addr %s1986, 32
      %s1988 = smul.addr %s1987, 4
      %s1989 = scalar_lea.vmem %s3, %s1988
      // Predicated region
      $region33: #{maxvit_forward.9} parent=31 // pred_check
        %p1990 = pneg %p100
      $region34: #{maxvit_forward.9} parent=31 // pred_check_branch
        %1992 = sbr.rel (%p1990) target = $region36
      $region35: #{maxvit_forward.9} parent=31 // pred_region
        _
      $region36: #{maxvit_forward.9} parent=31 // pred_fallthru
        _
    $region32: #{maxvit_forward.9} parent=5 // pred_fallthru
      _
    %p1993 = scmp.le.s32.totalorder 2, %s9
    // Predicated region
    $region37: #{maxvit_forward.9} parent=5 // pred_check
      %p1994 = pneg %p1993
    $region38: #{maxvit_forward.9} parent=5 // pred_check_branch
      %1996 = sbr.rel (%p1994) target = $region40
    $region39: #{maxvit_forward.9} parent=5 // pred_region
      %s1997 = ssub.s32 %s9, 2
      // Predicated region
      $region41: #{maxvit_forward.9} parent=39 // pred_check
        %p1998 = pneg %p106
      $region42: #{maxvit_forward.9} parent=39 // pred_check_branch
        %2000 = sbr.rel (%p1998) target = $region44
      $region43: #{maxvit_forward.9} parent=39 // pred_region
        %p2001 = scmp.lt.s32.totalorder %s15, 1
        %s2002 = scalar_select %p2001, %s15, 1
        %s2003 = smul.addr %s2002, 32
        %s2004 = smul.addr %s2003, 4
        %s2005 = scalar_lea.vmem %s3, %s2004
      $region44: #{maxvit_forward.9} parent=39 // pred_fallthru
        _
    $region40: #{maxvit_forward.9} parent=5 // pred_fallthru
      _
  $region6: #{maxvit_forward.9} parent=0 // loop_footer
    %s13 = sadd.s32 1, %s9
  $region7: #{maxvit_forward.9} parent=0 // loop_footer_branch
    %8 = sbr.rel target = $region3
  $region8: #{maxvit_forward.9} parent=0 // loop_exit
    _

// kernel: maxvit_forward.10
$region0: #{maxvit_forward.10}
  #allocation0 [shape = 'u32[]', space=smem, size = 0x4, offset = 0x4, fixed_abs, tag = 'smem constant byte address 0x4 - core index']
  #allocation1 [shape = 'u32[144,128]{1,0:T(1,128)}', space=vmem, size = 0x12000, scoped, tag = 'internal scratch']
  %s0 = inlined_call_operand.vmem [shape: bf16[2,16,16,8], index: 0, kind: input, shape index: {}]
  %s1 = inlined_call_operand.vmem [shape: bf16[72,8], index: 1, kind: input, shape index: {}]
  %s2 = inlined_call_operand.vmem [shape: f32[1,8], index: 2, kind: input, shape index: {}]
  %s3 = inlined_call_operand.vmem [shape: bf16[2,16,16,8], index: 3, kind: output, shape index: {}]
  %s4 = sld [smem:[#allocation0]]
  $region45: #{maxvit_forward.10} parent=0
    _
  %s6 = ssub.s32 1, %s4
  %s7 = scalar_select 0, %s6, %s4
  loop: start=0, step=1, limit=4
  $region2: #{maxvit_forward.10} parent=0 // loop_pre_header
    _
  $region3: #{maxvit_forward.10} parent=0 // loop_header
    %s9 = sphi 0, %s13
    %p10 = scmp.ge.s32.totalorder %s9, 4
    %s19 = sphi 0, %s21
    %s22 = sphi 0, %s19
    %s23 = sphi 0, %s22
    %s39 = sphi 0, %s23
    %s43 = sphi 0, %s43
    %s45 = sphi 0, %s43
    %s46 = sphi 0, %s45
    %s60 = sphi 0, %s46
    %s64 = sphi 0, %s64
    %s66 = sphi 0, %s64
    %s67 = sphi 0, %s66
    %s81 = sphi 0, %s67
    %s87 = sphi 0, %s89
    %s90 = sphi 0, %s87
    %s91 = sphi 0, %s90
    %s107 = sphi 0, %s91
  $region4: #{maxvit_forward.10} parent=0 // loop_header_branch
    %12 = sbr.rel (%p10) target = $region8
  $region5: #{maxvit_forward.10} parent=0 // loop_body
    %s14 = ssub.s32 %s9, 1
    %s15 = ssub.s32 %s9, 2
    %s16 = sadd.s32 %s9, 1
    %s17 = ssub.s32 %s9, %s16
    %p18 = scmp.eq.s32.totalorder %s17, 0
    %s20 = sadd.s32 %s19, 1
    %s21 = scalar_select %p18, %s19, %s20
    %p24 = pneg %p18
    %p25 = scmp.eq.s32.totalorder %s9, 1
    %p26 = por %p24, %p25
    %p27 = scmp.ne.s32.totalorder %s19, %s22
    %p28 = scmp.eq.s32.totalorder %s9, 0
    %p29 = por %p27, %p28
    %p30 = scmp.ne.s32.totalorder %s19, %s22
    %p31 = scmp.eq.s32.totalorder %s14, 1
    %p32 = por %p30, %p31
    %p33 = scmp.ne.s32.totalorder %s22, %s23
    %p34 = scmp.eq.s32.totalorder %s14, 0
    %p35 = por %p33, %p34
    %p36 = scmp.ne.s32.totalorder %s22, %s23
    %p37 = scmp.eq.s32.totalorder %s15, 1
    %p38 = por %p36, %p37
    %p40 = scmp.ne.s32.totalorder %s23, %s39
    %p41 = scmp.eq.s32.totalorder %s15, 0
    %p42 = por %p40, %p41
    %s44 = sadd.s32 %s43, 1
    %p47 = scmp.eq.s32.totalorder %s9, 1
    %p48 = scmp.ne.s32.totalorder %s43, %s45
    %p49 = scmp.eq.s32.totalorder %s9, 0
    %p50 = por %p48, %p49
    %p51 = scmp.ne.s32.totalorder %s43, %s45
    %p52 = scmp.eq.s32.totalorder %s14, 1
    %p53 = por %p51, %p52
    %p54 = scmp.ne.s32.totalorder %s45, %s46
    %p55 = scmp.eq.s32.totalorder %s14, 0
    %p56 = por %p54, %p55
    %p57 = scmp.ne.s32.totalorder %s45, %s46
    %p58 = scmp.eq.s32.totalorder %s15, 1
    %p59 = por %p57, %p58
    %p61 = scmp.ne.s32.totalorder %s46, %s60
    %p62 = scmp.eq.s32.totalorder %s15, 0
    %p63 = por %p61, %p62
    %s65 = sadd.s32 %s64, 1
    %p68 = scmp.eq.s32.totalorder %s9, 1
    %p69 = scmp.ne.s32.totalorder %s64, %s66
    %p70 = scmp.eq.s32.totalorder %s9, 0
    %p71 = por %p69, %p70
    %p72 = scmp.ne.s32.totalorder %s64, %s66
    %p73 = scmp.eq.s32.totalorder %s14, 1
    %p74 = por %p72, %p73
    %p75 = scmp.ne.s32.totalorder %s66, %s67
    %p76 = scmp.eq.s32.totalorder %s14, 0
    %p77 = por %p75, %p76
    %p78 = scmp.ne.s32.totalorder %s66, %s67
    %p79 = scmp.eq.s32.totalorder %s15, 1
    %p80 = por %p78, %p79
    %p82 = scmp.ne.s32.totalorder %s67, %s81
    %p83 = scmp.eq.s32.totalorder %s15, 0
    %p84 = por %p82, %p83
    %s85 = ssub.s32 %s9, %s16
    %p86 = scmp.eq.s32.totalorder %s85, 0
    %s88 = sadd.s32 %s87, 1
    %s89 = scalar_select %p86, %s87, %s88
    %p92 = pneg %p86
    %p93 = scmp.eq.s32.totalorder %s9, 1
    %p94 = por %p92, %p93
    %p95 = scmp.ne.s32.totalorder %s87, %s90
    %p96 = scmp.eq.s32.totalorder %s9, 0
    %p97 = por %p95, %p96
    %p98 = scmp.ne.s32.totalorder %s87, %s90
    %p99 = scmp.eq.s32.totalorder %s14, 1
    %p100 = por %p98, %p99
    %p101 = scmp.ne.s32.totalorder %s90, %s91
    %p102 = scmp.eq.s32.totalorder %s14, 0
    %p103 = por %p101, %p102
    %p104 = scmp.ne.s32.totalorder %s90, %s91
    %p105 = scmp.eq.s32.totalorder %s15, 1
    %p106 = por %p104, %p105
    %p108 = scmp.ne.s32.totalorder %s91, %s107
    %p109 = scmp.eq.s32.totalorder %s15, 0
    %p110 = por %p108, %p109
    %p111 = scmp.le.s32.totalorder 1, %s9
    %p112 = scmp.lt.s32.totalorder %s9, 3
    %p113 = pnand %p111, %p112
    %p114 = pneg %p113
    // Predicated region
    $region9: #{maxvit_forward.10} parent=5 // pred_check
      _
    $region10: #{maxvit_forward.10} parent=5 // pred_check_branch
      %116 = sbr.rel (%p113) target = $region12
    $region11: #{maxvit_forward.10} parent=5 // pred_region
      %s117 = ssub.s32 %s9, 1
      // Predicated region
      $region13: #{maxvit_forward.10} parent=11 // pred_check
        %p118 = pneg %p56
      $region14: #{maxvit_forward.10} parent=11 // pred_check_branch
        %120 = sbr.rel (%p118) target = $region16
      $region15: #{maxvit_forward.10} parent=11 // pred_region
        _
      $region16: #{maxvit_forward.10} parent=11 // pred_fallthru
        _
      // Predicated region
      $region17: #{maxvit_forward.10} parent=11 // pred_check
        %p121 = pneg %p77
      $region18: #{maxvit_forward.10} parent=11 // pred_check_branch
        %123 = sbr.rel (%p121) target = $region20
      $region19: #{maxvit_forward.10} parent=11 // pred_region
        _
      $region20: #{maxvit_forward.10} parent=11 // pred_fallthru
        _
    $region12: #{maxvit_forward.10} parent=5 // pred_fallthru
      _
    %p124 = scmp.lt.s32.totalorder %s9, 2
    // Predicated region
    $region21: #{maxvit_forward.10} parent=5 // pred_check
      %p125 = pneg %p124
    $region22: #{maxvit_forward.10} parent=5 // pred_check_branch
      %127 = sbr.rel (%p125) target = $region24
    $region23: #{maxvit_forward.10} parent=5 // pred_region
      // Predicated region
      $region25: #{maxvit_forward.10} parent=23 // pred_check
        %p128 = pneg %p29
      $region26: #{maxvit_forward.10} parent=23 // pred_check_branch
        %130 = sbr.rel (%p128) target = $region28
      $region27: #{maxvit_forward.10} parent=23 // pred_region
        %p131 = scmp.lt.s32.totalorder %s9, 1
        %s132 = scalar_select %p131, %s9, 1
        %s133 = smul.addr %s132, 32
        %s134 = smul.addr %s133, 4
        %s135 = scalar_lea.vmem %s0, %s134
      $region28: #{maxvit_forward.10} parent=23 // pred_fallthru
        _
    $region24: #{maxvit_forward.10} parent=5 // pred_fallthru
      _
    %p136 = scmp.le.s32.totalorder 1, %s9
    %p137 = scmp.lt.s32.totalorder %s9, 3
    %p138 = pnand %p136, %p137
    %p139 = pneg %p138
    // Predicated region
    $region29: #{maxvit_forward.10} parent=5 // pred_check
      _
    $region30: #{maxvit_forward.10} parent=5 // pred_check_branch
      %141 = sbr.rel (%p138) target = $region32
    $region31: #{maxvit_forward.10} parent=5 // pred_region
      %s142 = ssub.s32 %s9, 1
      %p143 = scmp.lt.s32.totalorder %s14, 1
      %s144 = scalar_select %p143, %s14, 1
      %s145 = smul.addr %s144, 32
      %s146 = smul.addr %s145, 4
      %s147 = scalar_lea.vmem %s0, %s146
      %p148 = pneg %p35
      %p149 = pneg %p32
      %p150 = pneg %p56
      %p151 = pneg %p53
      %p152 = pneg %p77
      %p153 = pneg %p74
      %p154 = pneg %p103
      %p155 = pneg %p100
      %p156 = scmp.lt.s32.totalorder %s14, 1
      %s157 = scalar_select %p156, %s14, 1
      %s158 = smul.addr %s157, 32
      %s159 = smul.addr %s158, 4
      %s160 = scalar_lea.vmem %s3, %s159
      %p161 = scmp.lt.s32.totalorder %s14, 1
      %s162 = scalar_select %p161, %s14, 1
      %s163 = smul.addr %s162, 32
      %s164 = smul.addr %s163, 4
      %s165 = scalar_lea.vmem %s0, %s164
      %p166 = scmp.lt.s32.totalorder %s14, 1
      %s167 = scalar_select %p166, %s14, 1
      %s168 = smul.addr %s167, 32
      %s169 = smul.addr %s168, 4
      %s170 = scalar_lea.vmem %s3, %s169
      %v172 = vld [vmem:[%s165] sm:$0xf]
      %v173 = vld [vmem:[%s165 + $0x4] sm:$0xf]
      %v174 = vld [vmem:[%s165 + $0x8] sm:$0xf]
      %v175 = vld [vmem:[%s165 + $0xc] sm:$0xf]
      %v176 = vld [vmem:[%s165 + $0x10] sm:$0xf]
      %v177 = vld [vmem:[%s165 + $0x14] sm:$0xf]
      %v178 = vld [vmem:[%s165 + $0x18] sm:$0xf]
      %v179 = vld [vmem:[%s165 + $0x1c] sm:$0xf]
      %v180 = vld [vmem:[%s165 + $0x20] sm:$0xf]
      %v181 = vld [vmem:[%s165 + $0x24] sm:$0xf]
      %v182 = vld [vmem:[%s165 + $0x28] sm:$0xf]
      %v183 = vld [vmem:[%s165 + $0x2c] sm:$0xf]
      %v184 = vld [vmem:[%s165 + $0x30] sm:$0xf]
      %v185 = vld [vmem:[%s165 + $0x34] sm:$0xf]
      %v186 = vld [vmem:[%s165 + $0x38] sm:$0xf]
      %v187 = vld [vmem:[%s165 + $0x3c] sm:$0xf]
      %v188 = vld [vmem:[%s165 + $0x40] sm:$0xf]
      %v189 = vld [vmem:[%s165 + $0x44] sm:$0xf]
      %v190 = vld [vmem:[%s165 + $0x48] sm:$0xf]
      %v191 = vld [vmem:[%s165 + $0x4c] sm:$0xf]
      %v192 = vld [vmem:[%s165 + $0x50] sm:$0xf]
      %v193 = vld [vmem:[%s165 + $0x54] sm:$0xf]
      %v194 = vld [vmem:[%s165 + $0x58] sm:$0xf]
      %v195 = vld [vmem:[%s165 + $0x5c] sm:$0xf]
      %v196 = vld [vmem:[%s165 + $0x60] sm:$0xf]
      %v197 = vld [vmem:[%s165 + $0x64] sm:$0xf]
      %v198 = vld [vmem:[%s165 + $0x68] sm:$0xf]
      %v199 = vld [vmem:[%s165 + $0x6c] sm:$0xf]
      %v200 = vld [vmem:[%s165 + $0x70] sm:$0xf]
      %v201 = vld [vmem:[%s165 + $0x74] sm:$0xf]
      %v202 = vld [vmem:[%s165 + $0x78] sm:$0xf]
      %v203 = vld [vmem:[%s165 + $0x7c] sm:$0xf]
      %v204 = vunpack.c.l.bf16 %v172
      %v205 = vunpack.c.l.bf16 %v173
      %v206 = vunpack.c.l.bf16 %v174
      %v207 = vunpack.c.l.bf16 %v175
      %v208 = vunpack.c.l.bf16 %v176
      %v209 = vunpack.c.l.bf16 %v177
      %v210 = vunpack.c.l.bf16 %v178
      %v211 = vunpack.c.l.bf16 %v179
      %v212 = vunpack.c.l.bf16 %v180
      %v213 = vunpack.c.l.bf16 %v181
      %v214 = vunpack.c.l.bf16 %v182
      %v215 = vunpack.c.l.bf16 %v183
      %v216 = vunpack.c.l.bf16 %v184
      %v217 = vunpack.c.l.bf16 %v185
      %v218 = vunpack.c.l.bf16 %v186
      %v219 = vunpack.c.l.bf16 %v187
      %v220 = vunpack.c.l.bf16 %v188
      %v221 = vunpack.c.l.bf16 %v189
      %v222 = vunpack.c.l.bf16 %v190
      %v223 = vunpack.c.l.bf16 %v191
      %v224 = vunpack.c.l.bf16 %v192
      %v225 = vunpack.c.l.bf16 %v193
      %v226 = vunpack.c.l.bf16 %v194
      %v227 = vunpack.c.l.bf16 %v195
      %v228 = vunpack.c.l.bf16 %v196
      %v229 = vunpack.c.l.bf16 %v197
      %v230 = vunpack.c.l.bf16 %v198
      %v231 = vunpack.c.l.bf16 %v199
      %v232 = vunpack.c.l.bf16 %v200
      %v233 = vunpack.c.l.bf16 %v201
      %v234 = vunpack.c.l.bf16 %v202
      %v235 = vunpack.c.l.bf16 %v203
      %vm268 = vcmask 1040384
      %v269 = vrot.slane %v204, 7
      %v270 = vrot.slane %v205, 7
      %v271 = vsel %vm268, %v269, %v270
      %v272 = vrot.slane %v206, 7
      %v273 = vrot.slane %v207, 7
      %v274 = vsel %vm268, %v272, %v273
      %v275 = vrot.slane %v208, 7
      %v276 = vrot.slane %v209, 7
      %v277 = vsel %vm268, %v275, %v276
      %v278 = vrot.slane %v210, 7
      %v279 = vrot.slane %v211, 7
      %v280 = vsel %vm268, %v278, %v279
      %v281 = vrot.slane %v212, 7
      %v282 = vrot.slane %v213, 7
      %v283 = vsel %vm268, %v281, %v282
      %v284 = vrot.slane %v214, 7
      %v285 = vrot.slane %v215, 7
      %v286 = vsel %vm268, %v284, %v285
      %v287 = vrot.slane %v216, 7
      %v288 = vrot.slane %v217, 7
      %v289 = vsel %vm268, %v287, %v288
      %v290 = vrot.slane %v218, 7
      %v291 = vrot.slane %v219, 7
      %v292 = vsel %vm268, %v290, %v291
      %v293 = vrot.slane %v220, 7
      %v294 = vrot.slane %v221, 7
      %v295 = vsel %vm268, %v293, %v294
      %v296 = vrot.slane %v222, 7
      %v297 = vrot.slane %v223, 7
      %v298 = vsel %vm268, %v296, %v297
      %v299 = vrot.slane %v224, 7
      %v300 = vrot.slane %v225, 7
      %v301 = vsel %vm268, %v299, %v300
      %v302 = vrot.slane %v226, 7
      %v303 = vrot.slane %v227, 7
      %v304 = vsel %vm268, %v302, %v303
      %v305 = vrot.slane %v228, 7
      %v306 = vrot.slane %v229, 7
      %v307 = vsel %vm268, %v305, %v306
      %v308 = vrot.slane %v230, 7
      %v309 = vrot.slane %v231, 7
      %v310 = vsel %vm268, %v308, %v309
      %v311 = vrot.slane %v232, 7
      %v312 = vrot.slane %v233, 7
      %v313 = vsel %vm268, %v311, %v312
      %v314 = vrot.slane %v234, 7
      %v315 = vrot.slane %v235, 7
      %v316 = vsel %vm268, %v314, %v315
      %v364 = vsel %vm268, 0.0, %v269
      %v365 = vsel %vm268, 0.0, %v272
      %v366 = vsel %vm268, 0.0, %v275
      %v367 = vsel %vm268, 0.0, %v278
      %v368 = vsel %vm268, 0.0, %v281
      %v369 = vsel %vm268, 0.0, %v284
      %v370 = vsel %vm268, 0.0, %v287
      %v371 = vsel %vm268, 0.0, %v290
      %v372 = vsel %vm268, 0.0, %v293
      %v373 = vsel %vm268, 0.0, %v296
      %v374 = vsel %vm268, 0.0, %v299
      %v375 = vsel %vm268, 0.0, %v302
      %v376 = vsel %vm268, 0.0, %v305
      %v377 = vsel %vm268, 0.0, %v308
      %v378 = vsel %vm268, 0.0, %v311
      %v379 = vsel %vm268, 0.0, %v314
      %v380 = vsel %vm268, %v270, 0.0
      %v381 = vsel %vm268, %v273, 0.0
      %v382 = vsel %vm268, %v276, 0.0
      %v383 = vsel %vm268, %v279, 0.0
      %v384 = vsel %vm268, %v282, 0.0
      %v385 = vsel %vm268, %v285, 0.0
      %v386 = vsel %vm268, %v288, 0.0
      %v387 = vsel %vm268, %v291, 0.0
      %v388 = vsel %vm268, %v294, 0.0
      %v389 = vsel %vm268, %v297, 0.0
      %v390 = vsel %vm268, %v300, 0.0
      %v391 = vsel %vm268, %v303, 0.0
      %v392 = vsel %vm268, %v306, 0.0
      %v393 = vsel %vm268, %v309, 0.0
      %v394 = vsel %vm268, %v312, 0.0
      %v395 = vsel %vm268, %v315, 0.0
      %vm427 = vcmask 1046528
      %v428 = vrot.slane 0.0, 1
      %v429 = vsel %vm427, %v428, %v428
      %v430 = vrot.slane %v364, 1
      %v431 = vrot.slane %v271, 1
      %v432 = vsel %vm427, %v430, %v431
      %v433 = vrot.slane %v380, 1
      %v434 = vsel %vm427, %v431, %v433
      %v435 = vrot.slane %v365, 1
      %v436 = vrot.slane %v274, 1
      %v437 = vsel %vm427, %v435, %v436
      %v438 = vrot.slane %v381, 1
      %v439 = vsel %vm427, %v436, %v438
      %v440 = vrot.slane %v366, 1
      %v441 = vrot.slane %v277, 1
      %v442 = vsel %vm427, %v440, %v441
      %v443 = vrot.slane %v382, 1
      %v444 = vsel %vm427, %v441, %v443
      %v445 = vrot.slane %v367, 1
      %v446 = vrot.slane %v280, 1
      %v447 = vsel %vm427, %v445, %v446
      %v448 = vrot.slane %v383, 1
      %v449 = vsel %vm427, %v446, %v448
      %v450 = vrot.slane %v368, 1
      %v451 = vrot.slane %v283, 1
      %v452 = vsel %vm427, %v450, %v451
      %v453 = vrot.slane %v384, 1
      %v454 = vsel %vm427, %v451, %v453
      %v455 = vrot.slane %v369, 1
      %v456 = vrot.slane %v286, 1
      %v457 = vsel %vm427, %v455, %v456
      %v458 = vrot.slane %v385, 1
      %v459 = vsel %vm427, %v456, %v458
      %v460 = vrot.slane %v370, 1
      %v461 = vrot.slane %v289, 1
      %v462 = vsel %vm427, %v460, %v461
      %v463 = vrot.slane %v386, 1
      %v464 = vsel %vm427, %v461, %v463
      %v465 = vrot.slane %v371, 1
      %v466 = vrot.slane %v292, 1
      %v467 = vsel %vm427, %v465, %v466
      %v468 = vrot.slane %v387, 1
      %v469 = vsel %vm427, %v466, %v468
      %v470 = vrot.slane %v372, 1
      %v471 = vrot.slane %v295, 1
      %v472 = vsel %vm427, %v470, %v471
      %v473 = vrot.slane %v388, 1
      %v474 = vsel %vm427, %v471, %v473
      %v475 = vrot.slane %v373, 1
      %v476 = vrot.slane %v298, 1
      %v477 = vsel %vm427, %v475, %v476
      %v478 = vrot.slane %v389, 1
      %v479 = vsel %vm427, %v476, %v478
      %v480 = vrot.slane %v374, 1
      %v481 = vrot.slane %v301, 1
      %v482 = vsel %vm427, %v480, %v481
      %v483 = vrot.slane %v390, 1
      %v484 = vsel %vm427, %v481, %v483
      %v485 = vrot.slane %v375, 1
      %v486 = vrot.slane %v304, 1
      %v487 = vsel %vm427, %v485, %v486
      %v488 = vrot.slane %v391, 1
      %v489 = vsel %vm427, %v486, %v488
      %v490 = vrot.slane %v376, 1
      %v491 = vrot.slane %v307, 1
      %v492 = vsel %vm427, %v490, %v491
      %v493 = vrot.slane %v392, 1
      %v494 = vsel %vm427, %v491, %v493
      %v495 = vrot.slane %v377, 1
      %v496 = vrot.slane %v310, 1
      %v497 = vsel %vm427, %v495, %v496
      %v498 = vrot.slane %v393, 1
      %v499 = vsel %vm427, %v496, %v498
      %v500 = vrot.slane %v378, 1
      %v501 = vrot.slane %v313, 1
      %v502 = vsel %vm427, %v500, %v501
      %v503 = vrot.slane %v394, 1
      %v504 = vsel %vm427, %v501, %v503
      %vm505 = vcmask 1045504
      %v506 = vrot.slane 0.0, 2
      %v507 = vsel %vm505, %v506, %v506
      %v508 = vrot.slane %v364, 2
      %v509 = vrot.slane %v271, 2
      %v510 = vsel %vm505, %v508, %v509
      %v511 = vrot.slane %v380, 2
      %v512 = vsel %vm505, %v509, %v511
      %v513 = vrot.slane %v365, 2
      %v514 = vrot.slane %v274, 2
      %v515 = vsel %vm505, %v513, %v514
      %v516 = vrot.slane %v381, 2
      %v517 = vsel %vm505, %v514, %v516
      %v518 = vrot.slane %v366, 2
      %v519 = vrot.slane %v277, 2
      %v520 = vsel %vm505, %v518, %v519
      %v521 = vrot.slane %v382, 2
      %v522 = vsel %vm505, %v519, %v521
      %v523 = vrot.slane %v367, 2
      %v524 = vrot.slane %v280, 2
      %v525 = vsel %vm505, %v523, %v524
      %v526 = vrot.slane %v383, 2
      %v527 = vsel %vm505, %v524, %v526
      %v528 = vrot.slane %v368, 2
      %v529 = vrot.slane %v283, 2
      %v530 = vsel %vm505, %v528, %v529
      %v531 = vrot.slane %v384, 2
      %v532 = vsel %vm505, %v529, %v531
      %v533 = vrot.slane %v369, 2
      %v534 = vrot.slane %v286, 2
      %v535 = vsel %vm505, %v533, %v534
      %v536 = vrot.slane %v385, 2
      %v537 = vsel %vm505, %v534, %v536
      %v538 = vrot.slane %v370, 2
      %v539 = vrot.slane %v289, 2
      %v540 = vsel %vm505, %v538, %v539
      %v541 = vrot.slane %v386, 2
      %v542 = vsel %vm505, %v539, %v541
      %v543 = vrot.slane %v371, 2
      %v544 = vrot.slane %v292, 2
      %v545 = vsel %vm505, %v543, %v544
      %v546 = vrot.slane %v387, 2
      %v547 = vsel %vm505, %v544, %v546
      %v548 = vrot.slane %v372, 2
      %v549 = vrot.slane %v295, 2
      %v550 = vsel %vm505, %v548, %v549
      %v551 = vrot.slane %v388, 2
      %v552 = vsel %vm505, %v549, %v551
      %v553 = vrot.slane %v373, 2
      %v554 = vrot.slane %v298, 2
      %v555 = vsel %vm505, %v553, %v554
      %v556 = vrot.slane %v389, 2
      %v557 = vsel %vm505, %v554, %v556
      %v558 = vrot.slane %v374, 2
      %v559 = vrot.slane %v301, 2
      %v560 = vsel %vm505, %v558, %v559
      %v561 = vrot.slane %v390, 2
      %v562 = vsel %vm505, %v559, %v561
      %v563 = vrot.slane %v375, 2
      %v564 = vrot.slane %v304, 2
      %v565 = vsel %vm505, %v563, %v564
      %v566 = vrot.slane %v391, 2
      %v567 = vsel %vm505, %v564, %v566
      %v568 = vrot.slane %v376, 2
      %v569 = vrot.slane %v307, 2
      %v570 = vsel %vm505, %v568, %v569
      %v571 = vrot.slane %v392, 2
      %v572 = vsel %vm505, %v569, %v571
      %v573 = vrot.slane %v377, 2
      %v574 = vrot.slane %v310, 2
      %v575 = vsel %vm505, %v573, %v574
      %v576 = vrot.slane %v393, 2
      %v577 = vsel %vm505, %v574, %v576
      %v578 = vrot.slane %v378, 2
      %v579 = vrot.slane %v313, 2
      %v580 = vsel %vm505, %v578, %v579
      %v581 = vrot.slane %v394, 2
      %v582 = vsel %vm505, %v579, %v581
      %v585 = vrot.slane %v379, 1
      %v586 = vrot.slane %v316, 1
      %v587 = vsel %vm427, %v585, %v586
      %v588 = vrot.slane %v395, 1
      %v589 = vsel %vm427, %v586, %v588
      %v590 = vrot.slane %v379, 2
      %v591 = vrot.slane %v316, 2
      %v592 = vsel %vm505, %v590, %v591
      %v593 = vrot.slane %v395, 2
      %v594 = vsel %vm505, %v591, %v593
      %595 = vrot.lane.b32.xlu0 %v429, 8
      %v596 = vpop.permute.xlu0 %595
      %597 = vrot.lane.b32.xlu0 %v432, 8
      %v598 = vpop.permute.xlu0 %597
      %599 = vrot.lane.b32.xlu0 %v434, 8
      %v600 = vpop.permute.xlu0 %599
      %601 = vrot.lane.b32.xlu0 %v437, 8
      %v602 = vpop.permute.xlu0 %601
      %603 = vrot.lane.b32.xlu0 %v439, 8
      %v604 = vpop.permute.xlu0 %603
      %605 = vrot.lane.b32.xlu0 %v442, 8
      %v606 = vpop.permute.xlu0 %605
      %607 = vrot.lane.b32.xlu0 %v444, 8
      %v608 = vpop.permute.xlu0 %607
      %609 = vrot.lane.b32.xlu0 %v447, 8
      %v610 = vpop.permute.xlu0 %609
      %611 = vrot.lane.b32.xlu0 %v449, 8
      %v612 = vpop.permute.xlu0 %611
      %613 = vrot.lane.b32.xlu0 %v452, 8
      %v614 = vpop.permute.xlu0 %613
      %615 = vrot.lane.b32.xlu0 %v454, 8
      %v616 = vpop.permute.xlu0 %615
      %617 = vrot.lane.b32.xlu0 %v457, 8
      %v618 = vpop.permute.xlu0 %617
      %619 = vrot.lane.b32.xlu0 %v459, 8
      %v620 = vpop.permute.xlu0 %619
      %621 = vrot.lane.b32.xlu0 %v462, 8
      %v622 = vpop.permute.xlu0 %621
      %623 = vrot.lane.b32.xlu0 %v464, 8
      %v624 = vpop.permute.xlu0 %623
      %625 = vrot.lane.b32.xlu0 %v467, 8
      %v626 = vpop.permute.xlu0 %625
      %627 = vrot.lane.b32.xlu0 %v469, 8
      %v628 = vpop.permute.xlu0 %627
      %629 = vrot.lane.b32.xlu0 %v472, 8
      %v630 = vpop.permute.xlu0 %629
      %631 = vrot.lane.b32.xlu0 %v474, 8
      %v632 = vpop.permute.xlu0 %631
      %633 = vrot.lane.b32.xlu0 %v477, 8
      %v634 = vpop.permute.xlu0 %633
      %635 = vrot.lane.b32.xlu0 %v479, 8
      %v636 = vpop.permute.xlu0 %635
      %637 = vrot.lane.b32.xlu0 %v482, 8
      %v638 = vpop.permute.xlu0 %637
      %639 = vrot.lane.b32.xlu0 %v484, 8
      %v640 = vpop.permute.xlu0 %639
      %641 = vrot.lane.b32.xlu0 %v487, 8
      %v642 = vpop.permute.xlu0 %641
      %643 = vrot.lane.b32.xlu0 %v489, 8
      %v644 = vpop.permute.xlu0 %643
      %645 = vrot.lane.b32.xlu0 %v492, 8
      %v646 = vpop.permute.xlu0 %645
      %647 = vrot.lane.b32.xlu0 %v494, 8
      %v648 = vpop.permute.xlu0 %647
      %649 = vrot.lane.b32.xlu0 %v497, 8
      %v650 = vpop.permute.xlu0 %649
      %651 = vrot.lane.b32.xlu0 %v499, 8
      %v652 = vpop.permute.xlu0 %651
      %653 = vrot.lane.b32.xlu0 %v502, 8
      %v654 = vpop.permute.xlu0 %653
      %655 = vrot.lane.b32.xlu0 %v504, 8
      %v656 = vpop.permute.xlu0 %655
      %688 = vrot.lane.b32.xlu0 %v507, 16
      %v689 = vpop.permute.xlu0 %688
      %690 = vrot.lane.b32.xlu0 %v510, 16
      %v691 = vpop.permute.xlu0 %690
      %692 = vrot.lane.b32.xlu0 %v512, 16
      %v693 = vpop.permute.xlu0 %692
      %694 = vrot.lane.b32.xlu0 %v515, 16
      %v695 = vpop.permute.xlu0 %694
      %696 = vrot.lane.b32.xlu0 %v517, 16
      %v697 = vpop.permute.xlu0 %696
      %698 = vrot.lane.b32.xlu0 %v520, 16
      %v699 = vpop.permute.xlu0 %698
      %700 = vrot.lane.b32.xlu0 %v522, 16
      %v701 = vpop.permute.xlu0 %700
      %702 = vrot.lane.b32.xlu0 %v525, 16
      %v703 = vpop.permute.xlu0 %702
      %704 = vrot.lane.b32.xlu0 %v527, 16
      %v705 = vpop.permute.xlu0 %704
      %706 = vrot.lane.b32.xlu0 %v530, 16
      %v707 = vpop.permute.xlu0 %706
      %708 = vrot.lane.b32.xlu0 %v532, 16
      %v709 = vpop.permute.xlu0 %708
      %710 = vrot.lane.b32.xlu0 %v535, 16
      %v711 = vpop.permute.xlu0 %710
      %712 = vrot.lane.b32.xlu0 %v537, 16
      %v713 = vpop.permute.xlu0 %712
      %714 = vrot.lane.b32.xlu0 %v540, 16
      %v715 = vpop.permute.xlu0 %714
      %716 = vrot.lane.b32.xlu0 %v542, 16
      %v717 = vpop.permute.xlu0 %716
      %718 = vrot.lane.b32.xlu0 %v545, 16
      %v719 = vpop.permute.xlu0 %718
      %720 = vrot.lane.b32.xlu0 %v547, 16
      %v721 = vpop.permute.xlu0 %720
      %722 = vrot.lane.b32.xlu0 %v550, 16
      %v723 = vpop.permute.xlu0 %722
      %724 = vrot.lane.b32.xlu0 %v552, 16
      %v725 = vpop.permute.xlu0 %724
      %726 = vrot.lane.b32.xlu0 %v555, 16
      %v727 = vpop.permute.xlu0 %726
      %728 = vrot.lane.b32.xlu0 %v557, 16
      %v729 = vpop.permute.xlu0 %728
      %730 = vrot.lane.b32.xlu0 %v560, 16
      %v731 = vpop.permute.xlu0 %730
      %732 = vrot.lane.b32.xlu0 %v562, 16
      %v733 = vpop.permute.xlu0 %732
      %734 = vrot.lane.b32.xlu0 %v565, 16
      %v735 = vpop.permute.xlu0 %734
      %736 = vrot.lane.b32.xlu0 %v567, 16
      %v737 = vpop.permute.xlu0 %736
      %738 = vrot.lane.b32.xlu0 %v570, 16
      %v739 = vpop.permute.xlu0 %738
      %740 = vrot.lane.b32.xlu0 %v572, 16
      %v741 = vpop.permute.xlu0 %740
      %742 = vrot.lane.b32.xlu0 %v575, 16
      %v743 = vpop.permute.xlu0 %742
      %744 = vrot.lane.b32.xlu0 %v577, 16
      %v745 = vpop.permute.xlu0 %744
      %746 = vrot.lane.b32.xlu0 %v580, 16
      %v747 = vpop.permute.xlu0 %746
      %748 = vrot.lane.b32.xlu0 %v582, 16
      %v749 = vpop.permute.xlu0 %748
      %781 = vrot.lane.b32.xlu0 %v364, 24
      %v782 = vpop.permute.xlu0 %781
      %783 = vrot.lane.b32.xlu0 %v271, 24
      %v784 = vpop.permute.xlu0 %783
      %785 = vrot.lane.b32.xlu0 %v365, 24
      %v786 = vpop.permute.xlu0 %785
      %787 = vrot.lane.b32.xlu0 %v274, 24
      %v788 = vpop.permute.xlu0 %787
      %789 = vrot.lane.b32.xlu0 %v366, 24
      %v790 = vpop.permute.xlu0 %789
      %791 = vrot.lane.b32.xlu0 %v277, 24
      %v792 = vpop.permute.xlu0 %791
      %793 = vrot.lane.b32.xlu0 %v367, 24
      %v794 = vpop.permute.xlu0 %793
      %795 = vrot.lane.b32.xlu0 %v280, 24
      %v796 = vpop.permute.xlu0 %795
      %797 = vrot.lane.b32.xlu0 %v368, 24
      %v798 = vpop.permute.xlu0 %797
      %799 = vrot.lane.b32.xlu0 %v283, 24
      %v800 = vpop.permute.xlu0 %799
      %801 = vrot.lane.b32.xlu0 %v369, 24
      %v802 = vpop.permute.xlu0 %801
      %803 = vrot.lane.b32.xlu0 %v286, 24
      %v804 = vpop.permute.xlu0 %803
      %805 = vrot.lane.b32.xlu0 %v370, 24
      %v806 = vpop.permute.xlu0 %805
      %807 = vrot.lane.b32.xlu0 %v289, 24
      %v808 = vpop.permute.xlu0 %807
      %809 = vrot.lane.b32.xlu0 %v371, 24
      %v810 = vpop.permute.xlu0 %809
      %811 = vrot.lane.b32.xlu0 %v292, 24
      %v812 = vpop.permute.xlu0 %811
      %813 = vrot.lane.b32.xlu0 %v372, 24
      %v814 = vpop.permute.xlu0 %813
      %815 = vrot.lane.b32.xlu0 %v295, 24
      %v816 = vpop.permute.xlu0 %815
      %817 = vrot.lane.b32.xlu0 %v373, 24
      %v818 = vpop.permute.xlu0 %817
      %819 = vrot.lane.b32.xlu0 %v298, 24
      %v820 = vpop.permute.xlu0 %819
      %821 = vrot.lane.b32.xlu0 %v374, 24
      %v822 = vpop.permute.xlu0 %821
      %823 = vrot.lane.b32.xlu0 %v301, 24
      %v824 = vpop.permute.xlu0 %823
      %825 = vrot.lane.b32.xlu0 %v375, 24
      %v826 = vpop.permute.xlu0 %825
      %827 = vrot.lane.b32.xlu0 %v304, 24
      %v828 = vpop.permute.xlu0 %827
      %829 = vrot.lane.b32.xlu0 %v376, 24
      %v830 = vpop.permute.xlu0 %829
      %831 = vrot.lane.b32.xlu0 %v307, 24
      %v832 = vpop.permute.xlu0 %831
      %833 = vrot.lane.b32.xlu0 %v377, 24
      %v834 = vpop.permute.xlu0 %833
      %835 = vrot.lane.b32.xlu0 %v310, 24
      %v836 = vpop.permute.xlu0 %835
      %837 = vrot.lane.b32.xlu0 %v378, 24
      %v838 = vpop.permute.xlu0 %837
      %839 = vrot.lane.b32.xlu0 %v313, 24
      %v840 = vpop.permute.xlu0 %839
      %841 = vrot.lane.b32.xlu0 %v379, 24
      %v842 = vpop.permute.xlu0 %841
      %843 = vrot.lane.b32.xlu0 %v316, 24
      %v844 = vpop.permute.xlu0 %843
      %877 = vrot.lane.b32.xlu0 %v432, 32
      %v878 = vpop.permute.xlu0 %877
      %879 = vrot.lane.b32.xlu0 %v434, 32
      %v880 = vpop.permute.xlu0 %879
      %881 = vrot.lane.b32.xlu0 %v437, 32
      %v882 = vpop.permute.xlu0 %881
      %883 = vrot.lane.b32.xlu0 %v439, 32
      %v884 = vpop.permute.xlu0 %883
      %885 = vrot.lane.b32.xlu0 %v442, 32
      %v886 = vpop.permute.xlu0 %885
      %887 = vrot.lane.b32.xlu0 %v444, 32
      %v888 = vpop.permute.xlu0 %887
      %889 = vrot.lane.b32.xlu0 %v447, 32
      %v890 = vpop.permute.xlu0 %889
      %891 = vrot.lane.b32.xlu0 %v449, 32
      %v892 = vpop.permute.xlu0 %891
      %893 = vrot.lane.b32.xlu0 %v452, 32
      %v894 = vpop.permute.xlu0 %893
      %895 = vrot.lane.b32.xlu0 %v454, 32
      %v896 = vpop.permute.xlu0 %895
      %897 = vrot.lane.b32.xlu0 %v457, 32
      %v898 = vpop.permute.xlu0 %897
      %899 = vrot.lane.b32.xlu0 %v459, 32
      %v900 = vpop.permute.xlu0 %899
      %901 = vrot.lane.b32.xlu0 %v462, 32
      %v902 = vpop.permute.xlu0 %901
      %903 = vrot.lane.b32.xlu0 %v464, 32
      %v904 = vpop.permute.xlu0 %903
      %905 = vrot.lane.b32.xlu0 %v467, 32
      %v906 = vpop.permute.xlu0 %905
      %907 = vrot.lane.b32.xlu0 %v469, 32
      %v908 = vpop.permute.xlu0 %907
      %909 = vrot.lane.b32.xlu0 %v472, 32
      %v910 = vpop.permute.xlu0 %909
      %911 = vrot.lane.b32.xlu0 %v474, 32
      %v912 = vpop.permute.xlu0 %911
      %913 = vrot.lane.b32.xlu0 %v477, 32
      %v914 = vpop.permute.xlu0 %913
      %915 = vrot.lane.b32.xlu0 %v479, 32
      %v916 = vpop.permute.xlu0 %915
      %917 = vrot.lane.b32.xlu0 %v482, 32
      %v918 = vpop.permute.xlu0 %917
      %919 = vrot.lane.b32.xlu0 %v484, 32
      %v920 = vpop.permute.xlu0 %919
      %921 = vrot.lane.b32.xlu0 %v487, 32
      %v922 = vpop.permute.xlu0 %921
      %923 = vrot.lane.b32.xlu0 %v489, 32
      %v924 = vpop.permute.xlu0 %923
      %925 = vrot.lane.b32.xlu0 %v492, 32
      %v926 = vpop.permute.xlu0 %925
      %927 = vrot.lane.b32.xlu0 %v494, 32
      %v928 = vpop.permute.xlu0 %927
      %929 = vrot.lane.b32.xlu0 %v497, 32
      %v930 = vpop.permute.xlu0 %929
      %931 = vrot.lane.b32.xlu0 %v499, 32
      %v932 = vpop.permute.xlu0 %931
      %933 = vrot.lane.b32.xlu0 %v502, 32
      %v934 = vpop.permute.xlu0 %933
      %935 = vrot.lane.b32.xlu0 %v504, 32
      %v936 = vpop.permute.xlu0 %935
      %937 = vrot.lane.b32.xlu0 %v587, 32
      %v938 = vpop.permute.xlu0 %937
      %939 = vrot.lane.b32.xlu0 %v589, 32
      %v940 = vpop.permute.xlu0 %939
      %973 = vrot.lane.b32.xlu0 %v510, 40
      %v974 = vpop.permute.xlu0 %973
      %975 = vrot.lane.b32.xlu0 %v512, 40
      %v976 = vpop.permute.xlu0 %975
      %977 = vrot.lane.b32.xlu0 %v515, 40
      %v978 = vpop.permute.xlu0 %977
      %979 = vrot.lane.b32.xlu0 %v517, 40
      %v980 = vpop.permute.xlu0 %979
      %981 = vrot.lane.b32.xlu0 %v520, 40
      %v982 = vpop.permute.xlu0 %981
      %983 = vrot.lane.b32.xlu0 %v522, 40
      %v984 = vpop.permute.xlu0 %983
      %985 = vrot.lane.b32.xlu0 %v525, 40
      %v986 = vpop.permute.xlu0 %985
      %987 = vrot.lane.b32.xlu0 %v527, 40
      %v988 = vpop.permute.xlu0 %987
      %989 = vrot.lane.b32.xlu0 %v530, 40
      %v990 = vpop.permute.xlu0 %989
      %991 = vrot.lane.b32.xlu0 %v532, 40
      %v992 = vpop.permute.xlu0 %991
      %993 = vrot.lane.b32.xlu0 %v535, 40
      %v994 = vpop.permute.xlu0 %993
      %995 = vrot.lane.b32.xlu0 %v537, 40
      %v996 = vpop.permute.xlu0 %995
      %997 = vrot.lane.b32.xlu0 %v540, 40
      %v998 = vpop.permute.xlu0 %997
      %999 = vrot.lane.b32.xlu0 %v542, 40
      %v1000 = vpop.permute.xlu0 %999
      %1001 = vrot.lane.b32.xlu0 %v545, 40
      %v1002 = vpop.permute.xlu0 %1001
      %1003 = vrot.lane.b32.xlu0 %v547, 40
      %v1004 = vpop.permute.xlu0 %1003
      %1005 = vrot.lane.b32.xlu0 %v550, 40
      %v1006 = vpop.permute.xlu0 %1005
      %1007 = vrot.lane.b32.xlu0 %v552, 40
      %v1008 = vpop.permute.xlu0 %1007
      %1009 = vrot.lane.b32.xlu0 %v555, 40
      %v1010 = vpop.permute.xlu0 %1009
      %1011 = vrot.lane.b32.xlu0 %v557, 40
      %v1012 = vpop.permute.xlu0 %1011
      %1013 = vrot.lane.b32.xlu0 %v560, 40
      %v1014 = vpop.permute.xlu0 %1013
      %1015 = vrot.lane.b32.xlu0 %v562, 40
      %v1016 = vpop.permute.xlu0 %1015
      %1017 = vrot.lane.b32.xlu0 %v565, 40
      %v1018 = vpop.permute.xlu0 %1017
      %1019 = vrot.lane.b32.xlu0 %v567, 40
      %v1020 = vpop.permute.xlu0 %1019
      %1021 = vrot.lane.b32.xlu0 %v570, 40
      %v1022 = vpop.permute.xlu0 %1021
      %1023 = vrot.lane.b32.xlu0 %v572, 40
      %v1024 = vpop.permute.xlu0 %1023
      %1025 = vrot.lane.b32.xlu0 %v575, 40
      %v1026 = vpop.permute.xlu0 %1025
      %1027 = vrot.lane.b32.xlu0 %v577, 40
      %v1028 = vpop.permute.xlu0 %1027
      %1029 = vrot.lane.b32.xlu0 %v580, 40
      %v1030 = vpop.permute.xlu0 %1029
      %1031 = vrot.lane.b32.xlu0 %v582, 40
      %v1032 = vpop.permute.xlu0 %1031
      %1033 = vrot.lane.b32.xlu0 %v592, 40
      %v1034 = vpop.permute.xlu0 %1033
      %1035 = vrot.lane.b32.xlu0 %v594, 40
      %v1036 = vpop.permute.xlu0 %1035
      %1069 = vrot.lane.b32.xlu0 %v365, 48
      %v1070 = vpop.permute.xlu0 %1069
      %1071 = vrot.lane.b32.xlu0 %v274, 48
      %v1072 = vpop.permute.xlu0 %1071
      %1073 = vrot.lane.b32.xlu0 %v366, 48
      %v1074 = vpop.permute.xlu0 %1073
      %1075 = vrot.lane.b32.xlu0 %v277, 48
      %v1076 = vpop.permute.xlu0 %1075
      %1077 = vrot.lane.b32.xlu0 %v367, 48
      %v1078 = vpop.permute.xlu0 %1077
      %1079 = vrot.lane.b32.xlu0 %v280, 48
      %v1080 = vpop.permute.xlu0 %1079
      %1081 = vrot.lane.b32.xlu0 %v368, 48
      %v1082 = vpop.permute.xlu0 %1081
      %1083 = vrot.lane.b32.xlu0 %v283, 48
      %v1084 = vpop.permute.xlu0 %1083
      %1085 = vrot.lane.b32.xlu0 %v369, 48
      %v1086 = vpop.permute.xlu0 %1085
      %1087 = vrot.lane.b32.xlu0 %v286, 48
      %v1088 = vpop.permute.xlu0 %1087
      %1089 = vrot.lane.b32.xlu0 %v370, 48
      %v1090 = vpop.permute.xlu0 %1089
      %1091 = vrot.lane.b32.xlu0 %v289, 48
      %v1092 = vpop.permute.xlu0 %1091
      %1093 = vrot.lane.b32.xlu0 %v371, 48
      %v1094 = vpop.permute.xlu0 %1093
      %1095 = vrot.lane.b32.xlu0 %v292, 48
      %v1096 = vpop.permute.xlu0 %1095
      %1097 = vrot.lane.b32.xlu0 %v372, 48
      %v1098 = vpop.permute.xlu0 %1097
      %1099 = vrot.lane.b32.xlu0 %v295, 48
      %v1100 = vpop.permute.xlu0 %1099
      %1101 = vrot.lane.b32.xlu0 %v373, 48
      %v1102 = vpop.permute.xlu0 %1101
      %1103 = vrot.lane.b32.xlu0 %v298, 48
      %v1104 = vpop.permute.xlu0 %1103
      %1105 = vrot.lane.b32.xlu0 %v374, 48
      %v1106 = vpop.permute.xlu0 %1105
      %1107 = vrot.lane.b32.xlu0 %v301, 48
      %v1108 = vpop.permute.xlu0 %1107
      %1109 = vrot.lane.b32.xlu0 %v375, 48
      %v1110 = vpop.permute.xlu0 %1109
      %1111 = vrot.lane.b32.xlu0 %v304, 48
      %v1112 = vpop.permute.xlu0 %1111
      %1113 = vrot.lane.b32.xlu0 %v376, 48
      %v1114 = vpop.permute.xlu0 %1113
      %1115 = vrot.lane.b32.xlu0 %v307, 48
      %v1116 = vpop.permute.xlu0 %1115
      %1117 = vrot.lane.b32.xlu0 %v377, 48
      %v1118 = vpop.permute.xlu0 %1117
      %1119 = vrot.lane.b32.xlu0 %v310, 48
      %v1120 = vpop.permute.xlu0 %1119
      %1121 = vrot.lane.b32.xlu0 %v378, 48
      %v1122 = vpop.permute.xlu0 %1121
      %1123 = vrot.lane.b32.xlu0 %v313, 48
      %v1124 = vpop.permute.xlu0 %1123
      %1125 = vrot.lane.b32.xlu0 %v379, 48
      %v1126 = vpop.permute.xlu0 %1125
      %1127 = vrot.lane.b32.xlu0 %v316, 48
      %v1128 = vpop.permute.xlu0 %1127
      %1129 = vrot.lane.b32.xlu0 0.0, 48
      %v1130 = vpop.permute.xlu0 %1129
      %1162 = vrot.lane.b32.xlu0 %v437, 56
      %v1163 = vpop.permute.xlu0 %1162
      %1164 = vrot.lane.b32.xlu0 %v439, 56
      %v1165 = vpop.permute.xlu0 %1164
      %1166 = vrot.lane.b32.xlu0 %v442, 56
      %v1167 = vpop.permute.xlu0 %1166
      %1168 = vrot.lane.b32.xlu0 %v444, 56
      %v1169 = vpop.permute.xlu0 %1168
      %1170 = vrot.lane.b32.xlu0 %v447, 56
      %v1171 = vpop.permute.xlu0 %1170
      %1172 = vrot.lane.b32.xlu0 %v449, 56
      %v1173 = vpop.permute.xlu0 %1172
      %1174 = vrot.lane.b32.xlu0 %v452, 56
      %v1175 = vpop.permute.xlu0 %1174
      %1176 = vrot.lane.b32.xlu0 %v454, 56
      %v1177 = vpop.permute.xlu0 %1176
      %1178 = vrot.lane.b32.xlu0 %v457, 56
      %v1179 = vpop.permute.xlu0 %1178
      %1180 = vrot.lane.b32.xlu0 %v459, 56
      %v1181 = vpop.permute.xlu0 %1180
      %1182 = vrot.lane.b32.xlu0 %v462, 56
      %v1183 = vpop.permute.xlu0 %1182
      %1184 = vrot.lane.b32.xlu0 %v464, 56
      %v1185 = vpop.permute.xlu0 %1184
      %1186 = vrot.lane.b32.xlu0 %v467, 56
      %v1187 = vpop.permute.xlu0 %1186
      %1188 = vrot.lane.b32.xlu0 %v469, 56
      %v1189 = vpop.permute.xlu0 %1188
      %1190 = vrot.lane.b32.xlu0 %v472, 56
      %v1191 = vpop.permute.xlu0 %1190
      %1192 = vrot.lane.b32.xlu0 %v474, 56
      %v1193 = vpop.permute.xlu0 %1192
      %1194 = vrot.lane.b32.xlu0 %v477, 56
      %v1195 = vpop.permute.xlu0 %1194
      %1196 = vrot.lane.b32.xlu0 %v479, 56
      %v1197 = vpop.permute.xlu0 %1196
      %1198 = vrot.lane.b32.xlu0 %v482, 56
      %v1199 = vpop.permute.xlu0 %1198
      %1200 = vrot.lane.b32.xlu0 %v484, 56
      %v1201 = vpop.permute.xlu0 %1200
      %1202 = vrot.lane.b32.xlu0 %v487, 56
      %v1203 = vpop.permute.xlu0 %1202
      %1204 = vrot.lane.b32.xlu0 %v489, 56
      %v1205 = vpop.permute.xlu0 %1204
      %1206 = vrot.lane.b32.xlu0 %v492, 56
      %v1207 = vpop.permute.xlu0 %1206
      %1208 = vrot.lane.b32.xlu0 %v494, 56
      %v1209 = vpop.permute.xlu0 %1208
      %1210 = vrot.lane.b32.xlu0 %v497, 56
      %v1211 = vpop.permute.xlu0 %1210
      %1212 = vrot.lane.b32.xlu0 %v499, 56
      %v1213 = vpop.permute.xlu0 %1212
      %1214 = vrot.lane.b32.xlu0 %v502, 56
      %v1215 = vpop.permute.xlu0 %1214
      %1216 = vrot.lane.b32.xlu0 %v504, 56
      %v1217 = vpop.permute.xlu0 %1216
      %1218 = vrot.lane.b32.xlu0 %v587, 56
      %v1219 = vpop.permute.xlu0 %1218
      %1220 = vrot.lane.b32.xlu0 %v589, 56
      %v1221 = vpop.permute.xlu0 %1220
      %1222 = vrot.lane.b32.xlu0 %v429, 56
      %v1223 = vpop.permute.xlu0 %1222
      %1255 = vrot.lane.b32.xlu0 %v515, 64
      %v1256 = vpop.permute.xlu0 %1255
      %1257 = vrot.lane.b32.xlu0 %v517, 64
      %v1258 = vpop.permute.xlu0 %1257
      %1259 = vrot.lane.b32.xlu0 %v520, 64
      %v1260 = vpop.permute.xlu0 %1259
      %1261 = vrot.lane.b32.xlu0 %v522, 64
      %v1262 = vpop.permute.xlu0 %1261
      %1263 = vrot.lane.b32.xlu0 %v525, 64
      %v1264 = vpop.permute.xlu0 %1263
      %1265 = vrot.lane.b32.xlu0 %v527, 64
      %v1266 = vpop.permute.xlu0 %1265
      %1267 = vrot.lane.b32.xlu0 %v530, 64
      %v1268 = vpop.permute.xlu0 %1267
      %1269 = vrot.lane.b32.xlu0 %v532, 64
      %v1270 = vpop.permute.xlu0 %1269
      %1271 = vrot.lane.b32.xlu0 %v535, 64
      %v1272 = vpop.permute.xlu0 %1271
      %1273 = vrot.lane.b32.xlu0 %v537, 64
      %v1274 = vpop.permute.xlu0 %1273
      %1275 = vrot.lane.b32.xlu0 %v540, 64
      %v1276 = vpop.permute.xlu0 %1275
      %1277 = vrot.lane.b32.xlu0 %v542, 64
      %v1278 = vpop.permute.xlu0 %1277
      %1279 = vrot.lane.b32.xlu0 %v545, 64
      %v1280 = vpop.permute.xlu0 %1279
      %1281 = vrot.lane.b32.xlu0 %v547, 64
      %v1282 = vpop.permute.xlu0 %1281
      %1283 = vrot.lane.b32.xlu0 %v550, 64
      %v1284 = vpop.permute.xlu0 %1283
      %1285 = vrot.lane.b32.xlu0 %v552, 64
      %v1286 = vpop.permute.xlu0 %1285
      %1287 = vrot.lane.b32.xlu0 %v555, 64
      %v1288 = vpop.permute.xlu0 %1287
      %1289 = vrot.lane.b32.xlu0 %v557, 64
      %v1290 = vpop.permute.xlu0 %1289
      %1291 = vrot.lane.b32.xlu0 %v560, 64
      %v1292 = vpop.permute.xlu0 %1291
      %1293 = vrot.lane.b32.xlu0 %v562, 64
      %v1294 = vpop.permute.xlu0 %1293
      %1295 = vrot.lane.b32.xlu0 %v565, 64
      %v1296 = vpop.permute.xlu0 %1295
      %1297 = vrot.lane.b32.xlu0 %v567, 64
      %v1298 = vpop.permute.xlu0 %1297
      %1299 = vrot.lane.b32.xlu0 %v570, 64
      %v1300 = vpop.permute.xlu0 %1299
      %1301 = vrot.lane.b32.xlu0 %v572, 64
      %v1302 = vpop.permute.xlu0 %1301
      %1303 = vrot.lane.b32.xlu0 %v575, 64
      %v1304 = vpop.permute.xlu0 %1303
      %1305 = vrot.lane.b32.xlu0 %v577, 64
      %v1306 = vpop.permute.xlu0 %1305
      %1307 = vrot.lane.b32.xlu0 %v580, 64
      %v1308 = vpop.permute.xlu0 %1307
      %1309 = vrot.lane.b32.xlu0 %v582, 64
      %v1310 = vpop.permute.xlu0 %1309
      %1311 = vrot.lane.b32.xlu0 %v592, 64
      %v1312 = vpop.permute.xlu0 %1311
      %1313 = vrot.lane.b32.xlu0 %v594, 64
      %v1314 = vpop.permute.xlu0 %1313
      %1315 = vrot.lane.b32.xlu0 %v507, 64
      %v1316 = vpop.permute.xlu0 %1315
      %vm1348 = vcmask 64512
      %v1349 = vsel %vm1348, 0.0, %v596
      %v1350 = vsel %vm1348, %v364, %v598
      %v1351 = vsel %vm1348, %v271, %v600
      %v1352 = vsel %vm1348, %v365, %v602
      %v1353 = vsel %vm1348, %v274, %v604
      %v1354 = vsel %vm1348, %v366, %v606
      %v1355 = vsel %vm1348, %v277, %v608
      %v1356 = vsel %vm1348, %v367, %v610
      %v1357 = vsel %vm1348, %v280, %v612
      %v1358 = vsel %vm1348, %v368, %v614
      %v1359 = vsel %vm1348, %v283, %v616
      %v1360 = vsel %vm1348, %v369, %v618
      %v1361 = vsel %vm1348, %v286, %v620
      %v1362 = vsel %vm1348, %v370, %v622
      %v1363 = vsel %vm1348, %v289, %v624
      %v1364 = vsel %vm1348, %v371, %v626
      %v1365 = vsel %vm1348, %v292, %v628
      %v1366 = vsel %vm1348, %v372, %v630
      %v1367 = vsel %vm1348, %v295, %v632
      %v1368 = vsel %vm1348, %v373, %v634
      %v1369 = vsel %vm1348, %v298, %v636
      %v1370 = vsel %vm1348, %v374, %v638
      %v1371 = vsel %vm1348, %v301, %v640
      %v1372 = vsel %vm1348, %v375, %v642
      %v1373 = vsel %vm1348, %v304, %v644
      %v1374 = vsel %vm1348, %v376, %v646
      %v1375 = vsel %vm1348, %v307, %v648
      %v1376 = vsel %vm1348, %v377, %v650
      %v1377 = vsel %vm1348, %v310, %v652
      %v1378 = vsel %vm1348, %v378, %v654
      %v1379 = vsel %vm1348, %v313, %v656
      %vm1380 = vcmask 130048
      %v1381 = vsel %vm1380, %v1349, %v689
      %v1382 = vsel %vm1380, %v1350, %v691
      %v1383 = vsel %vm1380, %v1351, %v693
      %v1384 = vsel %vm1380, %v1352, %v695
      %v1385 = vsel %vm1380, %v1353, %v697
      %v1386 = vsel %vm1380, %v1354, %v699
      %v1387 = vsel %vm1380, %v1355, %v701
      %v1388 = vsel %vm1380, %v1356, %v703
      %v1389 = vsel %vm1380, %v1357, %v705
      %v1390 = vsel %vm1380, %v1358, %v707
      %v1391 = vsel %vm1380, %v1359, %v709
      %v1392 = vsel %vm1380, %v1360, %v711
      %v1393 = vsel %vm1380, %v1361, %v713
      %v1394 = vsel %vm1380, %v1362, %v715
      %v1395 = vsel %vm1380, %v1363, %v717
      %v1396 = vsel %vm1380, %v1364, %v719
      %v1397 = vsel %vm1380, %v1365, %v721
      %v1398 = vsel %vm1380, %v1366, %v723
      %v1399 = vsel %vm1380, %v1367, %v725
      %v1400 = vsel %vm1380, %v1368, %v727
      %v1401 = vsel %vm1380, %v1369, %v729
      %v1402 = vsel %vm1380, %v1370, %v731
      %v1403 = vsel %vm1380, %v1371, %v733
      %v1404 = vsel %vm1380, %v1372, %v735
      %v1405 = vsel %vm1380, %v1373, %v737
      %v1406 = vsel %vm1380, %v1374, %v739
      %v1407 = vsel %vm1380, %v1375, %v741
      %v1408 = vsel %vm1380, %v1376, %v743
      %v1409 = vsel %vm1380, %v1377, %v745
      %v1410 = vsel %vm1380, %v1378, %v747
      %v1411 = vsel %vm1380, %v1379, %v749
      %vm1412 = vcmask 195584
      %v1413 = vsel %vm1412, %v1381, %v782
      %v1414 = vsel %vm1412, %v1381, %v784
      %v1415 = vsel %vm1412, %v1382, %v786
      %v1416 = vsel %vm1412, %v1383, %v788
      %v1417 = vsel %vm1412, %v1384, %v790
      %v1418 = vsel %vm1412, %v1385, %v792
      %v1419 = vsel %vm1412, %v1386, %v794
      %v1420 = vsel %vm1412, %v1387, %v796
      %v1421 = vsel %vm1412, %v1388, %v798
      %v1422 = vsel %vm1412, %v1389, %v800
      %v1423 = vsel %vm1412, %v1390, %v802
      %v1424 = vsel %vm1412, %v1391, %v804
      %v1425 = vsel %vm1412, %v1392, %v806
      %v1426 = vsel %vm1412, %v1393, %v808
      %v1427 = vsel %vm1412, %v1394, %v810
      %v1428 = vsel %vm1412, %v1395, %v812
      %v1429 = vsel %vm1412, %v1396, %v814
      %v1430 = vsel %vm1412, %v1397, %v816
      %v1431 = vsel %vm1412, %v1398, %v818
      %v1432 = vsel %vm1412, %v1399, %v820
      %v1433 = vsel %vm1412, %v1400, %v822
      %v1434 = vsel %vm1412, %v1401, %v824
      %v1435 = vsel %vm1412, %v1402, %v826
      %v1436 = vsel %vm1412, %v1403, %v828
      %v1437 = vsel %vm1412, %v1404, %v830
      %v1438 = vsel %vm1412, %v1405, %v832
      %v1439 = vsel %vm1412, %v1406, %v834
      %v1440 = vsel %vm1412, %v1407, %v836
      %v1441 = vsel %vm1412, %v1408, %v838
      %v1442 = vsel %vm1412, %v1409, %v840
      %v1443 = vsel %vm1412, %v1410, %v842
      %v1444 = vsel %vm1412, %v1411, %v844
      %vm1445 = vcmask 261120
      %v1446 = vsel %vm1445, %v1413, %v878
      %v1447 = vsel %vm1445, %v1414, %v880
      %v1448 = vsel %vm1445, %v1415, %v882
      %v1449 = vsel %vm1445, %v1416, %v884
      %v1450 = vsel %vm1445, %v1417, %v886
      %v1451 = vsel %vm1445, %v1418, %v888
      %v1452 = vsel %vm1445, %v1419, %v890
      %v1453 = vsel %vm1445, %v1420, %v892
      %v1454 = vsel %vm1445, %v1421, %v894
      %v1455 = vsel %vm1445, %v1422, %v896
      %v1456 = vsel %vm1445, %v1423, %v898
      %v1457 = vsel %vm1445, %v1424, %v900
      %v1458 = vsel %vm1445, %v1425, %v902
      %v1459 = vsel %vm1445, %v1426, %v904
      %v1460 = vsel %vm1445, %v1427, %v906
      %v1461 = vsel %vm1445, %v1428, %v908
      %v1462 = vsel %vm1445, %v1429, %v910
      %v1463 = vsel %vm1445, %v1430, %v912
      %v1464 = vsel %vm1445, %v1431, %v914
      %v1465 = vsel %vm1445, %v1432, %v916
      %v1466 = vsel %vm1445, %v1433, %v918
      %v1467 = vsel %vm1445, %v1434, %v920
      %v1468 = vsel %vm1445, %v1435, %v922
      %v1469 = vsel %vm1445, %v1436, %v924
      %v1470 = vsel %vm1445, %v1437, %v926
      %v1471 = vsel %vm1445, %v1438, %v928
      %v1472 = vsel %vm1445, %v1439, %v930
      %v1473 = vsel %vm1445, %v1440, %v932
      %v1474 = vsel %vm1445, %v1441, %v934
      %v1475 = vsel %vm1445, %v1442, %v936
      %v1476 = vsel %vm1445, %v1443, %v938
      %v1477 = vsel %vm1445, %v1444, %v940
      %vm1478 = vcmask 326656
      %v1479 = vsel %vm1478, %v1446, %v974
      %v1480 = vsel %vm1478, %v1447, %v976
      %v1481 = vsel %vm1478, %v1448, %v978
      %v1482 = vsel %vm1478, %v1449, %v980
      %v1483 = vsel %vm1478, %v1450, %v982
      %v1484 = vsel %vm1478, %v1451, %v984
      %v1485 = vsel %vm1478, %v1452, %v986
      %v1486 = vsel %vm1478, %v1453, %v988
      %v1487 = vsel %vm1478, %v1454, %v990
      %v1488 = vsel %vm1478, %v1455, %v992
      %v1489 = vsel %vm1478, %v1456, %v994
      %v1490 = vsel %vm1478, %v1457, %v996
      %v1491 = vsel %vm1478, %v1458, %v998
      %v1492 = vsel %vm1478, %v1459, %v1000
      %v1493 = vsel %vm1478, %v1460, %v1002
      %v1494 = vsel %vm1478, %v1461, %v1004
      %v1495 = vsel %vm1478, %v1462, %v1006
      %v1496 = vsel %vm1478, %v1463, %v1008
      %v1497 = vsel %vm1478, %v1464, %v1010
      %v1498 = vsel %vm1478, %v1465, %v1012
      %v1499 = vsel %vm1478, %v1466, %v1014
      %v1500 = vsel %vm1478, %v1467, %v1016
      %v1501 = vsel %vm1478, %v1468, %v1018
      %v1502 = vsel %vm1478, %v1469, %v1020
      %v1503 = vsel %vm1478, %v1470, %v1022
      %v1504 = vsel %vm1478, %v1471, %v1024
      %v1505 = vsel %vm1478, %v1472, %v1026
      %v1506 = vsel %vm1478, %v1473, %v1028
      %v1507 = vsel %vm1478, %v1474, %v1030
      %v1508 = vsel %vm1478, %v1475, %v1032
      %v1509 = vsel %vm1478, %v1476, %v1034
      %v1510 = vsel %vm1478, %v1477, %v1036
      %vm1511 = vcmask 392192
      %v1512 = vsel %vm1511, %v1479, %v1070
      %v1513 = vsel %vm1511, %v1480, %v1072
      %v1514 = vsel %vm1511, %v1481, %v1074
      %v1515 = vsel %vm1511, %v1482, %v1076
      %v1516 = vsel %vm1511, %v1483, %v1078
      %v1517 = vsel %vm1511, %v1484, %v1080
      %v1518 = vsel %vm1511, %v1485, %v1082
      %v1519 = vsel %vm1511, %v1486, %v1084
      %v1520 = vsel %vm1511, %v1487, %v1086
      %v1521 = vsel %vm1511, %v1488, %v1088
      %v1522 = vsel %vm1511, %v1489, %v1090
      %v1523 = vsel %vm1511, %v1490, %v1092
      %v1524 = vsel %vm1511, %v1491, %v1094
      %v1525 = vsel %vm1511, %v1492, %v1096
      %v1526 = vsel %vm1511, %v1493, %v1098
      %v1527 = vsel %vm1511, %v1494, %v1100
      %v1528 = vsel %vm1511, %v1495, %v1102
      %v1529 = vsel %vm1511, %v1496, %v1104
      %v1530 = vsel %vm1511, %v1497, %v1106
      %v1531 = vsel %vm1511, %v1498, %v1108
      %v1532 = vsel %vm1511, %v1499, %v1110
      %v1533 = vsel %vm1511, %v1500, %v1112
      %v1534 = vsel %vm1511, %v1501, %v1114
      %v1535 = vsel %vm1511, %v1502, %v1116
      %v1536 = vsel %vm1511, %v1503, %v1118
      %v1537 = vsel %vm1511, %v1504, %v1120
      %v1538 = vsel %vm1511, %v1505, %v1122
      %v1539 = vsel %vm1511, %v1506, %v1124
      %v1540 = vsel %vm1511, %v1507, %v1126
      %v1541 = vsel %vm1511, %v1508, %v1128
      %v1542 = vsel %vm1511, %v1509, %v1130
      %v1543 = vsel %vm1511, %v1510, %v1130
      %vm1544 = vcmask 457728
      %v1545 = vsel %vm1544, %v1512, %v1163
      %v1546 = vsel %vm1544, %v1513, %v1165
      %v1547 = vsel %vm1544, %v1514, %v1167
      %v1548 = vsel %vm1544, %v1515, %v1169
      %v1549 = vsel %vm1544, %v1516, %v1171
      %v1550 = vsel %vm1544, %v1517, %v1173
      %v1551 = vsel %vm1544, %v1518, %v1175
      %v1552 = vsel %vm1544, %v1519, %v1177
      %v1553 = vsel %vm1544, %v1520, %v1179
      %v1554 = vsel %vm1544, %v1521, %v1181
      %v1555 = vsel %vm1544, %v1522, %v1183
      %v1556 = vsel %vm1544, %v1523, %v1185
      %v1557 = vsel %vm1544, %v1524, %v1187
      %v1558 = vsel %vm1544, %v1525, %v1189
      %v1559 = vsel %vm1544, %v1526, %v1191
      %v1560 = vsel %vm1544, %v1527, %v1193
      %v1561 = vsel %vm1544, %v1528, %v1195
      %v1562 = vsel %vm1544, %v1529, %v1197
      %v1563 = vsel %vm1544, %v1530, %v1199
      %v1564 = vsel %vm1544, %v1531, %v1201
      %v1565 = vsel %vm1544, %v1532, %v1203
      %v1566 = vsel %vm1544, %v1533, %v1205
      %v1567 = vsel %vm1544, %v1534, %v1207
      %v1568 = vsel %vm1544, %v1535, %v1209
      %v1569 = vsel %vm1544, %v1536, %v1211
      %v1570 = vsel %vm1544, %v1537, %v1213
      %v1571 = vsel %vm1544, %v1538, %v1215
      %v1572 = vsel %vm1544, %v1539, %v1217
      %v1573 = vsel %vm1544, %v1540, %v1219
      %v1574 = vsel %vm1544, %v1541, %v1221
      %v1575 = vsel %vm1544, %v1542, %v1223
      %v1576 = vsel %vm1544, %v1543, %v1223
      %vm1577 = vcmask 523264
      %v1578 = vsel %vm1577, %v1545, %v1256
      %v1579 = vsel %vm1577, %v1546, %v1258
      %v1580 = vsel %vm1577, %v1547, %v1260
      %v1581 = vsel %vm1577, %v1548, %v1262
      %v1582 = vsel %vm1577, %v1549, %v1264
      %v1583 = vsel %vm1577, %v1550, %v1266
      %v1584 = vsel %vm1577, %v1551, %v1268
      %v1585 = vsel %vm1577, %v1552, %v1270
      %v1586 = vsel %vm1577, %v1553, %v1272
      %v1587 = vsel %vm1577, %v1554, %v1274
      %v1588 = vsel %vm1577, %v1555, %v1276
      %v1589 = vsel %vm1577, %v1556, %v1278
      %v1590 = vsel %vm1577, %v1557, %v1280
      %v1591 = vsel %vm1577, %v1558, %v1282
      %v1592 = vsel %vm1577, %v1559, %v1284
      %v1593 = vsel %vm1577, %v1560, %v1286
      %v1594 = vsel %vm1577, %v1561, %v1288
      %v1595 = vsel %vm1577, %v1562, %v1290
      %v1596 = vsel %vm1577, %v1563, %v1292
      %v1597 = vsel %vm1577, %v1564, %v1294
      %v1598 = vsel %vm1577, %v1565, %v1296
      %v1599 = vsel %vm1577, %v1566, %v1298
      %v1600 = vsel %vm1577, %v1567, %v1300
      %v1601 = vsel %vm1577, %v1568, %v1302
      %v1602 = vsel %vm1577, %v1569, %v1304
      %v1603 = vsel %vm1577, %v1570, %v1306
      %v1604 = vsel %vm1577, %v1571, %v1308
      %v1605 = vsel %vm1577, %v1572, %v1310
      %v1606 = vsel %vm1577, %v1573, %v1312
      %v1607 = vsel %vm1577, %v1574, %v1314
      %v1608 = vsel %vm1577, %v1575, %v1316
      %v1609 = vsel %vm1577, %v1576, %v1316
      %v1610 = vpack.c.bf16 %v1579, %v1578
      %v1611 = vpack.c.bf16 %v1581, %v1580
      %v1612 = vpack.c.bf16 %v1583, %v1582
      %v1613 = vpack.c.bf16 %v1585, %v1584
      %v1614 = vpack.c.bf16 %v1587, %v1586
      %v1615 = vpack.c.bf16 %v1589, %v1588
      %v1616 = vpack.c.bf16 %v1591, %v1590
      %v1617 = vpack.c.bf16 %v1593, %v1592
      %v1618 = vpack.c.bf16 %v1595, %v1594
      %v1619 = vpack.c.bf16 %v1597, %v1596
      %v1620 = vpack.c.bf16 %v1599, %v1598
      %v1621 = vpack.c.bf16 %v1601, %v1600
      %v1622 = vpack.c.bf16 %v1603, %v1602
      %v1623 = vpack.c.bf16 %v1605, %v1604
      %v1624 = vpack.c.bf16 %v1607, %v1606
      %v1625 = vpack.c.bf16 %v1609, %v1608
      %v1626 = vld [vmem:[%s1] sm:$0xf]
      %v1627 = vld [vmem:[%s1 + $0x4] sm:$0xf]
      %v1628 = vld [vmem:[%s1 + $0x8] sm:$0xf]
      %v1629 = vld [vmem:[%s1 + $0xc] sm:$0xf]
      %v1630 = vld [vmem:[%s1 + $0x10] sm:$0xf]
      %v1631 = vld [vmem:[%s1 + $0x14] sm:$0xf]
      %v1632 = vld [vmem:[%s1 + $0x18] sm:$0xf]
      %v1633 = vld [vmem:[%s1 + $0x1c] sm:$0xf]
      %v1634 = vld [vmem:[%s1 + $0x20] sm:$0xf]
      %v1635 = vld [vmem:[%s2] sm:$0x1]
      %v1637 = vlaneseq
      %v1638 = vshrl.u32 %v1637, 7
      %v1639 = vsub.s32 0, %v1638
      %v1640 = vrot.slane %v1635, %v1639
      %v1651 = vunpack.c.l.b16 %v1626
      %v1652 = vunpack.c.l.b16 %v1627
      %v1653 = vunpack.c.l.b16 %v1628
      %v1654 = vunpack.c.l.b16 %v1629
      %v1655 = vunpack.c.l.b16 %v1630
      %v1656 = vunpack.c.l.b16 %v1631
      %v1657 = vunpack.c.l.b16 %v1632
      %v1658 = vunpack.c.l.b16 %v1633
      %v1659 = vunpack.c.l.b16 %v1634
      %v1660 = vpack.c.b16 %v1652, %v1651
      %v1661 = vpack.c.b16 %v1654, %v1653
      %v1662 = vpack.c.b16 %v1656, %v1655
      %v1663 = vpack.c.b16 %v1658, %v1657
      %v1664 = vpack.c.b16 %v1659, %v1659
      %vm1669 = vcmask 588800
      %v1671 = vsel %vm1669, %v1610, 0
      %v1674 = vsel %vm1669, %v1611, 0
      %v1677 = vsel %vm1669, %v1612, 0
      %v1680 = vsel %vm1669, %v1613, 0
      %v1683 = vsel %vm1669, %v1614, 0
      %v1686 = vsel %vm1669, %v1615, 0
      %v1689 = vsel %vm1669, %v1616, 0
      %v1692 = vsel %vm1669, %v1617, 0
      %v1695 = vsel %vm1669, %v1618, 0
      %v1698 = vsel %vm1669, %v1619, 0
      %v1701 = vsel %vm1669, %v1620, 0
      %v1704 = vsel %vm1669, %v1621, 0
      %v1707 = vsel %vm1669, %v1622, 0
      %v1710 = vsel %vm1669, %v1623, 0
      %v1713 = vsel %vm1669, %v1624, 0
      %v1716 = vsel %vm1669, %v1625, 0
      %vm1718 = vcmask 1043456
      %v1720 = vsel %vm1718, %v1664, 0
      %1722 = vmatprep.subr.bf16.mxu0 0
      %1723 = vmatpush1.bf16.msra.mxu0 %v1660
      %1724 = vmatprep.subr.bf16.mxu0 0
      %1725 = vmatpush1.bf16.msra.mxu0 %v1661
      %1726 = vmatprep.subr.bf16.mxu0 0
      %1727 = vmatpush1.bf16.msra.mxu0 %v1662
      %1728 = vmatprep.subr.bf16.mxu0 0
      %1729 = vmatpush1.bf16.msra.mxu0 %v1663
      %1730 = vmatprep.subr.bf16.mxu0 0
      %1731 = vmatpush1.bf16.msra.mxu0 %v1720
      %1732 = vmatprep.subr.bf16.mxu0 0
      %1733 = vmatpush1.bf16.msra.mxu0 0
      %1734 = vmatprep.subr.bf16.mxu0 0
      %1735 = vmatpush1.bf16.msra.mxu0 0
      %1736 = vmatprep.subr.bf16.mxu0 0
      %1737 = vmatpush1.bf16.msra.mxu0 0
      %1738 = vmatprep.subr.bf16.mxu0 0
      %1739 = vmatpush1.bf16.msra.mxu0 0
      %1740 = vmatprep.subr.bf16.mxu0 0
      %1741 = vmatpush1.bf16.msra.mxu0 0
      %1742 = vmatprep.subr.bf16.mxu0 0
      %1743 = vmatpush1.bf16.msra.mxu0 0
      %1744 = vmatprep.subr.bf16.mxu0 0
      %1745 = vmatpush1.bf16.msra.mxu0 0
      %1746 = vmatprep.subr.bf16.mxu0 0
      %1747 = vmatpush1.bf16.msra.mxu0 0
      %1748 = vmatprep.subr.bf16.mxu0 0
      %1749 = vmatpush1.bf16.msra.mxu0 0
      %1750 = vmatprep.subr.bf16.mxu0 0
      %1751 = vmatpush1.bf16.msra.mxu0 0
      %1752 = vmatprep.subr.bf16.mxu0 0
      %1753 = vmatpush1.bf16.msra.mxu0 0
      %1754 = vmatprep.mubr.bf16.mxu0 0
      %1755 = vmatmul.mubr.bf16.gmra.mrb[0].mxu0 %v1671
      %v1756 = vpop.f32.mrb[0].mxu0
      %v1757 = vadd.f32 %v1640, %v1756
      %v1758 = vpop.f32.mrb[0].mxu0
      %v1759 = vpop.f32.mrb[0].mxu0
      %v1760 = vadd.f32 %v1640, %v1759
      %v1761 = vpop.f32.mrb[0].mxu0
      %1762 = vmatprep.mubr.bf16.mxu0 0
      %1763 = vmatmul.mubr.bf16.gmra.mrb[0].mxu0 %v1674
      %v1764 = vpop.f32.mrb[0].mxu0
      %v1765 = vadd.f32 %v1640, %v1764
      %v1766 = vpop.f32.mrb[0].mxu0
      %v1767 = vpop.f32.mrb[0].mxu0
      %v1768 = vadd.f32 %v1640, %v1767
      %v1769 = vpop.f32.mrb[0].mxu0
      %1770 = vmatprep.mubr.bf16.mxu0 0
      %1771 = vmatmul.mubr.bf16.gmra.mrb[0].mxu0 %v1677
      %v1772 = vpop.f32.mrb[0].mxu0
      %v1773 = vadd.f32 %v1640, %v1772
      %v1774 = vpop.f32.mrb[0].mxu0
      %v1775 = vpop.f32.mrb[0].mxu0
      %v1776 = vadd.f32 %v1640, %v1775
      %v1777 = vpop.f32.mrb[0].mxu0
      %1778 = vmatprep.mubr.bf16.mxu0 0
      %1779 = vmatmul.mubr.bf16.gmra.mrb[0].mxu0 %v1680
      %v1780 = vpop.f32.mrb[0].mxu0
      %v1781 = vadd.f32 %v1640, %v1780
      %v1782 = vpop.f32.mrb[0].mxu0
      %v1783 = vpop.f32.mrb[0].mxu0
      %v1784 = vadd.f32 %v1640, %v1783
      %v1785 = vpop.f32.mrb[0].mxu0
      %1786 = vmatprep.mubr.bf16.mxu0 0
      %1787 = vmatmul.mubr.bf16.gmra.mrb[0].mxu0 %v1683
      %v1788 = vpop.f32.mrb[0].mxu0
      %v1789 = vadd.f32 %v1640, %v1788
      %v1790 = vpop.f32.mrb[0].mxu0
      %v1791 = vpop.f32.mrb[0].mxu0
      %v1792 = vadd.f32 %v1640, %v1791
      %v1793 = vpop.f32.mrb[0].mxu0
      %1794 = vmatprep.mubr.bf16.mxu0 0
      %1795 = vmatmul.mubr.bf16.gmra.mrb[0].mxu0 %v1686
      %v1796 = vpop.f32.mrb[0].mxu0
      %v1797 = vadd.f32 %v1640, %v1796
      %v1798 = vpop.f32.mrb[0].mxu0
      %v1799 = vpop.f32.mrb[0].mxu0
      %v1800 = vadd.f32 %v1640, %v1799
      %v1801 = vpop.f32.mrb[0].mxu0
      %1802 = vmatprep.mubr.bf16.mxu0 0
      %1803 = vmatmul.mubr.bf16.gmra.mrb[0].mxu0 %v1689
      %v1804 = vpop.f32.mrb[0].mxu0
      %v1805 = vadd.f32 %v1640, %v1804
      %v1806 = vpop.f32.mrb[0].mxu0
      %v1807 = vpop.f32.mrb[0].mxu0
      %v1808 = vadd.f32 %v1640, %v1807
      %v1809 = vpop.f32.mrb[0].mxu0
      %1810 = vmatprep.mubr.bf16.mxu0 0
      %1811 = vmatmul.mubr.bf16.gmra.mrb[0].mxu0 %v1692
      %v1812 = vpop.f32.mrb[0].mxu0
      %v1813 = vadd.f32 %v1640, %v1812
      %v1814 = vpop.f32.mrb[0].mxu0
      %v1815 = vpop.f32.mrb[0].mxu0
      %v1816 = vadd.f32 %v1640, %v1815
      %v1817 = vpop.f32.mrb[0].mxu0
      %1818 = vmatprep.mubr.bf16.mxu0 0
      %1819 = vmatmul.mubr.bf16.gmra.mrb[0].mxu0 %v1695
      %v1820 = vpop.f32.mrb[0].mxu0
      %v1821 = vadd.f32 %v1640, %v1820
      %v1822 = vpop.f32.mrb[0].mxu0
      %v1823 = vpop.f32.mrb[0].mxu0
      %v1824 = vadd.f32 %v1640, %v1823
      %v1825 = vpop.f32.mrb[0].mxu0
      %1826 = vmatprep.mubr.bf16.mxu0 0
      %1827 = vmatmul.mubr.bf16.gmra.mrb[0].mxu0 %v1698
      %v1828 = vpop.f32.mrb[0].mxu0
      %v1829 = vadd.f32 %v1640, %v1828
      %v1830 = vpop.f32.mrb[0].mxu0
      %v1831 = vpop.f32.mrb[0].mxu0
      %v1832 = vadd.f32 %v1640, %v1831
      %v1833 = vpop.f32.mrb[0].mxu0
      %1834 = vmatprep.mubr.bf16.mxu0 0
      %1835 = vmatmul.mubr.bf16.gmra.mrb[0].mxu0 %v1701
      %v1836 = vpop.f32.mrb[0].mxu0
      %v1837 = vadd.f32 %v1640, %v1836
      %v1838 = vpop.f32.mrb[0].mxu0
      %v1839 = vpop.f32.mrb[0].mxu0
      %v1840 = vadd.f32 %v1640, %v1839
      %v1841 = vpop.f32.mrb[0].mxu0
      %1842 = vmatprep.mubr.bf16.mxu0 0
      %1843 = vmatmul.mubr.bf16.gmra.mrb[0].mxu0 %v1704
      %v1844 = vpop.f32.mrb[0].mxu0
      %v1845 = vadd.f32 %v1640, %v1844
      %v1846 = vpop.f32.mrb[0].mxu0
      %v1847 = vpop.f32.mrb[0].mxu0
      %v1848 = vadd.f32 %v1640, %v1847
      %v1849 = vpop.f32.mrb[0].mxu0
      %1850 = vmatprep.mubr.bf16.mxu0 0
      %1851 = vmatmul.mubr.bf16.gmra.mrb[0].mxu0 %v1707
      %v1852 = vpop.f32.mrb[0].mxu0
      %v1853 = vadd.f32 %v1640, %v1852
      %v1854 = vpop.f32.mrb[0].mxu0
      %v1855 = vpop.f32.mrb[0].mxu0
      %v1856 = vadd.f32 %v1640, %v1855
      %v1857 = vpop.f32.mrb[0].mxu0
      %1858 = vmatprep.mubr.bf16.mxu0 0
      %1859 = vmatmul.mubr.bf16.gmra.mrb[0].mxu0 %v1710
      %v1860 = vpop.f32.mrb[0].mxu0
      %v1861 = vadd.f32 %v1640, %v1860
      %v1862 = vpop.f32.mrb[0].mxu0
      %v1863 = vpop.f32.mrb[0].mxu0
      %v1864 = vadd.f32 %v1640, %v1863
      %v1865 = vpop.f32.mrb[0].mxu0
      %1866 = vmatprep.mubr.bf16.mxu0 0
      %1867 = vmatmul.mubr.bf16.gmra.mrb[0].mxu0 %v1713
      %v1868 = vpop.f32.mrb[0].mxu0
      %v1869 = vadd.f32 %v1640, %v1868
      %v1870 = vpop.f32.mrb[0].mxu0
      %v1871 = vpop.f32.mrb[0].mxu0
      %v1872 = vadd.f32 %v1640, %v1871
      %v1873 = vpop.f32.mrb[0].mxu0
      %1874 = vmatprep.mubr.bf16.mxu0 0
      %1875 = vmatmul.mubr.bf16.gmra.mrb[0].mxu0 %v1716
      %v1876 = vpop.f32.mrb[0].mxu0
      %v1877 = vadd.f32 %v1640, %v1876
      %v1878 = vpop.f32.mrb[0].mxu0
      %v1879 = vpop.f32.mrb[0].mxu0
      %v1880 = vadd.f32 %v1640, %v1879
      %v1881 = vpop.f32.mrb[0].mxu0
      %1882 = vdwg.mxu0
      %v1883 = vpack.c.bf16 %v1760, %v1757
      %v1884 = vpack.c.bf16 %v1768, %v1765
      %v1885 = vpack.c.bf16 %v1776, %v1773
      %v1886 = vpack.c.bf16 %v1784, %v1781
      %v1887 = vpack.c.bf16 %v1792, %v1789
      %v1888 = vpack.c.bf16 %v1800, %v1797
      %v1889 = vpack.c.bf16 %v1808, %v1805
      %v1890 = vpack.c.bf16 %v1816, %v1813
      %v1891 = vpack.c.bf16 %v1824, %v1821
      %v1892 = vpack.c.bf16 %v1832, %v1829
      %v1893 = vpack.c.bf16 %v1840, %v1837
      %v1894 = vpack.c.bf16 %v1848, %v1845
      %v1895 = vpack.c.bf16 %v1856, %v1853
      %v1896 = vpack.c.bf16 %v1864, %v1861
      %v1897 = vpack.c.bf16 %v1872, %v1869
      %v1898 = vpack.c.bf16 %v1880, %v1877
      %v1915 = vunpack.c.l.b16 %v1883
      %v1916 = vunpack.c.h.b16 %v1883
      %v1917 = vunpack.c.l.b16 %v1884
      %v1918 = vunpack.c.h.b16 %v1884
      %v1919 = vunpack.c.l.b16 %v1885
      %v1920 = vunpack.c.h.b16 %v1885
      %v1921 = vunpack.c.l.b16 %v1886
      %v1922 = vunpack.c.h.b16 %v1886
      %v1923 = vunpack.c.l.b16 %v1887
      %v1924 = vunpack.c.h.b16 %v1887
      %v1925 = vunpack.c.l.b16 %v1888
      %v1926 = vunpack.c.h.b16 %v1888
      %v1927 = vunpack.c.l.b16 %v1889
      %v1928 = vunpack.c.h.b16 %v1889
      %v1929 = vunpack.c.l.b16 %v1890
      %v1930 = vunpack.c.h.b16 %v1890
      %v1931 = vunpack.c.l.b16 %v1891
      %v1932 = vunpack.c.h.b16 %v1891
      %v1933 = vunpack.c.l.b16 %v1892
      %v1934 = vunpack.c.h.b16 %v1892
      %v1935 = vunpack.c.l.b16 %v1893
      %v1936 = vunpack.c.h.b16 %v1893
      %v1937 = vunpack.c.l.b16 %v1894
      %v1938 = vunpack.c.h.b16 %v1894
      %v1939 = vunpack.c.l.b16 %v1895
      %v1940 = vunpack.c.h.b16 %v1895
      %v1941 = vunpack.c.l.b16 %v1896
      %v1942 = vunpack.c.h.b16 %v1896
      %v1943 = vunpack.c.l.b16 %v1897
      %v1944 = vunpack.c.h.b16 %v1897
      %v1945 = vunpack.c.l.b16 %v1898
      %v1946 = vunpack.c.h.b16 %v1898
      %v1947 = vpack.c.b16 %v1915, %v1915
      %v1948 = vpack.c.b16 %v1916, %v1916
      %v1949 = vpack.c.b16 %v1917, %v1917
      %v1950 = vpack.c.b16 %v1918, %v1918
      %v1951 = vpack.c.b16 %v1919, %v1919
      %v1952 = vpack.c.b16 %v1920, %v1920
      %v1953 = vpack.c.b16 %v1921, %v1921
      %v1954 = vpack.c.b16 %v1922, %v1922
      %v1955 = vpack.c.b16 %v1923, %v1923
      %v1956 = vpack.c.b16 %v1924, %v1924
      %v1957 = vpack.c.b16 %v1925, %v1925
      %v1958 = vpack.c.b16 %v1926, %v1926
      %v1959 = vpack.c.b16 %v1927, %v1927
      %v1960 = vpack.c.b16 %v1928, %v1928
      %v1961 = vpack.c.b16 %v1929, %v1929
      %v1962 = vpack.c.b16 %v1930, %v1930
      %v1963 = vpack.c.b16 %v1931, %v1931
      %v1964 = vpack.c.b16 %v1932, %v1932
      %v1965 = vpack.c.b16 %v1933, %v1933
      %v1966 = vpack.c.b16 %v1934, %v1934
      %v1967 = vpack.c.b16 %v1935, %v1935
      %v1968 = vpack.c.b16 %v1936, %v1936
      %v1969 = vpack.c.b16 %v1937, %v1937
      %v1970 = vpack.c.b16 %v1938, %v1938
      %v1971 = vpack.c.b16 %v1939, %v1939
      %v1972 = vpack.c.b16 %v1940, %v1940
      %v1973 = vpack.c.b16 %v1941, %v1941
      %v1974 = vpack.c.b16 %v1942, %v1942
      %v1975 = vpack.c.b16 %v1943, %v1943
      %v1976 = vpack.c.b16 %v1944, %v1944
      %v1977 = vpack.c.b16 %v1945, %v1945
      %v1978 = vpack.c.b16 %v1946, %v1946
      %vm2011 = vcmask 60416
      %2012 = vst.msk [vmem:[%s170] sm:$0xf] %vm2011, %v1947
      %2013 = vst.msk [vmem:[%s170 + $0x4] sm:$0xf] %vm2011, %v1948
      %2014 = vst.msk [vmem:[%s170 + $0x8] sm:$0xf] %vm2011, %v1949
      %2015 = vst.msk [vmem:[%s170 + $0xc] sm:$0xf] %vm2011, %v1950
      %2016 = vst.msk [vmem:[%s170 + $0x10] sm:$0xf] %vm2011, %v1951
      %2017 = vst.msk [vmem:[%s170 + $0x14] sm:$0xf] %vm2011, %v1952
      %2018 = vst.msk [vmem:[%s170 + $0x18] sm:$0xf] %vm2011, %v1953
      %2019 = vst.msk [vmem:[%s170 + $0x1c] sm:$0xf] %vm2011, %v1954
      %2020 = vst.msk [vmem:[%s170 + $0x20] sm:$0xf] %vm2011, %v1955
      %2021 = vst.msk [vmem:[%s170 + $0x24] sm:$0xf] %vm2011, %v1956
      %2022 = vst.msk [vmem:[%s170 + $0x28] sm:$0xf] %vm2011, %v1957
      %2023 = vst.msk [vmem:[%s170 + $0x2c] sm:$0xf] %vm2011, %v1958
      %2024 = vst.msk [vmem:[%s170 + $0x30] sm:$0xf] %vm2011, %v1959
      %2025 = vst.msk [vmem:[%s170 + $0x34] sm:$0xf] %vm2011, %v1960
      %2026 = vst.msk [vmem:[%s170 + $0x38] sm:$0xf] %vm2011, %v1961
      %2027 = vst.msk [vmem:[%s170 + $0x3c] sm:$0xf] %vm2011, %v1962
      %2028 = vst.msk [vmem:[%s170 + $0x40] sm:$0xf] %vm2011, %v1963
      %2029 = vst.msk [vmem:[%s170 + $0x44] sm:$0xf] %vm2011, %v1964
      %2030 = vst.msk [vmem:[%s170 + $0x48] sm:$0xf] %vm2011, %v1965
      %2031 = vst.msk [vmem:[%s170 + $0x4c] sm:$0xf] %vm2011, %v1966
      %2032 = vst.msk [vmem:[%s170 + $0x50] sm:$0xf] %vm2011, %v1967
      %2033 = vst.msk [vmem:[%s170 + $0x54] sm:$0xf] %vm2011, %v1968
      %2034 = vst.msk [vmem:[%s170 + $0x58] sm:$0xf] %vm2011, %v1969
      %2035 = vst.msk [vmem:[%s170 + $0x5c] sm:$0xf] %vm2011, %v1970
      %2036 = vst.msk [vmem:[%s170 + $0x60] sm:$0xf] %vm2011, %v1971
      %2037 = vst.msk [vmem:[%s170 + $0x64] sm:$0xf] %vm2011, %v1972
      %2038 = vst.msk [vmem:[%s170 + $0x68] sm:$0xf] %vm2011, %v1973
      %2039 = vst.msk [vmem:[%s170 + $0x6c] sm:$0xf] %vm2011, %v1974
      %2040 = vst.msk [vmem:[%s170 + $0x70] sm:$0xf] %vm2011, %v1975
      %2041 = vst.msk [vmem:[%s170 + $0x74] sm:$0xf] %vm2011, %v1976
      %2042 = vst.msk [vmem:[%s170 + $0x78] sm:$0xf] %vm2011, %v1977
      %2043 = vst.msk [vmem:[%s170 + $0x7c] sm:$0xf] %vm2011, %v1978
      %p2044 = scmp.lt.s32.totalorder %s14, 1
      %s2045 = scalar_select %p2044, %s14, 1
      %s2046 = smul.addr %s2045, 32
      %s2047 = smul.addr %s2046, 4
      %s2048 = scalar_lea.vmem %s3, %s2047
      // Predicated region
      $region33: #{maxvit_forward.10} parent=31 // pred_check
        %p2049 = pneg %p100
      $region34: #{maxvit_forward.10} parent=31 // pred_check_branch
        %2051 = sbr.rel (%p2049) target = $region36
      $region35: #{maxvit_forward.10} parent=31 // pred_region
        _
      $region36: #{maxvit_forward.10} parent=31 // pred_fallthru
        _
    $region32: #{maxvit_forward.10} parent=5 // pred_fallthru
      _
    %p2052 = scmp.le.s32.totalorder 2, %s9
    // Predicated region
    $region37: #{maxvit_forward.10} parent=5 // pred_check
      %p2053 = pneg %p2052
    $region38: #{maxvit_forward.10} parent=5 // pred_check_branch
      %2055 = sbr.rel (%p2053) target = $region40
    $region39: #{maxvit_forward.10} parent=5 // pred_region
      %s2056 = ssub.s32 %s9, 2
      // Predicated region
      $region41: #{maxvit_forward.10} parent=39 // pred_check
        %p2057 = pneg %p106
      $region42: #{maxvit_forward.10} parent=39 // pred_check_branch
        %2059 = sbr.rel (%p2057) target = $region44
      $region43: #{maxvit_forward.10} parent=39 // pred_region
        %p2060 = scmp.lt.s32.totalorder %s15, 1
        %s2061 = scalar_select %p2060, %s15, 1
        %s2062 = smul.addr %s2061, 32
        %s2063 = smul.addr %s2062, 4
        %s2064 = scalar_lea.vmem %s3, %s2063
      $region44: #{maxvit_forward.10} parent=39 // pred_fallthru
        _
    $region40: #{maxvit_forward.10} parent=5 // pred_fallthru
      _
  $region6: #{maxvit_forward.10} parent=0 // loop_footer
    %s13 = sadd.s32 1, %s9
  $region7: #{maxvit_forward.10} parent=0 // loop_footer_branch
    %8 = sbr.rel target = $region3
  $region8: #{maxvit_forward.10} parent=0 // loop_exit
    _

// kernel: maxvit_forward.12
$region0: #{maxvit_forward.12}
  #allocation0 [shape = 'u32[]', space=smem, size = 0x4, offset = 0x4, fixed_abs, tag = 'smem constant byte address 0x4 - core index']
  #allocation1 [shape = 'u32[144,128]{1,0:T(1,128)}', space=vmem, size = 0x12000, scoped, tag = 'internal scratch']
  %s0 = inlined_call_operand.vmem [shape: bf16[512,8], index: 0, kind: input, shape index: {}]
  %s1 = inlined_call_operand.vmem [shape: bf16[8,64], index: 1, kind: input, shape index: {}]
  %s2 = inlined_call_operand.vmem [shape: f32[1,64], index: 2, kind: input, shape index: {}]
  %s3 = inlined_call_operand.vmem [shape: bf16[512,64], index: 3, kind: output, shape index: {}]
  %s4 = sld [smem:[#allocation0]]
  $region45: #{maxvit_forward.12} parent=0
    _
  %s6 = ssub.s32 1, %s4
  %s7 = scalar_select 0, %s6, %s4
  loop: start=0, step=1, limit=4
  $region2: #{maxvit_forward.12} parent=0 // loop_pre_header
    _
  $region3: #{maxvit_forward.12} parent=0 // loop_header
    %s9 = sphi 0, %s13
    %p10 = scmp.ge.s32.totalorder %s9, 4
    %s19 = sphi 0, %s21
    %s22 = sphi 0, %s19
    %s23 = sphi 0, %s22
    %s39 = sphi 0, %s23
    %s43 = sphi 0, %s43
    %s45 = sphi 0, %s43
    %s46 = sphi 0, %s45
    %s60 = sphi 0, %s46
    %s64 = sphi 0, %s64
    %s66 = sphi 0, %s64
    %s67 = sphi 0, %s66
    %s81 = sphi 0, %s67
    %s87 = sphi 0, %s89
    %s90 = sphi 0, %s87
    %s91 = sphi 0, %s90
    %s107 = sphi 0, %s91
  $region4: #{maxvit_forward.12} parent=0 // loop_header_branch
    %12 = sbr.rel (%p10) target = $region8
  $region5: #{maxvit_forward.12} parent=0 // loop_body
    %s14 = ssub.s32 %s9, 1
    %s15 = ssub.s32 %s9, 2
    %s16 = sadd.s32 %s9, 1
    %s17 = ssub.s32 %s9, %s16
    %p18 = scmp.eq.s32.totalorder %s17, 0
    %s20 = sadd.s32 %s19, 1
    %s21 = scalar_select %p18, %s19, %s20
    %p24 = pneg %p18
    %p25 = scmp.eq.s32.totalorder %s9, 1
    %p26 = por %p24, %p25
    %p27 = scmp.ne.s32.totalorder %s19, %s22
    %p28 = scmp.eq.s32.totalorder %s9, 0
    %p29 = por %p27, %p28
    %p30 = scmp.ne.s32.totalorder %s19, %s22
    %p31 = scmp.eq.s32.totalorder %s14, 1
    %p32 = por %p30, %p31
    %p33 = scmp.ne.s32.totalorder %s22, %s23
    %p34 = scmp.eq.s32.totalorder %s14, 0
    %p35 = por %p33, %p34
    %p36 = scmp.ne.s32.totalorder %s22, %s23
    %p37 = scmp.eq.s32.totalorder %s15, 1
    %p38 = por %p36, %p37
    %p40 = scmp.ne.s32.totalorder %s23, %s39
    %p41 = scmp.eq.s32.totalorder %s15, 0
    %p42 = por %p40, %p41
    %s44 = sadd.s32 %s43, 1
    %p47 = scmp.eq.s32.totalorder %s9, 1
    %p48 = scmp.ne.s32.totalorder %s43, %s45
    %p49 = scmp.eq.s32.totalorder %s9, 0
    %p50 = por %p48, %p49
    %p51 = scmp.ne.s32.totalorder %s43, %s45
    %p52 = scmp.eq.s32.totalorder %s14, 1
    %p53 = por %p51, %p52
    %p54 = scmp.ne.s32.totalorder %s45, %s46
    %p55 = scmp.eq.s32.totalorder %s14, 0
    %p56 = por %p54, %p55
    %p57 = scmp.ne.s32.totalorder %s45, %s46
    %p58 = scmp.eq.s32.totalorder %s15, 1
    %p59 = por %p57, %p58
    %p61 = scmp.ne.s32.totalorder %s46, %s60
    %p62 = scmp.eq.s32.totalorder %s15, 0
    %p63 = por %p61, %p62
    %s65 = sadd.s32 %s64, 1
    %p68 = scmp.eq.s32.totalorder %s9, 1
    %p69 = scmp.ne.s32.totalorder %s64, %s66
    %p70 = scmp.eq.s32.totalorder %s9, 0
    %p71 = por %p69, %p70
    %p72 = scmp.ne.s32.totalorder %s64, %s66
    %p73 = scmp.eq.s32.totalorder %s14, 1
    %p74 = por %p72, %p73
    %p75 = scmp.ne.s32.totalorder %s66, %s67
    %p76 = scmp.eq.s32.totalorder %s14, 0
    %p77 = por %p75, %p76
    %p78 = scmp.ne.s32.totalorder %s66, %s67
    %p79 = scmp.eq.s32.totalorder %s15, 1
    %p80 = por %p78, %p79
    %p82 = scmp.ne.s32.totalorder %s67, %s81
    %p83 = scmp.eq.s32.totalorder %s15, 0
    %p84 = por %p82, %p83
    %s85 = ssub.s32 %s9, %s16
    %p86 = scmp.eq.s32.totalorder %s85, 0
    %s88 = sadd.s32 %s87, 1
    %s89 = scalar_select %p86, %s87, %s88
    %p92 = pneg %p86
    %p93 = scmp.eq.s32.totalorder %s9, 1
    %p94 = por %p92, %p93
    %p95 = scmp.ne.s32.totalorder %s87, %s90
    %p96 = scmp.eq.s32.totalorder %s9, 0
    %p97 = por %p95, %p96
    %p98 = scmp.ne.s32.totalorder %s87, %s90
    %p99 = scmp.eq.s32.totalorder %s14, 1
    %p100 = por %p98, %p99
    %p101 = scmp.ne.s32.totalorder %s90, %s91
    %p102 = scmp.eq.s32.totalorder %s14, 0
    %p103 = por %p101, %p102
    %p104 = scmp.ne.s32.totalorder %s90, %s91
    %p105 = scmp.eq.s32.totalorder %s15, 1
    %p106 = por %p104, %p105
    %p108 = scmp.ne.s32.totalorder %s91, %s107
    %p109 = scmp.eq.s32.totalorder %s15, 0
    %p110 = por %p108, %p109
    %p111 = scmp.le.s32.totalorder 1, %s9
    %p112 = scmp.lt.s32.totalorder %s9, 3
    %p113 = pnand %p111, %p112
    %p114 = pneg %p113
    // Predicated region
    $region9: #{maxvit_forward.12} parent=5 // pred_check
      _
    $region10: #{maxvit_forward.12} parent=5 // pred_check_branch
      %116 = sbr.rel (%p113) target = $region12
    $region11: #{maxvit_forward.12} parent=5 // pred_region
      %s117 = ssub.s32 %s9, 1
      // Predicated region
      $region13: #{maxvit_forward.12} parent=11 // pred_check
        %p118 = pneg %p56
      $region14: #{maxvit_forward.12} parent=11 // pred_check_branch
        %120 = sbr.rel (%p118) target = $region16
      $region15: #{maxvit_forward.12} parent=11 // pred_region
        _
      $region16: #{maxvit_forward.12} parent=11 // pred_fallthru
        _
      // Predicated region
      $region17: #{maxvit_forward.12} parent=11 // pred_check
        %p121 = pneg %p77
      $region18: #{maxvit_forward.12} parent=11 // pred_check_branch
        %123 = sbr.rel (%p121) target = $region20
      $region19: #{maxvit_forward.12} parent=11 // pred_region
        _
      $region20: #{maxvit_forward.12} parent=11 // pred_fallthru
        _
    $region12: #{maxvit_forward.12} parent=5 // pred_fallthru
      _
    %p124 = scmp.lt.s32.totalorder %s9, 2
    // Predicated region
    $region21: #{maxvit_forward.12} parent=5 // pred_check
      %p125 = pneg %p124
    $region22: #{maxvit_forward.12} parent=5 // pred_check_branch
      %127 = sbr.rel (%p125) target = $region24
    $region23: #{maxvit_forward.12} parent=5 // pred_region
      // Predicated region
      $region25: #{maxvit_forward.12} parent=23 // pred_check
        %p128 = pneg %p29
      $region26: #{maxvit_forward.12} parent=23 // pred_check_branch
        %130 = sbr.rel (%p128) target = $region28
      $region27: #{maxvit_forward.12} parent=23 // pred_region
        %s131 = smul.u32 32, %s9
        %p132 = scmp.lt.s32.totalorder %s131, 63
        %s133 = scalar_select %p132, %s131, 63
        %s134 = smul.addr %s133, 4
        %s135 = scalar_lea.vmem %s0, %s134
        %s136 = smul.u32 32, %s9
      $region28: #{maxvit_forward.12} parent=23 // pred_fallthru
        _
    $region24: #{maxvit_forward.12} parent=5 // pred_fallthru
      _
    %p137 = scmp.le.s32.totalorder 1, %s9
    %p138 = scmp.lt.s32.totalorder %s9, 3
    %p139 = pnand %p137, %p138
    %p140 = pneg %p139
    // Predicated region
    $region29: #{maxvit_forward.12} parent=5 // pred_check
      _
    $region30: #{maxvit_forward.12} parent=5 // pred_check_branch
      %142 = sbr.rel (%p139) target = $region32
    $region31: #{maxvit_forward.12} parent=5 // pred_region
      %s143 = ssub.s32 %s9, 1
      %s144 = smul.u32 32, %s14
      %p145 = scmp.lt.s32.totalorder %s144, 63
      %s146 = scalar_select %p145, %s144, 63
      %s147 = smul.addr %s146, 4
      %s148 = scalar_lea.vmem %s0, %s147
      %p149 = pneg %p35
      %p150 = pneg %p32
      %p151 = pneg %p56
      %p152 = pneg %p53
      %p153 = pneg %p77
      %p154 = pneg %p74
      %p155 = pneg %p103
      %p156 = pneg %p100
      %s157 = smul.u32 32, %s14
      %p158 = scmp.lt.s32.totalorder %s157, 63
      %s159 = scalar_select %p158, %s157, 63
      %s160 = smul.addr %s159, 4
      %s161 = scalar_lea.vmem %s3, %s160
      %s162 = smul.u32 32, %s14
      %p163 = scmp.lt.s32.totalorder %s162, 63
      %s164 = scalar_select %p163, %s162, 63
      %s165 = smul.addr %s164, 4
      %s166 = scalar_lea.vmem %s0, %s165
      %s167 = smul.u32 32, %s14
      %s168 = smul.u32 32, %s14
      %p169 = scmp.lt.s32.totalorder %s168, 63
      %s170 = scalar_select %p169, %s168, 63
      %s171 = smul.addr %s170, 4
      %s172 = scalar_lea.vmem %s3, %s171
      %s173 = smul.u32 32, %s14
      %v175 = vld [vmem:[%s166] sm:$0xf]
      %v176 = vld [vmem:[%s166 + $0x4] sm:$0xf]
      %v177 = vld [vmem:[%s166 + $0x8] sm:$0xf]
      %v178 = vld [vmem:[%s166 + $0xc] sm:$0xf]
      %v179 = vld [vmem:[%s166 + $0x10] sm:$0xf]
      %v180 = vld [vmem:[%s166 + $0x14] sm:$0xf]
      %v181 = vld [vmem:[%s166 + $0x18] sm:$0xf]
      %v182 = vld [vmem:[%s166 + $0x1c] sm:$0xf]
      %v183 = vld [vmem:[%s166 + $0x20] sm:$0xf]
      %v184 = vld [vmem:[%s166 + $0x24] sm:$0xf]
      %v185 = vld [vmem:[%s166 + $0x28] sm:$0xf]
      %v186 = vld [vmem:[%s166 + $0x2c] sm:$0xf]
      %v187 = vld [vmem:[%s166 + $0x30] sm:$0xf]
      %v188 = vld [vmem:[%s166 + $0x34] sm:$0xf]
      %v189 = vld [vmem:[%s166 + $0x38] sm:$0xf]
      %v190 = vld [vmem:[%s166 + $0x3c] sm:$0xf]
      %v191 = vld [vmem:[%s166 + $0x40] sm:$0xf]
      %v192 = vld [vmem:[%s166 + $0x44] sm:$0xf]
      %v193 = vld [vmem:[%s166 + $0x48] sm:$0xf]
      %v194 = vld [vmem:[%s166 + $0x4c] sm:$0xf]
      %v195 = vld [vmem:[%s166 + $0x50] sm:$0xf]
      %v196 = vld [vmem:[%s166 + $0x54] sm:$0xf]
      %v197 = vld [vmem:[%s166 + $0x58] sm:$0xf]
      %v198 = vld [vmem:[%s166 + $0x5c] sm:$0xf]
      %v199 = vld [vmem:[%s166 + $0x60] sm:$0xf]
      %v200 = vld [vmem:[%s166 + $0x64] sm:$0xf]
      %v201 = vld [vmem:[%s166 + $0x68] sm:$0xf]
      %v202 = vld [vmem:[%s166 + $0x6c] sm:$0xf]
      %v203 = vld [vmem:[%s166 + $0x70] sm:$0xf]
      %v204 = vld [vmem:[%s166 + $0x74] sm:$0xf]
      %v205 = vld [vmem:[%s166 + $0x78] sm:$0xf]
      %v206 = vld [vmem:[%s166 + $0x7c] sm:$0xf]
      %v207 = vld [vmem:[%s1] sm:$0xf]
      %v208 = vld [vmem:[%s2] sm:$0x1]
      %v210 = vlaneseq
      %v211 = vshrl.u32 %v210, 7
      %v212 = vsub.s32 0, %v211
      %v213 = vrot.slane %v208, %v212
      %v247 = vunpack.c.l.b16 %v175
      %v248 = vunpack.c.l.b16 %v176
      %v249 = vunpack.c.l.b16 %v177
      %v250 = vunpack.c.l.b16 %v178
      %v251 = vunpack.c.l.b16 %v179
      %v252 = vunpack.c.l.b16 %v180
      %v253 = vunpack.c.l.b16 %v181
      %v254 = vunpack.c.l.b16 %v182
      %v255 = vunpack.c.l.b16 %v183
      %v256 = vunpack.c.l.b16 %v184
      %v257 = vunpack.c.l.b16 %v185
      %v258 = vunpack.c.l.b16 %v186
      %v259 = vunpack.c.l.b16 %v187
      %v260 = vunpack.c.l.b16 %v188
      %v261 = vunpack.c.l.b16 %v189
      %v262 = vunpack.c.l.b16 %v190
      %v263 = vunpack.c.l.b16 %v191
      %v264 = vunpack.c.l.b16 %v192
      %v265 = vunpack.c.l.b16 %v193
      %v266 = vunpack.c.l.b16 %v194
      %v267 = vunpack.c.l.b16 %v195
      %v268 = vunpack.c.l.b16 %v196
      %v269 = vunpack.c.l.b16 %v197
      %v270 = vunpack.c.l.b16 %v198
      %v271 = vunpack.c.l.b16 %v199
      %v272 = vunpack.c.l.b16 %v200
      %v273 = vunpack.c.l.b16 %v201
      %v274 = vunpack.c.l.b16 %v202
      %v275 = vunpack.c.l.b16 %v203
      %v276 = vunpack.c.l.b16 %v204
      %v277 = vunpack.c.l.b16 %v205
      %v278 = vunpack.c.l.b16 %v206
      %v279 = vpack.c.b16 %v248, %v247
      %v280 = vpack.c.b16 %v250, %v249
      %v281 = vpack.c.b16 %v252, %v251
      %v282 = vpack.c.b16 %v254, %v253
      %v283 = vpack.c.b16 %v256, %v255
      %v284 = vpack.c.b16 %v258, %v257
      %v285 = vpack.c.b16 %v260, %v259
      %v286 = vpack.c.b16 %v262, %v261
      %v287 = vpack.c.b16 %v264, %v263
      %v288 = vpack.c.b16 %v266, %v265
      %v289 = vpack.c.b16 %v268, %v267
      %v290 = vpack.c.b16 %v270, %v269
      %v291 = vpack.c.b16 %v272, %v271
      %v292 = vpack.c.b16 %v274, %v273
      %v293 = vpack.c.b16 %v276, %v275
      %v294 = vpack.c.b16 %v278, %v277
      %vm295 = vcmask 64512
      %v297 = vsel %vm295, %v279, 0
      %v300 = vsel %vm295, %v280, 0
      %v303 = vsel %vm295, %v281, 0
      %v306 = vsel %vm295, %v282, 0
      %v309 = vsel %vm295, %v283, 0
      %v312 = vsel %vm295, %v284, 0
      %v315 = vsel %vm295, %v285, 0
      %v318 = vsel %vm295, %v286, 0
      %v321 = vsel %vm295, %v287, 0
      %v324 = vsel %vm295, %v288, 0
      %v327 = vsel %vm295, %v289, 0
      %v330 = vsel %vm295, %v290, 0
      %v333 = vsel %vm295, %v291, 0
      %v336 = vsel %vm295, %v292, 0
      %v339 = vsel %vm295, %v293, 0
      %v342 = vsel %vm295, %v294, 0
      %vm344 = vcmask 1043456
      %v346 = vsel %vm344, %v207, 0
      %348 = vmatprep.subr.bf16.mxu0 0
      %349 = vmatpush1.bf16.msra.mxu0 %v346
      %350 = vmatprep.subr.bf16.mxu0 0
      %351 = vmatpush1.bf16.msra.mxu0 0
      %352 = vmatprep.subr.bf16.mxu0 0
      %353 = vmatpush1.bf16.msra.mxu0 0
      %354 = vmatprep.subr.bf16.mxu0 0
      %355 = vmatpush1.bf16.msra.mxu0 0
      %356 = vmatprep.subr.bf16.mxu0 0
      %357 = vmatpush1.bf16.msra.mxu0 0
      %358 = vmatprep.subr.bf16.mxu0 0
      %359 = vmatpush1.bf16.msra.mxu0 0
      %360 = vmatprep.subr.bf16.mxu0 0
      %361 = vmatpush1.bf16.msra.mxu0 0
      %362 = vmatprep.subr.bf16.mxu0 0
      %363 = vmatpush1.bf16.msra.mxu0 0
      %364 = vmatprep.subr.bf16.mxu0 0
      %365 = vmatpush1.bf16.msra.mxu0 0
      %366 = vmatprep.subr.bf16.mxu0 0
      %367 = vmatpush1.bf16.msra.mxu0 0
      %368 = vmatprep.subr.bf16.mxu0 0
      %369 = vmatpush1.bf16.msra.mxu0 0
      %370 = vmatprep.subr.bf16.mxu0 0
      %371 = vmatpush1.bf16.msra.mxu0 0
      %372 = vmatprep.subr.bf16.mxu0 0
      %373 = vmatpush1.bf16.msra.mxu0 0
      %374 = vmatprep.subr.bf16.mxu0 0
      %375 = vmatpush1.bf16.msra.mxu0 0
      %376 = vmatprep.subr.bf16.mxu0 0
      %377 = vmatpush1.bf16.msra.mxu0 0
      %378 = vmatprep.subr.bf16.mxu0 0
      %379 = vmatpush1.bf16.msra.mxu0 0
      %380 = vmatprep.mubr.bf16.mxu0 0
      %381 = vmatmul.mubr.bf16.gmra.mrb[0].mxu0 %v297
      %v382 = vpop.f32.mrb[0].mxu0
      %v383 = vadd.f32 %v213, %v382
      %v384 = vpop.f32.mrb[0].mxu0
      %v385 = vpop.f32.mrb[0].mxu0
      %v386 = vadd.f32 %v213, %v385
      %v387 = vpop.f32.mrb[0].mxu0
      %388 = vmatprep.mubr.bf16.mxu0 0
      %389 = vmatmul.mubr.bf16.gmra.mrb[0].mxu0 %v300
      %v390 = vpop.f32.mrb[0].mxu0
      %v391 = vadd.f32 %v213, %v390
      %v392 = vpop.f32.mrb[0].mxu0
      %v393 = vpop.f32.mrb[0].mxu0
      %v394 = vadd.f32 %v213, %v393
      %v395 = vpop.f32.mrb[0].mxu0
      %396 = vmatprep.mubr.bf16.mxu0 0
      %397 = vmatmul.mubr.bf16.gmra.mrb[0].mxu0 %v303
      %v398 = vpop.f32.mrb[0].mxu0
      %v399 = vadd.f32 %v213, %v398
      %v400 = vpop.f32.mrb[0].mxu0
      %v401 = vpop.f32.mrb[0].mxu0
      %v402 = vadd.f32 %v213, %v401
      %v403 = vpop.f32.mrb[0].mxu0
      %404 = vmatprep.mubr.bf16.mxu0 0
      %405 = vmatmul.mubr.bf16.gmra.mrb[0].mxu0 %v306
      %v406 = vpop.f32.mrb[0].mxu0
      %v407 = vadd.f32 %v213, %v406
      %v408 = vpop.f32.mrb[0].mxu0
      %v409 = vpop.f32.mrb[0].mxu0
      %v410 = vadd.f32 %v213, %v409
      %v411 = vpop.f32.mrb[0].mxu0
      %412 = vmatprep.mubr.bf16.mxu0 0
      %413 = vmatmul.mubr.bf16.gmra.mrb[0].mxu0 %v309
      %v414 = vpop.f32.mrb[0].mxu0
      %v415 = vadd.f32 %v213, %v414
      %v416 = vpop.f32.mrb[0].mxu0
      %v417 = vpop.f32.mrb[0].mxu0
      %v418 = vadd.f32 %v213, %v417
      %v419 = vpop.f32.mrb[0].mxu0
      %420 = vmatprep.mubr.bf16.mxu0 0
      %421 = vmatmul.mubr.bf16.gmra.mrb[0].mxu0 %v312
      %v422 = vpop.f32.mrb[0].mxu0
      %v423 = vadd.f32 %v213, %v422
      %v424 = vpop.f32.mrb[0].mxu0
      %v425 = vpop.f32.mrb[0].mxu0
      %v426 = vadd.f32 %v213, %v425
      %v427 = vpop.f32.mrb[0].mxu0
      %428 = vmatprep.mubr.bf16.mxu0 0
      %429 = vmatmul.mubr.bf16.gmra.mrb[0].mxu0 %v315
      %v430 = vpop.f32.mrb[0].mxu0
      %v431 = vadd.f32 %v213, %v430
      %v432 = vpop.f32.mrb[0].mxu0
      %v433 = vpop.f32.mrb[0].mxu0
      %v434 = vadd.f32 %v213, %v433
      %v435 = vpop.f32.mrb[0].mxu0
      %436 = vmatprep.mubr.bf16.mxu0 0
      %437 = vmatmul.mubr.bf16.gmra.mrb[0].mxu0 %v318
      %v438 = vpop.f32.mrb[0].mxu0
      %v439 = vadd.f32 %v213, %v438
      %v440 = vpop.f32.mrb[0].mxu0
      %v441 = vpop.f32.mrb[0].mxu0
      %v442 = vadd.f32 %v213, %v441
      %v443 = vpop.f32.mrb[0].mxu0
      %444 = vmatprep.mubr.bf16.mxu0 0
      %445 = vmatmul.mubr.bf16.gmra.mrb[0].mxu0 %v321
      %v446 = vpop.f32.mrb[0].mxu0
      %v447 = vadd.f32 %v213, %v446
      %v448 = vpop.f32.mrb[0].mxu0
      %v449 = vpop.f32.mrb[0].mxu0
      %v450 = vadd.f32 %v213, %v449
      %v451 = vpop.f32.mrb[0].mxu0
      %452 = vmatprep.mubr.bf16.mxu0 0
      %453 = vmatmul.mubr.bf16.gmra.mrb[0].mxu0 %v324
      %v454 = vpop.f32.mrb[0].mxu0
      %v455 = vadd.f32 %v213, %v454
      %v456 = vpop.f32.mrb[0].mxu0
      %v457 = vpop.f32.mrb[0].mxu0
      %v458 = vadd.f32 %v213, %v457
      %v459 = vpop.f32.mrb[0].mxu0
      %460 = vmatprep.mubr.bf16.mxu0 0
      %461 = vmatmul.mubr.bf16.gmra.mrb[0].mxu0 %v327
      %v462 = vpop.f32.mrb[0].mxu0
      %v463 = vadd.f32 %v213, %v462
      %v464 = vpop.f32.mrb[0].mxu0
      %v465 = vpop.f32.mrb[0].mxu0
      %v466 = vadd.f32 %v213, %v465
      %v467 = vpop.f32.mrb[0].mxu0
      %468 = vmatprep.mubr.bf16.mxu0 0
      %469 = vmatmul.mubr.bf16.gmra.mrb[0].mxu0 %v330
      %v470 = vpop.f32.mrb[0].mxu0
      %v471 = vadd.f32 %v213, %v470
      %v472 = vpop.f32.mrb[0].mxu0
      %v473 = vpop.f32.mrb[0].mxu0
      %v474 = vadd.f32 %v213, %v473
      %v475 = vpop.f32.mrb[0].mxu0
      %476 = vmatprep.mubr.bf16.mxu0 0
      %477 = vmatmul.mubr.bf16.gmra.mrb[0].mxu0 %v333
      %v478 = vpop.f32.mrb[0].mxu0
      %v479 = vadd.f32 %v213, %v478
      %v480 = vpop.f32.mrb[0].mxu0
      %v481 = vpop.f32.mrb[0].mxu0
      %v482 = vadd.f32 %v213, %v481
      %v483 = vpop.f32.mrb[0].mxu0
      %484 = vmatprep.mubr.bf16.mxu0 0
      %485 = vmatmul.mubr.bf16.gmra.mrb[0].mxu0 %v336
      %v486 = vpop.f32.mrb[0].mxu0
      %v487 = vadd.f32 %v213, %v486
      %v488 = vpop.f32.mrb[0].mxu0
      %v489 = vpop.f32.mrb[0].mxu0
      %v490 = vadd.f32 %v213, %v489
      %v491 = vpop.f32.mrb[0].mxu0
      %492 = vmatprep.mubr.bf16.mxu0 0
      %493 = vmatmul.mubr.bf16.gmra.mrb[0].mxu0 %v339
      %v494 = vpop.f32.mrb[0].mxu0
      %v495 = vadd.f32 %v213, %v494
      %v496 = vpop.f32.mrb[0].mxu0
      %v497 = vpop.f32.mrb[0].mxu0
      %v498 = vadd.f32 %v213, %v497
      %v499 = vpop.f32.mrb[0].mxu0
      %500 = vmatprep.mubr.bf16.mxu0 0
      %501 = vmatmul.mubr.bf16.gmra.mrb[0].mxu0 %v342
      %v502 = vpop.f32.mrb[0].mxu0
      %v503 = vadd.f32 %v213, %v502
      %v504 = vpop.f32.mrb[0].mxu0
      %v505 = vpop.f32.mrb[0].mxu0
      %v506 = vadd.f32 %v213, %v505
      %v507 = vpop.f32.mrb[0].mxu0
      %508 = vdwg.mxu0
      %v509 = vmul.f32 %v383, 0.5
      %v510 = vmul.f32 %v386, 0.5
      %v511 = vmul.f32 %v391, 0.5
      %v512 = vmul.f32 %v394, 0.5
      %v513 = vmul.f32 %v399, 0.5
      %v514 = vmul.f32 %v402, 0.5
      %v515 = vmul.f32 %v407, 0.5
      %v516 = vmul.f32 %v410, 0.5
      %v517 = vmul.f32 %v415, 0.5
      %v518 = vmul.f32 %v418, 0.5
      %v519 = vmul.f32 %v423, 0.5
      %v520 = vmul.f32 %v426, 0.5
      %v521 = vmul.f32 %v431, 0.5
      %v522 = vmul.f32 %v434, 0.5
      %v523 = vmul.f32 %v439, 0.5
      %v524 = vmul.f32 %v442, 0.5
      %v525 = vmul.f32 %v447, 0.5
      %v526 = vmul.f32 %v450, 0.5
      %v527 = vmul.f32 %v455, 0.5
      %v528 = vmul.f32 %v458, 0.5
      %v529 = vmul.f32 %v463, 0.5
      %v530 = vmul.f32 %v466, 0.5
      %v531 = vmul.f32 %v471, 0.5
      %v532 = vmul.f32 %v474, 0.5
      %v533 = vmul.f32 %v479, 0.5
      %v534 = vmul.f32 %v482, 0.5
      %v535 = vmul.f32 %v487, 0.5
      %v536 = vmul.f32 %v490, 0.5
      %v537 = vmul.f32 %v495, 0.5
      %v538 = vmul.f32 %v498, 0.5
      %v539 = vmul.f32 %v503, 0.5
      %v540 = vmul.f32 %v506, 0.5
      %v541 = vmul.f32 %v383, 0.044715
      %v542 = vmul.f32 %v386, 0.044715
      %v543 = vmul.f32 %v391, 0.044715
      %v544 = vmul.f32 %v394, 0.044715
      %v545 = vmul.f32 %v399, 0.044715
      %v546 = vmul.f32 %v402, 0.044715
      %v547 = vmul.f32 %v407, 0.044715
      %v548 = vmul.f32 %v410, 0.044715
      %v549 = vmul.f32 %v415, 0.044715
      %v550 = vmul.f32 %v418, 0.044715
      %v551 = vmul.f32 %v423, 0.044715
      %v552 = vmul.f32 %v426, 0.044715
      %v553 = vmul.f32 %v431, 0.044715
      %v554 = vmul.f32 %v434, 0.044715
      %v555 = vmul.f32 %v439, 0.044715
      %v556 = vmul.f32 %v442, 0.044715
      %v557 = vmul.f32 %v447, 0.044715
      %v558 = vmul.f32 %v450, 0.044715
      %v559 = vmul.f32 %v455, 0.044715
      %v560 = vmul.f32 %v458, 0.044715
      %v561 = vmul.f32 %v463, 0.044715
      %v562 = vmul.f32 %v466, 0.044715
      %v563 = vmul.f32 %v471, 0.044715
      %v564 = vmul.f32 %v474, 0.044715
      %v565 = vmul.f32 %v479, 0.044715
      %v566 = vmul.f32 %v482, 0.044715
      %v567 = vmul.f32 %v487, 0.044715
      %v568 = vmul.f32 %v490, 0.044715
      %v569 = vmul.f32 %v495, 0.044715
      %v570 = vmul.f32 %v498, 0.044715
      %v571 = vmul.f32 %v503, 0.044715
      %v572 = vmul.f32 %v506, 0.044715
      %v573 = vmul.f32 %v541, %v383
      %v574 = vmul.f32 %v542, %v386
      %v575 = vmul.f32 %v543, %v391
      %v576 = vmul.f32 %v544, %v394
      %v577 = vmul.f32 %v545, %v399
      %v578 = vmul.f32 %v546, %v402
      %v579 = vmul.f32 %v547, %v407
      %v580 = vmul.f32 %v548, %v410
      %v581 = vmul.f32 %v549, %v415
      %v582 = vmul.f32 %v550, %v418
      %v583 = vmul.f32 %v551, %v423
      %v584 = vmul.f32 %v552, %v426
      %v585 = vmul.f32 %v553, %v431
      %v586 = vmul.f32 %v554, %v434
      %v587 = vmul.f32 %v555, %v439
      %v588 = vmul.f32 %v556, %v442
      %v589 = vmul.f32 %v557, %v447
      %v590 = vmul.f32 %v558, %v450
      %v591 = vmul.f32 %v559, %v455
      %v592 = vmul.f32 %v560, %v458
      %v593 = vmul.f32 %v561, %v463
      %v594 = vmul.f32 %v562, %v466
      %v595 = vmul.f32 %v563, %v471
      %v596 = vmul.f32 %v564, %v474
      %v597 = vmul.f32 %v565, %v479
      %v598 = vmul.f32 %v566, %v482
      %v599 = vmul.f32 %v567, %v487
      %v600 = vmul.f32 %v568, %v490
      %v601 = vmul.f32 %v569, %v495
      %v602 = vmul.f32 %v570, %v498
      %v603 = vmul.f32 %v571, %v503
      %v604 = vmul.f32 %v572, %v506
      %v605 = vmul.f32 %v573, %v383
      %v606 = vmul.f32 %v574, %v386
      %v607 = vmul.f32 %v575, %v391
      %v608 = vmul.f32 %v576, %v394
      %v609 = vmul.f32 %v577, %v399
      %v610 = vmul.f32 %v578, %v402
      %v611 = vmul.f32 %v579, %v407
      %v612 = vmul.f32 %v580, %v410
      %v613 = vmul.f32 %v581, %v415
      %v614 = vmul.f32 %v582, %v418
      %v615 = vmul.f32 %v583, %v423
      %v616 = vmul.f32 %v584, %v426
      %v617 = vmul.f32 %v585, %v431
      %v618 = vmul.f32 %v586, %v434
      %v619 = vmul.f32 %v587, %v439
      %v620 = vmul.f32 %v588, %v442
      %v621 = vmul.f32 %v589, %v447
      %v622 = vmul.f32 %v590, %v450
      %v623 = vmul.f32 %v591, %v455
      %v624 = vmul.f32 %v592, %v458
      %v625 = vmul.f32 %v593, %v463
      %v626 = vmul.f32 %v594, %v466
      %v627 = vmul.f32 %v595, %v471
      %v628 = vmul.f32 %v596, %v474
      %v629 = vmul.f32 %v597, %v479
      %v630 = vmul.f32 %v598, %v482
      %v631 = vmul.f32 %v599, %v487
      %v632 = vmul.f32 %v600, %v490
      %v633 = vmul.f32 %v601, %v495
      %v634 = vmul.f32 %v602, %v498
      %v635 = vmul.f32 %v603, %v503
      %v636 = vmul.f32 %v604, %v506
      %v637 = vadd.f32 %v383, %v605
      %v638 = vadd.f32 %v386, %v606
      %v639 = vadd.f32 %v391, %v607
      %v640 = vadd.f32 %v394, %v608
      %v641 = vadd.f32 %v399, %v609
      %v642 = vadd.f32 %v402, %v610
      %v643 = vadd.f32 %v407, %v611
      %v644 = vadd.f32 %v410, %v612
      %v645 = vadd.f32 %v415, %v613
      %v646 = vadd.f32 %v418, %v614
      %v647 = vadd.f32 %v423, %v615
      %v648 = vadd.f32 %v426, %v616
      %v649 = vadd.f32 %v431, %v617
      %v650 = vadd.f32 %v434, %v618
      %v651 = vadd.f32 %v439, %v619
      %v652 = vadd.f32 %v442, %v620
      %v653 = vadd.f32 %v447, %v621
      %v654 = vadd.f32 %v450, %v622
      %v655 = vadd.f32 %v455, %v623
      %v656 = vadd.f32 %v458, %v624
      %v657 = vadd.f32 %v463, %v625
      %v658 = vadd.f32 %v466, %v626
      %v659 = vadd.f32 %v471, %v627
      %v660 = vadd.f32 %v474, %v628
      %v661 = vadd.f32 %v479, %v629
      %v662 = vadd.f32 %v482, %v630
      %v663 = vadd.f32 %v487, %v631
      %v664 = vadd.f32 %v490, %v632
      %v665 = vadd.f32 %v495, %v633
      %v666 = vadd.f32 %v498, %v634
      %v667 = vadd.f32 %v503, %v635
      %v668 = vadd.f32 %v506, %v636
      %v669 = vmul.f32 %v637, 0.7978846
      %v670 = vmul.f32 %v638, 0.7978846
      %v671 = vmul.f32 %v639, 0.7978846
      %v672 = vmul.f32 %v640, 0.7978846
      %v673 = vmul.f32 %v641, 0.7978846
      %v674 = vmul.f32 %v642, 0.7978846
      %v675 = vmul.f32 %v643, 0.7978846
      %v676 = vmul.f32 %v644, 0.7978846
      %v677 = vmul.f32 %v645, 0.7978846
      %v678 = vmul.f32 %v646, 0.7978846
      %v679 = vmul.f32 %v647, 0.7978846
      %v680 = vmul.f32 %v648, 0.7978846
      %v681 = vmul.f32 %v649, 0.7978846
      %v682 = vmul.f32 %v650, 0.7978846
      %v683 = vmul.f32 %v651, 0.7978846
      %v684 = vmul.f32 %v652, 0.7978846
      %v685 = vmul.f32 %v653, 0.7978846
      %v686 = vmul.f32 %v654, 0.7978846
      %v687 = vmul.f32 %v655, 0.7978846
      %v688 = vmul.f32 %v656, 0.7978846
      %v689 = vmul.f32 %v657, 0.7978846
      %v690 = vmul.f32 %v658, 0.7978846
      %v691 = vmul.f32 %v659, 0.7978846
      %v692 = vmul.f32 %v660, 0.7978846
      %v693 = vmul.f32 %v661, 0.7978846
      %v694 = vmul.f32 %v662, 0.7978846
      %v695 = vmul.f32 %v663, 0.7978846
      %v696 = vmul.f32 %v664, 0.7978846
      %v697 = vmul.f32 %v665, 0.7978846
      %v698 = vmul.f32 %v666, 0.7978846
      %v699 = vmul.f32 %v667, 0.7978846
      %v700 = vmul.f32 %v668, 0.7978846
      %v701 = vtanh.pop %v669
      %v702 = vtanh.pop %v670
      %v703 = vtanh.pop %v671
      %v704 = vtanh.pop %v672
      %v705 = vtanh.pop %v673
      %v706 = vtanh.pop %v674
      %v707 = vtanh.pop %v675
      %v708 = vtanh.pop %v676
      %v709 = vtanh.pop %v677
      %v710 = vtanh.pop %v678
      %v711 = vtanh.pop %v679
      %v712 = vtanh.pop %v680
      %v713 = vtanh.pop %v681
      %v714 = vtanh.pop %v682
      %v715 = vtanh.pop %v683
      %v716 = vtanh.pop %v684
      %v717 = vtanh.pop %v685
      %v718 = vtanh.pop %v686
      %v719 = vtanh.pop %v687
      %v720 = vtanh.pop %v688
      %v721 = vtanh.pop %v689
      %v722 = vtanh.pop %v690
      %v723 = vtanh.pop %v691
      %v724 = vtanh.pop %v692
      %v725 = vtanh.pop %v693
      %v726 = vtanh.pop %v694
      %v727 = vtanh.pop %v695
      %v728 = vtanh.pop %v696
      %v729 = vtanh.pop %v697
      %v730 = vtanh.pop %v698
      %v731 = vtanh.pop %v699
      %v732 = vtanh.pop %v700
      %v733 = vadd.f32 %v701, 1.0
      %v734 = vadd.f32 %v702, 1.0
      %v735 = vadd.f32 %v703, 1.0
      %v736 = vadd.f32 %v704, 1.0
      %v737 = vadd.f32 %v705, 1.0
      %v738 = vadd.f32 %v706, 1.0
      %v739 = vadd.f32 %v707, 1.0
      %v740 = vadd.f32 %v708, 1.0
      %v741 = vadd.f32 %v709, 1.0
      %v742 = vadd.f32 %v710, 1.0
      %v743 = vadd.f32 %v711, 1.0
      %v744 = vadd.f32 %v712, 1.0
      %v745 = vadd.f32 %v713, 1.0
      %v746 = vadd.f32 %v714, 1.0
      %v747 = vadd.f32 %v715, 1.0
      %v748 = vadd.f32 %v716, 1.0
      %v749 = vadd.f32 %v717, 1.0
      %v750 = vadd.f32 %v718, 1.0
      %v751 = vadd.f32 %v719, 1.0
      %v752 = vadd.f32 %v720, 1.0
      %v753 = vadd.f32 %v721, 1.0
      %v754 = vadd.f32 %v722, 1.0
      %v755 = vadd.f32 %v723, 1.0
      %v756 = vadd.f32 %v724, 1.0
      %v757 = vadd.f32 %v725, 1.0
      %v758 = vadd.f32 %v726, 1.0
      %v759 = vadd.f32 %v727, 1.0
      %v760 = vadd.f32 %v728, 1.0
      %v761 = vadd.f32 %v729, 1.0
      %v762 = vadd.f32 %v730, 1.0
      %v763 = vadd.f32 %v731, 1.0
      %v764 = vadd.f32 %v732, 1.0
      %v765 = vmul.f32 %v509, %v733
      %v766 = vmul.f32 %v510, %v734
      %v767 = vmul.f32 %v511, %v735
      %v768 = vmul.f32 %v512, %v736
      %v769 = vmul.f32 %v513, %v737
      %v770 = vmul.f32 %v514, %v738
      %v771 = vmul.f32 %v515, %v739
      %v772 = vmul.f32 %v516, %v740
      %v773 = vmul.f32 %v517, %v741
      %v774 = vmul.f32 %v518, %v742
      %v775 = vmul.f32 %v519, %v743
      %v776 = vmul.f32 %v520, %v744
      %v777 = vmul.f32 %v521, %v745
      %v778 = vmul.f32 %v522, %v746
      %v779 = vmul.f32 %v523, %v747
      %v780 = vmul.f32 %v524, %v748
      %v781 = vmul.f32 %v525, %v749
      %v782 = vmul.f32 %v526, %v750
      %v783 = vmul.f32 %v527, %v751
      %v784 = vmul.f32 %v528, %v752
      %v785 = vmul.f32 %v529, %v753
      %v786 = vmul.f32 %v530, %v754
      %v787 = vmul.f32 %v531, %v755
      %v788 = vmul.f32 %v532, %v756
      %v789 = vmul.f32 %v533, %v757
      %v790 = vmul.f32 %v534, %v758
      %v791 = vmul.f32 %v535, %v759
      %v792 = vmul.f32 %v536, %v760
      %v793 = vmul.f32 %v537, %v761
      %v794 = vmul.f32 %v538, %v762
      %v795 = vmul.f32 %v539, %v763
      %v796 = vmul.f32 %v540, %v764
      %v797 = vpack.c.bf16 %v766, %v765
      %v798 = vpack.c.bf16 %v768, %v767
      %v799 = vpack.c.bf16 %v770, %v769
      %v800 = vpack.c.bf16 %v772, %v771
      %v801 = vpack.c.bf16 %v774, %v773
      %v802 = vpack.c.bf16 %v776, %v775
      %v803 = vpack.c.bf16 %v778, %v777
      %v804 = vpack.c.bf16 %v780, %v779
      %v805 = vpack.c.bf16 %v782, %v781
      %v806 = vpack.c.bf16 %v784, %v783
      %v807 = vpack.c.bf16 %v786, %v785
      %v808 = vpack.c.bf16 %v788, %v787
      %v809 = vpack.c.bf16 %v790, %v789
      %v810 = vpack.c.bf16 %v792, %v791
      %v811 = vpack.c.bf16 %v794, %v793
      %v812 = vpack.c.bf16 %v796, %v795
      %v829 = vunpack.c.l.b16 %v797
      %v830 = vunpack.c.h.b16 %v797
      %v831 = vunpack.c.l.b16 %v798
      %v832 = vunpack.c.h.b16 %v798
      %v833 = vunpack.c.l.b16 %v799
      %v834 = vunpack.c.h.b16 %v799
      %v835 = vunpack.c.l.b16 %v800
      %v836 = vunpack.c.h.b16 %v800
      %v837 = vunpack.c.l.b16 %v801
      %v838 = vunpack.c.h.b16 %v801
      %v839 = vunpack.c.l.b16 %v802
      %v840 = vunpack.c.h.b16 %v802
      %v841 = vunpack.c.l.b16 %v803
      %v842 = vunpack.c.h.b16 %v803
      %v843 = vunpack.c.l.b16 %v804
      %v844 = vunpack.c.h.b16 %v804
      %v845 = vunpack.c.l.b16 %v805
      %v846 = vunpack.c.h.b16 %v805
      %v847 = vunpack.c.l.b16 %v806
      %v848 = vunpack.c.h.b16 %v806
      %v849 = vunpack.c.l.b16 %v807
      %v850 = vunpack.c.h.b16 %v807
      %v851 = vunpack.c.l.b16 %v808
      %v852 = vunpack.c.h.b16 %v808
      %v853 = vunpack.c.l.b16 %v809
      %v854 = vunpack.c.h.b16 %v809
      %v855 = vunpack.c.l.b16 %v810
      %v856 = vunpack.c.h.b16 %v810
      %v857 = vunpack.c.l.b16 %v811
      %v858 = vunpack.c.h.b16 %v811
      %v859 = vunpack.c.l.b16 %v812
      %v860 = vunpack.c.h.b16 %v812
      %v861 = vpack.c.b16 %v829, %v829
      %v862 = vpack.c.b16 %v830, %v830
      %v863 = vpack.c.b16 %v831, %v831
      %v864 = vpack.c.b16 %v832, %v832
      %v865 = vpack.c.b16 %v833, %v833
      %v866 = vpack.c.b16 %v834, %v834
      %v867 = vpack.c.b16 %v835, %v835
      %v868 = vpack.c.b16 %v836, %v836
      %v869 = vpack.c.b16 %v837, %v837
      %v870 = vpack.c.b16 %v838, %v838
      %v871 = vpack.c.b16 %v839, %v839
      %v872 = vpack.c.b16 %v840, %v840
      %v873 = vpack.c.b16 %v841, %v841
      %v874 = vpack.c.b16 %v842, %v842
      %v875 = vpack.c.b16 %v843, %v843
      %v876 = vpack.c.b16 %v844, %v844
      %v877 = vpack.c.b16 %v845, %v845
      %v878 = vpack.c.b16 %v846, %v846
      %v879 = vpack.c.b16 %v847, %v847
      %v880 = vpack.c.b16 %v848, %v848
      %v881 = vpack.c.b16 %v849, %v849
      %v882 = vpack.c.b16 %v850, %v850
      %v883 = vpack.c.b16 %v851, %v851
      %v884 = vpack.c.b16 %v852, %v852
      %v885 = vpack.c.b16 %v853, %v853
      %v886 = vpack.c.b16 %v854, %v854
      %v887 = vpack.c.b16 %v855, %v855
      %v888 = vpack.c.b16 %v856, %v856
      %v889 = vpack.c.b16 %v857, %v857
      %v890 = vpack.c.b16 %v858, %v858
      %v891 = vpack.c.b16 %v859, %v859
      %v892 = vpack.c.b16 %v860, %v860
      %vm925 = vcmask 519168
      %926 = vst.msk [vmem:[%s172] sm:$0xf] %vm925, %v861
      %927 = vst.msk [vmem:[%s172 + $0x4] sm:$0xf] %vm925, %v862
      %928 = vst.msk [vmem:[%s172 + $0x8] sm:$0xf] %vm925, %v863
      %929 = vst.msk [vmem:[%s172 + $0xc] sm:$0xf] %vm925, %v864
      %930 = vst.msk [vmem:[%s172 + $0x10] sm:$0xf] %vm925, %v865
      %931 = vst.msk [vmem:[%s172 + $0x14] sm:$0xf] %vm925, %v866
      %932 = vst.msk [vmem:[%s172 + $0x18] sm:$0xf] %vm925, %v867
      %933 = vst.msk [vmem:[%s172 + $0x1c] sm:$0xf] %vm925, %v868
      %934 = vst.msk [vmem:[%s172 + $0x20] sm:$0xf] %vm925, %v869
      %935 = vst.msk [vmem:[%s172 + $0x24] sm:$0xf] %vm925, %v870
      %936 = vst.msk [vmem:[%s172 + $0x28] sm:$0xf] %vm925, %v871
      %937 = vst.msk [vmem:[%s172 + $0x2c] sm:$0xf] %vm925, %v872
      %938 = vst.msk [vmem:[%s172 + $0x30] sm:$0xf] %vm925, %v873
      %939 = vst.msk [vmem:[%s172 + $0x34] sm:$0xf] %vm925, %v874
      %940 = vst.msk [vmem:[%s172 + $0x38] sm:$0xf] %vm925, %v875
      %941 = vst.msk [vmem:[%s172 + $0x3c] sm:$0xf] %vm925, %v876
      %942 = vst.msk [vmem:[%s172 + $0x40] sm:$0xf] %vm925, %v877
      %943 = vst.msk [vmem:[%s172 + $0x44] sm:$0xf] %vm925, %v878
      %944 = vst.msk [vmem:[%s172 + $0x48] sm:$0xf] %vm925, %v879
      %945 = vst.msk [vmem:[%s172 + $0x4c] sm:$0xf] %vm925, %v880
      %946 = vst.msk [vmem:[%s172 + $0x50] sm:$0xf] %vm925, %v881
      %947 = vst.msk [vmem:[%s172 + $0x54] sm:$0xf] %vm925, %v882
      %948 = vst.msk [vmem:[%s172 + $0x58] sm:$0xf] %vm925, %v883
      %949 = vst.msk [vmem:[%s172 + $0x5c] sm:$0xf] %vm925, %v884
      %950 = vst.msk [vmem:[%s172 + $0x60] sm:$0xf] %vm925, %v885
      %951 = vst.msk [vmem:[%s172 + $0x64] sm:$0xf] %vm925, %v886
      %952 = vst.msk [vmem:[%s172 + $0x68] sm:$0xf] %vm925, %v887
      %953 = vst.msk [vmem:[%s172 + $0x6c] sm:$0xf] %vm925, %v888
      %954 = vst.msk [vmem:[%s172 + $0x70] sm:$0xf] %vm925, %v889
      %955 = vst.msk [vmem:[%s172 + $0x74] sm:$0xf] %vm925, %v890
      %956 = vst.msk [vmem:[%s172 + $0x78] sm:$0xf] %vm925, %v891
      %957 = vst.msk [vmem:[%s172 + $0x7c] sm:$0xf] %vm925, %v892
      %s958 = smul.u32 32, %s14
      %p959 = scmp.lt.s32.totalorder %s958, 63
      %s960 = scalar_select %p959, %s958, 63
      %s961 = smul.addr %s960, 4
      %s962 = scalar_lea.vmem %s3, %s961
      // Predicated region
      $region33: #{maxvit_forward.12} parent=31 // pred_check
        %p963 = pneg %p100
      $region34: #{maxvit_forward.12} parent=31 // pred_check_branch
        %965 = sbr.rel (%p963) target = $region36
      $region35: #{maxvit_forward.12} parent=31 // pred_region
        %s966 = smul.u32 32, %s14
      $region36: #{maxvit_forward.12} parent=31 // pred_fallthru
        _
    $region32: #{maxvit_forward.12} parent=5 // pred_fallthru
      _
    %p967 = scmp.le.s32.totalorder 2, %s9
    // Predicated region
    $region37: #{maxvit_forward.12} parent=5 // pred_check
      %p968 = pneg %p967
    $region38: #{maxvit_forward.12} parent=5 // pred_check_branch
      %970 = sbr.rel (%p968) target = $region40
    $region39: #{maxvit_forward.12} parent=5 // pred_region
      %s971 = ssub.s32 %s9, 2
      // Predicated region
      $region41: #{maxvit_forward.12} parent=39 // pred_check
        %p972 = pneg %p106
      $region42: #{maxvit_forward.12} parent=39 // pred_check_branch
        %974 = sbr.rel (%p972) target = $region44
      $region43: #{maxvit_forward.12} parent=39 // pred_region
        %s975 = smul.u32 32, %s15
        %p976 = scmp.lt.s32.totalorder %s975, 63
        %s977 = scalar_select %p976, %s975, 63
        %s978 = smul.addr %s977, 4
        %s979 = scalar_lea.vmem %s3, %s978
      $region44: #{maxvit_forward.12} parent=39 // pred_fallthru
        _
    $region40: #{maxvit_forward.12} parent=5 // pred_fallthru
      _
  $region6: #{maxvit_forward.12} parent=0 // loop_footer
    %s13 = sadd.s32 1, %s9
  $region7: #{maxvit_forward.12} parent=0 // loop_footer_branch
    %8 = sbr.rel target = $region3
  $region8: #{maxvit_forward.12} parent=0 // loop_exit
    _

// kernel: maxvit_forward.13
$region0: #{maxvit_forward.13}
  #allocation0 [shape = 'u32[]', space=smem, size = 0x4, offset = 0x4, fixed_abs, tag = 'smem constant byte address 0x4 - core index']
  #allocation1 [shape = 'u32[144,128]{1,0:T(1,128)}', space=vmem, size = 0x12000, scoped, tag = 'internal scratch']
  %s0 = inlined_call_operand.vmem [shape: bf16[2,8,8,256], index: 0, kind: input, shape index: {}]
  %s1 = inlined_call_operand.vmem [shape: f32[9,64], index: 1, kind: input, shape index: {}]
  %s2 = inlined_call_operand.vmem [shape: f32[1,64], index: 2, kind: input, shape index: {}]
  %s3 = inlined_call_operand.vmem [shape: bf16[2,8,8,64], index: 3, kind: output, shape index: {}]
  %s4 = sld [smem:[#allocation0]]
  $region45: #{maxvit_forward.13} parent=0
    _
  %s6 = ssub.s32 1, %s4
  %s7 = scalar_select 0, %s6, %s4
  loop: start=0, step=1, limit=4
  $region2: #{maxvit_forward.13} parent=0 // loop_pre_header
    _
  $region3: #{maxvit_forward.13} parent=0 // loop_header
    %s9 = sphi 0, %s13
    %p10 = scmp.ge.s32.totalorder %s9, 4
    %s19 = sphi 0, %s21
    %s22 = sphi 0, %s19
    %s23 = sphi 0, %s22
    %s39 = sphi 0, %s23
    %s43 = sphi 0, %s43
    %s45 = sphi 0, %s43
    %s46 = sphi 0, %s45
    %s60 = sphi 0, %s46
    %s64 = sphi 0, %s64
    %s66 = sphi 0, %s64
    %s67 = sphi 0, %s66
    %s81 = sphi 0, %s67
    %s87 = sphi 0, %s89
    %s90 = sphi 0, %s87
    %s91 = sphi 0, %s90
    %s107 = sphi 0, %s91
  $region4: #{maxvit_forward.13} parent=0 // loop_header_branch
    %12 = sbr.rel (%p10) target = $region8
  $region5: #{maxvit_forward.13} parent=0 // loop_body
    %s14 = ssub.s32 %s9, 1
    %s15 = ssub.s32 %s9, 2
    %s16 = sadd.s32 %s9, 1
    %s17 = ssub.s32 %s9, %s16
    %p18 = scmp.eq.s32.totalorder %s17, 0
    %s20 = sadd.s32 %s19, 1
    %s21 = scalar_select %p18, %s19, %s20
    %p24 = pneg %p18
    %p25 = scmp.eq.s32.totalorder %s9, 1
    %p26 = por %p24, %p25
    %p27 = scmp.ne.s32.totalorder %s19, %s22
    %p28 = scmp.eq.s32.totalorder %s9, 0
    %p29 = por %p27, %p28
    %p30 = scmp.ne.s32.totalorder %s19, %s22
    %p31 = scmp.eq.s32.totalorder %s14, 1
    %p32 = por %p30, %p31
    %p33 = scmp.ne.s32.totalorder %s22, %s23
    %p34 = scmp.eq.s32.totalorder %s14, 0
    %p35 = por %p33, %p34
    %p36 = scmp.ne.s32.totalorder %s22, %s23
    %p37 = scmp.eq.s32.totalorder %s15, 1
    %p38 = por %p36, %p37
    %p40 = scmp.ne.s32.totalorder %s23, %s39
    %p41 = scmp.eq.s32.totalorder %s15, 0
    %p42 = por %p40, %p41
    %s44 = sadd.s32 %s43, 1
    %p47 = scmp.eq.s32.totalorder %s9, 1
    %p48 = scmp.ne.s32.totalorder %s43, %s45
    %p49 = scmp.eq.s32.totalorder %s9, 0
    %p50 = por %p48, %p49
    %p51 = scmp.ne.s32.totalorder %s43, %s45
    %p52 = scmp.eq.s32.totalorder %s14, 1
    %p53 = por %p51, %p52
    %p54 = scmp.ne.s32.totalorder %s45, %s46
    %p55 = scmp.eq.s32.totalorder %s14, 0
    %p56 = por %p54, %p55
    %p57 = scmp.ne.s32.totalorder %s45, %s46
    %p58 = scmp.eq.s32.totalorder %s15, 1
    %p59 = por %p57, %p58
    %p61 = scmp.ne.s32.totalorder %s46, %s60
    %p62 = scmp.eq.s32.totalorder %s15, 0
    %p63 = por %p61, %p62
    %s65 = sadd.s32 %s64, 1
    %p68 = scmp.eq.s32.totalorder %s9, 1
    %p69 = scmp.ne.s32.totalorder %s64, %s66
    %p70 = scmp.eq.s32.totalorder %s9, 0
    %p71 = por %p69, %p70
    %p72 = scmp.ne.s32.totalorder %s64, %s66
    %p73 = scmp.eq.s32.totalorder %s14, 1
    %p74 = por %p72, %p73
    %p75 = scmp.ne.s32.totalorder %s66, %s67
    %p76 = scmp.eq.s32.totalorder %s14, 0
    %p77 = por %p75, %p76
    %p78 = scmp.ne.s32.totalorder %s66, %s67
    %p79 = scmp.eq.s32.totalorder %s15, 1
    %p80 = por %p78, %p79
    %p82 = scmp.ne.s32.totalorder %s67, %s81
    %p83 = scmp.eq.s32.totalorder %s15, 0
    %p84 = por %p82, %p83
    %s85 = ssub.s32 %s9, %s16
    %p86 = scmp.eq.s32.totalorder %s85, 0
    %s88 = sadd.s32 %s87, 1
    %s89 = scalar_select %p86, %s87, %s88
    %p92 = pneg %p86
    %p93 = scmp.eq.s32.totalorder %s9, 1
    %p94 = por %p92, %p93
    %p95 = scmp.ne.s32.totalorder %s87, %s90
    %p96 = scmp.eq.s32.totalorder %s9, 0
    %p97 = por %p95, %p96
    %p98 = scmp.ne.s32.totalorder %s87, %s90
    %p99 = scmp.eq.s32.totalorder %s14, 1
    %p100 = por %p98, %p99
    %p101 = scmp.ne.s32.totalorder %s90, %s91
    %p102 = scmp.eq.s32.totalorder %s14, 0
    %p103 = por %p101, %p102
    %p104 = scmp.ne.s32.totalorder %s90, %s91
    %p105 = scmp.eq.s32.totalorder %s15, 1
    %p106 = por %p104, %p105
    %p108 = scmp.ne.s32.totalorder %s91, %s107
    %p109 = scmp.eq.s32.totalorder %s15, 0
    %p110 = por %p108, %p109
    %p111 = scmp.le.s32.totalorder 1, %s9
    %p112 = scmp.lt.s32.totalorder %s9, 3
    %p113 = pnand %p111, %p112
    %p114 = pneg %p113
    // Predicated region
    $region9: #{maxvit_forward.13} parent=5 // pred_check
      _
    $region10: #{maxvit_forward.13} parent=5 // pred_check_branch
      %116 = sbr.rel (%p113) target = $region12
    $region11: #{maxvit_forward.13} parent=5 // pred_region
      %s117 = ssub.s32 %s9, 1
      // Predicated region
      $region13: #{maxvit_forward.13} parent=11 // pred_check
        %p118 = pneg %p56
      $region14: #{maxvit_forward.13} parent=11 // pred_check_branch
        %120 = sbr.rel (%p118) target = $region16
      $region15: #{maxvit_forward.13} parent=11 // pred_region
        _
      $region16: #{maxvit_forward.13} parent=11 // pred_fallthru
        _
      // Predicated region
      $region17: #{maxvit_forward.13} parent=11 // pred_check
        %p121 = pneg %p77
      $region18: #{maxvit_forward.13} parent=11 // pred_check_branch
        %123 = sbr.rel (%p121) target = $region20
      $region19: #{maxvit_forward.13} parent=11 // pred_region
        _
      $region20: #{maxvit_forward.13} parent=11 // pred_fallthru
        _
    $region12: #{maxvit_forward.13} parent=5 // pred_fallthru
      _
    %p124 = scmp.lt.s32.totalorder %s9, 2
    // Predicated region
    $region21: #{maxvit_forward.13} parent=5 // pred_check
      %p125 = pneg %p124
    $region22: #{maxvit_forward.13} parent=5 // pred_check_branch
      %127 = sbr.rel (%p125) target = $region24
    $region23: #{maxvit_forward.13} parent=5 // pred_region
      // Predicated region
      $region25: #{maxvit_forward.13} parent=23 // pred_check
        %p128 = pneg %p29
      $region26: #{maxvit_forward.13} parent=23 // pred_check_branch
        %130 = sbr.rel (%p128) target = $region28
      $region27: #{maxvit_forward.13} parent=23 // pred_region
        %p131 = scmp.lt.s32.totalorder %s9, 1
        %s132 = scalar_select %p131, %s9, 1
        %s133 = smul.addr %s132, 16
        %s134 = smul.addr %s133, 4
        %s135 = scalar_lea.vmem %s0, %s134
      $region28: #{maxvit_forward.13} parent=23 // pred_fallthru
        _
    $region24: #{maxvit_forward.13} parent=5 // pred_fallthru
      _
    %p136 = scmp.le.s32.totalorder 1, %s9
    %p137 = scmp.lt.s32.totalorder %s9, 3
    %p138 = pnand %p136, %p137
    %p139 = pneg %p138
    // Predicated region
    $region29: #{maxvit_forward.13} parent=5 // pred_check
      _
    $region30: #{maxvit_forward.13} parent=5 // pred_check_branch
      %141 = sbr.rel (%p138) target = $region32
    $region31: #{maxvit_forward.13} parent=5 // pred_region
      %s142 = ssub.s32 %s9, 1
      %p143 = scmp.lt.s32.totalorder %s14, 1
      %s144 = scalar_select %p143, %s14, 1
      %s145 = smul.addr %s144, 16
      %s146 = smul.addr %s145, 4
      %s147 = scalar_lea.vmem %s0, %s146
      %p148 = pneg %p35
      %p149 = pneg %p32
      %p150 = pneg %p56
      %p151 = pneg %p53
      %p152 = pneg %p77
      %p153 = pneg %p74
      %p154 = pneg %p103
      %p155 = pneg %p100
      %p156 = scmp.lt.s32.totalorder %s14, 1
      %s157 = scalar_select %p156, %s14, 1
      %s158 = smul.addr %s157, 8
      %s159 = smul.addr %s158, 4
      %s160 = scalar_lea.vmem %s3, %s159
      %p161 = scmp.lt.s32.totalorder %s14, 1
      %s162 = scalar_select %p161, %s14, 1
      %s163 = smul.addr %s162, 16
      %s164 = smul.addr %s163, 4
      %s165 = scalar_lea.vmem %s0, %s164
      %p166 = scmp.lt.s32.totalorder %s14, 1
      %s167 = scalar_select %p166, %s14, 1
      %s168 = smul.addr %s167, 8
      %s169 = smul.addr %s168, 4
      %s170 = scalar_lea.vmem %s3, %s169
      %v171 = vld [vmem:[%s165] sm:$0xff]
      %v172 = vld [vmem:[%s165 + $0x8] sm:$0xff]
      %v173 = vld [vmem:[%s165 + $0x10] sm:$0xff]
      %v174 = vld [vmem:[%s165 + $0x18] sm:$0xff]
      %v175 = vld [vmem:[%s165 + $0x20] sm:$0xff]
      %v176 = vld [vmem:[%s165 + $0x28] sm:$0xff]
      %v177 = vld [vmem:[%s165 + $0x30] sm:$0xff]
      %v178 = vld [vmem:[%s165 + $0x38] sm:$0xff]
      %v179 = vunpack.c.l.bf16 %v171
      %v180 = vunpack.c.h.bf16 %v171
      %v181 = vunpack.c.l.bf16 %v172
      %v182 = vunpack.c.h.bf16 %v172
      %v183 = vunpack.c.l.bf16 %v173
      %v184 = vunpack.c.h.bf16 %v173
      %v185 = vunpack.c.l.bf16 %v174
      %v186 = vunpack.c.h.bf16 %v174
      %v187 = vunpack.c.l.bf16 %v175
      %v188 = vunpack.c.h.bf16 %v175
      %v189 = vunpack.c.l.bf16 %v176
      %v190 = vunpack.c.h.bf16 %v176
      %v191 = vunpack.c.l.bf16 %v177
      %v192 = vunpack.c.h.bf16 %v177
      %v193 = vunpack.c.l.bf16 %v178
      %v194 = vunpack.c.h.bf16 %v178
      %v211 = vrot.slane %v179, 7
      %v212 = vrot.slane %v180, 7
      %v213 = vrot.slane %v181, 7
      %v214 = vrot.slane %v182, 7
      %v215 = vrot.slane %v183, 7
      %v216 = vrot.slane %v184, 7
      %v217 = vrot.slane %v185, 7
      %v218 = vrot.slane %v186, 7
      %v219 = vrot.slane %v187, 7
      %v220 = vrot.slane %v188, 7
      %v221 = vrot.slane %v189, 7
      %v222 = vrot.slane %v190, 7
      %v223 = vrot.slane %v191, 7
      %v224 = vrot.slane %v192, 7
      %v225 = vrot.slane %v193, 7
      %v226 = vrot.slane %v194, 7
      %vm243 = vcmask 1040384
      %v244 = vsel %vm243, 0.0, %v211
      %v245 = vsel %vm243, 0.0, %v212
      %v246 = vsel %vm243, 0.0, %v213
      %v247 = vsel %vm243, 0.0, %v214
      %v248 = vsel %vm243, 0.0, %v215
      %v249 = vsel %vm243, 0.0, %v216
      %v250 = vsel %vm243, 0.0, %v217
      %v251 = vsel %vm243, 0.0, %v218
      %v252 = vsel %vm243, 0.0, %v219
      %v253 = vsel %vm243, 0.0, %v220
      %v254 = vsel %vm243, 0.0, %v221
      %v255 = vsel %vm243, 0.0, %v222
      %v256 = vsel %vm243, 0.0, %v223
      %v257 = vsel %vm243, 0.0, %v224
      %v258 = vsel %vm243, 0.0, %v225
      %v259 = vsel %vm243, 0.0, %v226
      %v260 = vld [vmem:[%s1] sm:$0xff]
      %v261 = vld [vmem:[%s1 + $0x8] sm:$0x1]
      %v262 = vlaneseq
      %v263 = vshrl.u32 %v262, 7
      %v264 = vsub.s32 0, %v263
      %v265 = vrot.slane %v260, %v264
      %267 = vrot.lane.b32.xlu0 %v265, 64
      %v268 = vpop.permute.xlu0 %267
      %v270 = vmul.f32 %v268, 0.0
      %v271 = vmul.f32 %v245, %v268
      %v272 = vmul.f32 %v247, %v268
      %v273 = vmul.f32 %v249, %v268
      %v274 = vmul.f32 %v251, %v268
      %v275 = vmul.f32 %v253, %v268
      %v276 = vmul.f32 %v255, %v268
      %v277 = vmul.f32 %v257, %v268
      %v278 = vadd.f32 %v270, 0.0
      %v279 = vadd.f32 %v271, 0.0
      %v280 = vadd.f32 %v272, 0.0
      %v281 = vadd.f32 %v273, 0.0
      %v282 = vadd.f32 %v274, 0.0
      %v283 = vadd.f32 %v275, 0.0
      %v284 = vadd.f32 %v276, 0.0
      %v285 = vadd.f32 %v277, 0.0
      %v286 = vlaneseq
      %v287 = vshrl.u32 %v286, 7
      %v288 = vsub.s32 1, %v287
      %v289 = vrot.slane %v260, %v288
      %v290 = vmul.f32 %v289, 0.0
      %v291 = vmul.f32 %v245, %v289
      %v292 = vmul.f32 %v212, %v289
      %v293 = vmul.f32 %v247, %v289
      %v294 = vmul.f32 %v214, %v289
      %v295 = vmul.f32 %v249, %v289
      %v296 = vmul.f32 %v216, %v289
      %v297 = vmul.f32 %v251, %v289
      %v298 = vmul.f32 %v218, %v289
      %v299 = vmul.f32 %v253, %v289
      %v300 = vmul.f32 %v220, %v289
      %v301 = vmul.f32 %v255, %v289
      %v302 = vmul.f32 %v222, %v289
      %v303 = vmul.f32 %v257, %v289
      %v304 = vmul.f32 %v224, %v289
      %vm320 = vcmask 1046528
      %v321 = vrot.slane %v290, 1
      %v322 = vsel %vm320, %v321, %v321
      %v323 = vrot.slane %v291, 1
      %v324 = vrot.slane %v292, 1
      %v325 = vsel %vm320, %v323, %v324
      %v326 = vrot.slane %v293, 1
      %v327 = vrot.slane %v294, 1
      %v328 = vsel %vm320, %v326, %v327
      %v329 = vrot.slane %v295, 1
      %v330 = vrot.slane %v296, 1
      %v331 = vsel %vm320, %v329, %v330
      %v332 = vrot.slane %v297, 1
      %v333 = vrot.slane %v298, 1
      %v334 = vsel %vm320, %v332, %v333
      %v335 = vrot.slane %v299, 1
      %v336 = vrot.slane %v300, 1
      %v337 = vsel %vm320, %v335, %v336
      %v338 = vrot.slane %v301, 1
      %v339 = vrot.slane %v302, 1
      %v340 = vsel %vm320, %v338, %v339
      %v341 = vrot.slane %v303, 1
      %v342 = vrot.slane %v304, 1
      %v343 = vsel %vm320, %v341, %v342
      %344 = vrot.lane.b32.xlu0 %v322, 64
      %v345 = vpop.permute.xlu0 %344
      %346 = vrot.lane.b32.xlu0 %v325, 64
      %v347 = vpop.permute.xlu0 %346
      %348 = vrot.lane.b32.xlu0 %v328, 64
      %v349 = vpop.permute.xlu0 %348
      %350 = vrot.lane.b32.xlu0 %v331, 64
      %v351 = vpop.permute.xlu0 %350
      %352 = vrot.lane.b32.xlu0 %v334, 64
      %v353 = vpop.permute.xlu0 %352
      %354 = vrot.lane.b32.xlu0 %v337, 64
      %v355 = vpop.permute.xlu0 %354
      %356 = vrot.lane.b32.xlu0 %v340, 64
      %v357 = vpop.permute.xlu0 %356
      %358 = vrot.lane.b32.xlu0 %v343, 64
      %v359 = vpop.permute.xlu0 %358
      %v368 = vadd.f32 %v278, %v345
      %v369 = vadd.f32 %v279, %v347
      %v370 = vadd.f32 %v280, %v349
      %v371 = vadd.f32 %v281, %v351
      %v372 = vadd.f32 %v282, %v353
      %v373 = vadd.f32 %v283, %v355
      %v374 = vadd.f32 %v284, %v357
      %v375 = vadd.f32 %v285, %v359
      %v376 = vlaneseq
      %v377 = vshrl.u32 %v376, 7
      %v378 = vsub.s32 2, %v377
      %v379 = vrot.slane %v260, %v378
      %381 = vrot.lane.b32.xlu0 %v379, 64
      %v382 = vpop.permute.xlu0 %381
      %v384 = vmul.f32 %v382, 0.0
      %v385 = vmul.f32 %v245, %v382
      %v386 = vmul.f32 %v212, %v382
      %v387 = vmul.f32 %v247, %v382
      %v388 = vmul.f32 %v214, %v382
      %v389 = vmul.f32 %v249, %v382
      %v390 = vmul.f32 %v216, %v382
      %v391 = vmul.f32 %v251, %v382
      %v392 = vmul.f32 %v218, %v382
      %v393 = vmul.f32 %v253, %v382
      %v394 = vmul.f32 %v220, %v382
      %v395 = vmul.f32 %v255, %v382
      %v396 = vmul.f32 %v222, %v382
      %v397 = vmul.f32 %v257, %v382
      %v398 = vmul.f32 %v224, %v382
      %v414 = vrot.slane %v384, 1
      %v415 = vsel %vm320, %v414, %v414
      %v416 = vrot.slane %v385, 1
      %v417 = vrot.slane %v386, 1
      %v418 = vsel %vm320, %v416, %v417
      %v419 = vrot.slane %v387, 1
      %v420 = vrot.slane %v388, 1
      %v421 = vsel %vm320, %v419, %v420
      %v422 = vrot.slane %v389, 1
      %v423 = vrot.slane %v390, 1
      %v424 = vsel %vm320, %v422, %v423
      %v425 = vrot.slane %v391, 1
      %v426 = vrot.slane %v392, 1
      %v427 = vsel %vm320, %v425, %v426
      %v428 = vrot.slane %v393, 1
      %v429 = vrot.slane %v394, 1
      %v430 = vsel %vm320, %v428, %v429
      %v431 = vrot.slane %v395, 1
      %v432 = vrot.slane %v396, 1
      %v433 = vsel %vm320, %v431, %v432
      %v434 = vrot.slane %v397, 1
      %v435 = vrot.slane %v398, 1
      %v436 = vsel %vm320, %v434, %v435
      %v445 = vadd.f32 %v368, %v415
      %v446 = vadd.f32 %v369, %v418
      %v447 = vadd.f32 %v370, %v421
      %v448 = vadd.f32 %v371, %v424
      %v449 = vadd.f32 %v372, %v427
      %v450 = vadd.f32 %v373, %v430
      %v451 = vadd.f32 %v374, %v433
      %v452 = vadd.f32 %v375, %v436
      %v453 = vlaneseq
      %v454 = vshrl.u32 %v453, 7
      %v455 = vsub.s32 3, %v454
      %v456 = vrot.slane %v260, %v455
      %458 = vrot.lane.b32.xlu0 %v456, 64
      %v459 = vpop.permute.xlu0 %458
      %v461 = vmul.f32 %v244, %v459
      %v462 = vmul.f32 %v246, %v459
      %v463 = vmul.f32 %v248, %v459
      %v464 = vmul.f32 %v250, %v459
      %v465 = vmul.f32 %v252, %v459
      %v466 = vmul.f32 %v254, %v459
      %v467 = vmul.f32 %v256, %v459
      %v468 = vmul.f32 %v258, %v459
      %v469 = vadd.f32 %v445, %v461
      %v470 = vadd.f32 %v446, %v462
      %v471 = vadd.f32 %v447, %v463
      %v472 = vadd.f32 %v448, %v464
      %v473 = vadd.f32 %v449, %v465
      %v474 = vadd.f32 %v450, %v466
      %v475 = vadd.f32 %v451, %v467
      %v476 = vadd.f32 %v452, %v468
      %v477 = vlaneseq
      %v478 = vshrl.u32 %v477, 7
      %v479 = vsub.s32 4, %v478
      %v480 = vrot.slane %v260, %v479
      %v481 = vmul.f32 %v244, %v480
      %v482 = vmul.f32 %v211, %v480
      %v483 = vmul.f32 %v246, %v480
      %v484 = vmul.f32 %v213, %v480
      %v485 = vmul.f32 %v248, %v480
      %v486 = vmul.f32 %v215, %v480
      %v487 = vmul.f32 %v250, %v480
      %v488 = vmul.f32 %v217, %v480
      %v489 = vmul.f32 %v252, %v480
      %v490 = vmul.f32 %v219, %v480
      %v491 = vmul.f32 %v254, %v480
      %v492 = vmul.f32 %v221, %v480
      %v493 = vmul.f32 %v256, %v480
      %v494 = vmul.f32 %v223, %v480
      %v495 = vmul.f32 %v258, %v480
      %v496 = vmul.f32 %v225, %v480
      %v513 = vrot.slane %v481, 1
      %v514 = vrot.slane %v482, 1
      %v515 = vsel %vm320, %v513, %v514
      %v516 = vrot.slane %v483, 1
      %v517 = vrot.slane %v484, 1
      %v518 = vsel %vm320, %v516, %v517
      %v519 = vrot.slane %v485, 1
      %v520 = vrot.slane %v486, 1
      %v521 = vsel %vm320, %v519, %v520
      %v522 = vrot.slane %v487, 1
      %v523 = vrot.slane %v488, 1
      %v524 = vsel %vm320, %v522, %v523
      %v525 = vrot.slane %v489, 1
      %v526 = vrot.slane %v490, 1
      %v527 = vsel %vm320, %v525, %v526
      %v528 = vrot.slane %v491, 1
      %v529 = vrot.slane %v492, 1
      %v530 = vsel %vm320, %v528, %v529
      %v531 = vrot.slane %v493, 1
      %v532 = vrot.slane %v494, 1
      %v533 = vsel %vm320, %v531, %v532
      %v534 = vrot.slane %v495, 1
      %v535 = vrot.slane %v496, 1
      %v536 = vsel %vm320, %v534, %v535
      %537 = vrot.lane.b32.xlu0 %v515, 64
      %v538 = vpop.permute.xlu0 %537
      %539 = vrot.lane.b32.xlu0 %v518, 64
      %v540 = vpop.permute.xlu0 %539
      %541 = vrot.lane.b32.xlu0 %v521, 64
      %v542 = vpop.permute.xlu0 %541
      %543 = vrot.lane.b32.xlu0 %v524, 64
      %v544 = vpop.permute.xlu0 %543
      %545 = vrot.lane.b32.xlu0 %v527, 64
      %v546 = vpop.permute.xlu0 %545
      %547 = vrot.lane.b32.xlu0 %v530, 64
      %v548 = vpop.permute.xlu0 %547
      %549 = vrot.lane.b32.xlu0 %v533, 64
      %v550 = vpop.permute.xlu0 %549
      %551 = vrot.lane.b32.xlu0 %v536, 64
      %v552 = vpop.permute.xlu0 %551
      %v561 = vadd.f32 %v469, %v538
      %v562 = vadd.f32 %v470, %v540
      %v563 = vadd.f32 %v471, %v542
      %v564 = vadd.f32 %v472, %v544
      %v565 = vadd.f32 %v473, %v546
      %v566 = vadd.f32 %v474, %v548
      %v567 = vadd.f32 %v475, %v550
      %v568 = vadd.f32 %v476, %v552
      %v569 = vlaneseq
      %v570 = vshrl.u32 %v569, 7
      %v571 = vsub.s32 5, %v570
      %v572 = vrot.slane %v260, %v571
      %574 = vrot.lane.b32.xlu0 %v572, 64
      %v575 = vpop.permute.xlu0 %574
      %v577 = vmul.f32 %v244, %v575
      %v578 = vmul.f32 %v211, %v575
      %v579 = vmul.f32 %v246, %v575
      %v580 = vmul.f32 %v213, %v575
      %v581 = vmul.f32 %v248, %v575
      %v582 = vmul.f32 %v215, %v575
      %v583 = vmul.f32 %v250, %v575
      %v584 = vmul.f32 %v217, %v575
      %v585 = vmul.f32 %v252, %v575
      %v586 = vmul.f32 %v219, %v575
      %v587 = vmul.f32 %v254, %v575
      %v588 = vmul.f32 %v221, %v575
      %v589 = vmul.f32 %v256, %v575
      %v590 = vmul.f32 %v223, %v575
      %v591 = vmul.f32 %v258, %v575
      %v592 = vmul.f32 %v225, %v575
      %v609 = vrot.slane %v577, 1
      %v610 = vrot.slane %v578, 1
      %v611 = vsel %vm320, %v609, %v610
      %v612 = vrot.slane %v579, 1
      %v613 = vrot.slane %v580, 1
      %v614 = vsel %vm320, %v612, %v613
      %v615 = vrot.slane %v581, 1
      %v616 = vrot.slane %v582, 1
      %v617 = vsel %vm320, %v615, %v616
      %v618 = vrot.slane %v583, 1
      %v619 = vrot.slane %v584, 1
      %v620 = vsel %vm320, %v618, %v619
      %v621 = vrot.slane %v585, 1
      %v622 = vrot.slane %v586, 1
      %v623 = vsel %vm320, %v621, %v622
      %v624 = vrot.slane %v587, 1
      %v625 = vrot.slane %v588, 1
      %v626 = vsel %vm320, %v624, %v625
      %v627 = vrot.slane %v589, 1
      %v628 = vrot.slane %v590, 1
      %v629 = vsel %vm320, %v627, %v628
      %v630 = vrot.slane %v591, 1
      %v631 = vrot.slane %v592, 1
      %v632 = vsel %vm320, %v630, %v631
      %v641 = vadd.f32 %v561, %v611
      %v642 = vadd.f32 %v562, %v614
      %v643 = vadd.f32 %v563, %v617
      %v644 = vadd.f32 %v564, %v620
      %v645 = vadd.f32 %v565, %v623
      %v646 = vadd.f32 %v566, %v626
      %v647 = vadd.f32 %v567, %v629
      %v648 = vadd.f32 %v568, %v632
      %v649 = vlaneseq
      %v650 = vshrl.u32 %v649, 7
      %v651 = vsub.s32 6, %v650
      %v652 = vrot.slane %v260, %v651
      %654 = vrot.lane.b32.xlu0 %v652, 64
      %v655 = vpop.permute.xlu0 %654
      %v657 = vmul.f32 %v245, %v655
      %v658 = vmul.f32 %v247, %v655
      %v659 = vmul.f32 %v249, %v655
      %v660 = vmul.f32 %v251, %v655
      %v661 = vmul.f32 %v253, %v655
      %v662 = vmul.f32 %v255, %v655
      %v663 = vmul.f32 %v257, %v655
      %v664 = vmul.f32 %v259, %v655
      %v665 = vadd.f32 %v641, %v657
      %v666 = vadd.f32 %v642, %v658
      %v667 = vadd.f32 %v643, %v659
      %v668 = vadd.f32 %v644, %v660
      %v669 = vadd.f32 %v645, %v661
      %v670 = vadd.f32 %v646, %v662
      %v671 = vadd.f32 %v647, %v663
      %v672 = vadd.f32 %v648, %v664
      %v673 = vlaneseq
      %v674 = vshrl.u32 %v673, 7
      %v675 = vsub.s32 7, %v674
      %v676 = vrot.slane %v260, %v675
      %v677 = vmul.f32 %v245, %v676
      %v678 = vmul.f32 %v212, %v676
      %v679 = vmul.f32 %v247, %v676
      %v680 = vmul.f32 %v214, %v676
      %v681 = vmul.f32 %v249, %v676
      %v682 = vmul.f32 %v216, %v676
      %v683 = vmul.f32 %v251, %v676
      %v684 = vmul.f32 %v218, %v676
      %v685 = vmul.f32 %v253, %v676
      %v686 = vmul.f32 %v220, %v676
      %v687 = vmul.f32 %v255, %v676
      %v688 = vmul.f32 %v222, %v676
      %v689 = vmul.f32 %v257, %v676
      %v690 = vmul.f32 %v224, %v676
      %v691 = vmul.f32 %v259, %v676
      %v692 = vmul.f32 %v226, %v676
      %v709 = vrot.slane %v677, 1
      %v710 = vrot.slane %v678, 1
      %v711 = vsel %vm320, %v709, %v710
      %v712 = vrot.slane %v679, 1
      %v713 = vrot.slane %v680, 1
      %v714 = vsel %vm320, %v712, %v713
      %v715 = vrot.slane %v681, 1
      %v716 = vrot.slane %v682, 1
      %v717 = vsel %vm320, %v715, %v716
      %v718 = vrot.slane %v683, 1
      %v719 = vrot.slane %v684, 1
      %v720 = vsel %vm320, %v718, %v719
      %v721 = vrot.slane %v685, 1
      %v722 = vrot.slane %v686, 1
      %v723 = vsel %vm320, %v721, %v722
      %v724 = vrot.slane %v687, 1
      %v725 = vrot.slane %v688, 1
      %v726 = vsel %vm320, %v724, %v725
      %v727 = vrot.slane %v689, 1
      %v728 = vrot.slane %v690, 1
      %v729 = vsel %vm320, %v727, %v728
      %v730 = vrot.slane %v691, 1
      %v731 = vrot.slane %v692, 1
      %v732 = vsel %vm320, %v730, %v731
      %733 = vrot.lane.b32.xlu0 %v711, 64
      %v734 = vpop.permute.xlu0 %733
      %735 = vrot.lane.b32.xlu0 %v714, 64
      %v736 = vpop.permute.xlu0 %735
      %737 = vrot.lane.b32.xlu0 %v717, 64
      %v738 = vpop.permute.xlu0 %737
      %739 = vrot.lane.b32.xlu0 %v720, 64
      %v740 = vpop.permute.xlu0 %739
      %741 = vrot.lane.b32.xlu0 %v723, 64
      %v742 = vpop.permute.xlu0 %741
      %743 = vrot.lane.b32.xlu0 %v726, 64
      %v744 = vpop.permute.xlu0 %743
      %745 = vrot.lane.b32.xlu0 %v729, 64
      %v746 = vpop.permute.xlu0 %745
      %747 = vrot.lane.b32.xlu0 %v732, 64
      %v748 = vpop.permute.xlu0 %747
      %v757 = vadd.f32 %v665, %v734
      %v758 = vadd.f32 %v666, %v736
      %v759 = vadd.f32 %v667, %v738
      %v760 = vadd.f32 %v668, %v740
      %v761 = vadd.f32 %v669, %v742
      %v762 = vadd.f32 %v670, %v744
      %v763 = vadd.f32 %v671, %v746
      %v764 = vadd.f32 %v672, %v748
      %v765 = vlaneseq
      %v766 = vshrl.u32 %v765, 7
      %v767 = vsub.s32 0, %v766
      %v768 = vrot.slane %v261, %v767
      %770 = vrot.lane.b32.xlu0 %v768, 64
      %v771 = vpop.permute.xlu0 %770
      %v773 = vmul.f32 %v245, %v771
      %v774 = vmul.f32 %v212, %v771
      %v775 = vmul.f32 %v247, %v771
      %v776 = vmul.f32 %v214, %v771
      %v777 = vmul.f32 %v249, %v771
      %v778 = vmul.f32 %v216, %v771
      %v779 = vmul.f32 %v251, %v771
      %v780 = vmul.f32 %v218, %v771
      %v781 = vmul.f32 %v253, %v771
      %v782 = vmul.f32 %v220, %v771
      %v783 = vmul.f32 %v255, %v771
      %v784 = vmul.f32 %v222, %v771
      %v785 = vmul.f32 %v257, %v771
      %v786 = vmul.f32 %v224, %v771
      %v787 = vmul.f32 %v259, %v771
      %v788 = vmul.f32 %v226, %v771
      %v805 = vrot.slane %v773, 1
      %v806 = vrot.slane %v774, 1
      %v807 = vsel %vm320, %v805, %v806
      %v808 = vrot.slane %v775, 1
      %v809 = vrot.slane %v776, 1
      %v810 = vsel %vm320, %v808, %v809
      %v811 = vrot.slane %v777, 1
      %v812 = vrot.slane %v778, 1
      %v813 = vsel %vm320, %v811, %v812
      %v814 = vrot.slane %v779, 1
      %v815 = vrot.slane %v780, 1
      %v816 = vsel %vm320, %v814, %v815
      %v817 = vrot.slane %v781, 1
      %v818 = vrot.slane %v782, 1
      %v819 = vsel %vm320, %v817, %v818
      %v820 = vrot.slane %v783, 1
      %v821 = vrot.slane %v784, 1
      %v822 = vsel %vm320, %v820, %v821
      %v823 = vrot.slane %v785, 1
      %v824 = vrot.slane %v786, 1
      %v825 = vsel %vm320, %v823, %v824
      %v826 = vrot.slane %v787, 1
      %v827 = vrot.slane %v788, 1
      %v828 = vsel %vm320, %v826, %v827
      %v837 = vadd.f32 %v757, %v807
      %v838 = vadd.f32 %v758, %v810
      %v839 = vadd.f32 %v759, %v813
      %v840 = vadd.f32 %v760, %v816
      %v841 = vadd.f32 %v761, %v819
      %v842 = vadd.f32 %v762, %v822
      %v843 = vadd.f32 %v763, %v825
      %v844 = vadd.f32 %v764, %v828
      %v845 = vld [vmem:[%s2] sm:$0x1]
      %v847 = vlaneseq
      %v848 = vshrl.u32 %v847, 7
      %v849 = vsub.s32 0, %v848
      %v850 = vrot.slane %v845, %v849
      %851 = vrot.lane.b32.xlu0 %v850, 64
      %v852 = vpop.permute.xlu0 %851
      %v854 = vadd.f32 %v837, %v852
      %v855 = vadd.f32 %v838, %v852
      %v856 = vadd.f32 %v839, %v852
      %v857 = vadd.f32 %v840, %v852
      %v858 = vadd.f32 %v841, %v852
      %v859 = vadd.f32 %v842, %v852
      %v860 = vadd.f32 %v843, %v852
      %v861 = vadd.f32 %v844, %v852
      %v862 = vmul.f32 %v854, 0.5
      %v863 = vmul.f32 %v855, 0.5
      %v864 = vmul.f32 %v856, 0.5
      %v865 = vmul.f32 %v857, 0.5
      %v866 = vmul.f32 %v858, 0.5
      %v867 = vmul.f32 %v859, 0.5
      %v868 = vmul.f32 %v860, 0.5
      %v869 = vmul.f32 %v861, 0.5
      %v870 = vmul.f32 %v854, 0.044715
      %v871 = vmul.f32 %v855, 0.044715
      %v872 = vmul.f32 %v856, 0.044715
      %v873 = vmul.f32 %v857, 0.044715
      %v874 = vmul.f32 %v858, 0.044715
      %v875 = vmul.f32 %v859, 0.044715
      %v876 = vmul.f32 %v860, 0.044715
      %v877 = vmul.f32 %v861, 0.044715
      %v878 = vmul.f32 %v870, %v854
      %v879 = vmul.f32 %v871, %v855
      %v880 = vmul.f32 %v872, %v856
      %v881 = vmul.f32 %v873, %v857
      %v882 = vmul.f32 %v874, %v858
      %v883 = vmul.f32 %v875, %v859
      %v884 = vmul.f32 %v876, %v860
      %v885 = vmul.f32 %v877, %v861
      %v886 = vmul.f32 %v878, %v854
      %v887 = vmul.f32 %v879, %v855
      %v888 = vmul.f32 %v880, %v856
      %v889 = vmul.f32 %v881, %v857
      %v890 = vmul.f32 %v882, %v858
      %v891 = vmul.f32 %v883, %v859
      %v892 = vmul.f32 %v884, %v860
      %v893 = vmul.f32 %v885, %v861
      %v894 = vadd.f32 %v854, %v886
      %v895 = vadd.f32 %v855, %v887
      %v896 = vadd.f32 %v856, %v888
      %v897 = vadd.f32 %v857, %v889
      %v898 = vadd.f32 %v858, %v890
      %v899 = vadd.f32 %v859, %v891
      %v900 = vadd.f32 %v860, %v892
      %v901 = vadd.f32 %v861, %v893
      %v902 = vmul.f32 %v894, 0.7978846
      %v903 = vmul.f32 %v895, 0.7978846
      %v904 = vmul.f32 %v896, 0.7978846
      %v905 = vmul.f32 %v897, 0.7978846
      %v906 = vmul.f32 %v898, 0.7978846
      %v907 = vmul.f32 %v899, 0.7978846
      %v908 = vmul.f32 %v900, 0.7978846
      %v909 = vmul.f32 %v901, 0.7978846
      %v910 = vtanh.pop %v902
      %v911 = vtanh.pop %v903
      %v912 = vtanh.pop %v904
      %v913 = vtanh.pop %v905
      %v914 = vtanh.pop %v906
      %v915 = vtanh.pop %v907
      %v916 = vtanh.pop %v908
      %v917 = vtanh.pop %v909
      %v918 = vadd.f32 %v910, 1.0
      %v919 = vadd.f32 %v911, 1.0
      %v920 = vadd.f32 %v912, 1.0
      %v921 = vadd.f32 %v913, 1.0
      %v922 = vadd.f32 %v914, 1.0
      %v923 = vadd.f32 %v915, 1.0
      %v924 = vadd.f32 %v916, 1.0
      %v925 = vadd.f32 %v917, 1.0
      %v926 = vmul.f32 %v862, %v918
      %v927 = vmul.f32 %v863, %v919
      %v928 = vmul.f32 %v864, %v920
      %v929 = vmul.f32 %v865, %v921
      %v930 = vmul.f32 %v866, %v922
      %v931 = vmul.f32 %v867, %v923
      %v932 = vmul.f32 %v868, %v924
      %v933 = vmul.f32 %v869, %v925
      %v934 = vpack.c.bf16 %v926, %v926
      %v935 = vpack.c.bf16 %v927, %v927
      %v936 = vpack.c.bf16 %v928, %v928
      %v937 = vpack.c.bf16 %v929, %v929
      %v938 = vpack.c.bf16 %v930, %v930
      %v939 = vpack.c.bf16 %v931, %v931
      %v940 = vpack.c.bf16 %v932, %v932
      %v941 = vpack.c.bf16 %v933, %v933
      %v950 = vunpack.c.l.b16 %v934
      %v951 = vunpack.c.l.b16 %v935
      %v952 = vunpack.c.l.b16 %v936
      %v953 = vunpack.c.l.b16 %v937
      %v954 = vunpack.c.l.b16 %v938
      %v955 = vunpack.c.l.b16 %v939
      %v956 = vunpack.c.l.b16 %v940
      %v957 = vunpack.c.l.b16 %v941
      %v958 = vpack.c.b16 %v950, %v950
      %v959 = vpack.c.b16 %v951, %v951
      %v960 = vpack.c.b16 %v952, %v952
      %v961 = vpack.c.b16 %v953, %v953
      %v962 = vpack.c.b16 %v954, %v954
      %v963 = vpack.c.b16 %v955, %v955
      %v964 = vpack.c.b16 %v956, %v956
      %v965 = vpack.c.b16 %v957, %v957
      %966 = vrot.lane.b32.xlu0 %v958, 64
      %v967 = vpop.permute.xlu0 %966
      %968 = vrot.lane.b32.xlu0 %v959, 64
      %v969 = vpop.permute.xlu0 %968
      %970 = vrot.lane.b32.xlu0 %v960, 64
      %v971 = vpop.permute.xlu0 %970
      %972 = vrot.lane.b32.xlu0 %v961, 64
      %v973 = vpop.permute.xlu0 %972
      %974 = vrot.lane.b32.xlu0 %v962, 64
      %v975 = vpop.permute.xlu0 %974
      %976 = vrot.lane.b32.xlu0 %v963, 64
      %v977 = vpop.permute.xlu0 %976
      %978 = vrot.lane.b32.xlu0 %v964, 64
      %v979 = vpop.permute.xlu0 %978
      %980 = vrot.lane.b32.xlu0 %v965, 64
      %v981 = vpop.permute.xlu0 %980
      %vm990 = vcmask 519168
      %991 = vst.msk [vmem:[%s170] sm:$0xf] %vm990, %v967
      %992 = vst.msk [vmem:[%s170 + $0x4] sm:$0xf] %vm990, %v969
      %993 = vst.msk [vmem:[%s170 + $0x8] sm:$0xf] %vm990, %v971
      %994 = vst.msk [vmem:[%s170 + $0xc] sm:$0xf] %vm990, %v973
      %995 = vst.msk [vmem:[%s170 + $0x10] sm:$0xf] %vm990, %v975
      %996 = vst.msk [vmem:[%s170 + $0x14] sm:$0xf] %vm990, %v977
      %997 = vst.msk [vmem:[%s170 + $0x18] sm:$0xf] %vm990, %v979
      %998 = vst.msk [vmem:[%s170 + $0x1c] sm:$0xf] %vm990, %v981
      %p999 = scmp.lt.s32.totalorder %s14, 1
      %s1000 = scalar_select %p999, %s14, 1
      %s1001 = smul.addr %s1000, 8
      %s1002 = smul.addr %s1001, 4
      %s1003 = scalar_lea.vmem %s3, %s1002
      // Predicated region
      $region33: #{maxvit_forward.13} parent=31 // pred_check
        %p1004 = pneg %p100
      $region34: #{maxvit_forward.13} parent=31 // pred_check_branch
        %1006 = sbr.rel (%p1004) target = $region36
      $region35: #{maxvit_forward.13} parent=31 // pred_region
        _
      $region36: #{maxvit_forward.13} parent=31 // pred_fallthru
        _
    $region32: #{maxvit_forward.13} parent=5 // pred_fallthru
      _
    %p1007 = scmp.le.s32.totalorder 2, %s9
    // Predicated region
    $region37: #{maxvit_forward.13} parent=5 // pred_check
      %p1008 = pneg %p1007
    $region38: #{maxvit_forward.13} parent=5 // pred_check_branch
      %1010 = sbr.rel (%p1008) target = $region40
    $region39: #{maxvit_forward.13} parent=5 // pred_region
      %s1011 = ssub.s32 %s9, 2
      // Predicated region
      $region41: #{maxvit_forward.13} parent=39 // pred_check
        %p1012 = pneg %p106
      $region42: #{maxvit_forward.13} parent=39 // pred_check_branch
        %1014 = sbr.rel (%p1012) target = $region44
      $region43: #{maxvit_forward.13} parent=39 // pred_region
        %p1015 = scmp.lt.s32.totalorder %s15, 1
        %s1016 = scalar_select %p1015, %s15, 1
        %s1017 = smul.addr %s1016, 8
        %s1018 = smul.addr %s1017, 4
        %s1019 = scalar_lea.vmem %s3, %s1018
      $region44: #{maxvit_forward.13} parent=39 // pred_fallthru
        _
    $region40: #{maxvit_forward.13} parent=5 // pred_fallthru
      _
  $region6: #{maxvit_forward.13} parent=0 // loop_footer
    %s13 = sadd.s32 1, %s9
  $region7: #{maxvit_forward.13} parent=0 // loop_footer_branch
    %8 = sbr.rel target = $region3
  $region8: #{maxvit_forward.13} parent=0 // loop_exit
    _

// kernel: sub.13
$region0: #{sub.13}
  %s0 = inlined_call_operand.vmem [shape: s32[2,4,4], index: 0, kind: input, shape index: {}]
  %s1 = inlined_call_operand.vmem [shape: s32[2,16], index: 1, kind: output, shape index: {}]
  $region1: #{sub.13} parent=0
    #allocation0 [shape = 'u8[4096]{0}', space=vmem, size = 0x1000, scoped, tag = 'scoped mem for output reshape']
    #allocation1 [shape = 'u8[8192]{0}', space=vmem, size = 0x2000, scoped, tag = 'scoped mem for input reshape']
    %s3 = sshllo.u32 0, 4
    %s4 = scalar_lea.vmem %s0, 4
    %v5 = vld [vmem:[%s4] sm:%s3]
    %s6 = scalar_lea.vmem [#allocation1], 8
    %7 = vst [vmem:[%s6] sm:%s3] %v5
    %v8 = vld [vmem:[%s0] sm:%s3]
    %9 = vst [vmem:[#allocation1] sm:%s3] %v8
    %s10 = smov 3
    %v11 = vld [vmem:[#allocation1] ss:$8 sm:%s10]
    %vm12 = vcmask 31744
    %13 = vst.msk [vmem:[#allocation0] sm:$0x3] %vm12, %v11
    %s14 = scalar_lea.vmem [#allocation1], 3
    %s15 = smov 3
    %v16 = vld [vmem:[%s14] ss:$8 sm:%s15]
    %17 = vrot.lane.b32.xlu0 %v16, 12
    %v18 = vpop.permute.xlu0 %17
    %vm19 = vcmask 130144
    %20 = vst.msk [vmem:[#allocation0] sm:$0x3] %vm19, %v18
    %s21 = scalar_lea.vmem [#allocation1], 2
    %s22 = smov 3
    %v23 = vld [vmem:[%s21] ss:$8 sm:%s22]
    %24 = vrot.lane.b32.xlu0 %v23, 8
    %v25 = vpop.permute.xlu0 %24
    %vm26 = vcmask 97344
    %27 = vst.msk [vmem:[#allocation0] sm:$0x3] %vm26, %v25
    %s28 = scalar_lea.vmem [#allocation1], 1
    %s29 = smov 3
    %v30 = vld [vmem:[%s28] ss:$8 sm:%s29]
    %31 = vrot.lane.b32.xlu0 %v30, 4
    %v32 = vpop.permute.xlu0 %31
    %vm33 = vcmask 64544
    %34 = vst.msk [vmem:[#allocation0] sm:$0x3] %vm33, %v32
    %s36 = sshllo.u32 0, 2
    %v38 = vld [vmem:[#allocation0] sm:%s36]
    %s39 = sshllo.u32 0, 2
    %40 = vst [vmem:[%s1] sm:%s39] %v38

// kernel: maxvit_forward.11
$region0: #{maxvit_forward.11}
  #allocation0 [shape = 'u32[]', space=smem, size = 0x4, offset = 0x4, fixed_abs, tag = 'smem constant byte address 0x4 - core index']
  #allocation1 [shape = 'u32[144,128]{1,0:T(1,128)}', space=vmem, size = 0x12000, scoped, tag = 'internal scratch']
  %s0 = inlined_call_operand.vmem [shape: bf16[2,8,8,32], index: 0, kind: input, shape index: {}]
  %s1 = inlined_call_operand.vmem [shape: bf16[8,16], index: 1, kind: input, shape index: {}]
  %s2 = inlined_call_operand.vmem [shape: f32[1,16], index: 2, kind: input, shape index: {}]
  %s3 = inlined_call_operand.vmem [shape: bf16[2,64,16], index: 3, kind: output, shape index: {}]
  %s4 = sld [smem:[#allocation0]]
  $region45: #{maxvit_forward.11} parent=0
    _
  %s6 = ssub.s32 1, %s4
  %s7 = scalar_select 0, %s6, %s4
  loop: start=0, step=1, limit=4
  $region2: #{maxvit_forward.11} parent=0 // loop_pre_header
    _
  $region3: #{maxvit_forward.11} parent=0 // loop_header
    %s9 = sphi 0, %s13
    %p10 = scmp.ge.s32.totalorder %s9, 4
    %s19 = sphi 0, %s21
    %s22 = sphi 0, %s19
    %s23 = sphi 0, %s22
    %s39 = sphi 0, %s23
    %s43 = sphi 0, %s43
    %s45 = sphi 0, %s43
    %s46 = sphi 0, %s45
    %s60 = sphi 0, %s46
    %s64 = sphi 0, %s64
    %s66 = sphi 0, %s64
    %s67 = sphi 0, %s66
    %s81 = sphi 0, %s67
    %s87 = sphi 0, %s89
    %s90 = sphi 0, %s87
    %s91 = sphi 0, %s90
    %s107 = sphi 0, %s91
  $region4: #{maxvit_forward.11} parent=0 // loop_header_branch
    %12 = sbr.rel (%p10) target = $region8
  $region5: #{maxvit_forward.11} parent=0 // loop_body
    %s14 = ssub.s32 %s9, 1
    %s15 = ssub.s32 %s9, 2
    %s16 = sadd.s32 %s9, 1
    %s17 = ssub.s32 %s9, %s16
    %p18 = scmp.eq.s32.totalorder %s17, 0
    %s20 = sadd.s32 %s19, 1
    %s21 = scalar_select %p18, %s19, %s20
    %p24 = pneg %p18
    %p25 = scmp.eq.s32.totalorder %s9, 1
    %p26 = por %p24, %p25
    %p27 = scmp.ne.s32.totalorder %s19, %s22
    %p28 = scmp.eq.s32.totalorder %s9, 0
    %p29 = por %p27, %p28
    %p30 = scmp.ne.s32.totalorder %s19, %s22
    %p31 = scmp.eq.s32.totalorder %s14, 1
    %p32 = por %p30, %p31
    %p33 = scmp.ne.s32.totalorder %s22, %s23
    %p34 = scmp.eq.s32.totalorder %s14, 0
    %p35 = por %p33, %p34
    %p36 = scmp.ne.s32.totalorder %s22, %s23
    %p37 = scmp.eq.s32.totalorder %s15, 1
    %p38 = por %p36, %p37
    %p40 = scmp.ne.s32.totalorder %s23, %s39
    %p41 = scmp.eq.s32.totalorder %s15, 0
    %p42 = por %p40, %p41
    %s44 = sadd.s32 %s43, 1
    %p47 = scmp.eq.s32.totalorder %s9, 1
    %p48 = scmp.ne.s32.totalorder %s43, %s45
    %p49 = scmp.eq.s32.totalorder %s9, 0
    %p50 = por %p48, %p49
    %p51 = scmp.ne.s32.totalorder %s43, %s45
    %p52 = scmp.eq.s32.totalorder %s14, 1
    %p53 = por %p51, %p52
    %p54 = scmp.ne.s32.totalorder %s45, %s46
    %p55 = scmp.eq.s32.totalorder %s14, 0
    %p56 = por %p54, %p55
    %p57 = scmp.ne.s32.totalorder %s45, %s46
    %p58 = scmp.eq.s32.totalorder %s15, 1
    %p59 = por %p57, %p58
    %p61 = scmp.ne.s32.totalorder %s46, %s60
    %p62 = scmp.eq.s32.totalorder %s15, 0
    %p63 = por %p61, %p62
    %s65 = sadd.s32 %s64, 1
    %p68 = scmp.eq.s32.totalorder %s9, 1
    %p69 = scmp.ne.s32.totalorder %s64, %s66
    %p70 = scmp.eq.s32.totalorder %s9, 0
    %p71 = por %p69, %p70
    %p72 = scmp.ne.s32.totalorder %s64, %s66
    %p73 = scmp.eq.s32.totalorder %s14, 1
    %p74 = por %p72, %p73
    %p75 = scmp.ne.s32.totalorder %s66, %s67
    %p76 = scmp.eq.s32.totalorder %s14, 0
    %p77 = por %p75, %p76
    %p78 = scmp.ne.s32.totalorder %s66, %s67
    %p79 = scmp.eq.s32.totalorder %s15, 1
    %p80 = por %p78, %p79
    %p82 = scmp.ne.s32.totalorder %s67, %s81
    %p83 = scmp.eq.s32.totalorder %s15, 0
    %p84 = por %p82, %p83
    %s85 = ssub.s32 %s9, %s16
    %p86 = scmp.eq.s32.totalorder %s85, 0
    %s88 = sadd.s32 %s87, 1
    %s89 = scalar_select %p86, %s87, %s88
    %p92 = pneg %p86
    %p93 = scmp.eq.s32.totalorder %s9, 1
    %p94 = por %p92, %p93
    %p95 = scmp.ne.s32.totalorder %s87, %s90
    %p96 = scmp.eq.s32.totalorder %s9, 0
    %p97 = por %p95, %p96
    %p98 = scmp.ne.s32.totalorder %s87, %s90
    %p99 = scmp.eq.s32.totalorder %s14, 1
    %p100 = por %p98, %p99
    %p101 = scmp.ne.s32.totalorder %s90, %s91
    %p102 = scmp.eq.s32.totalorder %s14, 0
    %p103 = por %p101, %p102
    %p104 = scmp.ne.s32.totalorder %s90, %s91
    %p105 = scmp.eq.s32.totalorder %s15, 1
    %p106 = por %p104, %p105
    %p108 = scmp.ne.s32.totalorder %s91, %s107
    %p109 = scmp.eq.s32.totalorder %s15, 0
    %p110 = por %p108, %p109
    %p111 = scmp.le.s32.totalorder 1, %s9
    %p112 = scmp.lt.s32.totalorder %s9, 3
    %p113 = pnand %p111, %p112
    %p114 = pneg %p113
    // Predicated region
    $region9: #{maxvit_forward.11} parent=5 // pred_check
      _
    $region10: #{maxvit_forward.11} parent=5 // pred_check_branch
      %116 = sbr.rel (%p113) target = $region12
    $region11: #{maxvit_forward.11} parent=5 // pred_region
      %s117 = ssub.s32 %s9, 1
      // Predicated region
      $region13: #{maxvit_forward.11} parent=11 // pred_check
        %p118 = pneg %p56
      $region14: #{maxvit_forward.11} parent=11 // pred_check_branch
        %120 = sbr.rel (%p118) target = $region16
      $region15: #{maxvit_forward.11} parent=11 // pred_region
        _
      $region16: #{maxvit_forward.11} parent=11 // pred_fallthru
        _
      // Predicated region
      $region17: #{maxvit_forward.11} parent=11 // pred_check
        %p121 = pneg %p77
      $region18: #{maxvit_forward.11} parent=11 // pred_check_branch
        %123 = sbr.rel (%p121) target = $region20
      $region19: #{maxvit_forward.11} parent=11 // pred_region
        _
      $region20: #{maxvit_forward.11} parent=11 // pred_fallthru
        _
    $region12: #{maxvit_forward.11} parent=5 // pred_fallthru
      _
    %p124 = scmp.lt.s32.totalorder %s9, 2
    // Predicated region
    $region21: #{maxvit_forward.11} parent=5 // pred_check
      %p125 = pneg %p124
    $region22: #{maxvit_forward.11} parent=5 // pred_check_branch
      %127 = sbr.rel (%p125) target = $region24
    $region23: #{maxvit_forward.11} parent=5 // pred_region
      // Predicated region
      $region25: #{maxvit_forward.11} parent=23 // pred_check
        %p128 = pneg %p29
      $region26: #{maxvit_forward.11} parent=23 // pred_check_branch
        %130 = sbr.rel (%p128) target = $region28
      $region27: #{maxvit_forward.11} parent=23 // pred_region
        %p131 = scmp.lt.s32.totalorder %s9, 1
        %s132 = scalar_select %p131, %s9, 1
        %s133 = smul.addr %s132, 8
        %s134 = smul.addr %s133, 4
        %s135 = scalar_lea.vmem %s0, %s134
      $region28: #{maxvit_forward.11} parent=23 // pred_fallthru
        _
    $region24: #{maxvit_forward.11} parent=5 // pred_fallthru
      _
    %p136 = scmp.le.s32.totalorder 1, %s9
    %p137 = scmp.lt.s32.totalorder %s9, 3
    %p138 = pnand %p136, %p137
    %p139 = pneg %p138
    // Predicated region
    $region29: #{maxvit_forward.11} parent=5 // pred_check
      _
    $region30: #{maxvit_forward.11} parent=5 // pred_check_branch
      %141 = sbr.rel (%p138) target = $region32
    $region31: #{maxvit_forward.11} parent=5 // pred_region
      %s142 = ssub.s32 %s9, 1
      %p143 = scmp.lt.s32.totalorder %s14, 1
      %s144 = scalar_select %p143, %s14, 1
      %s145 = smul.addr %s144, 8
      %s146 = smul.addr %s145, 4
      %s147 = scalar_lea.vmem %s0, %s146
      %p148 = pneg %p35
      %p149 = pneg %p32
      %p150 = pneg %p56
      %p151 = pneg %p53
      %p152 = pneg %p77
      %p153 = pneg %p74
      %p154 = pneg %p103
      %p155 = pneg %p100
      %p156 = scmp.lt.s32.totalorder %s14, 1
      %s157 = scalar_select %p156, %s14, 1
      %s158 = smul.addr %s157, 8
      %s159 = smul.addr %s158, 4
      %s160 = scalar_lea.vmem %s3, %s159
      %p161 = scmp.lt.s32.totalorder %s14, 1
      %s162 = scalar_select %p161, %s14, 1
      %s163 = smul.addr %s162, 8
      %s164 = smul.addr %s163, 4
      %s165 = scalar_lea.vmem %s0, %s164
      %p166 = scmp.lt.s32.totalorder %s14, 1
      %s167 = scalar_select %p166, %s14, 1
      %s168 = smul.addr %s167, 8
      %s169 = smul.addr %s168, 4
      %s170 = scalar_lea.vmem %s3, %s169
      %v172 = vld [vmem:[%s165] sm:$0xf]
      %v173 = vld [vmem:[%s165 + $0x4] sm:$0xf]
      %v174 = vld [vmem:[%s165 + $0x8] sm:$0xf]
      %v175 = vld [vmem:[%s165 + $0xc] sm:$0xf]
      %v176 = vld [vmem:[%s165 + $0x10] sm:$0xf]
      %v177 = vld [vmem:[%s165 + $0x14] sm:$0xf]
      %v178 = vld [vmem:[%s165 + $0x18] sm:$0xf]
      %v179 = vld [vmem:[%s165 + $0x1c] sm:$0xf]
      %v180 = vunpack.c.l.bf16 %v172
      %v181 = vunpack.c.l.bf16 %v173
      %v182 = vunpack.c.l.bf16 %v174
      %v183 = vunpack.c.l.bf16 %v175
      %v184 = vunpack.c.l.bf16 %v176
      %v185 = vunpack.c.l.bf16 %v177
      %v186 = vunpack.c.l.bf16 %v178
      %v187 = vunpack.c.l.bf16 %v179
      %v196 = vrot.slane %v180, 7
      %v197 = vrot.slane %v181, 7
      %v198 = vrot.slane %v182, 7
      %v199 = vrot.slane %v183, 7
      %v200 = vrot.slane %v184, 7
      %v201 = vrot.slane %v185, 7
      %v202 = vrot.slane %v186, 7
      %v203 = vrot.slane %v187, 7
      %vm212 = vcmask 1040384
      %v213 = vsel %vm212, 0.0, %v196
      %v214 = vsel %vm212, 0.0, %v197
      %v215 = vsel %vm212, 0.0, %v198
      %v216 = vsel %vm212, 0.0, %v199
      %v217 = vsel %vm212, 0.0, %v200
      %v218 = vsel %vm212, 0.0, %v201
      %v219 = vsel %vm212, 0.0, %v202
      %v220 = vsel %vm212, 0.0, %v203
      %v221 = vadd.f32 %v213, 0.0
      %v222 = vadd.f32 %v214, 0.0
      %v223 = vadd.f32 %v215, 0.0
      %v224 = vadd.f32 %v216, 0.0
      %v225 = vadd.f32 %v217, 0.0
      %v226 = vadd.f32 %v218, 0.0
      %v227 = vadd.f32 %v219, 0.0
      %vm236 = vcmask 1046528
      %v237 = vrot.slane 0.0, 1
      %v238 = vsel %vm236, %v237, %v237
      %v239 = vrot.slane %v213, 1
      %v240 = vrot.slane %v196, 1
      %v241 = vsel %vm236, %v239, %v240
      %v242 = vrot.slane %v214, 1
      %v243 = vrot.slane %v197, 1
      %v244 = vsel %vm236, %v242, %v243
      %v245 = vrot.slane %v215, 1
      %v246 = vrot.slane %v198, 1
      %v247 = vsel %vm236, %v245, %v246
      %v248 = vrot.slane %v216, 1
      %v249 = vrot.slane %v199, 1
      %v250 = vsel %vm236, %v248, %v249
      %v251 = vrot.slane %v217, 1
      %v252 = vrot.slane %v200, 1
      %v253 = vsel %vm236, %v251, %v252
      %v254 = vrot.slane %v218, 1
      %v255 = vrot.slane %v201, 1
      %v256 = vsel %vm236, %v254, %v255
      %v257 = vrot.slane %v219, 1
      %v258 = vrot.slane %v202, 1
      %v259 = vsel %vm236, %v257, %v258
      %260 = vrot.lane.b32.xlu0 %v238, 8
      %v261 = vpop.permute.xlu0 %260
      %262 = vrot.lane.b32.xlu0 %v241, 8
      %v263 = vpop.permute.xlu0 %262
      %264 = vrot.lane.b32.xlu0 %v244, 8
      %v265 = vpop.permute.xlu0 %264
      %266 = vrot.lane.b32.xlu0 %v247, 8
      %v267 = vpop.permute.xlu0 %266
      %268 = vrot.lane.b32.xlu0 %v250, 8
      %v269 = vpop.permute.xlu0 %268
      %270 = vrot.lane.b32.xlu0 %v253, 8
      %v271 = vpop.permute.xlu0 %270
      %272 = vrot.lane.b32.xlu0 %v256, 8
      %v273 = vpop.permute.xlu0 %272
      %274 = vrot.lane.b32.xlu0 %v259, 8
      %v275 = vpop.permute.xlu0 %274
      %v284 = vadd.f32 %v261, 0.0
      %v285 = vadd.f32 %v221, %v263
      %v286 = vadd.f32 %v222, %v265
      %v287 = vadd.f32 %v223, %v267
      %v288 = vadd.f32 %v224, %v269
      %v289 = vadd.f32 %v225, %v271
      %v290 = vadd.f32 %v226, %v273
      %v291 = vadd.f32 %v227, %v275
      %v300 = vadd.f32 %v284, %v238
      %v301 = vadd.f32 %v285, %v241
      %v302 = vadd.f32 %v286, %v244
      %v303 = vadd.f32 %v287, %v247
      %v304 = vadd.f32 %v288, %v250
      %v305 = vadd.f32 %v289, %v253
      %v306 = vadd.f32 %v290, %v256
      %v307 = vadd.f32 %v291, %v259
      %309 = vrot.lane.b32.xlu0 %v213, 16
      %v310 = vpop.permute.xlu0 %309
      %311 = vrot.lane.b32.xlu0 %v214, 16
      %v312 = vpop.permute.xlu0 %311
      %313 = vrot.lane.b32.xlu0 %v215, 16
      %v314 = vpop.permute.xlu0 %313
      %315 = vrot.lane.b32.xlu0 %v216, 16
      %v316 = vpop.permute.xlu0 %315
      %317 = vrot.lane.b32.xlu0 %v217, 16
      %v318 = vpop.permute.xlu0 %317
      %319 = vrot.lane.b32.xlu0 %v218, 16
      %v320 = vpop.permute.xlu0 %319
      %321 = vrot.lane.b32.xlu0 %v219, 16
      %v322 = vpop.permute.xlu0 %321
      %323 = vrot.lane.b32.xlu0 %v220, 16
      %v324 = vpop.permute.xlu0 %323
      %v333 = vadd.f32 %v300, %v310
      %v334 = vadd.f32 %v301, %v312
      %v335 = vadd.f32 %v302, %v314
      %v336 = vadd.f32 %v303, %v316
      %v337 = vadd.f32 %v304, %v318
      %v338 = vadd.f32 %v305, %v320
      %v339 = vadd.f32 %v306, %v322
      %v340 = vadd.f32 %v307, %v324
      %v341 = vrot.slane %v220, 1
      %v342 = vrot.slane %v203, 1
      %v343 = vsel %vm236, %v341, %v342
      %344 = vrot.lane.b32.xlu0 %v241, 24
      %v345 = vpop.permute.xlu0 %344
      %346 = vrot.lane.b32.xlu0 %v244, 24
      %v347 = vpop.permute.xlu0 %346
      %348 = vrot.lane.b32.xlu0 %v247, 24
      %v349 = vpop.permute.xlu0 %348
      %350 = vrot.lane.b32.xlu0 %v250, 24
      %v351 = vpop.permute.xlu0 %350
      %352 = vrot.lane.b32.xlu0 %v253, 24
      %v353 = vpop.permute.xlu0 %352
      %354 = vrot.lane.b32.xlu0 %v256, 24
      %v355 = vpop.permute.xlu0 %354
      %356 = vrot.lane.b32.xlu0 %v259, 24
      %v357 = vpop.permute.xlu0 %356
      %358 = vrot.lane.b32.xlu0 %v343, 24
      %v359 = vpop.permute.xlu0 %358
      %v368 = vadd.f32 %v333, %v345
      %v369 = vadd.f32 %v334, %v347
      %v370 = vadd.f32 %v335, %v349
      %v371 = vadd.f32 %v336, %v351
      %v372 = vadd.f32 %v337, %v353
      %v373 = vadd.f32 %v338, %v355
      %v374 = vadd.f32 %v339, %v357
      %v375 = vadd.f32 %v340, %v359
      %376 = vrot.lane.b32.xlu0 %v241, 16
      %v377 = vpop.permute.xlu0 %376
      %378 = vrot.lane.b32.xlu0 %v244, 16
      %v379 = vpop.permute.xlu0 %378
      %380 = vrot.lane.b32.xlu0 %v247, 16
      %v381 = vpop.permute.xlu0 %380
      %382 = vrot.lane.b32.xlu0 %v250, 16
      %v383 = vpop.permute.xlu0 %382
      %384 = vrot.lane.b32.xlu0 %v253, 16
      %v385 = vpop.permute.xlu0 %384
      %386 = vrot.lane.b32.xlu0 %v256, 16
      %v387 = vpop.permute.xlu0 %386
      %388 = vrot.lane.b32.xlu0 %v259, 16
      %v389 = vpop.permute.xlu0 %388
      %390 = vrot.lane.b32.xlu0 %v343, 16
      %v391 = vpop.permute.xlu0 %390
      %v400 = vadd.f32 %v368, %v377
      %v401 = vadd.f32 %v369, %v379
      %v402 = vadd.f32 %v370, %v381
      %v403 = vadd.f32 %v371, %v383
      %v404 = vadd.f32 %v372, %v385
      %v405 = vadd.f32 %v373, %v387
      %v406 = vadd.f32 %v374, %v389
      %v407 = vadd.f32 %v375, %v391
      %v408 = vadd.f32 %v400, %v213
      %v409 = vadd.f32 %v401, %v214
      %v410 = vadd.f32 %v402, %v215
      %v411 = vadd.f32 %v403, %v216
      %v412 = vadd.f32 %v404, %v217
      %v413 = vadd.f32 %v405, %v218
      %v414 = vadd.f32 %v406, %v219
      %v415 = vadd.f32 %v407, %v220
      %416 = vrot.lane.b32.xlu0 %v343, 8
      %v417 = vpop.permute.xlu0 %416
      %v419 = vadd.f32 %v408, %v263
      %v420 = vadd.f32 %v409, %v265
      %v421 = vadd.f32 %v410, %v267
      %v422 = vadd.f32 %v411, %v269
      %v423 = vadd.f32 %v412, %v271
      %v424 = vadd.f32 %v413, %v273
      %v425 = vadd.f32 %v414, %v275
      %v426 = vadd.f32 %v415, %v417
      %v428 = vadd.f32 %v419, %v241
      %v429 = vadd.f32 %v420, %v244
      %v430 = vadd.f32 %v421, %v247
      %v431 = vadd.f32 %v422, %v250
      %v432 = vadd.f32 %v423, %v253
      %v433 = vadd.f32 %v424, %v256
      %v434 = vadd.f32 %v425, %v259
      %v435 = vadd.f32 %v426, %v343
      %v436 = vmul.f32 %v428, 0.11111111
      %v437 = vmul.f32 %v429, 0.11111111
      %v438 = vmul.f32 %v430, 0.11111111
      %v439 = vmul.f32 %v431, 0.11111111
      %v440 = vmul.f32 %v432, 0.11111111
      %v441 = vmul.f32 %v433, 0.11111111
      %v442 = vmul.f32 %v434, 0.11111111
      %v443 = vmul.f32 %v435, 0.11111111
      %v444 = vpack.c.bf16 %v437, %v436
      %v445 = vpack.c.bf16 %v439, %v438
      %v446 = vpack.c.bf16 %v441, %v440
      %v447 = vpack.c.bf16 %v443, %v442
      %v448 = vld [vmem:[%s1] sm:$0xf]
      %v449 = vld [vmem:[%s2] sm:$0x1]
      %v451 = vlaneseq
      %v452 = vshrl.u32 %v451, 7
      %v453 = vsub.s32 0, %v452
      %v454 = vrot.slane %v449, %v453
      %460 = vrot.lane.b32.xlu0 %v444, 104
      %v461 = vpop.permute.xlu0 %460
      %462 = vrot.lane.b32.xlu0 %v445, 104
      %v463 = vpop.permute.xlu0 %462
      %464 = vrot.lane.b32.xlu0 %v446, 104
      %v465 = vpop.permute.xlu0 %464
      %466 = vrot.lane.b32.xlu0 %v447, 104
      %v467 = vpop.permute.xlu0 %466
      %vm468 = vcmask 64512
      %v470 = vsel %vm468, %v461, 0
      %v473 = vsel %vm468, %v463, 0
      %v476 = vsel %vm468, %v465, 0
      %v479 = vsel %vm468, %v467, 0
      %vm481 = vcmask 1043456
      %v483 = vsel %vm481, %v448, 0
      %485 = vmatprep.subr.bf16.mxu0 0
      %486 = vmatpush1.bf16.msra.mxu0 %v483
      %487 = vmatprep.subr.bf16.mxu0 0
      %488 = vmatpush1.bf16.msra.mxu0 0
      %489 = vmatprep.subr.bf16.mxu0 0
      %490 = vmatpush1.bf16.msra.mxu0 0
      %491 = vmatprep.subr.bf16.mxu0 0
      %492 = vmatpush1.bf16.msra.mxu0 0
      %493 = vmatprep.subr.bf16.mxu0 0
      %494 = vmatpush1.bf16.msra.mxu0 0
      %495 = vmatprep.subr.bf16.mxu0 0
      %496 = vmatpush1.bf16.msra.mxu0 0
      %497 = vmatprep.subr.bf16.mxu0 0
      %498 = vmatpush1.bf16.msra.mxu0 0
      %499 = vmatprep.subr.bf16.mxu0 0
      %500 = vmatpush1.bf16.msra.mxu0 0
      %501 = vmatprep.subr.bf16.mxu0 0
      %502 = vmatpush1.bf16.msra.mxu0 0
      %503 = vmatprep.subr.bf16.mxu0 0
      %504 = vmatpush1.bf16.msra.mxu0 0
      %505 = vmatprep.subr.bf16.mxu0 0
      %506 = vmatpush1.bf16.msra.mxu0 0
      %507 = vmatprep.subr.bf16.mxu0 0
      %508 = vmatpush1.bf16.msra.mxu0 0
      %509 = vmatprep.subr.bf16.mxu0 0
      %510 = vmatpush1.bf16.msra.mxu0 0
      %511 = vmatprep.subr.bf16.mxu0 0
      %512 = vmatpush1.bf16.msra.mxu0 0
      %513 = vmatprep.subr.bf16.mxu0 0
      %514 = vmatpush1.bf16.msra.mxu0 0
      %515 = vmatprep.subr.bf16.mxu0 0
      %516 = vmatpush1.bf16.msra.mxu0 0
      %517 = vmatprep.mubr.bf16.mxu0 0
      %518 = vmatmul.mubr.bf16.gmra.mrb[0].mxu0 %v470
      %v519 = vpop.f32.mrb[0].mxu0
      %v520 = vadd.f32 %v454, %v519
      %v521 = vpop.f32.mrb[0].mxu0
      %v522 = vpop.f32.mrb[0].mxu0
      %v523 = vadd.f32 %v454, %v522
      %v524 = vpop.f32.mrb[0].mxu0
      %525 = vmatprep.mubr.bf16.mxu0 0
      %526 = vmatmul.mubr.bf16.gmra.mrb[0].mxu0 %v473
      %v527 = vpop.f32.mrb[0].mxu0
      %v528 = vadd.f32 %v454, %v527
      %v529 = vpop.f32.mrb[0].mxu0
      %v530 = vpop.f32.mrb[0].mxu0
      %v531 = vadd.f32 %v454, %v530
      %v532 = vpop.f32.mrb[0].mxu0
      %533 = vmatprep.mubr.bf16.mxu0 0
      %534 = vmatmul.mubr.bf16.gmra.mrb[0].mxu0 %v476
      %v535 = vpop.f32.mrb[0].mxu0
      %v536 = vadd.f32 %v454, %v535
      %v537 = vpop.f32.mrb[0].mxu0
      %v538 = vpop.f32.mrb[0].mxu0
      %v539 = vadd.f32 %v454, %v538
      %v540 = vpop.f32.mrb[0].mxu0
      %541 = vmatprep.mubr.bf16.mxu0 0
      %542 = vmatmul.mubr.bf16.gmra.mrb[0].mxu0 %v479
      %v543 = vpop.f32.mrb[0].mxu0
      %v544 = vadd.f32 %v454, %v543
      %v545 = vpop.f32.mrb[0].mxu0
      %v546 = vpop.f32.mrb[0].mxu0
      %v547 = vadd.f32 %v454, %v546
      %v548 = vpop.f32.mrb[0].mxu0
      %549 = vdwg.mxu0
      %v550 = vpack.c.bf16 %v523, %v520
      %v551 = vpack.c.bf16 %v531, %v528
      %v552 = vpack.c.bf16 %v539, %v536
      %v553 = vpack.c.bf16 %v547, %v544
      %v558 = vunpack.c.l.b16 %v550
      %v559 = vunpack.c.h.b16 %v550
      %v560 = vunpack.c.l.b16 %v551
      %v561 = vunpack.c.h.b16 %v551
      %v562 = vunpack.c.l.b16 %v552
      %v563 = vunpack.c.h.b16 %v552
      %v564 = vunpack.c.l.b16 %v553
      %v565 = vunpack.c.h.b16 %v553
      %v566 = vpack.c.b16 %v558, %v558
      %v567 = vpack.c.b16 %v559, %v559
      %v568 = vpack.c.b16 %v560, %v560
      %v569 = vpack.c.b16 %v561, %v561
      %v570 = vpack.c.b16 %v562, %v562
      %v571 = vpack.c.b16 %v563, %v563
      %v572 = vpack.c.b16 %v564, %v564
      %v573 = vpack.c.b16 %v565, %v565
      %vm582 = vcmask 125952
      %583 = vst.msk [vmem:[%s170] sm:$0xf] %vm582, %v566
      %584 = vst.msk [vmem:[%s170 + $0x4] sm:$0xf] %vm582, %v567
      %585 = vst.msk [vmem:[%s170 + $0x8] sm:$0xf] %vm582, %v568
      %586 = vst.msk [vmem:[%s170 + $0xc] sm:$0xf] %vm582, %v569
      %587 = vst.msk [vmem:[%s170 + $0x10] sm:$0xf] %vm582, %v570
      %588 = vst.msk [vmem:[%s170 + $0x14] sm:$0xf] %vm582, %v571
      %589 = vst.msk [vmem:[%s170 + $0x18] sm:$0xf] %vm582, %v572
      %590 = vst.msk [vmem:[%s170 + $0x1c] sm:$0xf] %vm582, %v573
      %p591 = scmp.lt.s32.totalorder %s14, 1
      %s592 = scalar_select %p591, %s14, 1
      %s593 = smul.addr %s592, 8
      %s594 = smul.addr %s593, 4
      %s595 = scalar_lea.vmem %s3, %s594
      // Predicated region
      $region33: #{maxvit_forward.11} parent=31 // pred_check
        %p596 = pneg %p100
      $region34: #{maxvit_forward.11} parent=31 // pred_check_branch
        %598 = sbr.rel (%p596) target = $region36
      $region35: #{maxvit_forward.11} parent=31 // pred_region
        _
      $region36: #{maxvit_forward.11} parent=31 // pred_fallthru
        _
    $region32: #{maxvit_forward.11} parent=5 // pred_fallthru
      _
    %p599 = scmp.le.s32.totalorder 2, %s9
    // Predicated region
    $region37: #{maxvit_forward.11} parent=5 // pred_check
      %p600 = pneg %p599
    $region38: #{maxvit_forward.11} parent=5 // pred_check_branch
      %602 = sbr.rel (%p600) target = $region40
    $region39: #{maxvit_forward.11} parent=5 // pred_region
      %s603 = ssub.s32 %s9, 2
      // Predicated region
      $region41: #{maxvit_forward.11} parent=39 // pred_check
        %p604 = pneg %p106
      $region42: #{maxvit_forward.11} parent=39 // pred_check_branch
        %606 = sbr.rel (%p604) target = $region44
      $region43: #{maxvit_forward.11} parent=39 // pred_region
        %p607 = scmp.lt.s32.totalorder %s15, 1
        %s608 = scalar_select %p607, %s15, 1
        %s609 = smul.addr %s608, 8
        %s610 = smul.addr %s609, 4
        %s611 = scalar_lea.vmem %s3, %s610
      $region44: #{maxvit_forward.11} parent=39 // pred_fallthru
        _
    $region40: #{maxvit_forward.11} parent=5 // pred_fallthru
      _
  $region6: #{maxvit_forward.11} parent=0 // loop_footer
    %s13 = sadd.s32 1, %s9
  $region7: #{maxvit_forward.11} parent=0 // loop_footer_branch
    %8 = sbr.rel target = $region3
  $region8: #{maxvit_forward.11} parent=0 // loop_exit
    _

// kernel: maxvit_forward.14
$region0: #{maxvit_forward.14}
  #allocation0 [shape = 'u32[]', space=smem, size = 0x4, offset = 0x4, fixed_abs, tag = 'smem constant byte address 0x4 - core index']
  #allocation1 [shape = 'u32[144,128]{1,0:T(1,128)}', space=vmem, size = 0x12000, scoped, tag = 'internal scratch']
  %s0 = inlined_call_operand.vmem [shape: bf16[2,64,64], index: 0, kind: input, shape index: {}]
  %s1 = inlined_call_operand.vmem [shape: bf16[64,4], index: 1, kind: input, shape index: {}]
  %s2 = inlined_call_operand.vmem [shape: f32[1,4], index: 2, kind: input, shape index: {}]
  %s3 = inlined_call_operand.vmem [shape: bf16[4,64], index: 3, kind: input, shape index: {}]
  %s4 = inlined_call_operand.vmem [shape: f32[1,64], index: 4, kind: input, shape index: {}]
  %s5 = inlined_call_operand.vmem [shape: bf16[64,16], index: 5, kind: input, shape index: {}]
  %s6 = inlined_call_operand.vmem [shape: f32[1,16], index: 6, kind: input, shape index: {}]
  %s7 = inlined_call_operand.vmem [shape: bf16[2,64,16], index: 7, kind: input, shape index: {}]
  %s8 = inlined_call_operand.vmem [shape: bf16[2,64,16], index: 8, kind: output, shape index: {}]
  %s9 = sld [smem:[#allocation0]]
  $region65: #{maxvit_forward.14} parent=0
    _
  %s11 = ssub.s32 1, %s9
  %s12 = scalar_select 0, %s11, %s9
  loop: start=0, step=1, limit=4
  $region2: #{maxvit_forward.14} parent=0 // loop_pre_header
    _
  $region3: #{maxvit_forward.14} parent=0 // loop_header
    %s14 = sphi 0, %s18
    %p15 = scmp.ge.s32.totalorder %s14, 4
    %s24 = sphi 0, %s26
    %s27 = sphi 0, %s24
    %s28 = sphi 0, %s27
    %s44 = sphi 0, %s28
    %s48 = sphi 0, %s48
    %s50 = sphi 0, %s48
    %s51 = sphi 0, %s50
    %s65 = sphi 0, %s51
    %s69 = sphi 0, %s69
    %s71 = sphi 0, %s69
    %s72 = sphi 0, %s71
    %s86 = sphi 0, %s72
    %s90 = sphi 0, %s90
    %s92 = sphi 0, %s90
    %s93 = sphi 0, %s92
    %s107 = sphi 0, %s93
    %s111 = sphi 0, %s111
    %s113 = sphi 0, %s111
    %s114 = sphi 0, %s113
    %s128 = sphi 0, %s114
    %s132 = sphi 0, %s132
    %s134 = sphi 0, %s132
    %s135 = sphi 0, %s134
    %s149 = sphi 0, %s135
    %s153 = sphi 0, %s153
    %s155 = sphi 0, %s153
    %s156 = sphi 0, %s155
    %s170 = sphi 0, %s156
    %s176 = sphi 0, %s178
    %s179 = sphi 0, %s176
    %s180 = sphi 0, %s179
    %s196 = sphi 0, %s180
    %s202 = sphi 0, %s204
    %s205 = sphi 0, %s202
    %s206 = sphi 0, %s205
    %s222 = sphi 0, %s206
  $region4: #{maxvit_forward.14} parent=0 // loop_header_branch
    %17 = sbr.rel (%p15) target = $region8
  $region5: #{maxvit_forward.14} parent=0 // loop_body
    %s19 = ssub.s32 %s14, 1
    %s20 = ssub.s32 %s14, 2
    %s21 = sadd.s32 %s14, 1
    %s22 = ssub.s32 %s14, %s21
    %p23 = scmp.eq.s32.totalorder %s22, 0
    %s25 = sadd.s32 %s24, 1
    %s26 = scalar_select %p23, %s24, %s25
    %p29 = pneg %p23
    %p30 = scmp.eq.s32.totalorder %s14, 1
    %p31 = por %p29, %p30
    %p32 = scmp.ne.s32.totalorder %s24, %s27
    %p33 = scmp.eq.s32.totalorder %s14, 0
    %p34 = por %p32, %p33
    %p35 = scmp.ne.s32.totalorder %s24, %s27
    %p36 = scmp.eq.s32.totalorder %s19, 1
    %p37 = por %p35, %p36
    %p38 = scmp.ne.s32.totalorder %s27, %s28
    %p39 = scmp.eq.s32.totalorder %s19, 0
    %p40 = por %p38, %p39
    %p41 = scmp.ne.s32.totalorder %s27, %s28
    %p42 = scmp.eq.s32.totalorder %s20, 1
    %p43 = por %p41, %p42
    %p45 = scmp.ne.s32.totalorder %s28, %s44
    %p46 = scmp.eq.s32.totalorder %s20, 0
    %p47 = por %p45, %p46
    %s49 = sadd.s32 %s48, 1
    %p52 = scmp.eq.s32.totalorder %s14, 1
    %p53 = scmp.ne.s32.totalorder %s48, %s50
    %p54 = scmp.eq.s32.totalorder %s14, 0
    %p55 = por %p53, %p54
    %p56 = scmp.ne.s32.totalorder %s48, %s50
    %p57 = scmp.eq.s32.totalorder %s19, 1
    %p58 = por %p56, %p57
    %p59 = scmp.ne.s32.totalorder %s50, %s51
    %p60 = scmp.eq.s32.totalorder %s19, 0
    %p61 = por %p59, %p60
    %p62 = scmp.ne.s32.totalorder %s50, %s51
    %p63 = scmp.eq.s32.totalorder %s20, 1
    %p64 = por %p62, %p63
    %p66 = scmp.ne.s32.totalorder %s51, %s65
    %p67 = scmp.eq.s32.totalorder %s20, 0
    %p68 = por %p66, %p67
    %s70 = sadd.s32 %s69, 1
    %p73 = scmp.eq.s32.totalorder %s14, 1
    %p74 = scmp.ne.s32.totalorder %s69, %s71
    %p75 = scmp.eq.s32.totalorder %s14, 0
    %p76 = por %p74, %p75
    %p77 = scmp.ne.s32.totalorder %s69, %s71
    %p78 = scmp.eq.s32.totalorder %s19, 1
    %p79 = por %p77, %p78
    %p80 = scmp.ne.s32.totalorder %s71, %s72
    %p81 = scmp.eq.s32.totalorder %s19, 0
    %p82 = por %p80, %p81
    %p83 = scmp.ne.s32.totalorder %s71, %s72
    %p84 = scmp.eq.s32.totalorder %s20, 1
    %p85 = por %p83, %p84
    %p87 = scmp.ne.s32.totalorder %s72, %s86
    %p88 = scmp.eq.s32.totalorder %s20, 0
    %p89 = por %p87, %p88
    %s91 = sadd.s32 %s90, 1
    %p94 = scmp.eq.s32.totalorder %s14, 1
    %p95 = scmp.ne.s32.totalorder %s90, %s92
    %p96 = scmp.eq.s32.totalorder %s14, 0
    %p97 = por %p95, %p96
    %p98 = scmp.ne.s32.totalorder %s90, %s92
    %p99 = scmp.eq.s32.totalorder %s19, 1
    %p100 = por %p98, %p99
    %p101 = scmp.ne.s32.totalorder %s92, %s93
    %p102 = scmp.eq.s32.totalorder %s19, 0
    %p103 = por %p101, %p102
    %p104 = scmp.ne.s32.totalorder %s92, %s93
    %p105 = scmp.eq.s32.totalorder %s20, 1
    %p106 = por %p104, %p105
    %p108 = scmp.ne.s32.totalorder %s93, %s107
    %p109 = scmp.eq.s32.totalorder %s20, 0
    %p110 = por %p108, %p109
    %s112 = sadd.s32 %s111, 1
    %p115 = scmp.eq.s32.totalorder %s14, 1
    %p116 = scmp.ne.s32.totalorder %s111, %s113
    %p117 = scmp.eq.s32.totalorder %s14, 0
    %p118 = por %p116, %p117
    %p119 = scmp.ne.s32.totalorder %s111, %s113
    %p120 = scmp.eq.s32.totalorder %s19, 1
    %p121 = por %p119, %p120
    %p122 = scmp.ne.s32.totalorder %s113, %s114
    %p123 = scmp.eq.s32.totalorder %s19, 0
    %p124 = por %p122, %p123
    %p125 = scmp.ne.s32.totalorder %s113, %s114
    %p126 = scmp.eq.s32.totalorder %s20, 1
    %p127 = por %p125, %p126
    %p129 = scmp.ne.s32.totalorder %s114, %s128
    %p130 = scmp.eq.s32.totalorder %s20, 0
    %p131 = por %p129, %p130
    %s133 = sadd.s32 %s132, 1
    %p136 = scmp.eq.s32.totalorder %s14, 1
    %p137 = scmp.ne.s32.totalorder %s132, %s134
    %p138 = scmp.eq.s32.totalorder %s14, 0
    %p139 = por %p137, %p138
    %p140 = scmp.ne.s32.totalorder %s132, %s134
    %p141 = scmp.eq.s32.totalorder %s19, 1
    %p142 = por %p140, %p141
    %p143 = scmp.ne.s32.totalorder %s134, %s135
    %p144 = scmp.eq.s32.totalorder %s19, 0
    %p145 = por %p143, %p144
    %p146 = scmp.ne.s32.totalorder %s134, %s135
    %p147 = scmp.eq.s32.totalorder %s20, 1
    %p148 = por %p146, %p147
    %p150 = scmp.ne.s32.totalorder %s135, %s149
    %p151 = scmp.eq.s32.totalorder %s20, 0
    %p152 = por %p150, %p151
    %s154 = sadd.s32 %s153, 1
    %p157 = scmp.eq.s32.totalorder %s14, 1
    %p158 = scmp.ne.s32.totalorder %s153, %s155
    %p159 = scmp.eq.s32.totalorder %s14, 0
    %p160 = por %p158, %p159
    %p161 = scmp.ne.s32.totalorder %s153, %s155
    %p162 = scmp.eq.s32.totalorder %s19, 1
    %p163 = por %p161, %p162
    %p164 = scmp.ne.s32.totalorder %s155, %s156
    %p165 = scmp.eq.s32.totalorder %s19, 0
    %p166 = por %p164, %p165
    %p167 = scmp.ne.s32.totalorder %s155, %s156
    %p168 = scmp.eq.s32.totalorder %s20, 1
    %p169 = por %p167, %p168
    %p171 = scmp.ne.s32.totalorder %s156, %s170
    %p172 = scmp.eq.s32.totalorder %s20, 0
    %p173 = por %p171, %p172
    %s174 = ssub.s32 %s14, %s21
    %p175 = scmp.eq.s32.totalorder %s174, 0
    %s177 = sadd.s32 %s176, 1
    %s178 = scalar_select %p175, %s176, %s177
    %p181 = pneg %p175
    %p182 = scmp.eq.s32.totalorder %s14, 1
    %p183 = por %p181, %p182
    %p184 = scmp.ne.s32.totalorder %s176, %s179
    %p185 = scmp.eq.s32.totalorder %s14, 0
    %p186 = por %p184, %p185
    %p187 = scmp.ne.s32.totalorder %s176, %s179
    %p188 = scmp.eq.s32.totalorder %s19, 1
    %p189 = por %p187, %p188
    %p190 = scmp.ne.s32.totalorder %s179, %s180
    %p191 = scmp.eq.s32.totalorder %s19, 0
    %p192 = por %p190, %p191
    %p193 = scmp.ne.s32.totalorder %s179, %s180
    %p194 = scmp.eq.s32.totalorder %s20, 1
    %p195 = por %p193, %p194
    %p197 = scmp.ne.s32.totalorder %s180, %s196
    %p198 = scmp.eq.s32.totalorder %s20, 0
    %p199 = por %p197, %p198
    %s200 = ssub.s32 %s14, %s21
    %p201 = scmp.eq.s32.totalorder %s200, 0
    %s203 = sadd.s32 %s202, 1
    %s204 = scalar_select %p201, %s202, %s203
    %p207 = pneg %p201
    %p208 = scmp.eq.s32.totalorder %s14, 1
    %p209 = por %p207, %p208
    %p210 = scmp.ne.s32.totalorder %s202, %s205
    %p211 = scmp.eq.s32.totalorder %s14, 0
    %p212 = por %p210, %p211
    %p213 = scmp.ne.s32.totalorder %s202, %s205
    %p214 = scmp.eq.s32.totalorder %s19, 1
    %p215 = por %p213, %p214
    %p216 = scmp.ne.s32.totalorder %s205, %s206
    %p217 = scmp.eq.s32.totalorder %s19, 0
    %p218 = por %p216, %p217
    %p219 = scmp.ne.s32.totalorder %s205, %s206
    %p220 = scmp.eq.s32.totalorder %s20, 1
    %p221 = por %p219, %p220
    %p223 = scmp.ne.s32.totalorder %s206, %s222
    %p224 = scmp.eq.s32.totalorder %s20, 0
    %p225 = por %p223, %p224
    %p226 = scmp.le.s32.totalorder 1, %s14
    %p227 = scmp.lt.s32.totalorder %s14, 3
    %p228 = pnand %p226, %p227
    %p229 = pneg %p228
    // Predicated region
    $region9: #{maxvit_forward.14} parent=5 // pred_check
      _
    $region10: #{maxvit_forward.14} parent=5 // pred_check_branch
      %231 = sbr.rel (%p228) target = $region12
    $region11: #{maxvit_forward.14} parent=5 // pred_region
      %s232 = ssub.s32 %s14, 1
      // Predicated region
      $region13: #{maxvit_forward.14} parent=11 // pred_check
        %p233 = pneg %p61
      $region14: #{maxvit_forward.14} parent=11 // pred_check_branch
        %235 = sbr.rel (%p233) target = $region16
      $region15: #{maxvit_forward.14} parent=11 // pred_region
        _
      $region16: #{maxvit_forward.14} parent=11 // pred_fallthru
        _
      // Predicated region
      $region17: #{maxvit_forward.14} parent=11 // pred_check
        %p236 = pneg %p82
      $region18: #{maxvit_forward.14} parent=11 // pred_check_branch
        %238 = sbr.rel (%p236) target = $region20
      $region19: #{maxvit_forward.14} parent=11 // pred_region
        _
      $region20: #{maxvit_forward.14} parent=11 // pred_fallthru
        _
      // Predicated region
      $region21: #{maxvit_forward.14} parent=11 // pred_check
        %p239 = pneg %p103
      $region22: #{maxvit_forward.14} parent=11 // pred_check_branch
        %241 = sbr.rel (%p239) target = $region24
      $region23: #{maxvit_forward.14} parent=11 // pred_region
        _
      $region24: #{maxvit_forward.14} parent=11 // pred_fallthru
        _
      // Predicated region
      $region25: #{maxvit_forward.14} parent=11 // pred_check
        %p242 = pneg %p124
      $region26: #{maxvit_forward.14} parent=11 // pred_check_branch
        %244 = sbr.rel (%p242) target = $region28
      $region27: #{maxvit_forward.14} parent=11 // pred_region
        _
      $region28: #{maxvit_forward.14} parent=11 // pred_fallthru
        _
      // Predicated region
      $region29: #{maxvit_forward.14} parent=11 // pred_check
        %p245 = pneg %p145
      $region30: #{maxvit_forward.14} parent=11 // pred_check_branch
        %247 = sbr.rel (%p245) target = $region32
      $region31: #{maxvit_forward.14} parent=11 // pred_region
        _
      $region32: #{maxvit_forward.14} parent=11 // pred_fallthru
        _
      // Predicated region
      $region33: #{maxvit_forward.14} parent=11 // pred_check
        %p248 = pneg %p166
      $region34: #{maxvit_forward.14} parent=11 // pred_check_branch
        %250 = sbr.rel (%p248) target = $region36
      $region35: #{maxvit_forward.14} parent=11 // pred_region
        _
      $region36: #{maxvit_forward.14} parent=11 // pred_fallthru
        _
    $region12: #{maxvit_forward.14} parent=5 // pred_fallthru
      _
    %p251 = scmp.lt.s32.totalorder %s14, 2
    // Predicated region
    $region37: #{maxvit_forward.14} parent=5 // pred_check
      %p252 = pneg %p251
    $region38: #{maxvit_forward.14} parent=5 // pred_check_branch
      %254 = sbr.rel (%p252) target = $region40
    $region39: #{maxvit_forward.14} parent=5 // pred_region
      // Predicated region
      $region41: #{maxvit_forward.14} parent=39 // pred_check
        %p255 = pneg %p34
      $region42: #{maxvit_forward.14} parent=39 // pred_check_branch
        %257 = sbr.rel (%p255) target = $region44
      $region43: #{maxvit_forward.14} parent=39 // pred_region
        %p258 = scmp.lt.s32.totalorder %s14, 1
        %s259 = scalar_select %p258, %s14, 1
        %s260 = smul.addr %s259, 8
        %s261 = smul.addr %s260, 4
        %s262 = scalar_lea.vmem %s0, %s261
      $region44: #{maxvit_forward.14} parent=39 // pred_fallthru
        _
      // Predicated region
      $region45: #{maxvit_forward.14} parent=39 // pred_check
        %p263 = pneg %p186
      $region46: #{maxvit_forward.14} parent=39 // pred_check_branch
        %265 = sbr.rel (%p263) target = $region48
      $region47: #{maxvit_forward.14} parent=39 // pred_region
        %p266 = scmp.lt.s32.totalorder %s14, 1
        %s267 = scalar_select %p266, %s14, 1
        %s268 = smul.addr %s267, 8
        %s269 = smul.addr %s268, 4
        %s270 = scalar_lea.vmem %s7, %s269
      $region48: #{maxvit_forward.14} parent=39 // pred_fallthru
        _
    $region40: #{maxvit_forward.14} parent=5 // pred_fallthru
      _
    %p271 = scmp.le.s32.totalorder 1, %s14
    %p272 = scmp.lt.s32.totalorder %s14, 3
    %p273 = pnand %p271, %p272
    %p274 = pneg %p273
    // Predicated region
    $region49: #{maxvit_forward.14} parent=5 // pred_check
      _
    $region50: #{maxvit_forward.14} parent=5 // pred_check_branch
      %276 = sbr.rel (%p273) target = $region52
    $region51: #{maxvit_forward.14} parent=5 // pred_region
      %s277 = ssub.s32 %s14, 1
      %p278 = scmp.lt.s32.totalorder %s19, 1
      %s279 = scalar_select %p278, %s19, 1
      %s280 = smul.addr %s279, 8
      %s281 = smul.addr %s280, 4
      %s282 = scalar_lea.vmem %s0, %s281
      %p283 = pneg %p40
      %p284 = pneg %p37
      %p285 = pneg %p61
      %p286 = pneg %p58
      %p287 = pneg %p82
      %p288 = pneg %p79
      %p289 = pneg %p103
      %p290 = pneg %p100
      %p291 = pneg %p124
      %p292 = pneg %p121
      %p293 = pneg %p145
      %p294 = pneg %p142
      %p295 = pneg %p166
      %p296 = pneg %p163
      %p297 = scmp.lt.s32.totalorder %s19, 1
      %s298 = scalar_select %p297, %s19, 1
      %s299 = smul.addr %s298, 8
      %s300 = smul.addr %s299, 4
      %s301 = scalar_lea.vmem %s7, %s300
      %p302 = pneg %p192
      %p303 = pneg %p189
      %p304 = pneg %p218
      %p305 = pneg %p215
      %p306 = scmp.lt.s32.totalorder %s19, 1
      %s307 = scalar_select %p306, %s19, 1
      %s308 = smul.addr %s307, 8
      %s309 = smul.addr %s308, 4
      %s310 = scalar_lea.vmem %s8, %s309
      %p311 = scmp.lt.s32.totalorder %s19, 1
      %s312 = scalar_select %p311, %s19, 1
      %s313 = smul.addr %s312, 8
      %s314 = smul.addr %s313, 4
      %s315 = scalar_lea.vmem %s0, %s314
      %p316 = scmp.lt.s32.totalorder %s19, 1
      %s317 = scalar_select %p316, %s19, 1
      %s318 = smul.addr %s317, 8
      %s319 = smul.addr %s318, 4
      %s320 = scalar_lea.vmem %s7, %s319
      %p321 = scmp.lt.s32.totalorder %s19, 1
      %s322 = scalar_select %p321, %s19, 1
      %s323 = smul.addr %s322, 8
      %s324 = smul.addr %s323, 4
      %s325 = scalar_lea.vmem %s8, %s324
      %v327 = vld [vmem:[%s315] sm:$0xf]
      %v328 = vld [vmem:[%s315 + $0x4] sm:$0xf]
      %v329 = vld [vmem:[%s315 + $0x8] sm:$0xf]
      %v330 = vld [vmem:[%s315 + $0xc] sm:$0xf]
      %v331 = vld [vmem:[%s315 + $0x10] sm:$0xf]
      %v332 = vld [vmem:[%s315 + $0x14] sm:$0xf]
      %v333 = vld [vmem:[%s315 + $0x18] sm:$0xf]
      %v334 = vld [vmem:[%s315 + $0x1c] sm:$0xf]
      %v335 = vunpack.c.l.bf16 %v327
      %v336 = vunpack.c.l.bf16 %v328
      %v337 = vunpack.c.l.bf16 %v329
      %v338 = vunpack.c.l.bf16 %v330
      %v339 = vunpack.c.l.bf16 %v331
      %v340 = vunpack.c.l.bf16 %v332
      %v341 = vunpack.c.l.bf16 %v333
      %v342 = vunpack.c.l.bf16 %v334
      %vm343 = vcmask 523264
      %v344 = vsel %vm343, %v335, 0.0
      %v345 = vsel %vm343, %v336, 0.0
      %v346 = vadd.f32 %v344, %v345
      %v347 = vsel %vm343, %v337, 0.0
      %v348 = vadd.f32 %v346, %v347
      %v349 = vsel %vm343, %v338, 0.0
      %v350 = vadd.f32 %v348, %v349
      %v351 = vsel %vm343, %v339, 0.0
      %v352 = vadd.f32 %v350, %v351
      %v353 = vsel %vm343, %v340, 0.0
      %v354 = vadd.f32 %v352, %v353
      %v355 = vsel %vm343, %v341, 0.0
      %v356 = vadd.f32 %v354, %v355
      %v357 = vsel %vm343, %v342, 0.0
      %v358 = vadd.f32 %v356, %v357
      %v359 = vrot.slane %v358, 4
      %v360 = vadd.f32 %v358, %v359
      %v361 = vrot.slane %v360, 2
      %v362 = vadd.f32 %v360, %v361
      %v363 = vrot.slane %v362, 1
      %v364 = vadd.f32 %v362, %v363
      %v365 = vrcp.pop 64.0
      %v366 = vmul.f32 %v364, %v365
      %v367 = vpack.c.bf16 %v366, %v366
      %v368 = vld [vmem:[%s1] sm:$0xf]
      %v369 = vld [vmem:[%s1 + $0x4] sm:$0xf]
      %v370 = vld [vmem:[%s1 + $0x8] sm:$0xf]
      %v371 = vld [vmem:[%s1 + $0xc] sm:$0xf]
      %v372 = vld [vmem:[%s1 + $0x10] sm:$0xf]
      %v373 = vld [vmem:[%s1 + $0x14] sm:$0xf]
      %v374 = vld [vmem:[%s1 + $0x18] sm:$0xf]
      %v375 = vld [vmem:[%s1 + $0x1c] sm:$0xf]
      %v376 = vld [vmem:[%s2] sm:$0x1]
      %v385 = vunpack.c.l.b16 %v368
      %v386 = vunpack.c.l.b16 %v369
      %v387 = vunpack.c.l.b16 %v370
      %v388 = vunpack.c.l.b16 %v371
      %v389 = vunpack.c.l.b16 %v372
      %v390 = vunpack.c.l.b16 %v373
      %v391 = vunpack.c.l.b16 %v374
      %v392 = vunpack.c.l.b16 %v375
      %v393 = vpack.c.b16 %v386, %v385
      %v394 = vpack.c.b16 %v388, %v387
      %v395 = vpack.c.b16 %v390, %v389
      %v396 = vpack.c.b16 %v392, %v391
      %v402 = vsel %vm343, %v367, 0
      %404 = vmatprep.subr.bf16.mxu0 0
      %405 = vmatpush1.bf16.msra.mxu0 %v393
      %406 = vmatprep.subr.bf16.mxu0 0
      %407 = vmatpush1.bf16.msra.mxu0 %v394
      %408 = vmatprep.subr.bf16.mxu0 0
      %409 = vmatpush1.bf16.msra.mxu0 %v395
      %410 = vmatprep.subr.bf16.mxu0 0
      %411 = vmatpush1.bf16.msra.mxu0 %v396
      %412 = vmatprep.subr.bf16.mxu0 0
      %413 = vmatpush1.bf16.msra.mxu0 0
      %414 = vmatprep.subr.bf16.mxu0 0
      %415 = vmatpush1.bf16.msra.mxu0 0
      %416 = vmatprep.subr.bf16.mxu0 0
      %417 = vmatpush1.bf16.msra.mxu0 0
      %418 = vmatprep.subr.bf16.mxu0 0
      %419 = vmatpush1.bf16.msra.mxu0 0
      %420 = vmatprep.subr.bf16.mxu0 0
      %421 = vmatpush1.bf16.msra.mxu0 0
      %422 = vmatprep.subr.bf16.mxu0 0
      %423 = vmatpush1.bf16.msra.mxu0 0
      %424 = vmatprep.subr.bf16.mxu0 0
      %425 = vmatpush1.bf16.msra.mxu0 0
      %426 = vmatprep.subr.bf16.mxu0 0
      %427 = vmatpush1.bf16.msra.mxu0 0
      %428 = vmatprep.subr.bf16.mxu0 0
      %429 = vmatpush1.bf16.msra.mxu0 0
      %430 = vmatprep.subr.bf16.mxu0 0
      %431 = vmatpush1.bf16.msra.mxu0 0
      %432 = vmatprep.subr.bf16.mxu0 0
      %433 = vmatpush1.bf16.msra.mxu0 0
      %434 = vmatprep.subr.bf16.mxu0 0
      %435 = vmatpush1.bf16.msra.mxu0 0
      %436 = vmatprep.mubr.bf16.mxu0 0
      %437 = vmatmul.mubr.bf16.gmra.mrb[0].mxu0 %v402
      %v438 = vpop.f32.mrb[0].mxu0
      %v439 = vadd.f32 %v376, %v438
      %v440 = vpop.f32.mrb[0].mxu0
      %v441 = vpop.f32.mrb[0].mxu0
      %v442 = vpop.f32.mrb[0].mxu0
      %443 = vdwg.mxu0
      %v444 = vxor.u32 %v439, 2147483648
      %v445 = vmul.f32 %v444, 1.442695
      %v446 = vpow.pop %v445
      %v447 = vadd.f32 %v446, 1.0
      %v448 = vrcp.pop %v447
      %v449 = vmul.f32 1.0, %v448
      %v450 = vmul.f32 %v439, %v449
      %v451 = vpack.c.bf16 %v450, %v450
      %v452 = vld [vmem:[%s3] sm:$0x3]
      %v453 = vld [vmem:[%s4] sm:$0x1]
      %vm454 = vcmask 31744
      %v456 = vsel %vm454, %v451, 0
      %vm458 = vcmask 1041408
      %v460 = vsel %vm458, %v452, 0
      %462 = vmatprep.subr.bf16.mxu0 0
      %463 = vmatpush1.bf16.msra.mxu0 %v460
      %464 = vmatprep.subr.bf16.mxu0 0
      %465 = vmatpush1.bf16.msra.mxu0 0
      %466 = vmatprep.subr.bf16.mxu0 0
      %467 = vmatpush1.bf16.msra.mxu0 0
      %468 = vmatprep.subr.bf16.mxu0 0
      %469 = vmatpush1.bf16.msra.mxu0 0
      %470 = vmatprep.subr.bf16.mxu0 0
      %471 = vmatpush1.bf16.msra.mxu0 0
      %472 = vmatprep.subr.bf16.mxu0 0
      %473 = vmatpush1.bf16.msra.mxu0 0
      %474 = vmatprep.subr.bf16.mxu0 0
      %475 = vmatpush1.bf16.msra.mxu0 0
      %476 = vmatprep.subr.bf16.mxu0 0
      %477 = vmatpush1.bf16.msra.mxu0 0
      %478 = vmatprep.subr.bf16.mxu0 0
      %479 = vmatpush1.bf16.msra.mxu0 0
      %480 = vmatprep.subr.bf16.mxu0 0
      %481 = vmatpush1.bf16.msra.mxu0 0
      %482 = vmatprep.subr.bf16.mxu0 0
      %483 = vmatpush1.bf16.msra.mxu0 0
      %484 = vmatprep.subr.bf16.mxu0 0
      %485 = vmatpush1.bf16.msra.mxu0 0
      %486 = vmatprep.subr.bf16.mxu0 0
      %487 = vmatpush1.bf16.msra.mxu0 0
      %488 = vmatprep.subr.bf16.mxu0 0
      %489 = vmatpush1.bf16.msra.mxu0 0
      %490 = vmatprep.subr.bf16.mxu0 0
      %491 = vmatpush1.bf16.msra.mxu0 0
      %492 = vmatprep.subr.bf16.mxu0 0
      %493 = vmatpush1.bf16.msra.mxu0 0
      %494 = vmatprep.mubr.bf16.mxu0 0
      %495 = vmatmul.mubr.bf16.gmra.mrb[0].mxu0 %v456
      %v496 = vpop.f32.mrb[0].mxu0
      %v497 = vadd.f32 %v453, %v496
      %v498 = vpop.f32.mrb[0].mxu0
      %v499 = vpop.f32.mrb[0].mxu0
      %v500 = vpop.f32.mrb[0].mxu0
      %501 = vdwg.mxu0
      %v502 = vxor.u32 %v497, 2147483648
      %v503 = vmul.f32 %v502, 1.442695
      %v504 = vpow.pop %v503
      %v505 = vadd.f32 %v504, 1.0
      %v506 = vrcp.pop %v505
      %v507 = vmul.f32 1.0, %v506
      %v508 = vlaneseq
      %v509 = vshrl.u32 %v508, 7
      %v510 = vsub.s32 0, %v509
      %v511 = vrot.slane %v507, %v510
      %v512 = vmul.f32 %v335, %v511
      %v513 = vmul.f32 %v336, %v511
      %v514 = vmul.f32 %v337, %v511
      %v515 = vmul.f32 %v338, %v511
      %v516 = vmul.f32 %v339, %v511
      %v517 = vmul.f32 %v340, %v511
      %v518 = vmul.f32 %v341, %v511
      %v519 = vmul.f32 %v342, %v511
      %v520 = vpack.c.bf16 %v513, %v512
      %v521 = vpack.c.bf16 %v515, %v514
      %v522 = vpack.c.bf16 %v517, %v516
      %v523 = vpack.c.bf16 %v519, %v518
      %v524 = vld [vmem:[%s5] sm:$0xf]
      %v525 = vld [vmem:[%s5 + $0x4] sm:$0xf]
      %v526 = vld [vmem:[%s5 + $0x8] sm:$0xf]
      %v527 = vld [vmem:[%s5 + $0xc] sm:$0xf]
      %v528 = vld [vmem:[%s5 + $0x10] sm:$0xf]
      %v529 = vld [vmem:[%s5 + $0x14] sm:$0xf]
      %v530 = vld [vmem:[%s5 + $0x18] sm:$0xf]
      %v531 = vld [vmem:[%s5 + $0x1c] sm:$0xf]
      %v532 = vld [vmem:[%s6] sm:$0x1]
      %v534 = vlaneseq
      %v535 = vshrl.u32 %v534, 7
      %v536 = vsub.s32 0, %v535
      %v537 = vrot.slane %v532, %v536
      %v547 = vunpack.c.l.b16 %v524
      %v548 = vunpack.c.l.b16 %v525
      %v549 = vunpack.c.l.b16 %v526
      %v550 = vunpack.c.l.b16 %v527
      %v551 = vunpack.c.l.b16 %v528
      %v552 = vunpack.c.l.b16 %v529
      %v553 = vunpack.c.l.b16 %v530
      %v554 = vunpack.c.l.b16 %v531
      %v555 = vpack.c.b16 %v548, %v547
      %v556 = vpack.c.b16 %v550, %v549
      %v557 = vpack.c.b16 %v552, %v551
      %v558 = vpack.c.b16 %v554, %v553
      %v564 = vsel %vm343, %v520, 0
      %v567 = vsel %vm343, %v521, 0
      %v570 = vsel %vm343, %v522, 0
      %v573 = vsel %vm343, %v523, 0
      %575 = vmatprep.subr.bf16.mxu0 0
      %576 = vmatpush1.bf16.msra.mxu0 %v555
      %577 = vmatprep.subr.bf16.mxu0 0
      %578 = vmatpush1.bf16.msra.mxu0 %v556
      %579 = vmatprep.subr.bf16.mxu0 0
      %580 = vmatpush1.bf16.msra.mxu0 %v557
      %581 = vmatprep.subr.bf16.mxu0 0
      %582 = vmatpush1.bf16.msra.mxu0 %v558
      %583 = vmatprep.subr.bf16.mxu0 0
      %584 = vmatpush1.bf16.msra.mxu0 0
      %585 = vmatprep.subr.bf16.mxu0 0
      %586 = vmatpush1.bf16.msra.mxu0 0
      %587 = vmatprep.subr.bf16.mxu0 0
      %588 = vmatpush1.bf16.msra.mxu0 0
      %589 = vmatprep.subr.bf16.mxu0 0
      %590 = vmatpush1.bf16.msra.mxu0 0
      %591 = vmatprep.subr.bf16.mxu0 0
      %592 = vmatpush1.bf16.msra.mxu0 0
      %593 = vmatprep.subr.bf16.mxu0 0
      %594 = vmatpush1.bf16.msra.mxu0 0
      %595 = vmatprep.subr.bf16.mxu0 0
      %596 = vmatpush1.bf16.msra.mxu0 0
      %597 = vmatprep.subr.bf16.mxu0 0
      %598 = vmatpush1.bf16.msra.mxu0 0
      %599 = vmatprep.subr.bf16.mxu0 0
      %600 = vmatpush1.bf16.msra.mxu0 0
      %601 = vmatprep.subr.bf16.mxu0 0
      %602 = vmatpush1.bf16.msra.mxu0 0
      %603 = vmatprep.subr.bf16.mxu0 0
      %604 = vmatpush1.bf16.msra.mxu0 0
      %605 = vmatprep.subr.bf16.mxu0 0
      %606 = vmatpush1.bf16.msra.mxu0 0
      %607 = vmatprep.mubr.bf16.mxu0 0
      %608 = vmatmul.mubr.bf16.gmra.mrb[0].mxu0 %v564
      %v609 = vpop.f32.mrb[0].mxu0
      %v610 = vadd.f32 %v537, %v609
      %v611 = vpop.f32.mrb[0].mxu0
      %v612 = vpop.f32.mrb[0].mxu0
      %v613 = vadd.f32 %v537, %v612
      %v614 = vpop.f32.mrb[0].mxu0
      %615 = vmatprep.mubr.bf16.mxu0 0
      %616 = vmatmul.mubr.bf16.gmra.mrb[0].mxu0 %v567
      %v617 = vpop.f32.mrb[0].mxu0
      %v618 = vadd.f32 %v537, %v617
      %v619 = vpop.f32.mrb[0].mxu0
      %v620 = vpop.f32.mrb[0].mxu0
      %v621 = vadd.f32 %v537, %v620
      %v622 = vpop.f32.mrb[0].mxu0
      %623 = vmatprep.mubr.bf16.mxu0 0
      %624 = vmatmul.mubr.bf16.gmra.mrb[0].mxu0 %v570
      %v625 = vpop.f32.mrb[0].mxu0
      %v626 = vadd.f32 %v537, %v625
      %v627 = vpop.f32.mrb[0].mxu0
      %v628 = vpop.f32.mrb[0].mxu0
      %v629 = vadd.f32 %v537, %v628
      %v630 = vpop.f32.mrb[0].mxu0
      %631 = vmatprep.mubr.bf16.mxu0 0
      %632 = vmatmul.mubr.bf16.gmra.mrb[0].mxu0 %v573
      %v633 = vpop.f32.mrb[0].mxu0
      %v634 = vadd.f32 %v537, %v633
      %v635 = vpop.f32.mrb[0].mxu0
      %v636 = vpop.f32.mrb[0].mxu0
      %v637 = vadd.f32 %v537, %v636
      %v638 = vpop.f32.mrb[0].mxu0
      %639 = vdwg.mxu0
      %v640 = vld [vmem:[%s320] sm:$0xf]
      %v641 = vld [vmem:[%s320 + $0x4] sm:$0xf]
      %v642 = vld [vmem:[%s320 + $0x8] sm:$0xf]
      %v643 = vld [vmem:[%s320 + $0xc] sm:$0xf]
      %v644 = vld [vmem:[%s320 + $0x10] sm:$0xf]
      %v645 = vld [vmem:[%s320 + $0x14] sm:$0xf]
      %v646 = vld [vmem:[%s320 + $0x18] sm:$0xf]
      %v647 = vld [vmem:[%s320 + $0x1c] sm:$0xf]
      %v648 = vunpack.c.l.bf16 %v640
      %v649 = vunpack.c.l.bf16 %v641
      %v650 = vunpack.c.l.bf16 %v642
      %v651 = vunpack.c.l.bf16 %v643
      %v652 = vunpack.c.l.bf16 %v644
      %v653 = vunpack.c.l.bf16 %v645
      %v654 = vunpack.c.l.bf16 %v646
      %v655 = vunpack.c.l.bf16 %v647
      %v656 = vadd.f32 %v610, %v648
      %v657 = vadd.f32 %v613, %v649
      %v658 = vadd.f32 %v618, %v650
      %v659 = vadd.f32 %v621, %v651
      %v660 = vadd.f32 %v626, %v652
      %v661 = vadd.f32 %v629, %v653
      %v662 = vadd.f32 %v634, %v654
      %v663 = vadd.f32 %v637, %v655
      %v664 = vpack.c.bf16 %v657, %v656
      %v665 = vpack.c.bf16 %v659, %v658
      %v666 = vpack.c.bf16 %v661, %v660
      %v667 = vpack.c.bf16 %v663, %v662
      %v672 = vunpack.c.l.b16 %v664
      %v673 = vunpack.c.h.b16 %v664
      %v674 = vunpack.c.l.b16 %v665
      %v675 = vunpack.c.h.b16 %v665
      %v676 = vunpack.c.l.b16 %v666
      %v677 = vunpack.c.h.b16 %v666
      %v678 = vunpack.c.l.b16 %v667
      %v679 = vunpack.c.h.b16 %v667
      %v680 = vpack.c.b16 %v672, %v672
      %v681 = vpack.c.b16 %v673, %v673
      %v682 = vpack.c.b16 %v674, %v674
      %v683 = vpack.c.b16 %v675, %v675
      %v684 = vpack.c.b16 %v676, %v676
      %v685 = vpack.c.b16 %v677, %v677
      %v686 = vpack.c.b16 %v678, %v678
      %v687 = vpack.c.b16 %v679, %v679
      %vm696 = vcmask 125952
      %697 = vst.msk [vmem:[%s325] sm:$0xf] %vm696, %v680
      %698 = vst.msk [vmem:[%s325 + $0x4] sm:$0xf] %vm696, %v681
      %699 = vst.msk [vmem:[%s325 + $0x8] sm:$0xf] %vm696, %v682
      %700 = vst.msk [vmem:[%s325 + $0xc] sm:$0xf] %vm696, %v683
      %701 = vst.msk [vmem:[%s325 + $0x10] sm:$0xf] %vm696, %v684
      %702 = vst.msk [vmem:[%s325 + $0x14] sm:$0xf] %vm696, %v685
      %703 = vst.msk [vmem:[%s325 + $0x18] sm:$0xf] %vm696, %v686
      %704 = vst.msk [vmem:[%s325 + $0x1c] sm:$0xf] %vm696, %v687
      %p705 = scmp.lt.s32.totalorder %s19, 1
      %s706 = scalar_select %p705, %s19, 1
      %s707 = smul.addr %s706, 8
      %s708 = smul.addr %s707, 4
      %s709 = scalar_lea.vmem %s8, %s708
      // Predicated region
      $region53: #{maxvit_forward.14} parent=51 // pred_check
        %p710 = pneg %p215
      $region54: #{maxvit_forward.14} parent=51 // pred_check_branch
        %712 = sbr.rel (%p710) target = $region56
      $region55: #{maxvit_forward.14} parent=51 // pred_region
        _
      $region56: #{maxvit_forward.14} parent=51 // pred_fallthru
        _
    $region52: #{maxvit_forward.14} parent=5 // pred_fallthru
      _
    %p713 = scmp.le.s32.totalorder 2, %s14
    // Predicated region
    $region57: #{maxvit_forward.14} parent=5 // pred_check
      %p714 = pneg %p713
    $region58: #{maxvit_forward.14} parent=5 // pred_check_branch
      %716 = sbr.rel (%p714) target = $region60
    $region59: #{maxvit_forward.14} parent=5 // pred_region
      %s717 = ssub.s32 %s14, 2
      // Predicated region
      $region61: #{maxvit_forward.14} parent=59 // pred_check
        %p718 = pneg %p221
      $region62: #{maxvit_forward.14} parent=59 // pred_check_branch
        %720 = sbr.rel (%p718) target = $region64
      $region63: #{maxvit_forward.14} parent=59 // pred_region
        %p721 = scmp.lt.s32.totalorder %s20, 1
        %s722 = scalar_select %p721, %s20, 1
        %s723 = smul.addr %s722, 8
        %s724 = smul.addr %s723, 4
        %s725 = scalar_lea.vmem %s8, %s724
      $region64: #{maxvit_forward.14} parent=59 // pred_fallthru
        _
    $region60: #{maxvit_forward.14} parent=5 // pred_fallthru
      _
  $region6: #{maxvit_forward.14} parent=0 // loop_footer
    %s18 = sadd.s32 1, %s14
  $region7: #{maxvit_forward.14} parent=0 // loop_footer_branch
    %13 = sbr.rel target = $region3
  $region8: #{maxvit_forward.14} parent=0 // loop_exit
    _

// kernel: maxvit_forward.17
$region0: #{maxvit_forward.17}
  #allocation0 [shape = 'u32[]', space=smem, size = 0x4, offset = 0x4, fixed_abs, tag = 'smem constant byte address 0x4 - core index']
  #allocation1 [shape = 'u32[144,128]{1,0:T(1,128)}', space=vmem, size = 0x12000, scoped, tag = 'internal scratch']
  %s0 = inlined_call_operand.vmem [shape: bf16[2,64,16], index: 0, kind: input, shape index: {}]
  %s1 = inlined_call_operand.vmem [shape: bf16[16,4], index: 1, kind: input, shape index: {}]
  %s2 = inlined_call_operand.vmem [shape: f32[1,4], index: 2, kind: input, shape index: {}]
  %s3 = inlined_call_operand.hbm [shape: f32[2,1,4], index: 3, kind: output, shape index: {}]
  %s4 = sld [smem:[#allocation0]]
  $region45: #{maxvit_forward.17} parent=0
    _
  %s6 = ssub.s32 1, %s4
  %s7 = scalar_select 0, %s6, %s4
  $region1: #{maxvit_forward.17} parent=0
    #allocation2 [shape = 'u8[1024]{0}', space=vmem, size = 0x400, scoped, tag = 'output window, operand 0']
    #allocation3 [shape = 's32[2]{0}', space=sflag, size = 0x8, scoped, tag = 'scoped memory for maxvit_forward.17']
    %8 = vsyncpa [#allocation3], 0
    %s9 = scalar_lea.sflag [#allocation3], 1
    %10 = vsyncpa %s9, 0
    loop: start=0, step=1, limit=4
    $region2: #{maxvit_forward.17} parent=1 // loop_pre_header
      _
    $region3: #{maxvit_forward.17} parent=1 // loop_header
      %s12 = sphi 0, %s16
      %p13 = scmp.ge.s32.totalorder %s12, 4
      %s22 = sphi 0, %s24
      %s25 = sphi 0, %s22
      %s26 = sphi 0, %s25
      %s42 = sphi 0, %s26
      %s46 = sphi 0, %s46
      %s48 = sphi 0, %s46
      %s49 = sphi 0, %s48
      %s63 = sphi 0, %s49
      %s67 = sphi 0, %s67
      %s69 = sphi 0, %s67
      %s70 = sphi 0, %s69
      %s84 = sphi 0, %s70
      %s90 = sphi 0, %s92
      %s93 = sphi 0, %s90
      %s94 = sphi 0, %s93
      %s110 = sphi 0, %s94
    $region4: #{maxvit_forward.17} parent=1 // loop_header_branch
      %15 = sbr.rel (%p13) target = $region8
    $region5: #{maxvit_forward.17} parent=1 // loop_body
      %s17 = ssub.s32 %s12, 1
      %s18 = ssub.s32 %s12, 2
      %s19 = sadd.s32 %s12, 1
      %s20 = ssub.s32 %s12, %s19
      %p21 = scmp.eq.s32.totalorder %s20, 0
      %s23 = sadd.s32 %s22, 1
      %s24 = scalar_select %p21, %s22, %s23
      %p27 = pneg %p21
      %p28 = scmp.eq.s32.totalorder %s12, 1
      %p29 = por %p27, %p28
      %p30 = scmp.ne.s32.totalorder %s22, %s25
      %p31 = scmp.eq.s32.totalorder %s12, 0
      %p32 = por %p30, %p31
      %p33 = scmp.ne.s32.totalorder %s22, %s25
      %p34 = scmp.eq.s32.totalorder %s17, 1
      %p35 = por %p33, %p34
      %p36 = scmp.ne.s32.totalorder %s25, %s26
      %p37 = scmp.eq.s32.totalorder %s17, 0
      %p38 = por %p36, %p37
      %p39 = scmp.ne.s32.totalorder %s25, %s26
      %p40 = scmp.eq.s32.totalorder %s18, 1
      %p41 = por %p39, %p40
      %p43 = scmp.ne.s32.totalorder %s26, %s42
      %p44 = scmp.eq.s32.totalorder %s18, 0
      %p45 = por %p43, %p44
      %s47 = sadd.s32 %s46, 1
      %p50 = scmp.eq.s32.totalorder %s12, 1
      %p51 = scmp.ne.s32.totalorder %s46, %s48
      %p52 = scmp.eq.s32.totalorder %s12, 0
      %p53 = por %p51, %p52
      %p54 = scmp.ne.s32.totalorder %s46, %s48
      %p55 = scmp.eq.s32.totalorder %s17, 1
      %p56 = por %p54, %p55
      %p57 = scmp.ne.s32.totalorder %s48, %s49
      %p58 = scmp.eq.s32.totalorder %s17, 0
      %p59 = por %p57, %p58
      %p60 = scmp.ne.s32.totalorder %s48, %s49
      %p61 = scmp.eq.s32.totalorder %s18, 1
      %p62 = por %p60, %p61
      %p64 = scmp.ne.s32.totalorder %s49, %s63
      %p65 = scmp.eq.s32.totalorder %s18, 0
      %p66 = por %p64, %p65
      %s68 = sadd.s32 %s67, 1
      %p71 = scmp.eq.s32.totalorder %s12, 1
      %p72 = scmp.ne.s32.totalorder %s67, %s69
      %p73 = scmp.eq.s32.totalorder %s12, 0
      %p74 = por %p72, %p73
      %p75 = scmp.ne.s32.totalorder %s67, %s69
      %p76 = scmp.eq.s32.totalorder %s17, 1
      %p77 = por %p75, %p76
      %p78 = scmp.ne.s32.totalorder %s69, %s70
      %p79 = scmp.eq.s32.totalorder %s17, 0
      %p80 = por %p78, %p79
      %p81 = scmp.ne.s32.totalorder %s69, %s70
      %p82 = scmp.eq.s32.totalorder %s18, 1
      %p83 = por %p81, %p82
      %p85 = scmp.ne.s32.totalorder %s70, %s84
      %p86 = scmp.eq.s32.totalorder %s18, 0
      %p87 = por %p85, %p86
      %s88 = ssub.s32 %s12, %s19
      %p89 = scmp.eq.s32.totalorder %s88, 0
      %s91 = sadd.s32 %s90, 1
      %s92 = scalar_select %p89, %s90, %s91
      %p95 = pneg %p89
      %p96 = scmp.eq.s32.totalorder %s12, 1
      %p97 = por %p95, %p96
      %p98 = scmp.ne.s32.totalorder %s90, %s93
      %p99 = scmp.eq.s32.totalorder %s12, 0
      %p100 = por %p98, %p99
      %p101 = scmp.ne.s32.totalorder %s90, %s93
      %p102 = scmp.eq.s32.totalorder %s17, 1
      %p103 = por %p101, %p102
      %p104 = scmp.ne.s32.totalorder %s93, %s94
      %p105 = scmp.eq.s32.totalorder %s17, 0
      %p106 = por %p104, %p105
      %p107 = scmp.ne.s32.totalorder %s93, %s94
      %p108 = scmp.eq.s32.totalorder %s18, 1
      %p109 = por %p107, %p108
      %p111 = scmp.ne.s32.totalorder %s94, %s110
      %p112 = scmp.eq.s32.totalorder %s18, 0
      %p113 = por %p111, %p112
      %p114 = scmp.le.s32.totalorder 1, %s12
      %p115 = scmp.lt.s32.totalorder %s12, 3
      %p116 = pnand %p114, %p115
      %p117 = pneg %p116
      // Predicated region
      $region9: #{maxvit_forward.17} parent=5 // pred_check
        _
      $region10: #{maxvit_forward.17} parent=5 // pred_check_branch
        %119 = sbr.rel (%p116) target = $region12
      $region11: #{maxvit_forward.17} parent=5 // pred_region
        %s120 = ssub.s32 %s12, 1
        // Predicated region
        $region13: #{maxvit_forward.17} parent=11 // pred_check
          %p121 = pneg %p59
        $region14: #{maxvit_forward.17} parent=11 // pred_check_branch
          %123 = sbr.rel (%p121) target = $region16
        $region15: #{maxvit_forward.17} parent=11 // pred_region
          _
        $region16: #{maxvit_forward.17} parent=11 // pred_fallthru
          _
        // Predicated region
        $region17: #{maxvit_forward.17} parent=11 // pred_check
          %p124 = pneg %p80
        $region18: #{maxvit_forward.17} parent=11 // pred_check_branch
          %126 = sbr.rel (%p124) target = $region20
        $region19: #{maxvit_forward.17} parent=11 // pred_region
          _
        $region20: #{maxvit_forward.17} parent=11 // pred_fallthru
          _
      $region12: #{maxvit_forward.17} parent=5 // pred_fallthru
        _
      %p127 = scmp.lt.s32.totalorder %s12, 2
      // Predicated region
      $region21: #{maxvit_forward.17} parent=5 // pred_check
        %p128 = pneg %p127
      $region22: #{maxvit_forward.17} parent=5 // pred_check_branch
        %130 = sbr.rel (%p128) target = $region24
      $region23: #{maxvit_forward.17} parent=5 // pred_region
        // Predicated region
        $region25: #{maxvit_forward.17} parent=23 // pred_check
          %p131 = pneg %p32
        $region26: #{maxvit_forward.17} parent=23 // pred_check_branch
          %133 = sbr.rel (%p131) target = $region28
        $region27: #{maxvit_forward.17} parent=23 // pred_region
          %p134 = scmp.lt.s32.totalorder %s12, 1
          %s135 = scalar_select %p134, %s12, 1
          %s136 = smul.addr %s135, 8
          %s137 = smul.addr %s136, 4
          %s138 = scalar_lea.vmem %s0, %s137
        $region28: #{maxvit_forward.17} parent=23 // pred_fallthru
          _
      $region24: #{maxvit_forward.17} parent=5 // pred_fallthru
        _
      %p139 = scmp.le.s32.totalorder 1, %s12
      %p140 = scmp.lt.s32.totalorder %s12, 3
      %p141 = pnand %p139, %p140
      %p142 = pneg %p141
      // Predicated region
      $region29: #{maxvit_forward.17} parent=5 // pred_check
        _
      $region30: #{maxvit_forward.17} parent=5 // pred_check_branch
        %144 = sbr.rel (%p141) target = $region32
      $region31: #{maxvit_forward.17} parent=5 // pred_region
        %s145 = ssub.s32 %s12, 1
        %p146 = scmp.lt.s32.totalorder %s17, 1
        %s147 = scalar_select %p146, %s17, 1
        %s148 = smul.addr %s147, 8
        %s149 = smul.addr %s148, 4
        %s150 = scalar_lea.vmem %s0, %s149
        %p151 = pneg %p38
        %p152 = pneg %p35
        %p153 = pneg %p59
        %p154 = pneg %p56
        %p155 = pneg %p80
        %p156 = pneg %p77
        %p157 = pneg %p106
        %p158 = pneg %p103
        %s159 = sand.u32 %s93, 1
        %s160 = scalar_lea.sflag [#allocation3], %s159
        %s161 = sand.u32 %s93, 1
        %s162 = scalar_lea.vmem [#allocation2], %s161
        %p163 = scmp.lt.s32.totalorder %s17, 1
        %s164 = scalar_select %p163, %s17, 1
        %s165 = smul.addr %s164, 8
        %s166 = smul.addr %s165, 4
        %s167 = scalar_lea.vmem %s0, %s166
        %v169 = vld [vmem:[%s167] sm:$0xf]
        %v170 = vld [vmem:[%s167 + $0x4] sm:$0xf]
        %v171 = vld [vmem:[%s167 + $0x8] sm:$0xf]
        %v172 = vld [vmem:[%s167 + $0xc] sm:$0xf]
        %v173 = vld [vmem:[%s167 + $0x10] sm:$0xf]
        %v174 = vld [vmem:[%s167 + $0x14] sm:$0xf]
        %v175 = vld [vmem:[%s167 + $0x18] sm:$0xf]
        %v176 = vld [vmem:[%s167 + $0x1c] sm:$0xf]
        %v177 = vunpack.c.l.bf16 %v169
        %v178 = vunpack.c.l.bf16 %v170
        %v179 = vunpack.c.l.bf16 %v171
        %v180 = vunpack.c.l.bf16 %v172
        %v181 = vunpack.c.l.bf16 %v173
        %v182 = vunpack.c.l.bf16 %v174
        %v183 = vunpack.c.l.bf16 %v175
        %v184 = vunpack.c.l.bf16 %v176
        %vm185 = vcmask 130048
        %v186 = vsel %vm185, %v177, 0.0
        %v187 = vsel %vm185, %v178, 0.0
        %v188 = vadd.f32 %v186, %v187
        %v189 = vsel %vm185, %v179, 0.0
        %v190 = vadd.f32 %v188, %v189
        %v191 = vsel %vm185, %v180, 0.0
        %v192 = vadd.f32 %v190, %v191
        %v193 = vsel %vm185, %v181, 0.0
        %v194 = vadd.f32 %v192, %v193
        %v195 = vsel %vm185, %v182, 0.0
        %v196 = vadd.f32 %v194, %v195
        %v197 = vsel %vm185, %v183, 0.0
        %v198 = vadd.f32 %v196, %v197
        %v199 = vsel %vm185, %v184, 0.0
        %v200 = vadd.f32 %v198, %v199
        %v201 = vrot.slane %v200, 4
        %v202 = vadd.f32 %v200, %v201
        %v203 = vrot.slane %v202, 2
        %v204 = vadd.f32 %v202, %v203
        %v205 = vrot.slane %v204, 1
        %v206 = vadd.f32 %v204, %v205
        %v207 = vrcp.pop 64.0
        %v208 = vmul.f32 %v206, %v207
        %v209 = vpack.c.bf16 %v208, %v208
        %v210 = vld [vmem:[%s1] sm:$0xf]
        %v211 = vld [vmem:[%s1 + $0x4] sm:$0xf]
        %v212 = vld [vmem:[%s2] sm:$0x1]
        %v215 = vunpack.c.l.b16 %v210
        %v216 = vunpack.c.l.b16 %v211
        %v217 = vpack.c.b16 %v216, %v215
        %v220 = vsel %vm185, %v209, 0
        %222 = vmatprep.subr.bf16.mxu0 0
        %223 = vmatpush1.bf16.msra.mxu0 %v217
        %224 = vmatprep.subr.bf16.mxu0 0
        %225 = vmatpush1.bf16.msra.mxu0 0
        %226 = vmatprep.subr.bf16.mxu0 0
        %227 = vmatpush1.bf16.msra.mxu0 0
        %228 = vmatprep.subr.bf16.mxu0 0
        %229 = vmatpush1.bf16.msra.mxu0 0
        %230 = vmatprep.subr.bf16.mxu0 0
        %231 = vmatpush1.bf16.msra.mxu0 0
        %232 = vmatprep.subr.bf16.mxu0 0
        %233 = vmatpush1.bf16.msra.mxu0 0
        %234 = vmatprep.subr.bf16.mxu0 0
        %235 = vmatpush1.bf16.msra.mxu0 0
        %236 = vmatprep.subr.bf16.mxu0 0
        %237 = vmatpush1.bf16.msra.mxu0 0
        %238 = vmatprep.subr.bf16.mxu0 0
        %239 = vmatpush1.bf16.msra.mxu0 0
        %240 = vmatprep.subr.bf16.mxu0 0
        %241 = vmatpush1.bf16.msra.mxu0 0
        %242 = vmatprep.subr.bf16.mxu0 0
        %243 = vmatpush1.bf16.msra.mxu0 0
        %244 = vmatprep.subr.bf16.mxu0 0
        %245 = vmatpush1.bf16.msra.mxu0 0
        %246 = vmatprep.subr.bf16.mxu0 0
        %247 = vmatpush1.bf16.msra.mxu0 0
        %248 = vmatprep.subr.bf16.mxu0 0
        %249 = vmatpush1.bf16.msra.mxu0 0
        %250 = vmatprep.subr.bf16.mxu0 0
        %251 = vmatpush1.bf16.msra.mxu0 0
        %252 = vmatprep.subr.bf16.mxu0 0
        %253 = vmatpush1.bf16.msra.mxu0 0
        %254 = vmatprep.mubr.bf16.mxu0 0
        %255 = vmatmul.mubr.bf16.gmra.mrb[0].mxu0 %v220
        %v256 = vpop.f32.mrb[0].mxu0
        %v257 = vadd.f32 %v212, %v256
        %v258 = vpop.f32.mrb[0].mxu0
        %v259 = vpop.f32.mrb[0].mxu0
        %v260 = vpop.f32.mrb[0].mxu0
        %261 = vdwg.mxu0
        %v262 = vxor.u32 %v257, 2147483648
        %v263 = vmul.f32 %v262, 1.442695
        %v264 = vpow.pop %v263
        %v265 = vadd.f32 %v264, 1.0
        %v266 = vrcp.pop %v265
        %v267 = vmul.f32 1.0, %v266
        %vm268 = vcmask 24576
        %269 = vst.msk [vmem:[%s162] sm:$0x1] %vm268, %v267
        %s270 = sand.u32 %s93, 1
        %s271 = scalar_lea.sflag [#allocation3], %s270
        %s272 = sand.u32 %s93, 1
        %s273 = scalar_lea.vmem [#allocation2], %s272
        // Predicated region
        $region33: #{maxvit_forward.17} parent=31 // pred_check
          %p274 = pneg %p103
        $region34: #{maxvit_forward.17} parent=31 // pred_check_branch
          %276 = sbr.rel (%p274) target = $region36
        $region35: #{maxvit_forward.17} parent=31 // pred_region
          %s278 = ssub.s32 16, 16
          %279 = vsyncadd %s271, %s278
          %s280 = smul.addr %s17, 16
          %s281 = scalar_lea.hbm %s3, %s280
          %s283 = sshll.u32 %s273, 4
          %s284 = int_to_ptr.vmem [resolvable:$true] %s283
          %286 = dma.vmem_to_hbm [thread:$0]  %s284, 16, %s281, %s271
        $region36: #{maxvit_forward.17} parent=31 // pred_fallthru
          _
      $region32: #{maxvit_forward.17} parent=5 // pred_fallthru
        _
      %p287 = scmp.le.s32.totalorder 2, %s12
      // Predicated region
      $region37: #{maxvit_forward.17} parent=5 // pred_check
        %p288 = pneg %p287
      $region38: #{maxvit_forward.17} parent=5 // pred_check_branch
        %290 = sbr.rel (%p288) target = $region40
      $region39: #{maxvit_forward.17} parent=5 // pred_region
        %s291 = ssub.s32 %s12, 2
        // Predicated region
        $region41: #{maxvit_forward.17} parent=39 // pred_check
          %p292 = pneg %p109
        $region42: #{maxvit_forward.17} parent=39 // pred_check_branch
          %294 = sbr.rel (%p292) target = $region44
        $region43: #{maxvit_forward.17} parent=39 // pred_region
          %s295 = sand.u32 %s94, 1
          %s296 = scalar_lea.sflag [#allocation3], %s295
          %s297 = sand.u32 %s94, 1
          %s298 = scalar_lea.vmem [#allocation2], %s297
          %299 = dma.done %s296, 16
        $region44: #{maxvit_forward.17} parent=39 // pred_fallthru
          _
      $region40: #{maxvit_forward.17} parent=5 // pred_fallthru
        _
    $region6: #{maxvit_forward.17} parent=1 // loop_footer
      %s16 = sadd.s32 1, %s12
    $region7: #{maxvit_forward.17} parent=1 // loop_footer_branch
      %11 = sbr.rel target = $region3
    $region8: #{maxvit_forward.17} parent=1 // loop_exit
      _
    %300 = vsyncpa [#allocation3], 1
    %s301 = scalar_lea.sflag [#allocation3], 1
    %302 = vsyncpa %s301, 1

// kernel: maxvit_forward.15
$region0: #{maxvit_forward.15}
  #allocation0 [shape = 'u32[]', space=smem, size = 0x4, offset = 0x4, fixed_abs, tag = 'smem constant byte address 0x4 - core index']
  #allocation1 [shape = 'u32[144,128]{1,0:T(1,128)}', space=vmem, size = 0x12000, scoped, tag = 'internal scratch']
  %s0 = inlined_call_operand.vmem [shape: bf16[8,16,16], index: 0, kind: input, shape index: {}]
  %s1 = inlined_call_operand.vmem [shape: f32[1,16], index: 1, kind: input, shape index: {}]
  %s2 = inlined_call_operand.vmem [shape: f32[1,16], index: 2, kind: input, shape index: {}]
  %s3 = inlined_call_operand.vmem [shape: bf16[16,48], index: 3, kind: input, shape index: {}]
  %s4 = inlined_call_operand.vmem [shape: f32[1,48], index: 4, kind: input, shape index: {}]
  %s5 = inlined_call_operand.vmem [shape: f32[2,16,16], index: 5, kind: input, shape index: {}]
  %s6 = inlined_call_operand.vmem [shape: bf16[16,16], index: 6, kind: input, shape index: {}]
  %s7 = inlined_call_operand.vmem [shape: f32[1,16], index: 7, kind: input, shape index: {}]
  %s8 = inlined_call_operand.vmem [shape: f32[1,16], index: 8, kind: input, shape index: {}]
  %s9 = inlined_call_operand.vmem [shape: f32[1,16], index: 9, kind: input, shape index: {}]
  %s10 = inlined_call_operand.vmem [shape: bf16[16,64], index: 10, kind: input, shape index: {}]
  %s11 = inlined_call_operand.vmem [shape: f32[1,64], index: 11, kind: input, shape index: {}]
  %s12 = inlined_call_operand.vmem [shape: bf16[64,16], index: 12, kind: input, shape index: {}]
  %s13 = inlined_call_operand.vmem [shape: f32[1,16], index: 13, kind: input, shape index: {}]
  %s14 = inlined_call_operand.vmem [shape: bf16[8,16,16], index: 14, kind: output, shape index: {}]
  %s15 = sld [smem:[#allocation0]]
  $region89: #{maxvit_forward.15} parent=0
    _
  %s17 = ssub.s32 1, %s15
  %s18 = scalar_select 0, %s17, %s15
  loop: start=0, step=1, limit=4
  $region2: #{maxvit_forward.15} parent=0 // loop_pre_header
    _
  $region3: #{maxvit_forward.15} parent=0 // loop_header
    %s20 = sphi 0, %s24
    %p21 = scmp.ge.s32.totalorder %s20, 4
    %s30 = sphi 0, %s32
    %s33 = sphi 0, %s30
    %s34 = sphi 0, %s33
    %s50 = sphi 0, %s34
    %s54 = sphi 0, %s54
    %s56 = sphi 0, %s54
    %s57 = sphi 0, %s56
    %s71 = sphi 0, %s57
    %s75 = sphi 0, %s75
    %s77 = sphi 0, %s75
    %s78 = sphi 0, %s77
    %s92 = sphi 0, %s78
    %s96 = sphi 0, %s96
    %s98 = sphi 0, %s96
    %s99 = sphi 0, %s98
    %s113 = sphi 0, %s99
    %s117 = sphi 0, %s117
    %s119 = sphi 0, %s117
    %s120 = sphi 0, %s119
    %s134 = sphi 0, %s120
    %s138 = sphi 0, %s138
    %s140 = sphi 0, %s138
    %s141 = sphi 0, %s140
    %s155 = sphi 0, %s141
    %s159 = sphi 0, %s159
    %s161 = sphi 0, %s159
    %s162 = sphi 0, %s161
    %s176 = sphi 0, %s162
    %s180 = sphi 0, %s180
    %s182 = sphi 0, %s180
    %s183 = sphi 0, %s182
    %s197 = sphi 0, %s183
    %s201 = sphi 0, %s201
    %s203 = sphi 0, %s201
    %s204 = sphi 0, %s203
    %s218 = sphi 0, %s204
    %s222 = sphi 0, %s222
    %s224 = sphi 0, %s222
    %s225 = sphi 0, %s224
    %s239 = sphi 0, %s225
    %s243 = sphi 0, %s243
    %s245 = sphi 0, %s243
    %s246 = sphi 0, %s245
    %s260 = sphi 0, %s246
    %s264 = sphi 0, %s264
    %s266 = sphi 0, %s264
    %s267 = sphi 0, %s266
    %s281 = sphi 0, %s267
    %s285 = sphi 0, %s285
    %s287 = sphi 0, %s285
    %s288 = sphi 0, %s287
    %s302 = sphi 0, %s288
    %s306 = sphi 0, %s306
    %s308 = sphi 0, %s306
    %s309 = sphi 0, %s308
    %s323 = sphi 0, %s309
    %s329 = sphi 0, %s331
    %s332 = sphi 0, %s329
    %s333 = sphi 0, %s332
    %s349 = sphi 0, %s333
  $region4: #{maxvit_forward.15} parent=0 // loop_header_branch
    %23 = sbr.rel (%p21) target = $region8
  $region5: #{maxvit_forward.15} parent=0 // loop_body
    %s25 = ssub.s32 %s20, 1
    %s26 = ssub.s32 %s20, 2
    %s27 = sadd.s32 %s20, 1
    %s28 = ssub.s32 %s20, %s27
    %p29 = scmp.eq.s32.totalorder %s28, 0
    %s31 = sadd.s32 %s30, 1
    %s32 = scalar_select %p29, %s30, %s31
    %p35 = pneg %p29
    %p36 = scmp.eq.s32.totalorder %s20, 1
    %p37 = por %p35, %p36
    %p38 = scmp.ne.s32.totalorder %s30, %s33
    %p39 = scmp.eq.s32.totalorder %s20, 0
    %p40 = por %p38, %p39
    %p41 = scmp.ne.s32.totalorder %s30, %s33
    %p42 = scmp.eq.s32.totalorder %s25, 1
    %p43 = por %p41, %p42
    %p44 = scmp.ne.s32.totalorder %s33, %s34
    %p45 = scmp.eq.s32.totalorder %s25, 0
    %p46 = por %p44, %p45
    %p47 = scmp.ne.s32.totalorder %s33, %s34
    %p48 = scmp.eq.s32.totalorder %s26, 1
    %p49 = por %p47, %p48
    %p51 = scmp.ne.s32.totalorder %s34, %s50
    %p52 = scmp.eq.s32.totalorder %s26, 0
    %p53 = por %p51, %p52
    %s55 = sadd.s32 %s54, 1
    %p58 = scmp.eq.s32.totalorder %s20, 1
    %p59 = scmp.ne.s32.totalorder %s54, %s56
    %p60 = scmp.eq.s32.totalorder %s20, 0
    %p61 = por %p59, %p60
    %p62 = scmp.ne.s32.totalorder %s54, %s56
    %p63 = scmp.eq.s32.totalorder %s25, 1
    %p64 = por %p62, %p63
    %p65 = scmp.ne.s32.totalorder %s56, %s57
    %p66 = scmp.eq.s32.totalorder %s25, 0
    %p67 = por %p65, %p66
    %p68 = scmp.ne.s32.totalorder %s56, %s57
    %p69 = scmp.eq.s32.totalorder %s26, 1
    %p70 = por %p68, %p69
    %p72 = scmp.ne.s32.totalorder %s57, %s71
    %p73 = scmp.eq.s32.totalorder %s26, 0
    %p74 = por %p72, %p73
    %s76 = sadd.s32 %s75, 1
    %p79 = scmp.eq.s32.totalorder %s20, 1
    %p80 = scmp.ne.s32.totalorder %s75, %s77
    %p81 = scmp.eq.s32.totalorder %s20, 0
    %p82 = por %p80, %p81
    %p83 = scmp.ne.s32.totalorder %s75, %s77
    %p84 = scmp.eq.s32.totalorder %s25, 1
    %p85 = por %p83, %p84
    %p86 = scmp.ne.s32.totalorder %s77, %s78
    %p87 = scmp.eq.s32.totalorder %s25, 0
    %p88 = por %p86, %p87
    %p89 = scmp.ne.s32.totalorder %s77, %s78
    %p90 = scmp.eq.s32.totalorder %s26, 1
    %p91 = por %p89, %p90
    %p93 = scmp.ne.s32.totalorder %s78, %s92
    %p94 = scmp.eq.s32.totalorder %s26, 0
    %p95 = por %p93, %p94
    %s97 = sadd.s32 %s96, 1
    %p100 = scmp.eq.s32.totalorder %s20, 1
    %p101 = scmp.ne.s32.totalorder %s96, %s98
    %p102 = scmp.eq.s32.totalorder %s20, 0
    %p103 = por %p101, %p102
    %p104 = scmp.ne.s32.totalorder %s96, %s98
    %p105 = scmp.eq.s32.totalorder %s25, 1
    %p106 = por %p104, %p105
    %p107 = scmp.ne.s32.totalorder %s98, %s99
    %p108 = scmp.eq.s32.totalorder %s25, 0
    %p109 = por %p107, %p108
    %p110 = scmp.ne.s32.totalorder %s98, %s99
    %p111 = scmp.eq.s32.totalorder %s26, 1
    %p112 = por %p110, %p111
    %p114 = scmp.ne.s32.totalorder %s99, %s113
    %p115 = scmp.eq.s32.totalorder %s26, 0
    %p116 = por %p114, %p115
    %s118 = sadd.s32 %s117, 1
    %p121 = scmp.eq.s32.totalorder %s20, 1
    %p122 = scmp.ne.s32.totalorder %s117, %s119
    %p123 = scmp.eq.s32.totalorder %s20, 0
    %p124 = por %p122, %p123
    %p125 = scmp.ne.s32.totalorder %s117, %s119
    %p126 = scmp.eq.s32.totalorder %s25, 1
    %p127 = por %p125, %p126
    %p128 = scmp.ne.s32.totalorder %s119, %s120
    %p129 = scmp.eq.s32.totalorder %s25, 0
    %p130 = por %p128, %p129
    %p131 = scmp.ne.s32.totalorder %s119, %s120
    %p132 = scmp.eq.s32.totalorder %s26, 1
    %p133 = por %p131, %p132
    %p135 = scmp.ne.s32.totalorder %s120, %s134
    %p136 = scmp.eq.s32.totalorder %s26, 0
    %p137 = por %p135, %p136
    %s139 = sadd.s32 %s138, 1
    %p142 = scmp.eq.s32.totalorder %s20, 1
    %p143 = scmp.ne.s32.totalorder %s138, %s140
    %p144 = scmp.eq.s32.totalorder %s20, 0
    %p145 = por %p143, %p144
    %p146 = scmp.ne.s32.totalorder %s138, %s140
    %p147 = scmp.eq.s32.totalorder %s25, 1
    %p148 = por %p146, %p147
    %p149 = scmp.ne.s32.totalorder %s140, %s141
    %p150 = scmp.eq.s32.totalorder %s25, 0
    %p151 = por %p149, %p150
    %p152 = scmp.ne.s32.totalorder %s140, %s141
    %p153 = scmp.eq.s32.totalorder %s26, 1
    %p154 = por %p152, %p153
    %p156 = scmp.ne.s32.totalorder %s141, %s155
    %p157 = scmp.eq.s32.totalorder %s26, 0
    %p158 = por %p156, %p157
    %s160 = sadd.s32 %s159, 1
    %p163 = scmp.eq.s32.totalorder %s20, 1
    %p164 = scmp.ne.s32.totalorder %s159, %s161
    %p165 = scmp.eq.s32.totalorder %s20, 0
    %p166 = por %p164, %p165
    %p167 = scmp.ne.s32.totalorder %s159, %s161
    %p168 = scmp.eq.s32.totalorder %s25, 1
    %p169 = por %p167, %p168
    %p170 = scmp.ne.s32.totalorder %s161, %s162
    %p171 = scmp.eq.s32.totalorder %s25, 0
    %p172 = por %p170, %p171
    %p173 = scmp.ne.s32.totalorder %s161, %s162
    %p174 = scmp.eq.s32.totalorder %s26, 1
    %p175 = por %p173, %p174
    %p177 = scmp.ne.s32.totalorder %s162, %s176
    %p178 = scmp.eq.s32.totalorder %s26, 0
    %p179 = por %p177, %p178
    %s181 = sadd.s32 %s180, 1
    %p184 = scmp.eq.s32.totalorder %s20, 1
    %p185 = scmp.ne.s32.totalorder %s180, %s182
    %p186 = scmp.eq.s32.totalorder %s20, 0
    %p187 = por %p185, %p186
    %p188 = scmp.ne.s32.totalorder %s180, %s182
    %p189 = scmp.eq.s32.totalorder %s25, 1
    %p190 = por %p188, %p189
    %p191 = scmp.ne.s32.totalorder %s182, %s183
    %p192 = scmp.eq.s32.totalorder %s25, 0
    %p193 = por %p191, %p192
    %p194 = scmp.ne.s32.totalorder %s182, %s183
    %p195 = scmp.eq.s32.totalorder %s26, 1
    %p196 = por %p194, %p195
    %p198 = scmp.ne.s32.totalorder %s183, %s197
    %p199 = scmp.eq.s32.totalorder %s26, 0
    %p200 = por %p198, %p199
    %s202 = sadd.s32 %s201, 1
    %p205 = scmp.eq.s32.totalorder %s20, 1
    %p206 = scmp.ne.s32.totalorder %s201, %s203
    %p207 = scmp.eq.s32.totalorder %s20, 0
    %p208 = por %p206, %p207
    %p209 = scmp.ne.s32.totalorder %s201, %s203
    %p210 = scmp.eq.s32.totalorder %s25, 1
    %p211 = por %p209, %p210
    %p212 = scmp.ne.s32.totalorder %s203, %s204
    %p213 = scmp.eq.s32.totalorder %s25, 0
    %p214 = por %p212, %p213
    %p215 = scmp.ne.s32.totalorder %s203, %s204
    %p216 = scmp.eq.s32.totalorder %s26, 1
    %p217 = por %p215, %p216
    %p219 = scmp.ne.s32.totalorder %s204, %s218
    %p220 = scmp.eq.s32.totalorder %s26, 0
    %p221 = por %p219, %p220
    %s223 = sadd.s32 %s222, 1
    %p226 = scmp.eq.s32.totalorder %s20, 1
    %p227 = scmp.ne.s32.totalorder %s222, %s224
    %p228 = scmp.eq.s32.totalorder %s20, 0
    %p229 = por %p227, %p228
    %p230 = scmp.ne.s32.totalorder %s222, %s224
    %p231 = scmp.eq.s32.totalorder %s25, 1
    %p232 = por %p230, %p231
    %p233 = scmp.ne.s32.totalorder %s224, %s225
    %p234 = scmp.eq.s32.totalorder %s25, 0
    %p235 = por %p233, %p234
    %p236 = scmp.ne.s32.totalorder %s224, %s225
    %p237 = scmp.eq.s32.totalorder %s26, 1
    %p238 = por %p236, %p237
    %p240 = scmp.ne.s32.totalorder %s225, %s239
    %p241 = scmp.eq.s32.totalorder %s26, 0
    %p242 = por %p240, %p241
    %s244 = sadd.s32 %s243, 1
    %p247 = scmp.eq.s32.totalorder %s20, 1
    %p248 = scmp.ne.s32.totalorder %s243, %s245
    %p249 = scmp.eq.s32.totalorder %s20, 0
    %p250 = por %p248, %p249
    %p251 = scmp.ne.s32.totalorder %s243, %s245
    %p252 = scmp.eq.s32.totalorder %s25, 1
    %p253 = por %p251, %p252
    %p254 = scmp.ne.s32.totalorder %s245, %s246
    %p255 = scmp.eq.s32.totalorder %s25, 0
    %p256 = por %p254, %p255
    %p257 = scmp.ne.s32.totalorder %s245, %s246
    %p258 = scmp.eq.s32.totalorder %s26, 1
    %p259 = por %p257, %p258
    %p261 = scmp.ne.s32.totalorder %s246, %s260
    %p262 = scmp.eq.s32.totalorder %s26, 0
    %p263 = por %p261, %p262
    %s265 = sadd.s32 %s264, 1
    %p268 = scmp.eq.s32.totalorder %s20, 1
    %p269 = scmp.ne.s32.totalorder %s264, %s266
    %p270 = scmp.eq.s32.totalorder %s20, 0
    %p271 = por %p269, %p270
    %p272 = scmp.ne.s32.totalorder %s264, %s266
    %p273 = scmp.eq.s32.totalorder %s25, 1
    %p274 = por %p272, %p273
    %p275 = scmp.ne.s32.totalorder %s266, %s267
    %p276 = scmp.eq.s32.totalorder %s25, 0
    %p277 = por %p275, %p276
    %p278 = scmp.ne.s32.totalorder %s266, %s267
    %p279 = scmp.eq.s32.totalorder %s26, 1
    %p280 = por %p278, %p279
    %p282 = scmp.ne.s32.totalorder %s267, %s281
    %p283 = scmp.eq.s32.totalorder %s26, 0
    %p284 = por %p282, %p283
    %s286 = sadd.s32 %s285, 1
    %p289 = scmp.eq.s32.totalorder %s20, 1
    %p290 = scmp.ne.s32.totalorder %s285, %s287
    %p291 = scmp.eq.s32.totalorder %s20, 0
    %p292 = por %p290, %p291
    %p293 = scmp.ne.s32.totalorder %s285, %s287
    %p294 = scmp.eq.s32.totalorder %s25, 1
    %p295 = por %p293, %p294
    %p296 = scmp.ne.s32.totalorder %s287, %s288
    %p297 = scmp.eq.s32.totalorder %s25, 0
    %p298 = por %p296, %p297
    %p299 = scmp.ne.s32.totalorder %s287, %s288
    %p300 = scmp.eq.s32.totalorder %s26, 1
    %p301 = por %p299, %p300
    %p303 = scmp.ne.s32.totalorder %s288, %s302
    %p304 = scmp.eq.s32.totalorder %s26, 0
    %p305 = por %p303, %p304
    %s307 = sadd.s32 %s306, 1
    %p310 = scmp.eq.s32.totalorder %s20, 1
    %p311 = scmp.ne.s32.totalorder %s306, %s308
    %p312 = scmp.eq.s32.totalorder %s20, 0
    %p313 = por %p311, %p312
    %p314 = scmp.ne.s32.totalorder %s306, %s308
    %p315 = scmp.eq.s32.totalorder %s25, 1
    %p316 = por %p314, %p315
    %p317 = scmp.ne.s32.totalorder %s308, %s309
    %p318 = scmp.eq.s32.totalorder %s25, 0
    %p319 = por %p317, %p318
    %p320 = scmp.ne.s32.totalorder %s308, %s309
    %p321 = scmp.eq.s32.totalorder %s26, 1
    %p322 = por %p320, %p321
    %p324 = scmp.ne.s32.totalorder %s309, %s323
    %p325 = scmp.eq.s32.totalorder %s26, 0
    %p326 = por %p324, %p325
    %s327 = ssub.s32 %s20, %s27
    %p328 = scmp.eq.s32.totalorder %s327, 0
    %s330 = sadd.s32 %s329, 1
    %s331 = scalar_select %p328, %s329, %s330
    %p334 = pneg %p328
    %p335 = scmp.eq.s32.totalorder %s20, 1
    %p336 = por %p334, %p335
    %p337 = scmp.ne.s32.totalorder %s329, %s332
    %p338 = scmp.eq.s32.totalorder %s20, 0
    %p339 = por %p337, %p338
    %p340 = scmp.ne.s32.totalorder %s329, %s332
    %p341 = scmp.eq.s32.totalorder %s25, 1
    %p342 = por %p340, %p341
    %p343 = scmp.ne.s32.totalorder %s332, %s333
    %p344 = scmp.eq.s32.totalorder %s25, 0
    %p345 = por %p343, %p344
    %p346 = scmp.ne.s32.totalorder %s332, %s333
    %p347 = scmp.eq.s32.totalorder %s26, 1
    %p348 = por %p346, %p347
    %p350 = scmp.ne.s32.totalorder %s333, %s349
    %p351 = scmp.eq.s32.totalorder %s26, 0
    %p352 = por %p350, %p351
    %p353 = scmp.le.s32.totalorder 1, %s20
    %p354 = scmp.lt.s32.totalorder %s20, 3
    %p355 = pnand %p353, %p354
    %p356 = pneg %p355
    // Predicated region
    $region9: #{maxvit_forward.15} parent=5 // pred_check
      _
    $region10: #{maxvit_forward.15} parent=5 // pred_check_branch
      %358 = sbr.rel (%p355) target = $region12
    $region11: #{maxvit_forward.15} parent=5 // pred_region
      %s359 = ssub.s32 %s20, 1
      // Predicated region
      $region13: #{maxvit_forward.15} parent=11 // pred_check
        %p360 = pneg %p67
      $region14: #{maxvit_forward.15} parent=11 // pred_check_branch
        %362 = sbr.rel (%p360) target = $region16
      $region15: #{maxvit_forward.15} parent=11 // pred_region
        _
      $region16: #{maxvit_forward.15} parent=11 // pred_fallthru
        _
      // Predicated region
      $region17: #{maxvit_forward.15} parent=11 // pred_check
        %p363 = pneg %p88
      $region18: #{maxvit_forward.15} parent=11 // pred_check_branch
        %365 = sbr.rel (%p363) target = $region20
      $region19: #{maxvit_forward.15} parent=11 // pred_region
        _
      $region20: #{maxvit_forward.15} parent=11 // pred_fallthru
        _
      // Predicated region
      $region21: #{maxvit_forward.15} parent=11 // pred_check
        %p366 = pneg %p109
      $region22: #{maxvit_forward.15} parent=11 // pred_check_branch
        %368 = sbr.rel (%p366) target = $region24
      $region23: #{maxvit_forward.15} parent=11 // pred_region
        _
      $region24: #{maxvit_forward.15} parent=11 // pred_fallthru
        _
      // Predicated region
      $region25: #{maxvit_forward.15} parent=11 // pred_check
        %p369 = pneg %p130
      $region26: #{maxvit_forward.15} parent=11 // pred_check_branch
        %371 = sbr.rel (%p369) target = $region28
      $region27: #{maxvit_forward.15} parent=11 // pred_region
        _
      $region28: #{maxvit_forward.15} parent=11 // pred_fallthru
        _
      // Predicated region
      $region29: #{maxvit_forward.15} parent=11 // pred_check
        %p372 = pneg %p151
      $region30: #{maxvit_forward.15} parent=11 // pred_check_branch
        %374 = sbr.rel (%p372) target = $region32
      $region31: #{maxvit_forward.15} parent=11 // pred_region
        _
      $region32: #{maxvit_forward.15} parent=11 // pred_fallthru
        _
      // Predicated region
      $region33: #{maxvit_forward.15} parent=11 // pred_check
        %p375 = pneg %p172
      $region34: #{maxvit_forward.15} parent=11 // pred_check_branch
        %377 = sbr.rel (%p375) target = $region36
      $region35: #{maxvit_forward.15} parent=11 // pred_region
        _
      $region36: #{maxvit_forward.15} parent=11 // pred_fallthru
        _
      // Predicated region
      $region37: #{maxvit_forward.15} parent=11 // pred_check
        %p378 = pneg %p193
      $region38: #{maxvit_forward.15} parent=11 // pred_check_branch
        %380 = sbr.rel (%p378) target = $region40
      $region39: #{maxvit_forward.15} parent=11 // pred_region
        _
      $region40: #{maxvit_forward.15} parent=11 // pred_fallthru
        _
      // Predicated region
      $region41: #{maxvit_forward.15} parent=11 // pred_check
        %p381 = pneg %p214
      $region42: #{maxvit_forward.15} parent=11 // pred_check_branch
        %383 = sbr.rel (%p381) target = $region44
      $region43: #{maxvit_forward.15} parent=11 // pred_region
        _
      $region44: #{maxvit_forward.15} parent=11 // pred_fallthru
        _
      // Predicated region
      $region45: #{maxvit_forward.15} parent=11 // pred_check
        %p384 = pneg %p235
      $region46: #{maxvit_forward.15} parent=11 // pred_check_branch
        %386 = sbr.rel (%p384) target = $region48
      $region47: #{maxvit_forward.15} parent=11 // pred_region
        _
      $region48: #{maxvit_forward.15} parent=11 // pred_fallthru
        _
      // Predicated region
      $region49: #{maxvit_forward.15} parent=11 // pred_check
        %p387 = pneg %p256
      $region50: #{maxvit_forward.15} parent=11 // pred_check_branch
        %389 = sbr.rel (%p387) target = $region52
      $region51: #{maxvit_forward.15} parent=11 // pred_region
        _
      $region52: #{maxvit_forward.15} parent=11 // pred_fallthru
        _
      // Predicated region
      $region53: #{maxvit_forward.15} parent=11 // pred_check
        %p390 = pneg %p277
      $region54: #{maxvit_forward.15} parent=11 // pred_check_branch
        %392 = sbr.rel (%p390) target = $region56
      $region55: #{maxvit_forward.15} parent=11 // pred_region
        _
      $region56: #{maxvit_forward.15} parent=11 // pred_fallthru
        _
      // Predicated region
      $region57: #{maxvit_forward.15} parent=11 // pred_check
        %p393 = pneg %p298
      $region58: #{maxvit_forward.15} parent=11 // pred_check_branch
        %395 = sbr.rel (%p393) target = $region60
      $region59: #{maxvit_forward.15} parent=11 // pred_region
        _
      $region60: #{maxvit_forward.15} parent=11 // pred_fallthru
        _
      // Predicated region
      $region61: #{maxvit_forward.15} parent=11 // pred_check
        %p396 = pneg %p319
      $region62: #{maxvit_forward.15} parent=11 // pred_check_branch
        %398 = sbr.rel (%p396) target = $region64
      $region63: #{maxvit_forward.15} parent=11 // pred_region
        _
      $region64: #{maxvit_forward.15} parent=11 // pred_fallthru
        _
    $region12: #{maxvit_forward.15} parent=5 // pred_fallthru
      _
    %p399 = scmp.lt.s32.totalorder %s20, 2
    // Predicated region
    $region65: #{maxvit_forward.15} parent=5 // pred_check
      %p400 = pneg %p399
    $region66: #{maxvit_forward.15} parent=5 // pred_check_branch
      %402 = sbr.rel (%p400) target = $region68
    $region67: #{maxvit_forward.15} parent=5 // pred_region
      // Predicated region
      $region69: #{maxvit_forward.15} parent=67 // pred_check
        %p403 = pneg %p40
      $region70: #{maxvit_forward.15} parent=67 // pred_check_branch
        %405 = sbr.rel (%p403) target = $region72
      $region71: #{maxvit_forward.15} parent=67 // pred_region
        %s406 = smul.u32 4, %s20
        %p407 = scmp.lt.s32.totalorder %s406, 7
        %s408 = scalar_select %p407, %s406, 7
        %s409 = smul.addr %s408, 2
        %s410 = smul.addr %s409, 4
        %s411 = scalar_lea.vmem %s0, %s410
        %s412 = smul.u32 4, %s20
      $region72: #{maxvit_forward.15} parent=67 // pred_fallthru
        _
    $region68: #{maxvit_forward.15} parent=5 // pred_fallthru
      _
    %p413 = scmp.le.s32.totalorder 1, %s20
    %p414 = scmp.lt.s32.totalorder %s20, 3
    %p415 = pnand %p413, %p414
    %p416 = pneg %p415
    // Predicated region
    $region73: #{maxvit_forward.15} parent=5 // pred_check
      _
    $region74: #{maxvit_forward.15} parent=5 // pred_check_branch
      %418 = sbr.rel (%p415) target = $region76
    $region75: #{maxvit_forward.15} parent=5 // pred_region
      %s419 = ssub.s32 %s20, 1
      %s420 = smul.u32 4, %s25
      %p421 = scmp.lt.s32.totalorder %s420, 7
      %s422 = scalar_select %p421, %s420, 7
      %s423 = smul.addr %s422, 2
      %s424 = smul.addr %s423, 4
      %s425 = scalar_lea.vmem %s0, %s424
      %p426 = pneg %p46
      %p427 = pneg %p43
      %p428 = pneg %p67
      %p429 = pneg %p64
      %p430 = pneg %p88
      %p431 = pneg %p85
      %p432 = pneg %p109
      %p433 = pneg %p106
      %p434 = pneg %p130
      %p435 = pneg %p127
      %p436 = pneg %p151
      %p437 = pneg %p148
      %p438 = pneg %p172
      %p439 = pneg %p169
      %p440 = pneg %p193
      %p441 = pneg %p190
      %p442 = pneg %p214
      %p443 = pneg %p211
      %p444 = pneg %p235
      %p445 = pneg %p232
      %p446 = pneg %p256
      %p447 = pneg %p253
      %p448 = pneg %p277
      %p449 = pneg %p274
      %p450 = pneg %p298
      %p451 = pneg %p295
      %p452 = pneg %p319
      %p453 = pneg %p316
      %p454 = pneg %p345
      %p455 = pneg %p342
      %s456 = smul.u32 4, %s25
      %p457 = scmp.lt.s32.totalorder %s456, 7
      %s458 = scalar_select %p457, %s456, 7
      %s459 = smul.addr %s458, 2
      %s460 = smul.addr %s459, 4
      %s461 = scalar_lea.vmem %s14, %s460
      %s462 = smul.u32 4, %s25
      %p463 = scmp.lt.s32.totalorder %s462, 7
      %s464 = scalar_select %p463, %s462, 7
      %s465 = smul.addr %s464, 2
      %s466 = smul.addr %s465, 4
      %s467 = scalar_lea.vmem %s0, %s466
      %s468 = smul.u32 4, %s25
      %s469 = smul.u32 4, %s25
      %p470 = scmp.lt.s32.totalorder %s469, 7
      %s471 = scalar_select %p470, %s469, 7
      %s472 = smul.addr %s471, 2
      %s473 = smul.addr %s472, 4
      %s474 = scalar_lea.vmem %s14, %s473
      %s475 = smul.u32 4, %s25
      %v477 = vld [vmem:[%s467] sm:$0xf]
      %v478 = vld [vmem:[%s467 + $0x4] sm:$0xf]
      %v479 = vld [vmem:[%s467 + $0x8] sm:$0xf]
      %v480 = vld [vmem:[%s467 + $0xc] sm:$0xf]
      %v481 = vld [vmem:[%s467 + $0x10] sm:$0xf]
      %v482 = vld [vmem:[%s467 + $0x14] sm:$0xf]
      %v483 = vld [vmem:[%s467 + $0x18] sm:$0xf]
      %v484 = vld [vmem:[%s467 + $0x1c] sm:$0xf]
      %v485 = vunpack.c.l.bf16 %v477
      %v486 = vunpack.c.l.bf16 %v478
      %v487 = vunpack.c.l.bf16 %v479
      %v488 = vunpack.c.l.bf16 %v480
      %v489 = vunpack.c.l.bf16 %v481
      %v490 = vunpack.c.l.bf16 %v482
      %v491 = vunpack.c.l.bf16 %v483
      %v492 = vunpack.c.l.bf16 %v484
      %v493 = vld [vmem:[%s1] sm:$0x1]
      %v494 = vld [vmem:[%s2] sm:$0x1]
      %vm495 = vcmask 130048
      %v496 = vsel %vm495, %v485, 0.0
      %497 = vadd.xlane.f32.xlu0 %v496
      %v498 = vpop.xlane.xlu0 %497
      %v499 = vsel %vm495, %v486, 0.0
      %500 = vadd.xlane.f32.xlu0 %v499
      %v501 = vpop.xlane.xlu0 %500
      %v502 = vsel %vm495, %v487, 0.0
      %503 = vadd.xlane.f32.xlu0 %v502
      %v504 = vpop.xlane.xlu0 %503
      %v505 = vsel %vm495, %v488, 0.0
      %506 = vadd.xlane.f32.xlu0 %v505
      %v507 = vpop.xlane.xlu0 %506
      %v508 = vsel %vm495, %v489, 0.0
      %509 = vadd.xlane.f32.xlu0 %v508
      %v510 = vpop.xlane.xlu0 %509
      %v511 = vsel %vm495, %v490, 0.0
      %512 = vadd.xlane.f32.xlu0 %v511
      %v513 = vpop.xlane.xlu0 %512
      %v514 = vsel %vm495, %v491, 0.0
      %515 = vadd.xlane.f32.xlu0 %v514
      %v516 = vpop.xlane.xlu0 %515
      %v517 = vsel %vm495, %v492, 0.0
      %518 = vadd.xlane.f32.xlu0 %v517
      %v519 = vpop.xlane.xlu0 %518
      %v520 = vrcp.pop 16.0
      %v521 = vmul.f32 %v498, %v520
      %v522 = vmul.f32 %v501, %v520
      %v523 = vmul.f32 %v504, %v520
      %v524 = vmul.f32 %v507, %v520
      %v525 = vmul.f32 %v510, %v520
      %v526 = vmul.f32 %v513, %v520
      %v527 = vmul.f32 %v516, %v520
      %v528 = vmul.f32 %v519, %v520
      %v529 = vsub.f32 %v485, %v521
      %v530 = vsub.f32 %v486, %v522
      %v531 = vsub.f32 %v487, %v523
      %v532 = vsub.f32 %v488, %v524
      %v533 = vsub.f32 %v489, %v525
      %v534 = vsub.f32 %v490, %v526
      %v535 = vsub.f32 %v491, %v527
      %v536 = vsub.f32 %v492, %v528
      %v537 = vmul.f32 %v529, %v529
      %v538 = vmul.f32 %v530, %v530
      %v539 = vmul.f32 %v531, %v531
      %v540 = vmul.f32 %v532, %v532
      %v541 = vmul.f32 %v533, %v533
      %v542 = vmul.f32 %v534, %v534
      %v543 = vmul.f32 %v535, %v535
      %v544 = vmul.f32 %v536, %v536
      %v545 = vsel %vm495, %v537, 0.0
      %546 = vadd.xlane.f32.xlu0 %v545
      %v547 = vpop.xlane.xlu0 %546
      %v548 = vsel %vm495, %v538, 0.0
      %549 = vadd.xlane.f32.xlu0 %v548
      %v550 = vpop.xlane.xlu0 %549
      %v551 = vsel %vm495, %v539, 0.0
      %552 = vadd.xlane.f32.xlu0 %v551
      %v553 = vpop.xlane.xlu0 %552
      %v554 = vsel %vm495, %v540, 0.0
      %555 = vadd.xlane.f32.xlu0 %v554
      %v556 = vpop.xlane.xlu0 %555
      %v557 = vsel %vm495, %v541, 0.0
      %558 = vadd.xlane.f32.xlu0 %v557
      %v559 = vpop.xlane.xlu0 %558
      %v560 = vsel %vm495, %v542, 0.0
      %561 = vadd.xlane.f32.xlu0 %v560
      %v562 = vpop.xlane.xlu0 %561
      %v563 = vsel %vm495, %v543, 0.0
      %564 = vadd.xlane.f32.xlu0 %v563
      %v565 = vpop.xlane.xlu0 %564
      %v566 = vsel %vm495, %v544, 0.0
      %567 = vadd.xlane.f32.xlu0 %v566
      %v568 = vpop.xlane.xlu0 %567
      %v569 = vmul.f32 %v547, %v520
      %v570 = vmul.f32 %v550, %v520
      %v571 = vmul.f32 %v553, %v520
      %v572 = vmul.f32 %v556, %v520
      %v573 = vmul.f32 %v559, %v520
      %v574 = vmul.f32 %v562, %v520
      %v575 = vmul.f32 %v565, %v520
      %v576 = vmul.f32 %v568, %v520
      %v577 = vadd.f32 %v569, 1e-05
      %v578 = vadd.f32 %v570, 1e-05
      %v579 = vadd.f32 %v571, 1e-05
      %v580 = vadd.f32 %v572, 1e-05
      %v581 = vadd.f32 %v573, 1e-05
      %v582 = vadd.f32 %v574, 1e-05
      %v583 = vadd.f32 %v575, 1e-05
      %v584 = vadd.f32 %v576, 1e-05
      %v585 = vrsqrt.pop %v577
      %v586 = vrsqrt.pop %v578
      %v587 = vrsqrt.pop %v579
      %v588 = vrsqrt.pop %v580
      %v589 = vrsqrt.pop %v581
      %v590 = vrsqrt.pop %v582
      %v591 = vrsqrt.pop %v583
      %v592 = vrsqrt.pop %v584
      %v593 = vmul.f32 %v529, %v585
      %v594 = vmul.f32 %v530, %v586
      %v595 = vmul.f32 %v531, %v587
      %v596 = vmul.f32 %v532, %v588
      %v597 = vmul.f32 %v533, %v589
      %v598 = vmul.f32 %v534, %v590
      %v599 = vmul.f32 %v535, %v591
      %v600 = vmul.f32 %v536, %v592
      %v602 = vlaneseq
      %v603 = vshrl.u32 %v602, 7
      %v604 = vsub.s32 0, %v603
      %v605 = vrot.slane %v493, %v604
      %v607 = vmul.f32 %v593, %v605
      %v608 = vmul.f32 %v594, %v605
      %v609 = vmul.f32 %v595, %v605
      %v610 = vmul.f32 %v596, %v605
      %v611 = vmul.f32 %v597, %v605
      %v612 = vmul.f32 %v598, %v605
      %v613 = vmul.f32 %v599, %v605
      %v614 = vmul.f32 %v600, %v605
      %v616 = vlaneseq
      %v617 = vshrl.u32 %v616, 7
      %v618 = vsub.s32 0, %v617
      %v619 = vrot.slane %v494, %v618
      %v621 = vadd.f32 %v607, %v619
      %v622 = vadd.f32 %v608, %v619
      %v623 = vadd.f32 %v609, %v619
      %v624 = vadd.f32 %v610, %v619
      %v625 = vadd.f32 %v611, %v619
      %v626 = vadd.f32 %v612, %v619
      %v627 = vadd.f32 %v613, %v619
      %v628 = vadd.f32 %v614, %v619
      %v629 = vpack.c.bf16 %v622, %v621
      %v630 = vpack.c.bf16 %v624, %v623
      %v631 = vpack.c.bf16 %v626, %v625
      %v632 = vpack.c.bf16 %v628, %v627
      %v633 = vld [vmem:[%s3] sm:$0xf]
      %v634 = vld [vmem:[%s3 + $0x4] sm:$0xf]
      %v635 = vld [vmem:[%s4] sm:$0x1]
      %v637 = vlaneseq
      %v638 = vshrl.u32 %v637, 7
      %v639 = vsub.s32 0, %v638
      %v640 = vrot.slane %v635, %v639
      %v644 = vunpack.c.l.b16 %v633
      %v645 = vunpack.c.l.b16 %v634
      %v646 = vpack.c.b16 %v645, %v644
      %v649 = vsel %vm495, %v629, 0
      %v652 = vsel %vm495, %v630, 0
      %v655 = vsel %vm495, %v631, 0
      %v658 = vsel %vm495, %v632, 0
      %660 = vmatprep.subr.bf16.mxu0 0
      %661 = vmatpush1.bf16.msra.mxu0 %v646
      %662 = vmatprep.subr.bf16.mxu0 0
      %663 = vmatpush1.bf16.msra.mxu0 0
      %664 = vmatprep.subr.bf16.mxu0 0
      %665 = vmatpush1.bf16.msra.mxu0 0
      %666 = vmatprep.subr.bf16.mxu0 0
      %667 = vmatpush1.bf16.msra.mxu0 0
      %668 = vmatprep.subr.bf16.mxu0 0
      %669 = vmatpush1.bf16.msra.mxu0 0
      %670 = vmatprep.subr.bf16.mxu0 0
      %671 = vmatpush1.bf16.msra.mxu0 0
      %672 = vmatprep.subr.bf16.mxu0 0
      %673 = vmatpush1.bf16.msra.mxu0 0
      %674 = vmatprep.subr.bf16.mxu0 0
      %675 = vmatpush1.bf16.msra.mxu0 0
      %676 = vmatprep.subr.bf16.mxu0 0
      %677 = vmatpush1.bf16.msra.mxu0 0
      %678 = vmatprep.subr.bf16.mxu0 0
      %679 = vmatpush1.bf16.msra.mxu0 0
      %680 = vmatprep.subr.bf16.mxu0 0
      %681 = vmatpush1.bf16.msra.mxu0 0
      %682 = vmatprep.subr.bf16.mxu0 0
      %683 = vmatpush1.bf16.msra.mxu0 0
      %684 = vmatprep.subr.bf16.mxu0 0
      %685 = vmatpush1.bf16.msra.mxu0 0
      %686 = vmatprep.subr.bf16.mxu0 0
      %687 = vmatpush1.bf16.msra.mxu0 0
      %688 = vmatprep.subr.bf16.mxu0 0
      %689 = vmatpush1.bf16.msra.mxu0 0
      %690 = vmatprep.subr.bf16.mxu0 0
      %691 = vmatpush1.bf16.msra.mxu0 0
      %692 = vmatprep.mubr.bf16.mxu0 0
      %693 = vmatmul.mubr.bf16.gmra.mrb[0].mxu0 %v649
      %v694 = vpop.f32.mrb[0].mxu0
      %v695 = vadd.f32 %v640, %v694
      %v696 = vpop.f32.mrb[0].mxu0
      %v697 = vpop.f32.mrb[0].mxu0
      %v698 = vadd.f32 %v640, %v697
      %v699 = vpop.f32.mrb[0].mxu0
      %700 = vmatprep.mubr.bf16.mxu0 0
      %701 = vmatmul.mubr.bf16.gmra.mrb[0].mxu0 %v652
      %v702 = vpop.f32.mrb[0].mxu0
      %v703 = vadd.f32 %v640, %v702
      %v704 = vpop.f32.mrb[0].mxu0
      %v705 = vpop.f32.mrb[0].mxu0
      %v706 = vadd.f32 %v640, %v705
      %v707 = vpop.f32.mrb[0].mxu0
      %708 = vmatprep.mubr.bf16.mxu0 0
      %709 = vmatmul.mubr.bf16.gmra.mrb[0].mxu0 %v655
      %v710 = vpop.f32.mrb[0].mxu0
      %v711 = vadd.f32 %v640, %v710
      %v712 = vpop.f32.mrb[0].mxu0
      %v713 = vpop.f32.mrb[0].mxu0
      %v714 = vadd.f32 %v640, %v713
      %v715 = vpop.f32.mrb[0].mxu0
      %716 = vmatprep.mubr.bf16.mxu0 0
      %717 = vmatmul.mubr.bf16.gmra.mrb[0].mxu0 %v658
      %v718 = vpop.f32.mrb[0].mxu0
      %v719 = vadd.f32 %v640, %v718
      %v720 = vpop.f32.mrb[0].mxu0
      %v721 = vpop.f32.mrb[0].mxu0
      %v722 = vadd.f32 %v640, %v721
      %v723 = vpop.f32.mrb[0].mxu0
      %724 = vdwg.mxu0
      %v725 = vld [vmem:[%s5] sm:$0xff]
      %v726 = vld [vmem:[%s5 + $0x8] sm:$0xff]
      %v727 = vld [vmem:[%s5 + $0x10] sm:$0xff]
      %v728 = vld [vmem:[%s5 + $0x18] sm:$0xff]
      %731 = vrot.lane.b32.xlu0 %v695, 112
      %v732 = vpop.permute.xlu0 %731
      %733 = vrot.lane.b32.xlu0 %v698, 112
      %v734 = vpop.permute.xlu0 %733
      %vm735 = vcmask 64512
      %v736 = vsel %vm735, %v695, 0
      %v738 = vsel %vm735, %v698, 0
      %v740 = vsel %vm735, %v732, 0
      %v742 = vsel %vm735, %v734, 0
      %744 = vmatprep.subr.mxu0 0.0
      %745 = vmatpush1.xpose.msra.mxu0 %v740
      %746 = vmatprep.subr.mxu0 0.0
      %747 = vmatpush1.xpose.msra.mxu0 %v742
      %748 = vmatprep.subr.mxu0 0.0
      %749 = vmatpush1.xpose.msra.mxu0 0.0
      %750 = vmatprep.subr.mxu0 0.0
      %751 = vmatpush1.xpose.msra.mxu0 0.0
      %752 = vmatprep.subr.mxu0 0.0
      %753 = vmatpush1.xpose.msra.mxu0 0.0
      %754 = vmatprep.subr.mxu0 0.0
      %755 = vmatpush1.xpose.msra.mxu0 0.0
      %756 = vmatprep.subr.mxu0 0.0
      %757 = vmatpush1.xpose.msra.mxu0 0.0
      %758 = vmatprep.subr.mxu0 0.0
      %759 = vmatpush1.xpose.msra.mxu0 0.0
      %760 = vmatprep.subr.mxu0 0.0
      %761 = vmatpush1.xpose.msra.mxu0 0.0
      %762 = vmatprep.subr.mxu0 0.0
      %763 = vmatpush1.xpose.msra.mxu0 0.0
      %764 = vmatprep.subr.mxu0 0.0
      %765 = vmatpush1.xpose.msra.mxu0 0.0
      %766 = vmatprep.subr.mxu0 0.0
      %767 = vmatpush1.xpose.msra.mxu0 0.0
      %768 = vmatprep.subr.mxu0 0.0
      %769 = vmatpush1.xpose.msra.mxu0 0.0
      %770 = vmatprep.subr.mxu0 0.0
      %771 = vmatpush1.xpose.msra.mxu0 0.0
      %772 = vmatprep.subr.mxu0 0.0
      %773 = vmatpush1.xpose.msra.mxu0 0.0
      %774 = vmatprep.subr.mxu0 0.0
      %775 = vmatpush1.xpose.msra.mxu0 0.0
      %776 = vmatprep.subr.mxu0 0.0
      %777 = vmatpush1.xpose.msra.mxu0 0.0
      %778 = vmatprep.subr.mxu0 0.0
      %779 = vmatpush1.xpose.msra.mxu0 0.0
      %780 = vmatprep.subr.mxu0 0.0
      %781 = vmatpush1.xpose.msra.mxu0 0.0
      %782 = vmatprep.subr.mxu0 0.0
      %783 = vmatpush1.xpose.msra.mxu0 0.0
      %784 = vmatprep.subr.mxu0 0.0
      %785 = vmatpush1.xpose.msra.mxu0 0.0
      %786 = vmatprep.subr.mxu0 0.0
      %787 = vmatpush1.xpose.msra.mxu0 0.0
      %788 = vmatprep.subr.mxu0 0.0
      %789 = vmatpush1.xpose.msra.mxu0 0.0
      %790 = vmatprep.subr.mxu0 0.0
      %791 = vmatpush1.xpose.msra.mxu0 0.0
      %792 = vmatprep.subr.mxu0 0.0
      %793 = vmatpush1.xpose.msra.mxu0 0.0
      %794 = vmatprep.subr.mxu0 0.0
      %795 = vmatpush1.xpose.msra.mxu0 0.0
      %796 = vmatprep.subr.mxu0 0.0
      %797 = vmatpush1.xpose.msra.mxu0 0.0
      %798 = vmatprep.subr.mxu0 0.0
      %799 = vmatpush1.xpose.msra.mxu0 0.0
      %800 = vmatprep.subr.mxu0 0.0
      %801 = vmatpush1.xpose.msra.mxu0 0.0
      %802 = vmatprep.subr.mxu0 0.0
      %803 = vmatpush1.xpose.msra.mxu0 0.0
      %804 = vmatprep.subr.mxu0 0.0
      %805 = vmatpush1.xpose.msra.mxu0 0.0
      %806 = vmatprep.subr.mxu0 0.0
      %807 = vmatpush1.xpose.msra.mxu0 0.0
      %808 = vmatprep.mubr.f32.mxu0 0.0
      %809 = vmatmul.mubr.f32.gmra.mrb[0].mxu0 %v736
      %v810 = vpop.f32.mrb[0].mxu0
      %v811 = vadd.f32 %v725, %v810
      %v812 = vpop.f32.mrb[0].mxu0
      %813 = vmatprep.mubr.f32.mxu0 0.0
      %814 = vmatmul.mubr.f32.gmra.mrb[0].mxu0 %v738
      %v815 = vpop.f32.mrb[0].mxu0
      %v816 = vadd.f32 %v726, %v815
      %v817 = vpop.f32.mrb[0].mxu0
      %818 = vdwg.mxu0
      %821 = vrot.lane.b32.xlu0 %v703, 112
      %v822 = vpop.permute.xlu0 %821
      %823 = vrot.lane.b32.xlu0 %v706, 112
      %v824 = vpop.permute.xlu0 %823
      %v825 = vsel %vm735, %v703, 0
      %v827 = vsel %vm735, %v706, 0
      %v829 = vsel %vm735, %v822, 0
      %v831 = vsel %vm735, %v824, 0
      %833 = vmatprep.subr.mxu0 0.0
      %834 = vmatpush1.xpose.msra.mxu0 %v829
      %835 = vmatprep.subr.mxu0 0.0
      %836 = vmatpush1.xpose.msra.mxu0 %v831
      %837 = vmatprep.subr.mxu0 0.0
      %838 = vmatpush1.xpose.msra.mxu0 0.0
      %839 = vmatprep.subr.mxu0 0.0
      %840 = vmatpush1.xpose.msra.mxu0 0.0
      %841 = vmatprep.subr.mxu0 0.0
      %842 = vmatpush1.xpose.msra.mxu0 0.0
      %843 = vmatprep.subr.mxu0 0.0
      %844 = vmatpush1.xpose.msra.mxu0 0.0
      %845 = vmatprep.subr.mxu0 0.0
      %846 = vmatpush1.xpose.msra.mxu0 0.0
      %847 = vmatprep.subr.mxu0 0.0
      %848 = vmatpush1.xpose.msra.mxu0 0.0
      %849 = vmatprep.subr.mxu0 0.0
      %850 = vmatpush1.xpose.msra.mxu0 0.0
      %851 = vmatprep.subr.mxu0 0.0
      %852 = vmatpush1.xpose.msra.mxu0 0.0
      %853 = vmatprep.subr.mxu0 0.0
      %854 = vmatpush1.xpose.msra.mxu0 0.0
      %855 = vmatprep.subr.mxu0 0.0
      %856 = vmatpush1.xpose.msra.mxu0 0.0
      %857 = vmatprep.subr.mxu0 0.0
      %858 = vmatpush1.xpose.msra.mxu0 0.0
      %859 = vmatprep.subr.mxu0 0.0
      %860 = vmatpush1.xpose.msra.mxu0 0.0
      %861 = vmatprep.subr.mxu0 0.0
      %862 = vmatpush1.xpose.msra.mxu0 0.0
      %863 = vmatprep.subr.mxu0 0.0
      %864 = vmatpush1.xpose.msra.mxu0 0.0
      %865 = vmatprep.subr.mxu0 0.0
      %866 = vmatpush1.xpose.msra.mxu0 0.0
      %867 = vmatprep.subr.mxu0 0.0
      %868 = vmatpush1.xpose.msra.mxu0 0.0
      %869 = vmatprep.subr.mxu0 0.0
      %870 = vmatpush1.xpose.msra.mxu0 0.0
      %871 = vmatprep.subr.mxu0 0.0
      %872 = vmatpush1.xpose.msra.mxu0 0.0
      %873 = vmatprep.subr.mxu0 0.0
      %874 = vmatpush1.xpose.msra.mxu0 0.0
      %875 = vmatprep.subr.mxu0 0.0
      %876 = vmatpush1.xpose.msra.mxu0 0.0
      %877 = vmatprep.subr.mxu0 0.0
      %878 = vmatpush1.xpose.msra.mxu0 0.0
      %879 = vmatprep.subr.mxu0 0.0
      %880 = vmatpush1.xpose.msra.mxu0 0.0
      %881 = vmatprep.subr.mxu0 0.0
      %882 = vmatpush1.xpose.msra.mxu0 0.0
      %883 = vmatprep.subr.mxu0 0.0
      %884 = vmatpush1.xpose.msra.mxu0 0.0
      %885 = vmatprep.subr.mxu0 0.0
      %886 = vmatpush1.xpose.msra.mxu0 0.0
      %887 = vmatprep.subr.mxu0 0.0
      %888 = vmatpush1.xpose.msra.mxu0 0.0
      %889 = vmatprep.subr.mxu0 0.0
      %890 = vmatpush1.xpose.msra.mxu0 0.0
      %891 = vmatprep.subr.mxu0 0.0
      %892 = vmatpush1.xpose.msra.mxu0 0.0
      %893 = vmatprep.subr.mxu0 0.0
      %894 = vmatpush1.xpose.msra.mxu0 0.0
      %895 = vmatprep.subr.mxu0 0.0
      %896 = vmatpush1.xpose.msra.mxu0 0.0
      %897 = vmatprep.mubr.f32.mxu0 0.0
      %898 = vmatmul.mubr.f32.gmra.mrb[0].mxu0 %v825
      %v899 = vpop.f32.mrb[0].mxu0
      %v900 = vadd.f32 %v725, %v899
      %v901 = vpop.f32.mrb[0].mxu0
      %902 = vmatprep.mubr.f32.mxu0 0.0
      %903 = vmatmul.mubr.f32.gmra.mrb[0].mxu0 %v827
      %v904 = vpop.f32.mrb[0].mxu0
      %v905 = vadd.f32 %v726, %v904
      %v906 = vpop.f32.mrb[0].mxu0
      %907 = vdwg.mxu0
      %910 = vrot.lane.b32.xlu0 %v711, 112
      %v911 = vpop.permute.xlu0 %910
      %912 = vrot.lane.b32.xlu0 %v714, 112
      %v913 = vpop.permute.xlu0 %912
      %v914 = vsel %vm735, %v711, 0
      %v916 = vsel %vm735, %v714, 0
      %v918 = vsel %vm735, %v911, 0
      %v920 = vsel %vm735, %v913, 0
      %922 = vmatprep.subr.mxu0 0.0
      %923 = vmatpush1.xpose.msra.mxu0 %v918
      %924 = vmatprep.subr.mxu0 0.0
      %925 = vmatpush1.xpose.msra.mxu0 %v920
      %926 = vmatprep.subr.mxu0 0.0
      %927 = vmatpush1.xpose.msra.mxu0 0.0
      %928 = vmatprep.subr.mxu0 0.0
      %929 = vmatpush1.xpose.msra.mxu0 0.0
      %930 = vmatprep.subr.mxu0 0.0
      %931 = vmatpush1.xpose.msra.mxu0 0.0
      %932 = vmatprep.subr.mxu0 0.0
      %933 = vmatpush1.xpose.msra.mxu0 0.0
      %934 = vmatprep.subr.mxu0 0.0
      %935 = vmatpush1.xpose.msra.mxu0 0.0
      %936 = vmatprep.subr.mxu0 0.0
      %937 = vmatpush1.xpose.msra.mxu0 0.0
      %938 = vmatprep.subr.mxu0 0.0
      %939 = vmatpush1.xpose.msra.mxu0 0.0
      %940 = vmatprep.subr.mxu0 0.0
      %941 = vmatpush1.xpose.msra.mxu0 0.0
      %942 = vmatprep.subr.mxu0 0.0
      %943 = vmatpush1.xpose.msra.mxu0 0.0
      %944 = vmatprep.subr.mxu0 0.0
      %945 = vmatpush1.xpose.msra.mxu0 0.0
      %946 = vmatprep.subr.mxu0 0.0
      %947 = vmatpush1.xpose.msra.mxu0 0.0
      %948 = vmatprep.subr.mxu0 0.0
      %949 = vmatpush1.xpose.msra.mxu0 0.0
      %950 = vmatprep.subr.mxu0 0.0
      %951 = vmatpush1.xpose.msra.mxu0 0.0
      %952 = vmatprep.subr.mxu0 0.0
      %953 = vmatpush1.xpose.msra.mxu0 0.0
      %954 = vmatprep.subr.mxu0 0.0
      %955 = vmatpush1.xpose.msra.mxu0 0.0
      %956 = vmatprep.subr.mxu0 0.0
      %957 = vmatpush1.xpose.msra.mxu0 0.0
      %958 = vmatprep.subr.mxu0 0.0
      %959 = vmatpush1.xpose.msra.mxu0 0.0
      %960 = vmatprep.subr.mxu0 0.0
      %961 = vmatpush1.xpose.msra.mxu0 0.0
      %962 = vmatprep.subr.mxu0 0.0
      %963 = vmatpush1.xpose.msra.mxu0 0.0
      %964 = vmatprep.subr.mxu0 0.0
      %965 = vmatpush1.xpose.msra.mxu0 0.0
      %966 = vmatprep.subr.mxu0 0.0
      %967 = vmatpush1.xpose.msra.mxu0 0.0
      %968 = vmatprep.subr.mxu0 0.0
      %969 = vmatpush1.xpose.msra.mxu0 0.0
      %970 = vmatprep.subr.mxu0 0.0
      %971 = vmatpush1.xpose.msra.mxu0 0.0
      %972 = vmatprep.subr.mxu0 0.0
      %973 = vmatpush1.xpose.msra.mxu0 0.0
      %974 = vmatprep.subr.mxu0 0.0
      %975 = vmatpush1.xpose.msra.mxu0 0.0
      %976 = vmatprep.subr.mxu0 0.0
      %977 = vmatpush1.xpose.msra.mxu0 0.0
      %978 = vmatprep.subr.mxu0 0.0
      %979 = vmatpush1.xpose.msra.mxu0 0.0
      %980 = vmatprep.subr.mxu0 0.0
      %981 = vmatpush1.xpose.msra.mxu0 0.0
      %982 = vmatprep.subr.mxu0 0.0
      %983 = vmatpush1.xpose.msra.mxu0 0.0
      %984 = vmatprep.subr.mxu0 0.0
      %985 = vmatpush1.xpose.msra.mxu0 0.0
      %986 = vmatprep.mubr.f32.mxu0 0.0
      %987 = vmatmul.mubr.f32.gmra.mrb[0].mxu0 %v914
      %v988 = vpop.f32.mrb[0].mxu0
      %v989 = vadd.f32 %v725, %v988
      %v990 = vpop.f32.mrb[0].mxu0
      %991 = vmatprep.mubr.f32.mxu0 0.0
      %992 = vmatmul.mubr.f32.gmra.mrb[0].mxu0 %v916
      %v993 = vpop.f32.mrb[0].mxu0
      %v994 = vadd.f32 %v726, %v993
      %v995 = vpop.f32.mrb[0].mxu0
      %996 = vdwg.mxu0
      %999 = vrot.lane.b32.xlu0 %v719, 112
      %v1000 = vpop.permute.xlu0 %999
      %1001 = vrot.lane.b32.xlu0 %v722, 112
      %v1002 = vpop.permute.xlu0 %1001
      %v1003 = vsel %vm735, %v719, 0
      %v1005 = vsel %vm735, %v722, 0
      %v1007 = vsel %vm735, %v1000, 0
      %v1009 = vsel %vm735, %v1002, 0
      %1011 = vmatprep.subr.mxu0 0.0
      %1012 = vmatpush1.xpose.msra.mxu0 %v1007
      %1013 = vmatprep.subr.mxu0 0.0
      %1014 = vmatpush1.xpose.msra.mxu0 %v1009
      %1015 = vmatprep.subr.mxu0 0.0
      %1016 = vmatpush1.xpose.msra.mxu0 0.0
      %1017 = vmatprep.subr.mxu0 0.0
      %1018 = vmatpush1.xpose.msra.mxu0 0.0
      %1019 = vmatprep.subr.mxu0 0.0
      %1020 = vmatpush1.xpose.msra.mxu0 0.0
      %1021 = vmatprep.subr.mxu0 0.0
      %1022 = vmatpush1.xpose.msra.mxu0 0.0
      %1023 = vmatprep.subr.mxu0 0.0
      %1024 = vmatpush1.xpose.msra.mxu0 0.0
      %1025 = vmatprep.subr.mxu0 0.0
      %1026 = vmatpush1.xpose.msra.mxu0 0.0
      %1027 = vmatprep.subr.mxu0 0.0
      %1028 = vmatpush1.xpose.msra.mxu0 0.0
      %1029 = vmatprep.subr.mxu0 0.0
      %1030 = vmatpush1.xpose.msra.mxu0 0.0
      %1031 = vmatprep.subr.mxu0 0.0
      %1032 = vmatpush1.xpose.msra.mxu0 0.0
      %1033 = vmatprep.subr.mxu0 0.0
      %1034 = vmatpush1.xpose.msra.mxu0 0.0
      %1035 = vmatprep.subr.mxu0 0.0
      %1036 = vmatpush1.xpose.msra.mxu0 0.0
      %1037 = vmatprep.subr.mxu0 0.0
      %1038 = vmatpush1.xpose.msra.mxu0 0.0
      %1039 = vmatprep.subr.mxu0 0.0
      %1040 = vmatpush1.xpose.msra.mxu0 0.0
      %1041 = vmatprep.subr.mxu0 0.0
      %1042 = vmatpush1.xpose.msra.mxu0 0.0
      %1043 = vmatprep.subr.mxu0 0.0
      %1044 = vmatpush1.xpose.msra.mxu0 0.0
      %1045 = vmatprep.subr.mxu0 0.0
      %1046 = vmatpush1.xpose.msra.mxu0 0.0
      %1047 = vmatprep.subr.mxu0 0.0
      %1048 = vmatpush1.xpose.msra.mxu0 0.0
      %1049 = vmatprep.subr.mxu0 0.0
      %1050 = vmatpush1.xpose.msra.mxu0 0.0
      %1051 = vmatprep.subr.mxu0 0.0
      %1052 = vmatpush1.xpose.msra.mxu0 0.0
      %1053 = vmatprep.subr.mxu0 0.0
      %1054 = vmatpush1.xpose.msra.mxu0 0.0
      %1055 = vmatprep.subr.mxu0 0.0
      %1056 = vmatpush1.xpose.msra.mxu0 0.0
      %1057 = vmatprep.subr.mxu0 0.0
      %1058 = vmatpush1.xpose.msra.mxu0 0.0
      %1059 = vmatprep.subr.mxu0 0.0
      %1060 = vmatpush1.xpose.msra.mxu0 0.0
      %1061 = vmatprep.subr.mxu0 0.0
      %1062 = vmatpush1.xpose.msra.mxu0 0.0
      %1063 = vmatprep.subr.mxu0 0.0
      %1064 = vmatpush1.xpose.msra.mxu0 0.0
      %1065 = vmatprep.subr.mxu0 0.0
      %1066 = vmatpush1.xpose.msra.mxu0 0.0
      %1067 = vmatprep.subr.mxu0 0.0
      %1068 = vmatpush1.xpose.msra.mxu0 0.0
      %1069 = vmatprep.subr.mxu0 0.0
      %1070 = vmatpush1.xpose.msra.mxu0 0.0
      %1071 = vmatprep.subr.mxu0 0.0
      %1072 = vmatpush1.xpose.msra.mxu0 0.0
      %1073 = vmatprep.subr.mxu0 0.0
      %1074 = vmatpush1.xpose.msra.mxu0 0.0
      %1075 = vmatprep.mubr.f32.mxu0 0.0
      %1076 = vmatmul.mubr.f32.gmra.mrb[0].mxu0 %v1003
      %v1077 = vpop.f32.mrb[0].mxu0
      %v1078 = vadd.f32 %v725, %v1077
      %v1079 = vpop.f32.mrb[0].mxu0
      %1080 = vmatprep.mubr.f32.mxu0 0.0
      %1081 = vmatmul.mubr.f32.gmra.mrb[0].mxu0 %v1005
      %v1082 = vpop.f32.mrb[0].mxu0
      %v1083 = vadd.f32 %v726, %v1082
      %v1084 = vpop.f32.mrb[0].mxu0
      %1085 = vdwg.mxu0
      %v1086 = vsel %vm495, %v811, -inf
      %1087 = vmax.xlane.f32.xlu0 %v1086
      %v1088 = vpop.xlane.xlu0 %1087
      %v1089 = vsel %vm495, %v816, -inf
      %1090 = vmax.xlane.f32.xlu0 %v1089
      %v1091 = vpop.xlane.xlu0 %1090
      %v1092 = vsel %vm495, %v900, -inf
      %1093 = vmax.xlane.f32.xlu0 %v1092
      %v1094 = vpop.xlane.xlu0 %1093
      %v1095 = vsel %vm495, %v905, -inf
      %1096 = vmax.xlane.f32.xlu0 %v1095
      %v1097 = vpop.xlane.xlu0 %1096
      %v1098 = vsel %vm495, %v989, -inf
      %1099 = vmax.xlane.f32.xlu0 %v1098
      %v1100 = vpop.xlane.xlu0 %1099
      %v1101 = vsel %vm495, %v994, -inf
      %1102 = vmax.xlane.f32.xlu0 %v1101
      %v1103 = vpop.xlane.xlu0 %1102
      %v1104 = vsel %vm495, %v1078, -inf
      %1105 = vmax.xlane.f32.xlu0 %v1104
      %v1106 = vpop.xlane.xlu0 %1105
      %v1107 = vsel %vm495, %v1083, -inf
      %1108 = vmax.xlane.f32.xlu0 %v1107
      %v1109 = vpop.xlane.xlu0 %1108
      %v1110 = vsub.f32 %v811, %v1088
      %v1111 = vsub.f32 %v816, %v1091
      %v1112 = vsub.f32 %v900, %v1094
      %v1113 = vsub.f32 %v905, %v1097
      %v1114 = vsub.f32 %v989, %v1100
      %v1115 = vsub.f32 %v994, %v1103
      %v1116 = vsub.f32 %v1078, %v1106
      %v1117 = vsub.f32 %v1083, %v1109
      %v1118 = vmul.f32 %v1110, 1.442695
      %v1119 = vpow.pop %v1118
      %v1120 = vmul.f32 %v1111, 1.442695
      %v1121 = vpow.pop %v1120
      %v1122 = vmul.f32 %v1112, 1.442695
      %v1123 = vpow.pop %v1122
      %v1124 = vmul.f32 %v1113, 1.442695
      %v1125 = vpow.pop %v1124
      %v1126 = vmul.f32 %v1114, 1.442695
      %v1127 = vpow.pop %v1126
      %v1128 = vmul.f32 %v1115, 1.442695
      %v1129 = vpow.pop %v1128
      %v1130 = vmul.f32 %v1116, 1.442695
      %v1131 = vpow.pop %v1130
      %v1132 = vmul.f32 %v1117, 1.442695
      %v1133 = vpow.pop %v1132
      %v1134 = vsel %vm495, %v1119, 0.0
      %1135 = vadd.xlane.f32.xlu0 %v1134
      %v1136 = vpop.xlane.xlu0 %1135
      %v1137 = vsel %vm495, %v1121, 0.0
      %1138 = vadd.xlane.f32.xlu0 %v1137
      %v1139 = vpop.xlane.xlu0 %1138
      %v1140 = vsel %vm495, %v1123, 0.0
      %1141 = vadd.xlane.f32.xlu0 %v1140
      %v1142 = vpop.xlane.xlu0 %1141
      %v1143 = vsel %vm495, %v1125, 0.0
      %1144 = vadd.xlane.f32.xlu0 %v1143
      %v1145 = vpop.xlane.xlu0 %1144
      %v1146 = vsel %vm495, %v1127, 0.0
      %1147 = vadd.xlane.f32.xlu0 %v1146
      %v1148 = vpop.xlane.xlu0 %1147
      %v1149 = vsel %vm495, %v1129, 0.0
      %1150 = vadd.xlane.f32.xlu0 %v1149
      %v1151 = vpop.xlane.xlu0 %1150
      %v1152 = vsel %vm495, %v1131, 0.0
      %1153 = vadd.xlane.f32.xlu0 %v1152
      %v1154 = vpop.xlane.xlu0 %1153
      %v1155 = vsel %vm495, %v1133, 0.0
      %1156 = vadd.xlane.f32.xlu0 %v1155
      %v1157 = vpop.xlane.xlu0 %1156
      %v1158 = vrcp.pop %v1136
      %v1159 = vrcp.pop %v1139
      %v1160 = vrcp.pop %v1142
      %v1161 = vrcp.pop %v1145
      %v1162 = vrcp.pop %v1148
      %v1163 = vrcp.pop %v1151
      %v1164 = vrcp.pop %v1154
      %v1165 = vrcp.pop %v1157
      %v1166 = vmul.f32 %v1119, %v1158
      %v1167 = vmul.f32 %v1121, %v1159
      %v1168 = vmul.f32 %v1123, %v1160
      %v1169 = vmul.f32 %v1125, %v1161
      %v1170 = vmul.f32 %v1127, %v1162
      %v1171 = vmul.f32 %v1129, %v1163
      %v1172 = vmul.f32 %v1131, %v1164
      %v1173 = vmul.f32 %v1133, %v1165
      %1174 = vrot.lane.b32.xlu0 %v695, 96
      %v1175 = vpop.permute.xlu0 %1174
      %1176 = vrot.lane.b32.xlu0 %v698, 96
      %v1177 = vpop.permute.xlu0 %1176
      %v1181 = vsel %vm495, %v1166, 0
      %v1184 = vsel %vm495, %v1167, 0
      %1186 = vmatprep.subr.mxu0 0.0
      %1187 = vmatpush1.msra.mxu0 %v1175
      %1188 = vmatprep.subr.mxu0 0.0
      %1189 = vmatpush1.msra.mxu0 %v1177
      %1190 = vmatprep.subr.mxu0 0.0
      %1191 = vmatpush1.msra.mxu0 0.0
      %1192 = vmatprep.subr.mxu0 0.0
      %1193 = vmatpush1.msra.mxu0 0.0
      %1194 = vmatprep.subr.mxu0 0.0
      %1195 = vmatpush1.msra.mxu0 0.0
      %1196 = vmatprep.subr.mxu0 0.0
      %1197 = vmatpush1.msra.mxu0 0.0
      %1198 = vmatprep.subr.mxu0 0.0
      %1199 = vmatpush1.msra.mxu0 0.0
      %1200 = vmatprep.subr.mxu0 0.0
      %1201 = vmatpush1.msra.mxu0 0.0
      %1202 = vmatprep.subr.mxu0 0.0
      %1203 = vmatpush1.msra.mxu0 0.0
      %1204 = vmatprep.subr.mxu0 0.0
      %1205 = vmatpush1.msra.mxu0 0.0
      %1206 = vmatprep.subr.mxu0 0.0
      %1207 = vmatpush1.msra.mxu0 0.0
      %1208 = vmatprep.subr.mxu0 0.0
      %1209 = vmatpush1.msra.mxu0 0.0
      %1210 = vmatprep.subr.mxu0 0.0
      %1211 = vmatpush1.msra.mxu0 0.0
      %1212 = vmatprep.subr.mxu0 0.0
      %1213 = vmatpush1.msra.mxu0 0.0
      %1214 = vmatprep.subr.mxu0 0.0
      %1215 = vmatpush1.msra.mxu0 0.0
      %1216 = vmatprep.subr.mxu0 0.0
      %1217 = vmatpush1.msra.mxu0 0.0
      %1218 = vmatprep.subr.mxu0 0.0
      %1219 = vmatpush1.msra.mxu0 0.0
      %1220 = vmatprep.subr.mxu0 0.0
      %1221 = vmatpush1.msra.mxu0 0.0
      %1222 = vmatprep.subr.mxu0 0.0
      %1223 = vmatpush1.msra.mxu0 0.0
      %1224 = vmatprep.subr.mxu0 0.0
      %1225 = vmatpush1.msra.mxu0 0.0
      %1226 = vmatprep.subr.mxu0 0.0
      %1227 = vmatpush1.msra.mxu0 0.0
      %1228 = vmatprep.subr.mxu0 0.0
      %1229 = vmatpush1.msra.mxu0 0.0
      %1230 = vmatprep.subr.mxu0 0.0
      %1231 = vmatpush1.msra.mxu0 0.0
      %1232 = vmatprep.subr.mxu0 0.0
      %1233 = vmatpush1.msra.mxu0 0.0
      %1234 = vmatprep.subr.mxu0 0.0
      %1235 = vmatpush1.msra.mxu0 0.0
      %1236 = vmatprep.subr.mxu0 0.0
      %1237 = vmatpush1.msra.mxu0 0.0
      %1238 = vmatprep.subr.mxu0 0.0
      %1239 = vmatpush1.msra.mxu0 0.0
      %1240 = vmatprep.subr.mxu0 0.0
      %1241 = vmatpush1.msra.mxu0 0.0
      %1242 = vmatprep.subr.mxu0 0.0
      %1243 = vmatpush1.msra.mxu0 0.0
      %1244 = vmatprep.subr.mxu0 0.0
      %1245 = vmatpush1.msra.mxu0 0.0
      %1246 = vmatprep.subr.mxu0 0.0
      %1247 = vmatpush1.msra.mxu0 0.0
      %1248 = vmatprep.subr.mxu0 0.0
      %1249 = vmatpush1.msra.mxu0 0.0
      %1250 = vmatprep.mubr.f32.mxu0 0.0
      %1251 = vmatmul.mubr.f32.gmra.mrb[0].mxu0 %v1181
      %v1252 = vpop.f32.mrb[0].mxu0
      %v1253 = vadd.f32 0.0, %v1252
      %v1254 = vpop.f32.mrb[0].mxu0
      %1255 = vmatprep.mubr.f32.mxu0 0.0
      %1256 = vmatmul.mubr.f32.gmra.mrb[0].mxu0 %v1184
      %v1257 = vpop.f32.mrb[0].mxu0
      %v1258 = vadd.f32 0.0, %v1257
      %v1259 = vpop.f32.mrb[0].mxu0
      %1260 = vdwg.mxu0
      %1261 = vrot.lane.b32.xlu0 %v703, 96
      %v1262 = vpop.permute.xlu0 %1261
      %1263 = vrot.lane.b32.xlu0 %v706, 96
      %v1264 = vpop.permute.xlu0 %1263
      %v1268 = vsel %vm495, %v1168, 0
      %v1271 = vsel %vm495, %v1169, 0
      %1273 = vmatprep.subr.mxu0 0.0
      %1274 = vmatpush1.msra.mxu0 %v1262
      %1275 = vmatprep.subr.mxu0 0.0
      %1276 = vmatpush1.msra.mxu0 %v1264
      %1277 = vmatprep.subr.mxu0 0.0
      %1278 = vmatpush1.msra.mxu0 0.0
      %1279 = vmatprep.subr.mxu0 0.0
      %1280 = vmatpush1.msra.mxu0 0.0
      %1281 = vmatprep.subr.mxu0 0.0
      %1282 = vmatpush1.msra.mxu0 0.0
      %1283 = vmatprep.subr.mxu0 0.0
      %1284 = vmatpush1.msra.mxu0 0.0
      %1285 = vmatprep.subr.mxu0 0.0
      %1286 = vmatpush1.msra.mxu0 0.0
      %1287 = vmatprep.subr.mxu0 0.0
      %1288 = vmatpush1.msra.mxu0 0.0
      %1289 = vmatprep.subr.mxu0 0.0
      %1290 = vmatpush1.msra.mxu0 0.0
      %1291 = vmatprep.subr.mxu0 0.0
      %1292 = vmatpush1.msra.mxu0 0.0
      %1293 = vmatprep.subr.mxu0 0.0
      %1294 = vmatpush1.msra.mxu0 0.0
      %1295 = vmatprep.subr.mxu0 0.0
      %1296 = vmatpush1.msra.mxu0 0.0
      %1297 = vmatprep.subr.mxu0 0.0
      %1298 = vmatpush1.msra.mxu0 0.0
      %1299 = vmatprep.subr.mxu0 0.0
      %1300 = vmatpush1.msra.mxu0 0.0
      %1301 = vmatprep.subr.mxu0 0.0
      %1302 = vmatpush1.msra.mxu0 0.0
      %1303 = vmatprep.subr.mxu0 0.0
      %1304 = vmatpush1.msra.mxu0 0.0
      %1305 = vmatprep.subr.mxu0 0.0
      %1306 = vmatpush1.msra.mxu0 0.0
      %1307 = vmatprep.subr.mxu0 0.0
      %1308 = vmatpush1.msra.mxu0 0.0
      %1309 = vmatprep.subr.mxu0 0.0
      %1310 = vmatpush1.msra.mxu0 0.0
      %1311 = vmatprep.subr.mxu0 0.0
      %1312 = vmatpush1.msra.mxu0 0.0
      %1313 = vmatprep.subr.mxu0 0.0
      %1314 = vmatpush1.msra.mxu0 0.0
      %1315 = vmatprep.subr.mxu0 0.0
      %1316 = vmatpush1.msra.mxu0 0.0
      %1317 = vmatprep.subr.mxu0 0.0
      %1318 = vmatpush1.msra.mxu0 0.0
      %1319 = vmatprep.subr.mxu0 0.0
      %1320 = vmatpush1.msra.mxu0 0.0
      %1321 = vmatprep.subr.mxu0 0.0
      %1322 = vmatpush1.msra.mxu0 0.0
      %1323 = vmatprep.subr.mxu0 0.0
      %1324 = vmatpush1.msra.mxu0 0.0
      %1325 = vmatprep.subr.mxu0 0.0
      %1326 = vmatpush1.msra.mxu0 0.0
      %1327 = vmatprep.subr.mxu0 0.0
      %1328 = vmatpush1.msra.mxu0 0.0
      %1329 = vmatprep.subr.mxu0 0.0
      %1330 = vmatpush1.msra.mxu0 0.0
      %1331 = vmatprep.subr.mxu0 0.0
      %1332 = vmatpush1.msra.mxu0 0.0
      %1333 = vmatprep.subr.mxu0 0.0
      %1334 = vmatpush1.msra.mxu0 0.0
      %1335 = vmatprep.subr.mxu0 0.0
      %1336 = vmatpush1.msra.mxu0 0.0
      %1337 = vmatprep.mubr.f32.mxu0 0.0
      %1338 = vmatmul.mubr.f32.gmra.mrb[0].mxu0 %v1268
      %v1339 = vpop.f32.mrb[0].mxu0
      %v1340 = vadd.f32 0.0, %v1339
      %v1341 = vpop.f32.mrb[0].mxu0
      %1342 = vmatprep.mubr.f32.mxu0 0.0
      %1343 = vmatmul.mubr.f32.gmra.mrb[0].mxu0 %v1271
      %v1344 = vpop.f32.mrb[0].mxu0
      %v1345 = vadd.f32 0.0, %v1344
      %v1346 = vpop.f32.mrb[0].mxu0
      %1347 = vdwg.mxu0
      %1348 = vrot.lane.b32.xlu0 %v711, 96
      %v1349 = vpop.permute.xlu0 %1348
      %1350 = vrot.lane.b32.xlu0 %v714, 96
      %v1351 = vpop.permute.xlu0 %1350
      %v1355 = vsel %vm495, %v1170, 0
      %v1358 = vsel %vm495, %v1171, 0
      %1360 = vmatprep.subr.mxu0 0.0
      %1361 = vmatpush1.msra.mxu0 %v1349
      %1362 = vmatprep.subr.mxu0 0.0
      %1363 = vmatpush1.msra.mxu0 %v1351
      %1364 = vmatprep.subr.mxu0 0.0
      %1365 = vmatpush1.msra.mxu0 0.0
      %1366 = vmatprep.subr.mxu0 0.0
      %1367 = vmatpush1.msra.mxu0 0.0
      %1368 = vmatprep.subr.mxu0 0.0
      %1369 = vmatpush1.msra.mxu0 0.0
      %1370 = vmatprep.subr.mxu0 0.0
      %1371 = vmatpush1.msra.mxu0 0.0
      %1372 = vmatprep.subr.mxu0 0.0
      %1373 = vmatpush1.msra.mxu0 0.0
      %1374 = vmatprep.subr.mxu0 0.0
      %1375 = vmatpush1.msra.mxu0 0.0
      %1376 = vmatprep.subr.mxu0 0.0
      %1377 = vmatpush1.msra.mxu0 0.0
      %1378 = vmatprep.subr.mxu0 0.0
      %1379 = vmatpush1.msra.mxu0 0.0
      %1380 = vmatprep.subr.mxu0 0.0
      %1381 = vmatpush1.msra.mxu0 0.0
      %1382 = vmatprep.subr.mxu0 0.0
      %1383 = vmatpush1.msra.mxu0 0.0
      %1384 = vmatprep.subr.mxu0 0.0
      %1385 = vmatpush1.msra.mxu0 0.0
      %1386 = vmatprep.subr.mxu0 0.0
      %1387 = vmatpush1.msra.mxu0 0.0
      %1388 = vmatprep.subr.mxu0 0.0
      %1389 = vmatpush1.msra.mxu0 0.0
      %1390 = vmatprep.subr.mxu0 0.0
      %1391 = vmatpush1.msra.mxu0 0.0
      %1392 = vmatprep.subr.mxu0 0.0
      %1393 = vmatpush1.msra.mxu0 0.0
      %1394 = vmatprep.subr.mxu0 0.0
      %1395 = vmatpush1.msra.mxu0 0.0
      %1396 = vmatprep.subr.mxu0 0.0
      %1397 = vmatpush1.msra.mxu0 0.0
      %1398 = vmatprep.subr.mxu0 0.0
      %1399 = vmatpush1.msra.mxu0 0.0
      %1400 = vmatprep.subr.mxu0 0.0
      %1401 = vmatpush1.msra.mxu0 0.0
      %1402 = vmatprep.subr.mxu0 0.0
      %1403 = vmatpush1.msra.mxu0 0.0
      %1404 = vmatprep.subr.mxu0 0.0
      %1405 = vmatpush1.msra.mxu0 0.0
      %1406 = vmatprep.subr.mxu0 0.0
      %1407 = vmatpush1.msra.mxu0 0.0
      %1408 = vmatprep.subr.mxu0 0.0
      %1409 = vmatpush1.msra.mxu0 0.0
      %1410 = vmatprep.subr.mxu0 0.0
      %1411 = vmatpush1.msra.mxu0 0.0
      %1412 = vmatprep.subr.mxu0 0.0
      %1413 = vmatpush1.msra.mxu0 0.0
      %1414 = vmatprep.subr.mxu0 0.0
      %1415 = vmatpush1.msra.mxu0 0.0
      %1416 = vmatprep.subr.mxu0 0.0
      %1417 = vmatpush1.msra.mxu0 0.0
      %1418 = vmatprep.subr.mxu0 0.0
      %1419 = vmatpush1.msra.mxu0 0.0
      %1420 = vmatprep.subr.mxu0 0.0
      %1421 = vmatpush1.msra.mxu0 0.0
      %1422 = vmatprep.subr.mxu0 0.0
      %1423 = vmatpush1.msra.mxu0 0.0
      %1424 = vmatprep.mubr.f32.mxu0 0.0
      %1425 = vmatmul.mubr.f32.gmra.mrb[0].mxu0 %v1355
      %v1426 = vpop.f32.mrb[0].mxu0
      %v1427 = vadd.f32 0.0, %v1426
      %v1428 = vpop.f32.mrb[0].mxu0
      %1429 = vmatprep.mubr.f32.mxu0 0.0
      %1430 = vmatmul.mubr.f32.gmra.mrb[0].mxu0 %v1358
      %v1431 = vpop.f32.mrb[0].mxu0
      %v1432 = vadd.f32 0.0, %v1431
      %v1433 = vpop.f32.mrb[0].mxu0
      %1434 = vdwg.mxu0
      %1435 = vrot.lane.b32.xlu0 %v719, 96
      %v1436 = vpop.permute.xlu0 %1435
      %1437 = vrot.lane.b32.xlu0 %v722, 96
      %v1438 = vpop.permute.xlu0 %1437
      %v1442 = vsel %vm495, %v1172, 0
      %v1445 = vsel %vm495, %v1173, 0
      %1447 = vmatprep.subr.mxu0 0.0
      %1448 = vmatpush1.msra.mxu0 %v1436
      %1449 = vmatprep.subr.mxu0 0.0
      %1450 = vmatpush1.msra.mxu0 %v1438
      %1451 = vmatprep.subr.mxu0 0.0
      %1452 = vmatpush1.msra.mxu0 0.0
      %1453 = vmatprep.subr.mxu0 0.0
      %1454 = vmatpush1.msra.mxu0 0.0
      %1455 = vmatprep.subr.mxu0 0.0
      %1456 = vmatpush1.msra.mxu0 0.0
      %1457 = vmatprep.subr.mxu0 0.0
      %1458 = vmatpush1.msra.mxu0 0.0
      %1459 = vmatprep.subr.mxu0 0.0
      %1460 = vmatpush1.msra.mxu0 0.0
      %1461 = vmatprep.subr.mxu0 0.0
      %1462 = vmatpush1.msra.mxu0 0.0
      %1463 = vmatprep.subr.mxu0 0.0
      %1464 = vmatpush1.msra.mxu0 0.0
      %1465 = vmatprep.subr.mxu0 0.0
      %1466 = vmatpush1.msra.mxu0 0.0
      %1467 = vmatprep.subr.mxu0 0.0
      %1468 = vmatpush1.msra.mxu0 0.0
      %1469 = vmatprep.subr.mxu0 0.0
      %1470 = vmatpush1.msra.mxu0 0.0
      %1471 = vmatprep.subr.mxu0 0.0
      %1472 = vmatpush1.msra.mxu0 0.0
      %1473 = vmatprep.subr.mxu0 0.0
      %1474 = vmatpush1.msra.mxu0 0.0
      %1475 = vmatprep.subr.mxu0 0.0
      %1476 = vmatpush1.msra.mxu0 0.0
      %1477 = vmatprep.subr.mxu0 0.0
      %1478 = vmatpush1.msra.mxu0 0.0
      %1479 = vmatprep.subr.mxu0 0.0
      %1480 = vmatpush1.msra.mxu0 0.0
      %1481 = vmatprep.subr.mxu0 0.0
      %1482 = vmatpush1.msra.mxu0 0.0
      %1483 = vmatprep.subr.mxu0 0.0
      %1484 = vmatpush1.msra.mxu0 0.0
      %1485 = vmatprep.subr.mxu0 0.0
      %1486 = vmatpush1.msra.mxu0 0.0
      %1487 = vmatprep.subr.mxu0 0.0
      %1488 = vmatpush1.msra.mxu0 0.0
      %1489 = vmatprep.subr.mxu0 0.0
      %1490 = vmatpush1.msra.mxu0 0.0
      %1491 = vmatprep.subr.mxu0 0.0
      %1492 = vmatpush1.msra.mxu0 0.0
      %1493 = vmatprep.subr.mxu0 0.0
      %1494 = vmatpush1.msra.mxu0 0.0
      %1495 = vmatprep.subr.mxu0 0.0
      %1496 = vmatpush1.msra.mxu0 0.0
      %1497 = vmatprep.subr.mxu0 0.0
      %1498 = vmatpush1.msra.mxu0 0.0
      %1499 = vmatprep.subr.mxu0 0.0
      %1500 = vmatpush1.msra.mxu0 0.0
      %1501 = vmatprep.subr.mxu0 0.0
      %1502 = vmatpush1.msra.mxu0 0.0
      %1503 = vmatprep.subr.mxu0 0.0
      %1504 = vmatpush1.msra.mxu0 0.0
      %1505 = vmatprep.subr.mxu0 0.0
      %1506 = vmatpush1.msra.mxu0 0.0
      %1507 = vmatprep.subr.mxu0 0.0
      %1508 = vmatpush1.msra.mxu0 0.0
      %1509 = vmatprep.subr.mxu0 0.0
      %1510 = vmatpush1.msra.mxu0 0.0
      %1511 = vmatprep.mubr.f32.mxu0 0.0
      %1512 = vmatmul.mubr.f32.gmra.mrb[0].mxu0 %v1442
      %v1513 = vpop.f32.mrb[0].mxu0
      %v1514 = vadd.f32 0.0, %v1513
      %v1515 = vpop.f32.mrb[0].mxu0
      %1516 = vmatprep.mubr.f32.mxu0 0.0
      %1517 = vmatmul.mubr.f32.gmra.mrb[0].mxu0 %v1445
      %v1518 = vpop.f32.mrb[0].mxu0
      %v1519 = vadd.f32 0.0, %v1518
      %v1520 = vpop.f32.mrb[0].mxu0
      %1521 = vdwg.mxu0
      %1522 = vrot.lane.b32.xlu0 %v695, 120
      %v1523 = vpop.permute.xlu0 %1522
      %1524 = vrot.lane.b32.xlu0 %v698, 120
      %v1525 = vpop.permute.xlu0 %1524
      %1526 = vrot.lane.b32.xlu0 %v695, 104
      %v1527 = vpop.permute.xlu0 %1526
      %1528 = vrot.lane.b32.xlu0 %v698, 104
      %v1529 = vpop.permute.xlu0 %1528
      %v1530 = vsel %vm735, %v1523, 0
      %v1532 = vsel %vm735, %v1525, 0
      %v1534 = vsel %vm735, %v1527, 0
      %v1536 = vsel %vm735, %v1529, 0
      %1538 = vmatprep.subr.mxu0 0.0
      %1539 = vmatpush1.xpose.msra.mxu0 %v1534
      %1540 = vmatprep.subr.mxu0 0.0
      %1541 = vmatpush1.xpose.msra.mxu0 %v1536
      %1542 = vmatprep.subr.mxu0 0.0
      %1543 = vmatpush1.xpose.msra.mxu0 0.0
      %1544 = vmatprep.subr.mxu0 0.0
      %1545 = vmatpush1.xpose.msra.mxu0 0.0
      %1546 = vmatprep.subr.mxu0 0.0
      %1547 = vmatpush1.xpose.msra.mxu0 0.0
      %1548 = vmatprep.subr.mxu0 0.0
      %1549 = vmatpush1.xpose.msra.mxu0 0.0
      %1550 = vmatprep.subr.mxu0 0.0
      %1551 = vmatpush1.xpose.msra.mxu0 0.0
      %1552 = vmatprep.subr.mxu0 0.0
      %1553 = vmatpush1.xpose.msra.mxu0 0.0
      %1554 = vmatprep.subr.mxu0 0.0
      %1555 = vmatpush1.xpose.msra.mxu0 0.0
      %1556 = vmatprep.subr.mxu0 0.0
      %1557 = vmatpush1.xpose.msra.mxu0 0.0
      %1558 = vmatprep.subr.mxu0 0.0
      %1559 = vmatpush1.xpose.msra.mxu0 0.0
      %1560 = vmatprep.subr.mxu0 0.0
      %1561 = vmatpush1.xpose.msra.mxu0 0.0
      %1562 = vmatprep.subr.mxu0 0.0
      %1563 = vmatpush1.xpose.msra.mxu0 0.0
      %1564 = vmatprep.subr.mxu0 0.0
      %1565 = vmatpush1.xpose.msra.mxu0 0.0
      %1566 = vmatprep.subr.mxu0 0.0
      %1567 = vmatpush1.xpose.msra.mxu0 0.0
      %1568 = vmatprep.subr.mxu0 0.0
      %1569 = vmatpush1.xpose.msra.mxu0 0.0
      %1570 = vmatprep.subr.mxu0 0.0
      %1571 = vmatpush1.xpose.msra.mxu0 0.0
      %1572 = vmatprep.subr.mxu0 0.0
      %1573 = vmatpush1.xpose.msra.mxu0 0.0
      %1574 = vmatprep.subr.mxu0 0.0
      %1575 = vmatpush1.xpose.msra.mxu0 0.0
      %1576 = vmatprep.subr.mxu0 0.0
      %1577 = vmatpush1.xpose.msra.mxu0 0.0
      %1578 = vmatprep.subr.mxu0 0.0
      %1579 = vmatpush1.xpose.msra.mxu0 0.0
      %1580 = vmatprep.subr.mxu0 0.0
      %1581 = vmatpush1.xpose.msra.mxu0 0.0
      %1582 = vmatprep.subr.mxu0 0.0
      %1583 = vmatpush1.xpose.msra.mxu0 0.0
      %1584 = vmatprep.subr.mxu0 0.0
      %1585 = vmatpush1.xpose.msra.mxu0 0.0
      %1586 = vmatprep.subr.mxu0 0.0
      %1587 = vmatpush1.xpose.msra.mxu0 0.0
      %1588 = vmatprep.subr.mxu0 0.0
      %1589 = vmatpush1.xpose.msra.mxu0 0.0
      %1590 = vmatprep.subr.mxu0 0.0
      %1591 = vmatpush1.xpose.msra.mxu0 0.0
      %1592 = vmatprep.subr.mxu0 0.0
      %1593 = vmatpush1.xpose.msra.mxu0 0.0
      %1594 = vmatprep.subr.mxu0 0.0
      %1595 = vmatpush1.xpose.msra.mxu0 0.0
      %1596 = vmatprep.subr.mxu0 0.0
      %1597 = vmatpush1.xpose.msra.mxu0 0.0
      %1598 = vmatprep.subr.mxu0 0.0
      %1599 = vmatpush1.xpose.msra.mxu0 0.0
      %1600 = vmatprep.subr.mxu0 0.0
      %1601 = vmatpush1.xpose.msra.mxu0 0.0
      %1602 = vmatprep.mubr.f32.mxu0 0.0
      %1603 = vmatmul.mubr.f32.gmra.mrb[0].mxu0 %v1530
      %v1604 = vpop.f32.mrb[0].mxu0
      %v1605 = vadd.f32 %v727, %v1604
      %v1606 = vpop.f32.mrb[0].mxu0
      %1607 = vmatprep.mubr.f32.mxu0 0.0
      %1608 = vmatmul.mubr.f32.gmra.mrb[0].mxu0 %v1532
      %v1609 = vpop.f32.mrb[0].mxu0
      %v1610 = vadd.f32 %v728, %v1609
      %v1611 = vpop.f32.mrb[0].mxu0
      %1612 = vdwg.mxu0
      %1613 = vrot.lane.b32.xlu0 %v703, 120
      %v1614 = vpop.permute.xlu0 %1613
      %1615 = vrot.lane.b32.xlu0 %v706, 120
      %v1616 = vpop.permute.xlu0 %1615
      %1617 = vrot.lane.b32.xlu0 %v703, 104
      %v1618 = vpop.permute.xlu0 %1617
      %1619 = vrot.lane.b32.xlu0 %v706, 104
      %v1620 = vpop.permute.xlu0 %1619
      %v1621 = vsel %vm735, %v1614, 0
      %v1623 = vsel %vm735, %v1616, 0
      %v1625 = vsel %vm735, %v1618, 0
      %v1627 = vsel %vm735, %v1620, 0
      %1629 = vmatprep.subr.mxu0 0.0
      %1630 = vmatpush1.xpose.msra.mxu0 %v1625
      %1631 = vmatprep.subr.mxu0 0.0
      %1632 = vmatpush1.xpose.msra.mxu0 %v1627
      %1633 = vmatprep.subr.mxu0 0.0
      %1634 = vmatpush1.xpose.msra.mxu0 0.0
      %1635 = vmatprep.subr.mxu0 0.0
      %1636 = vmatpush1.xpose.msra.mxu0 0.0
      %1637 = vmatprep.subr.mxu0 0.0
      %1638 = vmatpush1.xpose.msra.mxu0 0.0
      %1639 = vmatprep.subr.mxu0 0.0
      %1640 = vmatpush1.xpose.msra.mxu0 0.0
      %1641 = vmatprep.subr.mxu0 0.0
      %1642 = vmatpush1.xpose.msra.mxu0 0.0
      %1643 = vmatprep.subr.mxu0 0.0
      %1644 = vmatpush1.xpose.msra.mxu0 0.0
      %1645 = vmatprep.subr.mxu0 0.0
      %1646 = vmatpush1.xpose.msra.mxu0 0.0
      %1647 = vmatprep.subr.mxu0 0.0
      %1648 = vmatpush1.xpose.msra.mxu0 0.0
      %1649 = vmatprep.subr.mxu0 0.0
      %1650 = vmatpush1.xpose.msra.mxu0 0.0
      %1651 = vmatprep.subr.mxu0 0.0
      %1652 = vmatpush1.xpose.msra.mxu0 0.0
      %1653 = vmatprep.subr.mxu0 0.0
      %1654 = vmatpush1.xpose.msra.mxu0 0.0
      %1655 = vmatprep.subr.mxu0 0.0
      %1656 = vmatpush1.xpose.msra.mxu0 0.0
      %1657 = vmatprep.subr.mxu0 0.0
      %1658 = vmatpush1.xpose.msra.mxu0 0.0
      %1659 = vmatprep.subr.mxu0 0.0
      %1660 = vmatpush1.xpose.msra.mxu0 0.0
      %1661 = vmatprep.subr.mxu0 0.0
      %1662 = vmatpush1.xpose.msra.mxu0 0.0
      %1663 = vmatprep.subr.mxu0 0.0
      %1664 = vmatpush1.xpose.msra.mxu0 0.0
      %1665 = vmatprep.subr.mxu0 0.0
      %1666 = vmatpush1.xpose.msra.mxu0 0.0
      %1667 = vmatprep.subr.mxu0 0.0
      %1668 = vmatpush1.xpose.msra.mxu0 0.0
      %1669 = vmatprep.subr.mxu0 0.0
      %1670 = vmatpush1.xpose.msra.mxu0 0.0
      %1671 = vmatprep.subr.mxu0 0.0
      %1672 = vmatpush1.xpose.msra.mxu0 0.0
      %1673 = vmatprep.subr.mxu0 0.0
      %1674 = vmatpush1.xpose.msra.mxu0 0.0
      %1675 = vmatprep.subr.mxu0 0.0
      %1676 = vmatpush1.xpose.msra.mxu0 0.0
      %1677 = vmatprep.subr.mxu0 0.0
      %1678 = vmatpush1.xpose.msra.mxu0 0.0
      %1679 = vmatprep.subr.mxu0 0.0
      %1680 = vmatpush1.xpose.msra.mxu0 0.0
      %1681 = vmatprep.subr.mxu0 0.0
      %1682 = vmatpush1.xpose.msra.mxu0 0.0
      %1683 = vmatprep.subr.mxu0 0.0
      %1684 = vmatpush1.xpose.msra.mxu0 0.0
      %1685 = vmatprep.subr.mxu0 0.0
      %1686 = vmatpush1.xpose.msra.mxu0 0.0
      %1687 = vmatprep.subr.mxu0 0.0
      %1688 = vmatpush1.xpose.msra.mxu0 0.0
      %1689 = vmatprep.subr.mxu0 0.0
      %1690 = vmatpush1.xpose.msra.mxu0 0.0
      %1691 = vmatprep.subr.mxu0 0.0
      %1692 = vmatpush1.xpose.msra.mxu0 0.0
      %1693 = vmatprep.mubr.f32.mxu0 0.0
      %1694 = vmatmul.mubr.f32.gmra.mrb[0].mxu0 %v1621
      %v1695 = vpop.f32.mrb[0].mxu0
      %v1696 = vadd.f32 %v727, %v1695
      %v1697 = vpop.f32.mrb[0].mxu0
      %1698 = vmatprep.mubr.f32.mxu0 0.0
      %1699 = vmatmul.mubr.f32.gmra.mrb[0].mxu0 %v1623
      %v1700 = vpop.f32.mrb[0].mxu0
      %v1701 = vadd.f32 %v728, %v1700
      %v1702 = vpop.f32.mrb[0].mxu0
      %1703 = vdwg.mxu0
      %1704 = vrot.lane.b32.xlu0 %v711, 120
      %v1705 = vpop.permute.xlu0 %1704
      %1706 = vrot.lane.b32.xlu0 %v714, 120
      %v1707 = vpop.permute.xlu0 %1706
      %1708 = vrot.lane.b32.xlu0 %v711, 104
      %v1709 = vpop.permute.xlu0 %1708
      %1710 = vrot.lane.b32.xlu0 %v714, 104
      %v1711 = vpop.permute.xlu0 %1710
      %v1712 = vsel %vm735, %v1705, 0
      %v1714 = vsel %vm735, %v1707, 0
      %v1716 = vsel %vm735, %v1709, 0
      %v1718 = vsel %vm735, %v1711, 0
      %1720 = vmatprep.subr.mxu0 0.0
      %1721 = vmatpush1.xpose.msra.mxu0 %v1716
      %1722 = vmatprep.subr.mxu0 0.0
      %1723 = vmatpush1.xpose.msra.mxu0 %v1718
      %1724 = vmatprep.subr.mxu0 0.0
      %1725 = vmatpush1.xpose.msra.mxu0 0.0
      %1726 = vmatprep.subr.mxu0 0.0
      %1727 = vmatpush1.xpose.msra.mxu0 0.0
      %1728 = vmatprep.subr.mxu0 0.0
      %1729 = vmatpush1.xpose.msra.mxu0 0.0
      %1730 = vmatprep.subr.mxu0 0.0
      %1731 = vmatpush1.xpose.msra.mxu0 0.0
      %1732 = vmatprep.subr.mxu0 0.0
      %1733 = vmatpush1.xpose.msra.mxu0 0.0
      %1734 = vmatprep.subr.mxu0 0.0
      %1735 = vmatpush1.xpose.msra.mxu0 0.0
      %1736 = vmatprep.subr.mxu0 0.0
      %1737 = vmatpush1.xpose.msra.mxu0 0.0
      %1738 = vmatprep.subr.mxu0 0.0
      %1739 = vmatpush1.xpose.msra.mxu0 0.0
      %1740 = vmatprep.subr.mxu0 0.0
      %1741 = vmatpush1.xpose.msra.mxu0 0.0
      %1742 = vmatprep.subr.mxu0 0.0
      %1743 = vmatpush1.xpose.msra.mxu0 0.0
      %1744 = vmatprep.subr.mxu0 0.0
      %1745 = vmatpush1.xpose.msra.mxu0 0.0
      %1746 = vmatprep.subr.mxu0 0.0
      %1747 = vmatpush1.xpose.msra.mxu0 0.0
      %1748 = vmatprep.subr.mxu0 0.0
      %1749 = vmatpush1.xpose.msra.mxu0 0.0
      %1750 = vmatprep.subr.mxu0 0.0
      %1751 = vmatpush1.xpose.msra.mxu0 0.0
      %1752 = vmatprep.subr.mxu0 0.0
      %1753 = vmatpush1.xpose.msra.mxu0 0.0
      %1754 = vmatprep.subr.mxu0 0.0
      %1755 = vmatpush1.xpose.msra.mxu0 0.0
      %1756 = vmatprep.subr.mxu0 0.0
      %1757 = vmatpush1.xpose.msra.mxu0 0.0
      %1758 = vmatprep.subr.mxu0 0.0
      %1759 = vmatpush1.xpose.msra.mxu0 0.0
      %1760 = vmatprep.subr.mxu0 0.0
      %1761 = vmatpush1.xpose.msra.mxu0 0.0
      %1762 = vmatprep.subr.mxu0 0.0
      %1763 = vmatpush1.xpose.msra.mxu0 0.0
      %1764 = vmatprep.subr.mxu0 0.0
      %1765 = vmatpush1.xpose.msra.mxu0 0.0
      %1766 = vmatprep.subr.mxu0 0.0
      %1767 = vmatpush1.xpose.msra.mxu0 0.0
      %1768 = vmatprep.subr.mxu0 0.0
      %1769 = vmatpush1.xpose.msra.mxu0 0.0
      %1770 = vmatprep.subr.mxu0 0.0
      %1771 = vmatpush1.xpose.msra.mxu0 0.0
      %1772 = vmatprep.subr.mxu0 0.0
      %1773 = vmatpush1.xpose.msra.mxu0 0.0
      %1774 = vmatprep.subr.mxu0 0.0
      %1775 = vmatpush1.xpose.msra.mxu0 0.0
      %1776 = vmatprep.subr.mxu0 0.0
      %1777 = vmatpush1.xpose.msra.mxu0 0.0
      %1778 = vmatprep.subr.mxu0 0.0
      %1779 = vmatpush1.xpose.msra.mxu0 0.0
      %1780 = vmatprep.subr.mxu0 0.0
      %1781 = vmatpush1.xpose.msra.mxu0 0.0
      %1782 = vmatprep.subr.mxu0 0.0
      %1783 = vmatpush1.xpose.msra.mxu0 0.0
      %1784 = vmatprep.mubr.f32.mxu0 0.0
      %1785 = vmatmul.mubr.f32.gmra.mrb[0].mxu0 %v1712
      %v1786 = vpop.f32.mrb[0].mxu0
      %v1787 = vadd.f32 %v727, %v1786
      %v1788 = vpop.f32.mrb[0].mxu0
      %1789 = vmatprep.mubr.f32.mxu0 0.0
      %1790 = vmatmul.mubr.f32.gmra.mrb[0].mxu0 %v1714
      %v1791 = vpop.f32.mrb[0].mxu0
      %v1792 = vadd.f32 %v728, %v1791
      %v1793 = vpop.f32.mrb[0].mxu0
      %1794 = vdwg.mxu0
      %1795 = vrot.lane.b32.xlu0 %v719, 120
      %v1796 = vpop.permute.xlu0 %1795
      %1797 = vrot.lane.b32.xlu0 %v722, 120
      %v1798 = vpop.permute.xlu0 %1797
      %1799 = vrot.lane.b32.xlu0 %v719, 104
      %v1800 = vpop.permute.xlu0 %1799
      %1801 = vrot.lane.b32.xlu0 %v722, 104
      %v1802 = vpop.permute.xlu0 %1801
      %v1803 = vsel %vm735, %v1796, 0
      %v1805 = vsel %vm735, %v1798, 0
      %v1807 = vsel %vm735, %v1800, 0
      %v1809 = vsel %vm735, %v1802, 0
      %1811 = vmatprep.subr.mxu0 0.0
      %1812 = vmatpush1.xpose.msra.mxu0 %v1807
      %1813 = vmatprep.subr.mxu0 0.0
      %1814 = vmatpush1.xpose.msra.mxu0 %v1809
      %1815 = vmatprep.subr.mxu0 0.0
      %1816 = vmatpush1.xpose.msra.mxu0 0.0
      %1817 = vmatprep.subr.mxu0 0.0
      %1818 = vmatpush1.xpose.msra.mxu0 0.0
      %1819 = vmatprep.subr.mxu0 0.0
      %1820 = vmatpush1.xpose.msra.mxu0 0.0
      %1821 = vmatprep.subr.mxu0 0.0
      %1822 = vmatpush1.xpose.msra.mxu0 0.0
      %1823 = vmatprep.subr.mxu0 0.0
      %1824 = vmatpush1.xpose.msra.mxu0 0.0
      %1825 = vmatprep.subr.mxu0 0.0
      %1826 = vmatpush1.xpose.msra.mxu0 0.0
      %1827 = vmatprep.subr.mxu0 0.0
      %1828 = vmatpush1.xpose.msra.mxu0 0.0
      %1829 = vmatprep.subr.mxu0 0.0
      %1830 = vmatpush1.xpose.msra.mxu0 0.0
      %1831 = vmatprep.subr.mxu0 0.0
      %1832 = vmatpush1.xpose.msra.mxu0 0.0
      %1833 = vmatprep.subr.mxu0 0.0
      %1834 = vmatpush1.xpose.msra.mxu0 0.0
      %1835 = vmatprep.subr.mxu0 0.0
      %1836 = vmatpush1.xpose.msra.mxu0 0.0
      %1837 = vmatprep.subr.mxu0 0.0
      %1838 = vmatpush1.xpose.msra.mxu0 0.0
      %1839 = vmatprep.subr.mxu0 0.0
      %1840 = vmatpush1.xpose.msra.mxu0 0.0
      %1841 = vmatprep.subr.mxu0 0.0
      %1842 = vmatpush1.xpose.msra.mxu0 0.0
      %1843 = vmatprep.subr.mxu0 0.0
      %1844 = vmatpush1.xpose.msra.mxu0 0.0
      %1845 = vmatprep.subr.mxu0 0.0
      %1846 = vmatpush1.xpose.msra.mxu0 0.0
      %1847 = vmatprep.subr.mxu0 0.0
      %1848 = vmatpush1.xpose.msra.mxu0 0.0
      %1849 = vmatprep.subr.mxu0 0.0
      %1850 = vmatpush1.xpose.msra.mxu0 0.0
      %1851 = vmatprep.subr.mxu0 0.0
      %1852 = vmatpush1.xpose.msra.mxu0 0.0
      %1853 = vmatprep.subr.mxu0 0.0
      %1854 = vmatpush1.xpose.msra.mxu0 0.0
      %1855 = vmatprep.subr.mxu0 0.0
      %1856 = vmatpush1.xpose.msra.mxu0 0.0
      %1857 = vmatprep.subr.mxu0 0.0
      %1858 = vmatpush1.xpose.msra.mxu0 0.0
      %1859 = vmatprep.subr.mxu0 0.0
      %1860 = vmatpush1.xpose.msra.mxu0 0.0
      %1861 = vmatprep.subr.mxu0 0.0
      %1862 = vmatpush1.xpose.msra.mxu0 0.0
      %1863 = vmatprep.subr.mxu0 0.0
      %1864 = vmatpush1.xpose.msra.mxu0 0.0
      %1865 = vmatprep.subr.mxu0 0.0
      %1866 = vmatpush1.xpose.msra.mxu0 0.0
      %1867 = vmatprep.subr.mxu0 0.0
      %1868 = vmatpush1.xpose.msra.mxu0 0.0
      %1869 = vmatprep.subr.mxu0 0.0
      %1870 = vmatpush1.xpose.msra.mxu0 0.0
      %1871 = vmatprep.subr.mxu0 0.0
      %1872 = vmatpush1.xpose.msra.mxu0 0.0
      %1873 = vmatprep.subr.mxu0 0.0
      %1874 = vmatpush1.xpose.msra.mxu0 0.0
      %1875 = vmatprep.mubr.f32.mxu0 0.0
      %1876 = vmatmul.mubr.f32.gmra.mrb[0].mxu0 %v1803
      %v1877 = vpop.f32.mrb[0].mxu0
      %v1878 = vadd.f32 %v727, %v1877
      %v1879 = vpop.f32.mrb[0].mxu0
      %1880 = vmatprep.mubr.f32.mxu0 0.0
      %1881 = vmatmul.mubr.f32.gmra.mrb[0].mxu0 %v1805
      %v1882 = vpop.f32.mrb[0].mxu0
      %v1883 = vadd.f32 %v728, %v1882
      %v1884 = vpop.f32.mrb[0].mxu0
      %1885 = vdwg.mxu0
      %v1886 = vsel %vm495, %v1605, -inf
      %1887 = vmax.xlane.f32.xlu0 %v1886
      %v1888 = vpop.xlane.xlu0 %1887
      %v1889 = vsel %vm495, %v1610, -inf
      %1890 = vmax.xlane.f32.xlu0 %v1889
      %v1891 = vpop.xlane.xlu0 %1890
      %v1892 = vsel %vm495, %v1696, -inf
      %1893 = vmax.xlane.f32.xlu0 %v1892
      %v1894 = vpop.xlane.xlu0 %1893
      %v1895 = vsel %vm495, %v1701, -inf
      %1896 = vmax.xlane.f32.xlu0 %v1895
      %v1897 = vpop.xlane.xlu0 %1896
      %v1898 = vsel %vm495, %v1787, -inf
      %1899 = vmax.xlane.f32.xlu0 %v1898
      %v1900 = vpop.xlane.xlu0 %1899
      %v1901 = vsel %vm495, %v1792, -inf
      %1902 = vmax.xlane.f32.xlu0 %v1901
      %v1903 = vpop.xlane.xlu0 %1902
      %v1904 = vsel %vm495, %v1878, -inf
      %1905 = vmax.xlane.f32.xlu0 %v1904
      %v1906 = vpop.xlane.xlu0 %1905
      %v1907 = vsel %vm495, %v1883, -inf
      %1908 = vmax.xlane.f32.xlu0 %v1907
      %v1909 = vpop.xlane.xlu0 %1908
      %v1910 = vsub.f32 %v1605, %v1888
      %v1911 = vsub.f32 %v1610, %v1891
      %v1912 = vsub.f32 %v1696, %v1894
      %v1913 = vsub.f32 %v1701, %v1897
      %v1914 = vsub.f32 %v1787, %v1900
      %v1915 = vsub.f32 %v1792, %v1903
      %v1916 = vsub.f32 %v1878, %v1906
      %v1917 = vsub.f32 %v1883, %v1909
      %v1918 = vmul.f32 %v1910, 1.442695
      %v1919 = vpow.pop %v1918
      %v1920 = vmul.f32 %v1911, 1.442695
      %v1921 = vpow.pop %v1920
      %v1922 = vmul.f32 %v1912, 1.442695
      %v1923 = vpow.pop %v1922
      %v1924 = vmul.f32 %v1913, 1.442695
      %v1925 = vpow.pop %v1924
      %v1926 = vmul.f32 %v1914, 1.442695
      %v1927 = vpow.pop %v1926
      %v1928 = vmul.f32 %v1915, 1.442695
      %v1929 = vpow.pop %v1928
      %v1930 = vmul.f32 %v1916, 1.442695
      %v1931 = vpow.pop %v1930
      %v1932 = vmul.f32 %v1917, 1.442695
      %v1933 = vpow.pop %v1932
      %v1934 = vsel %vm495, %v1919, 0.0
      %1935 = vadd.xlane.f32.xlu0 %v1934
      %v1936 = vpop.xlane.xlu0 %1935
      %v1937 = vsel %vm495, %v1921, 0.0
      %1938 = vadd.xlane.f32.xlu0 %v1937
      %v1939 = vpop.xlane.xlu0 %1938
      %v1940 = vsel %vm495, %v1923, 0.0
      %1941 = vadd.xlane.f32.xlu0 %v1940
      %v1942 = vpop.xlane.xlu0 %1941
      %v1943 = vsel %vm495, %v1925, 0.0
      %1944 = vadd.xlane.f32.xlu0 %v1943
      %v1945 = vpop.xlane.xlu0 %1944
      %v1946 = vsel %vm495, %v1927, 0.0
      %1947 = vadd.xlane.f32.xlu0 %v1946
      %v1948 = vpop.xlane.xlu0 %1947
      %v1949 = vsel %vm495, %v1929, 0.0
      %1950 = vadd.xlane.f32.xlu0 %v1949
      %v1951 = vpop.xlane.xlu0 %1950
      %v1952 = vsel %vm495, %v1931, 0.0
      %1953 = vadd.xlane.f32.xlu0 %v1952
      %v1954 = vpop.xlane.xlu0 %1953
      %v1955 = vsel %vm495, %v1933, 0.0
      %1956 = vadd.xlane.f32.xlu0 %v1955
      %v1957 = vpop.xlane.xlu0 %1956
      %v1958 = vrcp.pop %v1936
      %v1959 = vrcp.pop %v1939
      %v1960 = vrcp.pop %v1942
      %v1961 = vrcp.pop %v1945
      %v1962 = vrcp.pop %v1948
      %v1963 = vrcp.pop %v1951
      %v1964 = vrcp.pop %v1954
      %v1965 = vrcp.pop %v1957
      %v1966 = vmul.f32 %v1919, %v1958
      %v1967 = vmul.f32 %v1921, %v1959
      %v1968 = vmul.f32 %v1923, %v1960
      %v1969 = vmul.f32 %v1925, %v1961
      %v1970 = vmul.f32 %v1927, %v1962
      %v1971 = vmul.f32 %v1929, %v1963
      %v1972 = vmul.f32 %v1931, %v1964
      %v1973 = vmul.f32 %v1933, %v1965
      %1974 = vrot.lane.b32.xlu0 %v695, 88
      %v1975 = vpop.permute.xlu0 %1974
      %1976 = vrot.lane.b32.xlu0 %v698, 88
      %v1977 = vpop.permute.xlu0 %1976
      %v1981 = vsel %vm495, %v1966, 0
      %v1984 = vsel %vm495, %v1967, 0
      %1986 = vmatprep.subr.mxu0 0.0
      %1987 = vmatpush1.msra.mxu0 %v1975
      %1988 = vmatprep.subr.mxu0 0.0
      %1989 = vmatpush1.msra.mxu0 %v1977
      %1990 = vmatprep.subr.mxu0 0.0
      %1991 = vmatpush1.msra.mxu0 0.0
      %1992 = vmatprep.subr.mxu0 0.0
      %1993 = vmatpush1.msra.mxu0 0.0
      %1994 = vmatprep.subr.mxu0 0.0
      %1995 = vmatpush1.msra.mxu0 0.0
      %1996 = vmatprep.subr.mxu0 0.0
      %1997 = vmatpush1.msra.mxu0 0.0
      %1998 = vmatprep.subr.mxu0 0.0
      %1999 = vmatpush1.msra.mxu0 0.0
      %2000 = vmatprep.subr.mxu0 0.0
      %2001 = vmatpush1.msra.mxu0 0.0
      %2002 = vmatprep.subr.mxu0 0.0
      %2003 = vmatpush1.msra.mxu0 0.0
      %2004 = vmatprep.subr.mxu0 0.0
      %2005 = vmatpush1.msra.mxu0 0.0
      %2006 = vmatprep.subr.mxu0 0.0
      %2007 = vmatpush1.msra.mxu0 0.0
      %2008 = vmatprep.subr.mxu0 0.0
      %2009 = vmatpush1.msra.mxu0 0.0
      %2010 = vmatprep.subr.mxu0 0.0
      %2011 = vmatpush1.msra.mxu0 0.0
      %2012 = vmatprep.subr.mxu0 0.0
      %2013 = vmatpush1.msra.mxu0 0.0
      %2014 = vmatprep.subr.mxu0 0.0
      %2015 = vmatpush1.msra.mxu0 0.0
      %2016 = vmatprep.subr.mxu0 0.0
      %2017 = vmatpush1.msra.mxu0 0.0
      %2018 = vmatprep.subr.mxu0 0.0
      %2019 = vmatpush1.msra.mxu0 0.0
      %2020 = vmatprep.subr.mxu0 0.0
      %2021 = vmatpush1.msra.mxu0 0.0
      %2022 = vmatprep.subr.mxu0 0.0
      %2023 = vmatpush1.msra.mxu0 0.0
      %2024 = vmatprep.subr.mxu0 0.0
      %2025 = vmatpush1.msra.mxu0 0.0
      %2026 = vmatprep.subr.mxu0 0.0
      %2027 = vmatpush1.msra.mxu0 0.0
      %2028 = vmatprep.subr.mxu0 0.0
      %2029 = vmatpush1.msra.mxu0 0.0
      %2030 = vmatprep.subr.mxu0 0.0
      %2031 = vmatpush1.msra.mxu0 0.0
      %2032 = vmatprep.subr.mxu0 0.0
      %2033 = vmatpush1.msra.mxu0 0.0
      %2034 = vmatprep.subr.mxu0 0.0
      %2035 = vmatpush1.msra.mxu0 0.0
      %2036 = vmatprep.subr.mxu0 0.0
      %2037 = vmatpush1.msra.mxu0 0.0
      %2038 = vmatprep.subr.mxu0 0.0
      %2039 = vmatpush1.msra.mxu0 0.0
      %2040 = vmatprep.subr.mxu0 0.0
      %2041 = vmatpush1.msra.mxu0 0.0
      %2042 = vmatprep.subr.mxu0 0.0
      %2043 = vmatpush1.msra.mxu0 0.0
      %2044 = vmatprep.subr.mxu0 0.0
      %2045 = vmatpush1.msra.mxu0 0.0
      %2046 = vmatprep.subr.mxu0 0.0
      %2047 = vmatpush1.msra.mxu0 0.0
      %2048 = vmatprep.subr.mxu0 0.0
      %2049 = vmatpush1.msra.mxu0 0.0
      %2050 = vmatprep.mubr.f32.mxu0 0.0
      %2051 = vmatmul.mubr.f32.gmra.mrb[0].mxu0 %v1981
      %v2052 = vpop.f32.mrb[0].mxu0
      %v2053 = vadd.f32 0.0, %v2052
      %v2054 = vpop.f32.mrb[0].mxu0
      %2055 = vmatprep.mubr.f32.mxu0 0.0
      %2056 = vmatmul.mubr.f32.gmra.mrb[0].mxu0 %v1984
      %v2057 = vpop.f32.mrb[0].mxu0
      %v2058 = vadd.f32 0.0, %v2057
      %v2059 = vpop.f32.mrb[0].mxu0
      %2060 = vdwg.mxu0
      %2061 = vrot.lane.b32.xlu0 %v703, 88
      %v2062 = vpop.permute.xlu0 %2061
      %2063 = vrot.lane.b32.xlu0 %v706, 88
      %v2064 = vpop.permute.xlu0 %2063
      %v2068 = vsel %vm495, %v1968, 0
      %v2071 = vsel %vm495, %v1969, 0
      %2073 = vmatprep.subr.mxu0 0.0
      %2074 = vmatpush1.msra.mxu0 %v2062
      %2075 = vmatprep.subr.mxu0 0.0
      %2076 = vmatpush1.msra.mxu0 %v2064
      %2077 = vmatprep.subr.mxu0 0.0
      %2078 = vmatpush1.msra.mxu0 0.0
      %2079 = vmatprep.subr.mxu0 0.0
      %2080 = vmatpush1.msra.mxu0 0.0
      %2081 = vmatprep.subr.mxu0 0.0
      %2082 = vmatpush1.msra.mxu0 0.0
      %2083 = vmatprep.subr.mxu0 0.0
      %2084 = vmatpush1.msra.mxu0 0.0
      %2085 = vmatprep.subr.mxu0 0.0
      %2086 = vmatpush1.msra.mxu0 0.0
      %2087 = vmatprep.subr.mxu0 0.0
      %2088 = vmatpush1.msra.mxu0 0.0
      %2089 = vmatprep.subr.mxu0 0.0
      %2090 = vmatpush1.msra.mxu0 0.0
      %2091 = vmatprep.subr.mxu0 0.0
      %2092 = vmatpush1.msra.mxu0 0.0
      %2093 = vmatprep.subr.mxu0 0.0
      %2094 = vmatpush1.msra.mxu0 0.0
      %2095 = vmatprep.subr.mxu0 0.0
      %2096 = vmatpush1.msra.mxu0 0.0
      %2097 = vmatprep.subr.mxu0 0.0
      %2098 = vmatpush1.msra.mxu0 0.0
      %2099 = vmatprep.subr.mxu0 0.0
      %2100 = vmatpush1.msra.mxu0 0.0
      %2101 = vmatprep.subr.mxu0 0.0
      %2102 = vmatpush1.msra.mxu0 0.0
      %2103 = vmatprep.subr.mxu0 0.0
      %2104 = vmatpush1.msra.mxu0 0.0
      %2105 = vmatprep.subr.mxu0 0.0
      %2106 = vmatpush1.msra.mxu0 0.0
      %2107 = vmatprep.subr.mxu0 0.0
      %2108 = vmatpush1.msra.mxu0 0.0
      %2109 = vmatprep.subr.mxu0 0.0
      %2110 = vmatpush1.msra.mxu0 0.0
      %2111 = vmatprep.subr.mxu0 0.0
      %2112 = vmatpush1.msra.mxu0 0.0
      %2113 = vmatprep.subr.mxu0 0.0
      %2114 = vmatpush1.msra.mxu0 0.0
      %2115 = vmatprep.subr.mxu0 0.0
      %2116 = vmatpush1.msra.mxu0 0.0
      %2117 = vmatprep.subr.mxu0 0.0
      %2118 = vmatpush1.msra.mxu0 0.0
      %2119 = vmatprep.subr.mxu0 0.0
      %2120 = vmatpush1.msra.mxu0 0.0
      %2121 = vmatprep.subr.mxu0 0.0
      %2122 = vmatpush1.msra.mxu0 0.0
      %2123 = vmatprep.subr.mxu0 0.0
      %2124 = vmatpush1.msra.mxu0 0.0
      %2125 = vmatprep.subr.mxu0 0.0
      %2126 = vmatpush1.msra.mxu0 0.0
      %2127 = vmatprep.subr.mxu0 0.0
      %2128 = vmatpush1.msra.mxu0 0.0
      %2129 = vmatprep.subr.mxu0 0.0
      %2130 = vmatpush1.msra.mxu0 0.0
      %2131 = vmatprep.subr.mxu0 0.0
      %2132 = vmatpush1.msra.mxu0 0.0
      %2133 = vmatprep.subr.mxu0 0.0
      %2134 = vmatpush1.msra.mxu0 0.0
      %2135 = vmatprep.subr.mxu0 0.0
      %2136 = vmatpush1.msra.mxu0 0.0
      %2137 = vmatprep.mubr.f32.mxu0 0.0
      %2138 = vmatmul.mubr.f32.gmra.mrb[0].mxu0 %v2068
      %v2139 = vpop.f32.mrb[0].mxu0
      %v2140 = vadd.f32 0.0, %v2139
      %v2141 = vpop.f32.mrb[0].mxu0
      %2142 = vmatprep.mubr.f32.mxu0 0.0
      %2143 = vmatmul.mubr.f32.gmra.mrb[0].mxu0 %v2071
      %v2144 = vpop.f32.mrb[0].mxu0
      %v2145 = vadd.f32 0.0, %v2144
      %v2146 = vpop.f32.mrb[0].mxu0
      %2147 = vdwg.mxu0
      %2148 = vrot.lane.b32.xlu0 %v711, 88
      %v2149 = vpop.permute.xlu0 %2148
      %2150 = vrot.lane.b32.xlu0 %v714, 88
      %v2151 = vpop.permute.xlu0 %2150
      %v2155 = vsel %vm495, %v1970, 0
      %v2158 = vsel %vm495, %v1971, 0
      %2160 = vmatprep.subr.mxu0 0.0
      %2161 = vmatpush1.msra.mxu0 %v2149
      %2162 = vmatprep.subr.mxu0 0.0
      %2163 = vmatpush1.msra.mxu0 %v2151
      %2164 = vmatprep.subr.mxu0 0.0
      %2165 = vmatpush1.msra.mxu0 0.0
      %2166 = vmatprep.subr.mxu0 0.0
      %2167 = vmatpush1.msra.mxu0 0.0
      %2168 = vmatprep.subr.mxu0 0.0
      %2169 = vmatpush1.msra.mxu0 0.0
      %2170 = vmatprep.subr.mxu0 0.0
      %2171 = vmatpush1.msra.mxu0 0.0
      %2172 = vmatprep.subr.mxu0 0.0
      %2173 = vmatpush1.msra.mxu0 0.0
      %2174 = vmatprep.subr.mxu0 0.0
      %2175 = vmatpush1.msra.mxu0 0.0
      %2176 = vmatprep.subr.mxu0 0.0
      %2177 = vmatpush1.msra.mxu0 0.0
      %2178 = vmatprep.subr.mxu0 0.0
      %2179 = vmatpush1.msra.mxu0 0.0
      %2180 = vmatprep.subr.mxu0 0.0
      %2181 = vmatpush1.msra.mxu0 0.0
      %2182 = vmatprep.subr.mxu0 0.0
      %2183 = vmatpush1.msra.mxu0 0.0
      %2184 = vmatprep.subr.mxu0 0.0
      %2185 = vmatpush1.msra.mxu0 0.0
      %2186 = vmatprep.subr.mxu0 0.0
      %2187 = vmatpush1.msra.mxu0 0.0
      %2188 = vmatprep.subr.mxu0 0.0
      %2189 = vmatpush1.msra.mxu0 0.0
      %2190 = vmatprep.subr.mxu0 0.0
      %2191 = vmatpush1.msra.mxu0 0.0
      %2192 = vmatprep.subr.mxu0 0.0
      %2193 = vmatpush1.msra.mxu0 0.0
      %2194 = vmatprep.subr.mxu0 0.0
      %2195 = vmatpush1.msra.mxu0 0.0
      %2196 = vmatprep.subr.mxu0 0.0
      %2197 = vmatpush1.msra.mxu0 0.0
      %2198 = vmatprep.subr.mxu0 0.0
      %2199 = vmatpush1.msra.mxu0 0.0
      %2200 = vmatprep.subr.mxu0 0.0
      %2201 = vmatpush1.msra.mxu0 0.0
      %2202 = vmatprep.subr.mxu0 0.0
      %2203 = vmatpush1.msra.mxu0 0.0
      %2204 = vmatprep.subr.mxu0 0.0
      %2205 = vmatpush1.msra.mxu0 0.0
      %2206 = vmatprep.subr.mxu0 0.0
      %2207 = vmatpush1.msra.mxu0 0.0
      %2208 = vmatprep.subr.mxu0 0.0
      %2209 = vmatpush1.msra.mxu0 0.0
      %2210 = vmatprep.subr.mxu0 0.0
      %2211 = vmatpush1.msra.mxu0 0.0
      %2212 = vmatprep.subr.mxu0 0.0
      %2213 = vmatpush1.msra.mxu0 0.0
      %2214 = vmatprep.subr.mxu0 0.0
      %2215 = vmatpush1.msra.mxu0 0.0
      %2216 = vmatprep.subr.mxu0 0.0
      %2217 = vmatpush1.msra.mxu0 0.0
      %2218 = vmatprep.subr.mxu0 0.0
      %2219 = vmatpush1.msra.mxu0 0.0
      %2220 = vmatprep.subr.mxu0 0.0
      %2221 = vmatpush1.msra.mxu0 0.0
      %2222 = vmatprep.subr.mxu0 0.0
      %2223 = vmatpush1.msra.mxu0 0.0
      %2224 = vmatprep.mubr.f32.mxu0 0.0
      %2225 = vmatmul.mubr.f32.gmra.mrb[0].mxu0 %v2155
      %v2226 = vpop.f32.mrb[0].mxu0
      %v2227 = vadd.f32 0.0, %v2226
      %v2228 = vpop.f32.mrb[0].mxu0
      %2229 = vmatprep.mubr.f32.mxu0 0.0
      %2230 = vmatmul.mubr.f32.gmra.mrb[0].mxu0 %v2158
      %v2231 = vpop.f32.mrb[0].mxu0
      %v2232 = vadd.f32 0.0, %v2231
      %v2233 = vpop.f32.mrb[0].mxu0
      %2234 = vdwg.mxu0
      %2235 = vrot.lane.b32.xlu0 %v719, 88
      %v2236 = vpop.permute.xlu0 %2235
      %2237 = vrot.lane.b32.xlu0 %v722, 88
      %v2238 = vpop.permute.xlu0 %2237
      %v2242 = vsel %vm495, %v1972, 0
      %v2245 = vsel %vm495, %v1973, 0
      %2247 = vmatprep.subr.mxu0 0.0
      %2248 = vmatpush1.msra.mxu0 %v2236
      %2249 = vmatprep.subr.mxu0 0.0
      %2250 = vmatpush1.msra.mxu0 %v2238
      %2251 = vmatprep.subr.mxu0 0.0
      %2252 = vmatpush1.msra.mxu0 0.0
      %2253 = vmatprep.subr.mxu0 0.0
      %2254 = vmatpush1.msra.mxu0 0.0
      %2255 = vmatprep.subr.mxu0 0.0
      %2256 = vmatpush1.msra.mxu0 0.0
      %2257 = vmatprep.subr.mxu0 0.0
      %2258 = vmatpush1.msra.mxu0 0.0
      %2259 = vmatprep.subr.mxu0 0.0
      %2260 = vmatpush1.msra.mxu0 0.0
      %2261 = vmatprep.subr.mxu0 0.0
      %2262 = vmatpush1.msra.mxu0 0.0
      %2263 = vmatprep.subr.mxu0 0.0
      %2264 = vmatpush1.msra.mxu0 0.0
      %2265 = vmatprep.subr.mxu0 0.0
      %2266 = vmatpush1.msra.mxu0 0.0
      %2267 = vmatprep.subr.mxu0 0.0
      %2268 = vmatpush1.msra.mxu0 0.0
      %2269 = vmatprep.subr.mxu0 0.0
      %2270 = vmatpush1.msra.mxu0 0.0
      %2271 = vmatprep.subr.mxu0 0.0
      %2272 = vmatpush1.msra.mxu0 0.0
      %2273 = vmatprep.subr.mxu0 0.0
      %2274 = vmatpush1.msra.mxu0 0.0
      %2275 = vmatprep.subr.mxu0 0.0
      %2276 = vmatpush1.msra.mxu0 0.0
      %2277 = vmatprep.subr.mxu0 0.0
      %2278 = vmatpush1.msra.mxu0 0.0
      %2279 = vmatprep.subr.mxu0 0.0
      %2280 = vmatpush1.msra.mxu0 0.0
      %2281 = vmatprep.subr.mxu0 0.0
      %2282 = vmatpush1.msra.mxu0 0.0
      %2283 = vmatprep.subr.mxu0 0.0
      %2284 = vmatpush1.msra.mxu0 0.0
      %2285 = vmatprep.subr.mxu0 0.0
      %2286 = vmatpush1.msra.mxu0 0.0
      %2287 = vmatprep.subr.mxu0 0.0
      %2288 = vmatpush1.msra.mxu0 0.0
      %2289 = vmatprep.subr.mxu0 0.0
      %2290 = vmatpush1.msra.mxu0 0.0
      %2291 = vmatprep.subr.mxu0 0.0
      %2292 = vmatpush1.msra.mxu0 0.0
      %2293 = vmatprep.subr.mxu0 0.0
      %2294 = vmatpush1.msra.mxu0 0.0
      %2295 = vmatprep.subr.mxu0 0.0
      %2296 = vmatpush1.msra.mxu0 0.0
      %2297 = vmatprep.subr.mxu0 0.0
      %2298 = vmatpush1.msra.mxu0 0.0
      %2299 = vmatprep.subr.mxu0 0.0
      %2300 = vmatpush1.msra.mxu0 0.0
      %2301 = vmatprep.subr.mxu0 0.0
      %2302 = vmatpush1.msra.mxu0 0.0
      %2303 = vmatprep.subr.mxu0 0.0
      %2304 = vmatpush1.msra.mxu0 0.0
      %2305 = vmatprep.subr.mxu0 0.0
      %2306 = vmatpush1.msra.mxu0 0.0
      %2307 = vmatprep.subr.mxu0 0.0
      %2308 = vmatpush1.msra.mxu0 0.0
      %2309 = vmatprep.subr.mxu0 0.0
      %2310 = vmatpush1.msra.mxu0 0.0
      %2311 = vmatprep.mubr.f32.mxu0 0.0
      %2312 = vmatmul.mubr.f32.gmra.mrb[0].mxu0 %v2242
      %v2313 = vpop.f32.mrb[0].mxu0
      %v2314 = vadd.f32 0.0, %v2313
      %v2315 = vpop.f32.mrb[0].mxu0
      %2316 = vmatprep.mubr.f32.mxu0 0.0
      %2317 = vmatmul.mubr.f32.gmra.mrb[0].mxu0 %v2245
      %v2318 = vpop.f32.mrb[0].mxu0
      %v2319 = vadd.f32 0.0, %v2318
      %v2320 = vpop.f32.mrb[0].mxu0
      %2321 = vdwg.mxu0
      %2330 = vrot.lane.b32.xlu0 %v2053, 8
      %v2331 = vpop.permute.xlu0 %2330
      %2332 = vrot.lane.b32.xlu0 %v2058, 8
      %v2333 = vpop.permute.xlu0 %2332
      %2334 = vrot.lane.b32.xlu0 %v2140, 8
      %v2335 = vpop.permute.xlu0 %2334
      %2336 = vrot.lane.b32.xlu0 %v2145, 8
      %v2337 = vpop.permute.xlu0 %2336
      %2338 = vrot.lane.b32.xlu0 %v2227, 8
      %v2339 = vpop.permute.xlu0 %2338
      %2340 = vrot.lane.b32.xlu0 %v2232, 8
      %v2341 = vpop.permute.xlu0 %2340
      %2342 = vrot.lane.b32.xlu0 %v2314, 8
      %v2343 = vpop.permute.xlu0 %2342
      %2344 = vrot.lane.b32.xlu0 %v2319, 8
      %v2345 = vpop.permute.xlu0 %2344
      %v2354 = vsel %vm735, %v1253, %v2331
      %v2355 = vsel %vm735, %v1258, %v2333
      %v2356 = vsel %vm735, %v1340, %v2335
      %v2357 = vsel %vm735, %v1345, %v2337
      %v2358 = vsel %vm735, %v1427, %v2339
      %v2359 = vsel %vm735, %v1432, %v2341
      %v2360 = vsel %vm735, %v1514, %v2343
      %v2361 = vsel %vm735, %v1519, %v2345
      %v2362 = vpack.c.bf16 %v2355, %v2354
      %v2363 = vpack.c.bf16 %v2357, %v2356
      %v2364 = vpack.c.bf16 %v2359, %v2358
      %v2365 = vpack.c.bf16 %v2361, %v2360
      %v2366 = vld [vmem:[%s6] sm:$0xf]
      %v2367 = vld [vmem:[%s6 + $0x4] sm:$0xf]
      %v2370 = vunpack.c.l.b16 %v2366
      %v2371 = vunpack.c.l.b16 %v2367
      %v2372 = vpack.c.b16 %v2371, %v2370
      %v2375 = vsel %vm495, %v2362, 0
      %v2378 = vsel %vm495, %v2363, 0
      %v2381 = vsel %vm495, %v2364, 0
      %v2384 = vsel %vm495, %v2365, 0
      %2386 = vmatprep.subr.bf16.mxu0 0
      %2387 = vmatpush1.bf16.msra.mxu0 %v2372
      %2388 = vmatprep.subr.bf16.mxu0 0
      %2389 = vmatpush1.bf16.msra.mxu0 0
      %2390 = vmatprep.subr.bf16.mxu0 0
      %2391 = vmatpush1.bf16.msra.mxu0 0
      %2392 = vmatprep.subr.bf16.mxu0 0
      %2393 = vmatpush1.bf16.msra.mxu0 0
      %2394 = vmatprep.subr.bf16.mxu0 0
      %2395 = vmatpush1.bf16.msra.mxu0 0
      %2396 = vmatprep.subr.bf16.mxu0 0
      %2397 = vmatpush1.bf16.msra.mxu0 0
      %2398 = vmatprep.subr.bf16.mxu0 0
      %2399 = vmatpush1.bf16.msra.mxu0 0
      %2400 = vmatprep.subr.bf16.mxu0 0
      %2401 = vmatpush1.bf16.msra.mxu0 0
      %2402 = vmatprep.subr.bf16.mxu0 0
      %2403 = vmatpush1.bf16.msra.mxu0 0
      %2404 = vmatprep.subr.bf16.mxu0 0
      %2405 = vmatpush1.bf16.msra.mxu0 0
      %2406 = vmatprep.subr.bf16.mxu0 0
      %2407 = vmatpush1.bf16.msra.mxu0 0
      %2408 = vmatprep.subr.bf16.mxu0 0
      %2409 = vmatpush1.bf16.msra.mxu0 0
      %2410 = vmatprep.subr.bf16.mxu0 0
      %2411 = vmatpush1.bf16.msra.mxu0 0
      %2412 = vmatprep.subr.bf16.mxu0 0
      %2413 = vmatpush1.bf16.msra.mxu0 0
      %2414 = vmatprep.subr.bf16.mxu0 0
      %2415 = vmatpush1.bf16.msra.mxu0 0
      %2416 = vmatprep.subr.bf16.mxu0 0
      %2417 = vmatpush1.bf16.msra.mxu0 0
      %2418 = vmatprep.mubr.bf16.mxu0 0
      %2419 = vmatmul.mubr.bf16.gmra.mrb[0].mxu0 %v2375
      %v2420 = vpop.f32.mrb[0].mxu0
      %v2421 = vadd.f32 0.0, %v2420
      %v2422 = vpop.f32.mrb[0].mxu0
      %v2423 = vpop.f32.mrb[0].mxu0
      %v2424 = vadd.f32 0.0, %v2423
      %v2425 = vpop.f32.mrb[0].mxu0
      %2426 = vmatprep.mubr.bf16.mxu0 0
      %2427 = vmatmul.mubr.bf16.gmra.mrb[0].mxu0 %v2378
      %v2428 = vpop.f32.mrb[0].mxu0
      %v2429 = vadd.f32 0.0, %v2428
      %v2430 = vpop.f32.mrb[0].mxu0
      %v2431 = vpop.f32.mrb[0].mxu0
      %v2432 = vadd.f32 0.0, %v2431
      %v2433 = vpop.f32.mrb[0].mxu0
      %2434 = vmatprep.mubr.bf16.mxu0 0
      %2435 = vmatmul.mubr.bf16.gmra.mrb[0].mxu0 %v2381
      %v2436 = vpop.f32.mrb[0].mxu0
      %v2437 = vadd.f32 0.0, %v2436
      %v2438 = vpop.f32.mrb[0].mxu0
      %v2439 = vpop.f32.mrb[0].mxu0
      %v2440 = vadd.f32 0.0, %v2439
      %v2441 = vpop.f32.mrb[0].mxu0
      %2442 = vmatprep.mubr.bf16.mxu0 0
      %2443 = vmatmul.mubr.bf16.gmra.mrb[0].mxu0 %v2384
      %v2444 = vpop.f32.mrb[0].mxu0
      %v2445 = vadd.f32 0.0, %v2444
      %v2446 = vpop.f32.mrb[0].mxu0
      %v2447 = vpop.f32.mrb[0].mxu0
      %v2448 = vadd.f32 0.0, %v2447
      %v2449 = vpop.f32.mrb[0].mxu0
      %2450 = vdwg.mxu0
      %v2451 = vadd.f32 %v485, %v2421
      %v2452 = vadd.f32 %v486, %v2424
      %v2453 = vadd.f32 %v487, %v2429
      %v2454 = vadd.f32 %v488, %v2432
      %v2455 = vadd.f32 %v489, %v2437
      %v2456 = vadd.f32 %v490, %v2440
      %v2457 = vadd.f32 %v491, %v2445
      %v2458 = vadd.f32 %v492, %v2448
      %v2459 = vld [vmem:[%s7] sm:$0x1]
      %v2461 = vlaneseq
      %v2462 = vshrl.u32 %v2461, 7
      %v2463 = vsub.s32 0, %v2462
      %v2464 = vrot.slane %v2459, %v2463
      %v2466 = vadd.f32 %v2451, %v2464
      %v2467 = vadd.f32 %v2452, %v2464
      %v2468 = vadd.f32 %v2453, %v2464
      %v2469 = vadd.f32 %v2454, %v2464
      %v2470 = vadd.f32 %v2455, %v2464
      %v2471 = vadd.f32 %v2456, %v2464
      %v2472 = vadd.f32 %v2457, %v2464
      %v2473 = vadd.f32 %v2458, %v2464
      %v2474 = vld [vmem:[%s8] sm:$0x1]
      %v2475 = vld [vmem:[%s9] sm:$0x1]
      %v2476 = vsel %vm495, %v2466, 0.0
      %2477 = vadd.xlane.f32.xlu0 %v2476
      %v2478 = vpop.xlane.xlu0 %2477
      %v2479 = vsel %vm495, %v2467, 0.0
      %2480 = vadd.xlane.f32.xlu0 %v2479
      %v2481 = vpop.xlane.xlu0 %2480
      %v2482 = vsel %vm495, %v2468, 0.0
      %2483 = vadd.xlane.f32.xlu0 %v2482
      %v2484 = vpop.xlane.xlu0 %2483
      %v2485 = vsel %vm495, %v2469, 0.0
      %2486 = vadd.xlane.f32.xlu0 %v2485
      %v2487 = vpop.xlane.xlu0 %2486
      %v2488 = vsel %vm495, %v2470, 0.0
      %2489 = vadd.xlane.f32.xlu0 %v2488
      %v2490 = vpop.xlane.xlu0 %2489
      %v2491 = vsel %vm495, %v2471, 0.0
      %2492 = vadd.xlane.f32.xlu0 %v2491
      %v2493 = vpop.xlane.xlu0 %2492
      %v2494 = vsel %vm495, %v2472, 0.0
      %2495 = vadd.xlane.f32.xlu0 %v2494
      %v2496 = vpop.xlane.xlu0 %2495
      %v2497 = vsel %vm495, %v2473, 0.0
      %2498 = vadd.xlane.f32.xlu0 %v2497
      %v2499 = vpop.xlane.xlu0 %2498
      %v2500 = vmul.f32 %v2478, %v520
      %v2501 = vmul.f32 %v2481, %v520
      %v2502 = vmul.f32 %v2484, %v520
      %v2503 = vmul.f32 %v2487, %v520
      %v2504 = vmul.f32 %v2490, %v520
      %v2505 = vmul.f32 %v2493, %v520
      %v2506 = vmul.f32 %v2496, %v520
      %v2507 = vmul.f32 %v2499, %v520
      %v2508 = vsub.f32 %v2466, %v2500
      %v2509 = vsub.f32 %v2467, %v2501
      %v2510 = vsub.f32 %v2468, %v2502
      %v2511 = vsub.f32 %v2469, %v2503
      %v2512 = vsub.f32 %v2470, %v2504
      %v2513 = vsub.f32 %v2471, %v2505
      %v2514 = vsub.f32 %v2472, %v2506
      %v2515 = vsub.f32 %v2473, %v2507
      %v2516 = vmul.f32 %v2508, %v2508
      %v2517 = vmul.f32 %v2509, %v2509
      %v2518 = vmul.f32 %v2510, %v2510
      %v2519 = vmul.f32 %v2511, %v2511
      %v2520 = vmul.f32 %v2512, %v2512
      %v2521 = vmul.f32 %v2513, %v2513
      %v2522 = vmul.f32 %v2514, %v2514
      %v2523 = vmul.f32 %v2515, %v2515
      %v2524 = vsel %vm495, %v2516, 0.0
      %2525 = vadd.xlane.f32.xlu0 %v2524
      %v2526 = vpop.xlane.xlu0 %2525
      %v2527 = vsel %vm495, %v2517, 0.0
      %2528 = vadd.xlane.f32.xlu0 %v2527
      %v2529 = vpop.xlane.xlu0 %2528
      %v2530 = vsel %vm495, %v2518, 0.0
      %2531 = vadd.xlane.f32.xlu0 %v2530
      %v2532 = vpop.xlane.xlu0 %2531
      %v2533 = vsel %vm495, %v2519, 0.0
      %2534 = vadd.xlane.f32.xlu0 %v2533
      %v2535 = vpop.xlane.xlu0 %2534
      %v2536 = vsel %vm495, %v2520, 0.0
      %2537 = vadd.xlane.f32.xlu0 %v2536
      %v2538 = vpop.xlane.xlu0 %2537
      %v2539 = vsel %vm495, %v2521, 0.0
      %2540 = vadd.xlane.f32.xlu0 %v2539
      %v2541 = vpop.xlane.xlu0 %2540
      %v2542 = vsel %vm495, %v2522, 0.0
      %2543 = vadd.xlane.f32.xlu0 %v2542
      %v2544 = vpop.xlane.xlu0 %2543
      %v2545 = vsel %vm495, %v2523, 0.0
      %2546 = vadd.xlane.f32.xlu0 %v2545
      %v2547 = vpop.xlane.xlu0 %2546
      %v2548 = vmul.f32 %v2526, %v520
      %v2549 = vmul.f32 %v2529, %v520
      %v2550 = vmul.f32 %v2532, %v520
      %v2551 = vmul.f32 %v2535, %v520
      %v2552 = vmul.f32 %v2538, %v520
      %v2553 = vmul.f32 %v2541, %v520
      %v2554 = vmul.f32 %v2544, %v520
      %v2555 = vmul.f32 %v2547, %v520
      %v2556 = vadd.f32 %v2548, 1e-05
      %v2557 = vadd.f32 %v2549, 1e-05
      %v2558 = vadd.f32 %v2550, 1e-05
      %v2559 = vadd.f32 %v2551, 1e-05
      %v2560 = vadd.f32 %v2552, 1e-05
      %v2561 = vadd.f32 %v2553, 1e-05
      %v2562 = vadd.f32 %v2554, 1e-05
      %v2563 = vadd.f32 %v2555, 1e-05
      %v2564 = vrsqrt.pop %v2556
      %v2565 = vrsqrt.pop %v2557
      %v2566 = vrsqrt.pop %v2558
      %v2567 = vrsqrt.pop %v2559
      %v2568 = vrsqrt.pop %v2560
      %v2569 = vrsqrt.pop %v2561
      %v2570 = vrsqrt.pop %v2562
      %v2571 = vrsqrt.pop %v2563
      %v2572 = vmul.f32 %v2508, %v2564
      %v2573 = vmul.f32 %v2509, %v2565
      %v2574 = vmul.f32 %v2510, %v2566
      %v2575 = vmul.f32 %v2511, %v2567
      %v2576 = vmul.f32 %v2512, %v2568
      %v2577 = vmul.f32 %v2513, %v2569
      %v2578 = vmul.f32 %v2514, %v2570
      %v2579 = vmul.f32 %v2515, %v2571
      %v2581 = vlaneseq
      %v2582 = vshrl.u32 %v2581, 7
      %v2583 = vsub.s32 0, %v2582
      %v2584 = vrot.slane %v2474, %v2583
      %v2586 = vmul.f32 %v2572, %v2584
      %v2587 = vmul.f32 %v2573, %v2584
      %v2588 = vmul.f32 %v2574, %v2584
      %v2589 = vmul.f32 %v2575, %v2584
      %v2590 = vmul.f32 %v2576, %v2584
      %v2591 = vmul.f32 %v2577, %v2584
      %v2592 = vmul.f32 %v2578, %v2584
      %v2593 = vmul.f32 %v2579, %v2584
      %v2595 = vlaneseq
      %v2596 = vshrl.u32 %v2595, 7
      %v2597 = vsub.s32 0, %v2596
      %v2598 = vrot.slane %v2475, %v2597
      %v2600 = vadd.f32 %v2586, %v2598
      %v2601 = vadd.f32 %v2587, %v2598
      %v2602 = vadd.f32 %v2588, %v2598
      %v2603 = vadd.f32 %v2589, %v2598
      %v2604 = vadd.f32 %v2590, %v2598
      %v2605 = vadd.f32 %v2591, %v2598
      %v2606 = vadd.f32 %v2592, %v2598
      %v2607 = vadd.f32 %v2593, %v2598
      %v2608 = vpack.c.bf16 %v2601, %v2600
      %v2609 = vpack.c.bf16 %v2603, %v2602
      %v2610 = vpack.c.bf16 %v2605, %v2604
      %v2611 = vpack.c.bf16 %v2607, %v2606
      %v2612 = vld [vmem:[%s10] sm:$0xf]
      %v2613 = vld [vmem:[%s10 + $0x4] sm:$0xf]
      %v2614 = vld [vmem:[%s11] sm:$0x1]
      %v2616 = vlaneseq
      %v2617 = vshrl.u32 %v2616, 7
      %v2618 = vsub.s32 0, %v2617
      %v2619 = vrot.slane %v2614, %v2618
      %v2623 = vunpack.c.l.b16 %v2612
      %v2624 = vunpack.c.l.b16 %v2613
      %v2625 = vpack.c.b16 %v2624, %v2623
      %v2628 = vsel %vm495, %v2608, 0
      %v2631 = vsel %vm495, %v2609, 0
      %v2634 = vsel %vm495, %v2610, 0
      %v2637 = vsel %vm495, %v2611, 0
      %2639 = vmatprep.subr.bf16.mxu0 0
      %2640 = vmatpush1.bf16.msra.mxu0 %v2625
      %2641 = vmatprep.subr.bf16.mxu0 0
      %2642 = vmatpush1.bf16.msra.mxu0 0
      %2643 = vmatprep.subr.bf16.mxu0 0
      %2644 = vmatpush1.bf16.msra.mxu0 0
      %2645 = vmatprep.subr.bf16.mxu0 0
      %2646 = vmatpush1.bf16.msra.mxu0 0
      %2647 = vmatprep.subr.bf16.mxu0 0
      %2648 = vmatpush1.bf16.msra.mxu0 0
      %2649 = vmatprep.subr.bf16.mxu0 0
      %2650 = vmatpush1.bf16.msra.mxu0 0
      %2651 = vmatprep.subr.bf16.mxu0 0
      %2652 = vmatpush1.bf16.msra.mxu0 0
      %2653 = vmatprep.subr.bf16.mxu0 0
      %2654 = vmatpush1.bf16.msra.mxu0 0
      %2655 = vmatprep.subr.bf16.mxu0 0
      %2656 = vmatpush1.bf16.msra.mxu0 0
      %2657 = vmatprep.subr.bf16.mxu0 0
      %2658 = vmatpush1.bf16.msra.mxu0 0
      %2659 = vmatprep.subr.bf16.mxu0 0
      %2660 = vmatpush1.bf16.msra.mxu0 0
      %2661 = vmatprep.subr.bf16.mxu0 0
      %2662 = vmatpush1.bf16.msra.mxu0 0
      %2663 = vmatprep.subr.bf16.mxu0 0
      %2664 = vmatpush1.bf16.msra.mxu0 0
      %2665 = vmatprep.subr.bf16.mxu0 0
      %2666 = vmatpush1.bf16.msra.mxu0 0
      %2667 = vmatprep.subr.bf16.mxu0 0
      %2668 = vmatpush1.bf16.msra.mxu0 0
      %2669 = vmatprep.subr.bf16.mxu0 0
      %2670 = vmatpush1.bf16.msra.mxu0 0
      %2671 = vmatprep.mubr.bf16.mxu0 0
      %2672 = vmatmul.mubr.bf16.gmra.mrb[0].mxu0 %v2628
      %v2673 = vpop.f32.mrb[0].mxu0
      %v2674 = vadd.f32 %v2619, %v2673
      %v2675 = vpop.f32.mrb[0].mxu0
      %v2676 = vpop.f32.mrb[0].mxu0
      %v2677 = vadd.f32 %v2619, %v2676
      %v2678 = vpop.f32.mrb[0].mxu0
      %2679 = vmatprep.mubr.bf16.mxu0 0
      %2680 = vmatmul.mubr.bf16.gmra.mrb[0].mxu0 %v2631
      %v2681 = vpop.f32.mrb[0].mxu0
      %v2682 = vadd.f32 %v2619, %v2681
      %v2683 = vpop.f32.mrb[0].mxu0
      %v2684 = vpop.f32.mrb[0].mxu0
      %v2685 = vadd.f32 %v2619, %v2684
      %v2686 = vpop.f32.mrb[0].mxu0
      %2687 = vmatprep.mubr.bf16.mxu0 0
      %2688 = vmatmul.mubr.bf16.gmra.mrb[0].mxu0 %v2634
      %v2689 = vpop.f32.mrb[0].mxu0
      %v2690 = vadd.f32 %v2619, %v2689
      %v2691 = vpop.f32.mrb[0].mxu0
      %v2692 = vpop.f32.mrb[0].mxu0
      %v2693 = vadd.f32 %v2619, %v2692
      %v2694 = vpop.f32.mrb[0].mxu0
      %2695 = vmatprep.mubr.bf16.mxu0 0
      %2696 = vmatmul.mubr.bf16.gmra.mrb[0].mxu0 %v2637
      %v2697 = vpop.f32.mrb[0].mxu0
      %v2698 = vadd.f32 %v2619, %v2697
      %v2699 = vpop.f32.mrb[0].mxu0
      %v2700 = vpop.f32.mrb[0].mxu0
      %v2701 = vadd.f32 %v2619, %v2700
      %v2702 = vpop.f32.mrb[0].mxu0
      %2703 = vdwg.mxu0
      %v2704 = vmul.f32 %v2674, 0.5
      %v2705 = vmul.f32 %v2677, 0.5
      %v2706 = vmul.f32 %v2682, 0.5
      %v2707 = vmul.f32 %v2685, 0.5
      %v2708 = vmul.f32 %v2690, 0.5
      %v2709 = vmul.f32 %v2693, 0.5
      %v2710 = vmul.f32 %v2698, 0.5
      %v2711 = vmul.f32 %v2701, 0.5
      %v2712 = vmul.f32 %v2674, 0.044715
      %v2713 = vmul.f32 %v2677, 0.044715
      %v2714 = vmul.f32 %v2682, 0.044715
      %v2715 = vmul.f32 %v2685, 0.044715
      %v2716 = vmul.f32 %v2690, 0.044715
      %v2717 = vmul.f32 %v2693, 0.044715
      %v2718 = vmul.f32 %v2698, 0.044715
      %v2719 = vmul.f32 %v2701, 0.044715
      %v2720 = vmul.f32 %v2712, %v2674
      %v2721 = vmul.f32 %v2713, %v2677
      %v2722 = vmul.f32 %v2714, %v2682
      %v2723 = vmul.f32 %v2715, %v2685
      %v2724 = vmul.f32 %v2716, %v2690
      %v2725 = vmul.f32 %v2717, %v2693
      %v2726 = vmul.f32 %v2718, %v2698
      %v2727 = vmul.f32 %v2719, %v2701
      %v2728 = vmul.f32 %v2720, %v2674
      %v2729 = vmul.f32 %v2721, %v2677
      %v2730 = vmul.f32 %v2722, %v2682
      %v2731 = vmul.f32 %v2723, %v2685
      %v2732 = vmul.f32 %v2724, %v2690
      %v2733 = vmul.f32 %v2725, %v2693
      %v2734 = vmul.f32 %v2726, %v2698
      %v2735 = vmul.f32 %v2727, %v2701
      %v2736 = vadd.f32 %v2674, %v2728
      %v2737 = vadd.f32 %v2677, %v2729
      %v2738 = vadd.f32 %v2682, %v2730
      %v2739 = vadd.f32 %v2685, %v2731
      %v2740 = vadd.f32 %v2690, %v2732
      %v2741 = vadd.f32 %v2693, %v2733
      %v2742 = vadd.f32 %v2698, %v2734
      %v2743 = vadd.f32 %v2701, %v2735
      %v2744 = vmul.f32 %v2736, 0.7978846
      %v2745 = vmul.f32 %v2737, 0.7978846
      %v2746 = vmul.f32 %v2738, 0.7978846
      %v2747 = vmul.f32 %v2739, 0.7978846
      %v2748 = vmul.f32 %v2740, 0.7978846
      %v2749 = vmul.f32 %v2741, 0.7978846
      %v2750 = vmul.f32 %v2742, 0.7978846
      %v2751 = vmul.f32 %v2743, 0.7978846
      %v2752 = vtanh.pop %v2744
      %v2753 = vtanh.pop %v2745
      %v2754 = vtanh.pop %v2746
      %v2755 = vtanh.pop %v2747
      %v2756 = vtanh.pop %v2748
      %v2757 = vtanh.pop %v2749
      %v2758 = vtanh.pop %v2750
      %v2759 = vtanh.pop %v2751
      %v2760 = vadd.f32 %v2752, 1.0
      %v2761 = vadd.f32 %v2753, 1.0
      %v2762 = vadd.f32 %v2754, 1.0
      %v2763 = vadd.f32 %v2755, 1.0
      %v2764 = vadd.f32 %v2756, 1.0
      %v2765 = vadd.f32 %v2757, 1.0
      %v2766 = vadd.f32 %v2758, 1.0
      %v2767 = vadd.f32 %v2759, 1.0
      %v2768 = vmul.f32 %v2704, %v2760
      %v2769 = vmul.f32 %v2705, %v2761
      %v2770 = vmul.f32 %v2706, %v2762
      %v2771 = vmul.f32 %v2707, %v2763
      %v2772 = vmul.f32 %v2708, %v2764
      %v2773 = vmul.f32 %v2709, %v2765
      %v2774 = vmul.f32 %v2710, %v2766
      %v2775 = vmul.f32 %v2711, %v2767
      %v2776 = vpack.c.bf16 %v2769, %v2768
      %v2777 = vpack.c.bf16 %v2771, %v2770
      %v2778 = vpack.c.bf16 %v2773, %v2772
      %v2779 = vpack.c.bf16 %v2775, %v2774
      %v2780 = vld [vmem:[%s12] sm:$0xf]
      %v2781 = vld [vmem:[%s12 + $0x4] sm:$0xf]
      %v2782 = vld [vmem:[%s12 + $0x8] sm:$0xf]
      %v2783 = vld [vmem:[%s12 + $0xc] sm:$0xf]
      %v2784 = vld [vmem:[%s12 + $0x10] sm:$0xf]
      %v2785 = vld [vmem:[%s12 + $0x14] sm:$0xf]
      %v2786 = vld [vmem:[%s12 + $0x18] sm:$0xf]
      %v2787 = vld [vmem:[%s12 + $0x1c] sm:$0xf]
      %v2788 = vld [vmem:[%s13] sm:$0x1]
      %v2790 = vlaneseq
      %v2791 = vshrl.u32 %v2790, 7
      %v2792 = vsub.s32 0, %v2791
      %v2793 = vrot.slane %v2788, %v2792
      %v2803 = vunpack.c.l.b16 %v2780
      %v2804 = vunpack.c.l.b16 %v2781
      %v2805 = vunpack.c.l.b16 %v2782
      %v2806 = vunpack.c.l.b16 %v2783
      %v2807 = vunpack.c.l.b16 %v2784
      %v2808 = vunpack.c.l.b16 %v2785
      %v2809 = vunpack.c.l.b16 %v2786
      %v2810 = vunpack.c.l.b16 %v2787
      %v2811 = vpack.c.b16 %v2804, %v2803
      %v2812 = vpack.c.b16 %v2806, %v2805
      %v2813 = vpack.c.b16 %v2808, %v2807
      %v2814 = vpack.c.b16 %v2810, %v2809
      %vm2819 = vcmask 523264
      %v2821 = vsel %vm2819, %v2776, 0
      %v2824 = vsel %vm2819, %v2777, 0
      %v2827 = vsel %vm2819, %v2778, 0
      %v2830 = vsel %vm2819, %v2779, 0
      %2832 = vmatprep.subr.bf16.mxu0 0
      %2833 = vmatpush1.bf16.msra.mxu0 %v2811
      %2834 = vmatprep.subr.bf16.mxu0 0
      %2835 = vmatpush1.bf16.msra.mxu0 %v2812
      %2836 = vmatprep.subr.bf16.mxu0 0
      %2837 = vmatpush1.bf16.msra.mxu0 %v2813
      %2838 = vmatprep.subr.bf16.mxu0 0
      %2839 = vmatpush1.bf16.msra.mxu0 %v2814
      %2840 = vmatprep.subr.bf16.mxu0 0
      %2841 = vmatpush1.bf16.msra.mxu0 0
      %2842 = vmatprep.subr.bf16.mxu0 0
      %2843 = vmatpush1.bf16.msra.mxu0 0
      %2844 = vmatprep.subr.bf16.mxu0 0
      %2845 = vmatpush1.bf16.msra.mxu0 0
      %2846 = vmatprep.subr.bf16.mxu0 0
      %2847 = vmatpush1.bf16.msra.mxu0 0
      %2848 = vmatprep.subr.bf16.mxu0 0
      %2849 = vmatpush1.bf16.msra.mxu0 0
      %2850 = vmatprep.subr.bf16.mxu0 0
      %2851 = vmatpush1.bf16.msra.mxu0 0
      %2852 = vmatprep.subr.bf16.mxu0 0
      %2853 = vmatpush1.bf16.msra.mxu0 0
      %2854 = vmatprep.subr.bf16.mxu0 0
      %2855 = vmatpush1.bf16.msra.mxu0 0
      %2856 = vmatprep.subr.bf16.mxu0 0
      %2857 = vmatpush1.bf16.msra.mxu0 0
      %2858 = vmatprep.subr.bf16.mxu0 0
      %2859 = vmatpush1.bf16.msra.mxu0 0
      %2860 = vmatprep.subr.bf16.mxu0 0
      %2861 = vmatpush1.bf16.msra.mxu0 0
      %2862 = vmatprep.subr.bf16.mxu0 0
      %2863 = vmatpush1.bf16.msra.mxu0 0
      %2864 = vmatprep.mubr.bf16.mxu0 0
      %2865 = vmatmul.mubr.bf16.gmra.mrb[0].mxu0 %v2821
      %v2866 = vpop.f32.mrb[0].mxu0
      %v2867 = vadd.f32 %v2793, %v2866
      %v2868 = vpop.f32.mrb[0].mxu0
      %v2869 = vpop.f32.mrb[0].mxu0
      %v2870 = vadd.f32 %v2793, %v2869
      %v2871 = vpop.f32.mrb[0].mxu0
      %2872 = vmatprep.mubr.bf16.mxu0 0
      %2873 = vmatmul.mubr.bf16.gmra.mrb[0].mxu0 %v2824
      %v2874 = vpop.f32.mrb[0].mxu0
      %v2875 = vadd.f32 %v2793, %v2874
      %v2876 = vpop.f32.mrb[0].mxu0
      %v2877 = vpop.f32.mrb[0].mxu0
      %v2878 = vadd.f32 %v2793, %v2877
      %v2879 = vpop.f32.mrb[0].mxu0
      %2880 = vmatprep.mubr.bf16.mxu0 0
      %2881 = vmatmul.mubr.bf16.gmra.mrb[0].mxu0 %v2827
      %v2882 = vpop.f32.mrb[0].mxu0
      %v2883 = vadd.f32 %v2793, %v2882
      %v2884 = vpop.f32.mrb[0].mxu0
      %v2885 = vpop.f32.mrb[0].mxu0
      %v2886 = vadd.f32 %v2793, %v2885
      %v2887 = vpop.f32.mrb[0].mxu0
      %2888 = vmatprep.mubr.bf16.mxu0 0
      %2889 = vmatmul.mubr.bf16.gmra.mrb[0].mxu0 %v2830
      %v2890 = vpop.f32.mrb[0].mxu0
      %v2891 = vadd.f32 %v2793, %v2890
      %v2892 = vpop.f32.mrb[0].mxu0
      %v2893 = vpop.f32.mrb[0].mxu0
      %v2894 = vadd.f32 %v2793, %v2893
      %v2895 = vpop.f32.mrb[0].mxu0
      %2896 = vdwg.mxu0
      %v2897 = vadd.f32 %v2466, %v2867
      %v2898 = vadd.f32 %v2467, %v2870
      %v2899 = vadd.f32 %v2468, %v2875
      %v2900 = vadd.f32 %v2469, %v2878
      %v2901 = vadd.f32 %v2470, %v2883
      %v2902 = vadd.f32 %v2471, %v2886
      %v2903 = vadd.f32 %v2472, %v2891
      %v2904 = vadd.f32 %v2473, %v2894
      %v2905 = vpack.c.bf16 %v2898, %v2897
      %v2906 = vpack.c.bf16 %v2900, %v2899
      %v2907 = vpack.c.bf16 %v2902, %v2901
      %v2908 = vpack.c.bf16 %v2904, %v2903
      %v2913 = vunpack.c.l.b16 %v2905
      %v2914 = vunpack.c.h.b16 %v2905
      %v2915 = vunpack.c.l.b16 %v2906
      %v2916 = vunpack.c.h.b16 %v2906
      %v2917 = vunpack.c.l.b16 %v2907
      %v2918 = vunpack.c.h.b16 %v2907
      %v2919 = vunpack.c.l.b16 %v2908
      %v2920 = vunpack.c.h.b16 %v2908
      %v2921 = vpack.c.b16 %v2913, %v2913
      %v2922 = vpack.c.b16 %v2914, %v2914
      %v2923 = vpack.c.b16 %v2915, %v2915
      %v2924 = vpack.c.b16 %v2916, %v2916
      %v2925 = vpack.c.b16 %v2917, %v2917
      %v2926 = vpack.c.b16 %v2918, %v2918
      %v2927 = vpack.c.b16 %v2919, %v2919
      %v2928 = vpack.c.b16 %v2920, %v2920
      %vm2937 = vcmask 125952
      %2938 = vst.msk [vmem:[%s474] sm:$0xf] %vm2937, %v2921
      %2939 = vst.msk [vmem:[%s474 + $0x4] sm:$0xf] %vm2937, %v2922
      %2940 = vst.msk [vmem:[%s474 + $0x8] sm:$0xf] %vm2937, %v2923
      %2941 = vst.msk [vmem:[%s474 + $0xc] sm:$0xf] %vm2937, %v2924
      %2942 = vst.msk [vmem:[%s474 + $0x10] sm:$0xf] %vm2937, %v2925
      %2943 = vst.msk [vmem:[%s474 + $0x14] sm:$0xf] %vm2937, %v2926
      %2944 = vst.msk [vmem:[%s474 + $0x18] sm:$0xf] %vm2937, %v2927
      %2945 = vst.msk [vmem:[%s474 + $0x1c] sm:$0xf] %vm2937, %v2928
      %s2946 = smul.u32 4, %s25
      %p2947 = scmp.lt.s32.totalorder %s2946, 7
      %s2948 = scalar_select %p2947, %s2946, 7
      %s2949 = smul.addr %s2948, 2
      %s2950 = smul.addr %s2949, 4
      %s2951 = scalar_lea.vmem %s14, %s2950
      // Predicated region
      $region77: #{maxvit_forward.15} parent=75 // pred_check
        %p2952 = pneg %p342
      $region78: #{maxvit_forward.15} parent=75 // pred_check_branch
        %2954 = sbr.rel (%p2952) target = $region80
      $region79: #{maxvit_forward.15} parent=75 // pred_region
        %s2955 = smul.u32 4, %s25
      $region80: #{maxvit_forward.15} parent=75 // pred_fallthru
        _
    $region76: #{maxvit_forward.15} parent=5 // pred_fallthru
      _
    %p2956 = scmp.le.s32.totalorder 2, %s20
    // Predicated region
    $region81: #{maxvit_forward.15} parent=5 // pred_check
      %p2957 = pneg %p2956
    $region82: #{maxvit_forward.15} parent=5 // pred_check_branch
      %2959 = sbr.rel (%p2957) target = $region84
    $region83: #{maxvit_forward.15} parent=5 // pred_region
      %s2960 = ssub.s32 %s20, 2
      // Predicated region
      $region85: #{maxvit_forward.15} parent=83 // pred_check
        %p2961 = pneg %p348
      $region86: #{maxvit_forward.15} parent=83 // pred_check_branch
        %2963 = sbr.rel (%p2961) target = $region88
      $region87: #{maxvit_forward.15} parent=83 // pred_region
        %s2964 = smul.u32 4, %s26
        %p2965 = scmp.lt.s32.totalorder %s2964, 7
        %s2966 = scalar_select %p2965, %s2964, 7
        %s2967 = smul.addr %s2966, 2
        %s2968 = smul.addr %s2967, 4
        %s2969 = scalar_lea.vmem %s14, %s2968
      $region88: #{maxvit_forward.15} parent=83 // pred_fallthru
        _
    $region84: #{maxvit_forward.15} parent=5 // pred_fallthru
      _
  $region6: #{maxvit_forward.15} parent=0 // loop_footer
    %s24 = sadd.s32 1, %s20
  $region7: #{maxvit_forward.15} parent=0 // loop_footer_branch
    %19 = sbr.rel target = $region3
  $region8: #{maxvit_forward.15} parent=0 // loop_exit
    _

</llo_original>
